<compile_context>
chip_gen: v7x
topology: tpu7x:2x2x1
jax: 0.10.0
libtpu: 0.0.40
codegen_flags: <defaults>
</compile_context>

<pallas_src>
import functools

import jax
import jax.numpy as jnp
from jax.experimental import pallas as pl
from jax.experimental.pallas import tpu as pltpu

LRELU_SLOPE = 0.2
BN_EPS = 1e-5
VMEM_LIMIT = 32 * 1024 * 1024  # explicit; plenty of headroom on v5e/v6e/v7x


def _round_up(x, m):
    return ((x + m - 1) // m) * m


def _choose_m_tiling(m, cap=1024, min_blocks=2):
    """Pick (mp, tm) for the row (M) axis.

    Preferences: tm divides m exactly (no pad copy / no padded rows), tm is a
    multiple of 16 (bf16 sublane packing) or 8, tm <= cap (VMEM), and at least
    `min_blocks` blocks whenever m >= 32 so both v7x TensorCores get work.
    Falls back to padding m up only when no aligned divisor exists.
    """
    if m < 32:
        return m, m  # single full-extent block (full dims need no 8-alignment)
    limit = max(8, min(cap, m // min_blocks))
    for align in (16, 8):
        t = (limit // align) * align
        while t >= align:
            if m % t == 0:
                return m, t
            t -= align
    tm = max(16, (limit // 16) * 16)
    return _round_up(m, tm), tm


def _choose_n_tiling(cout):
    """Column tile: full Cout when small (no padded lanes written to HBM),
    256-wide tiles otherwise to feed v6e/v7x's 256-wide MXUs (128 fallback)."""
    if cout <= 256:
        return cout
    for tn in (256, 128):
        if cout % tn == 0:
            return tn
    return cout


# ---------------------------------------------------------------------------
# Pallas kernels
# ---------------------------------------------------------------------------
def _matmul_bias_act_kernel(a_ref, b_ref, bias_ref, o_ref, *, act):
    """Single-shot (no K loop) bf16 matmul, f32 accumulate, fused bias+act."""
    y = jnp.dot(a_ref[...], b_ref[...], preferred_element_type=jnp.float32)
    y = y + bias_ref[...]
    if act == "leaky":
        y = jnp.where(y > 0.0, y, LRELU_SLOPE * y)
    elif act == "sigmoid":
        y = 1.0 / (1.0 + jnp.exp(-y))  # exact; final layer is tiny
    o_ref[...] = y.astype(o_ref.dtype)


def _matmul_stats_kernel(a_ref, b_ref, raw_ref, sum_ref, sq_ref):
    """Matmul (no bias: BN cancels it) + per-block partial column stats.

    Raw output is written back as bf16; the stats come from the f32
    accumulator.  Partial sums are reduced to an (8, tn) slab per M block
    (tile-aligned sublane groups); the tiny final reduction happens in JAX.
    """
    y = jnp.dot(a_ref[...], b_ref[...], preferred_element_type=jnp.float32)
    raw_ref[...] = y.astype(raw_ref.dtype)
    tm, tn = y.shape
    yp = y.reshape(tm // 8, 8, tn)
    sum_ref[...] = jnp.sum(yp, axis=0)
    sq_ref[...] = jnp.sum(yp * yp, axis=0)


def _affine_lrelu_kernel(x_ref, scale_ref, shift_ref, o_ref):
    """Fused BatchNorm affine transform + LeakyReLU(0.2); bf16 in / bf16 out."""
    y = x_ref[...].astype(jnp.float32) * scale_ref[...] + shift_ref[...]
    o_ref[...] = jnp.where(y > 0.0, y, LRELU_SLOPE * y).astype(o_ref.dtype)


# ---------------------------------------------------------------------------
# Pallas wrappers
# ---------------------------------------------------------------------------
def conv_act_pallas(patches, w2d, bias, act, out_dtype):
    """patches:(M,K) @ w2d:(K,Cout) + bias with fused activation. Returns (M, Cout)."""
    m, k = patches.shape
    _, cout = w2d.shape
    cout_p = max(cout, 8)  # tiny lane hedge for the final Cout=1 head
    if cout_p != cout:
        w2d = jnp.pad(w2d, ((0, 0), (0, cout_p - cout)))
        bias = jnp.pad(bias, (0, cout_p - cout))
    mp, tm = _choose_m_tiling(m)
    tn = _choose_n_tiling(cout_p)
    a = patches if mp == m else jnp.pad(patches, ((0, mp - m), (0, 0)))
    grid = (mp // tm, cout_p // tn)
    out = pl.pallas_call(
        functools.partial(_matmul_bias_act_kernel, act=act),
        out_shape=jax.ShapeDtypeStruct((mp, cout_p), out_dtype),
        grid_spec=pltpu.PrefetchScalarGridSpec(
            num_scalar_prefetch=0,
            grid=grid,
            in_specs=[
                pl.BlockSpec((tm, k), lambda i, j: (i, 0)),
                pl.BlockSpec((k, tn), lambda i, j: (0, j)),
                pl.BlockSpec((1, tn), lambda i, j: (0, j)),
            ],
            out_specs=pl.BlockSpec((tm, tn), lambda i, j: (i, j)),
        ),
        compiler_params=pltpu.CompilerParams(
            dimension_semantics=("parallel", "parallel"),
            vmem_limit_bytes=VMEM_LIMIT),
    )(a, w2d.astype(jnp.bfloat16),
      bias.astype(jnp.float32).reshape(1, cout_p))
    if mp != m:
        out = out[:m]
    if cout_p != cout:
        out = out[:, :cout]
    return out


def conv_stats_pallas(patches, w2d):
    """Matmul (bias-free) with fused BatchNorm statistics.

    Returns (raw (Mp, Cout) bf16, sums (num_i*8, Cout) f32, sqs (...) f32).
    Any zero-padded rows contribute exactly 0 to the sums (no bias), so the
    caller just divides by the true row count.
    """
    m, k = patches.shape
    _, cout = w2d.shape
    mp, tm = _choose_m_tiling(m)
    assert tm % 8 == 0, (m, tm)
    tn = _choose_n_tiling(cout)
    num_i = mp // tm
    a = patches if mp == m else jnp.pad(patches, ((0, mp - m), (0, 0)))
    grid = (num_i, cout // tn)
    raw, sums, sqs = pl.pallas_call(
        _matmul_stats_kernel,
        out_shape=(jax.ShapeDtypeStruct((mp, cout), jnp.bfloat16),
                   jax.ShapeDtypeStruct((num_i * 8, cout), jnp.float32),
                   jax.ShapeDtypeStruct((num_i * 8, cout), jnp.float32)),
        grid_spec=pltpu.PrefetchScalarGridSpec(
            num_scalar_prefetch=0,
            grid=grid,
            in_specs=[
                pl.BlockSpec((tm, k), lambda i, j: (i, 0)),
                pl.BlockSpec((k, tn), lambda i, j: (0, j)),
            ],
            out_specs=(pl.BlockSpec((tm, tn), lambda i, j: (i, j)),
                       pl.BlockSpec((8, tn), lambda i, j: (i, j)),
                       pl.BlockSpec((8, tn), lambda i, j: (i, j))),
        ),
        compiler_params=pltpu.CompilerParams(
            dimension_semantics=("parallel", "parallel"),
            vmem_limit_bytes=VMEM_LIMIT),
    )(a, w2d.astype(jnp.bfloat16))
    return raw, sums, sqs


def affine_lrelu_pallas(x, scale, shift):
    """y = LeakyReLU(x * scale + shift), per-column scale/shift; bf16 out.

    Pure elementwise streaming pass -> uses its own (larger) row tile.
    """
    mp, cout = x.shape
    mp2, tm = _choose_m_tiling(mp, cap=2048)
    if mp2 != mp:  # mp is always a multiple of 8 here; stay safe anyway
        tm = 8 if mp % 8 == 0 else mp
    tn = _choose_n_tiling(cout)
    grid = (mp // tm, cout // tn)
    return pl.pallas_call(
        _affine_lrelu_kernel,
        out_shape=jax.ShapeDtypeStruct((mp, cout), jnp.bfloat16),
        grid_spec=pltpu.PrefetchScalarGridSpec(
            num_scalar_prefetch=0,
            grid=grid,
            in_specs=[pl.BlockSpec((tm, tn), lambda i, j: (i, j)),
                      pl.BlockSpec((1, tn), lambda i, j: (0, j)),
                      pl.BlockSpec((1, tn), lambda i, j: (0, j))],
            out_specs=pl.BlockSpec((tm, tn), lambda i, j: (i, j)),
        ),
        compiler_params=pltpu.CompilerParams(
            dimension_semantics=("parallel", "parallel"),
            vmem_limit_bytes=VMEM_LIMIT),
    )(x, scale.astype(jnp.float32).reshape(1, cout),
      shift.astype(jnp.float32).reshape(1, cout))


# ---------------------------------------------------------------------------
# JAX glue: im2col patch extraction (pure data movement, bf16, single copy).
# ---------------------------------------------------------------------------
def im2col_nhwc(x, ksize, stride, pad):
    n, h, w, c = x.shape
    xp = jnp.pad(x, ((0, 0), (pad, pad), (pad, pad), (0, 0)))
    ho = (h + 2 * pad - ksize) // stride + 1
    wo = (w + 2 * pad - ksize) // stride + 1
    taps = []
    for ky in range(ksize):
        for kx in range(ksize):
            taps.append(xp[:, ky:ky + stride * ho:stride,
                           kx:kx + stride * wo:stride, :])
    patches = jnp.stack(taps, axis=3)                        # (n, ho, wo, K*K, c)
    patches = patches.reshape(n, ho, wo, ksize * ksize * c)  # tap-major, channel-minor
    return patches.reshape(n * ho * wo, ksize * ksize * c), ho, wo


def _w_to_2d(w):
    # (cout, cin, kh, kw) -> (kh*kw*cin, cout), matching im2col tap ordering.
    return jnp.transpose(w, (2, 3, 1, 0)).reshape(-1, w.shape[0])


# ---------------------------------------------------------------------------
# Parameters (deterministic synthetic init, mirroring weights_init)
# ---------------------------------------------------------------------------
def init_params(key, in_dim=3, dim=8):
    chans = [in_dim, dim, dim * 2, dim * 4, dim * 8]
    keys = jax.random.split(key, 16)
    ki = 0
    convs = []
    for li in range(4):  # four 5x5 stride-2 convs
        cin, cout = chans[li], chans[li + 1]
        w = 0.02 * jax.random.normal(keys[ki], (cout, cin, 5, 5), jnp.float32); ki += 1
        b = 0.01 * jax.random.normal(keys[ki], (cout,), jnp.float32); ki += 1
        convs.append((w, b))
    # final conv: dim*8 -> 1, kernel 4, stride 1, no padding
    w = 0.02 * jax.random.normal(keys[ki], (1, dim * 8, 4, 4), jnp.float32); ki += 1
    b = 0.01 * jax.random.normal(keys[ki], (1,), jnp.float32); ki += 1
    convs.append((w, b))

    bns = []
    for li in range(1, 4):  # BatchNorm on conv_bn_lrelu blocks (layers 2..4)
        cout = chans[li + 1]
        gamma = 1.0 + 0.02 * jax.random.normal(keys[ki], (cout,), jnp.float32); ki += 1
        beta = jnp.zeros((cout,), jnp.float32)
        bns.append((gamma, beta))
    return convs, bns


# ---------------------------------------------------------------------------
# Forward pass (Pallas)
# ---------------------------------------------------------------------------
def discriminator_forward(x_nchw, convs, bns):
    # NCHW -> NHWC; activations carried in bf16 (matmuls accumulate in f32).
    x = jnp.transpose(x_nchw, (0, 2, 3, 1)).astype(jnp.bfloat16)
    n = x.shape[0]

    # layer 1: Conv2d(5, s=2, p=2) + LeakyReLU(0.2)
    w, b = convs[0]
    cout = w.shape[0]
    patches, ho, wo = im2col_nhwc(x, 5, 2, 2)
    y = conv_act_pallas(patches, _w_to_2d(w), b, act="leaky",
                        out_dtype=jnp.bfloat16)
    x = y.reshape(n, ho, wo, cout)

    # layers 2..4: Conv2d(5, s=2, p=2) + BatchNorm2d (train-mode stats) + LeakyReLU(0.2)
    for li in range(1, 4):
        # Conv bias is skipped: BN's mean subtraction cancels a per-channel
        # constant exactly, so the result is mathematically identical.
        w, _unused_bias = convs[li]
        gamma, beta = bns[li - 1]
        cout = w.shape[0]
        patches, ho, wo = im2col_nhwc(x, 5, 2, 2)
        m = patches.shape[0]

        raw, sums, sqs = conv_stats_pallas(patches, _w_to_2d(w))
        s = sums.sum(axis=0)
        sq = sqs.sum(axis=0)
        mean = s / m
        # biased variance (torch BN training mode); clamp against cancellation
        # in E[x^2] - E[x]^2.
        var = jnp.maximum(sq / m - mean * mean, 0.0)
        scale = gamma / jnp.sqrt(var + BN_EPS)
        shift = beta - mean * scale

        y = affine_lrelu_pallas(raw, scale, shift)
        if y.shape[0] != m:
            y = y[:m]
        x = y.reshape(n, ho, wo, cout)

    # layer 5: Conv2d(dim*8 -> 1, kernel 4, s=1, p=0) + Sigmoid, then view(-1).
    # The 4x4 kernel covers the whole 4x4 map, so im2col degenerates to a flatten.
    w, b = convs[4]
    patches = x.reshape(n, -1)
    y = conv_act_pallas(patches, _w_to_2d(w), b, act="sigmoid",
                        out_dtype=jnp.float32)
    return y.reshape(-1)  # (N,)


# ---------------------------------------------------------------------------
# Pure-JAX f32 reference (for correctness checking only)
# ---------------------------------------------------------------------------
def reference_forward(x_nchw, convs, bns):
    x = jnp.transpose(x_nchw, (0, 2, 3, 1)).astype(jnp.float32)

    def conv(xx, w, b, stride, pad):
        y = jax.lax.conv_general_dilated(
            xx, jnp.transpose(w, (2, 3, 1, 0)),
            window_strides=(stride, stride),
            padding=[(pad, pad), (pad, pad)],
            dimension_numbers=("NHWC", "HWIO", "NHWC"))
        return y + b

    w, b = convs[0]
    x = jax.nn.leaky_relu(conv(x, w, b, 2, 2), 0.2)
    for li in range(1, 4):
        w, b = convs[li]
        gamma, beta = bns[li - 1]
        y = conv(x, w, b, 2, 2)
        mean = y.mean(axis=(0, 1, 2))
        var = y.var(axis=(0, 1, 2))
        y = (y - mean) / jnp.sqrt(var + BN_EPS) * gamma + beta
        x = jax.nn.leaky_relu(y, 0.2)
    w, b = convs[4]
    y = conv(x, w, b, 1, 0)
    return jax.nn.sigmoid(y).reshape(-1)


if __name__ == "__main__":
    key = jax.random.PRNGKey(0)
    k_param, k_x = jax.random.split(key)
    # spatial must be 64: four stride-2 convs + the final 4x4 conv -> 1x1
    batch, in_dim, dim = 2, 3, 8
    convs, bns = init_params(k_param, in_dim=in_dim, dim=dim)
    x = jax.random.normal(k_x, (batch, in_dim, 64, 64), jnp.float32)

    out = jax.jit(discriminator_forward)(x, convs, bns)
    out = jax.block_until_ready(out)
    ref = jax.block_until_ready(jax.jit(reference_forward)(x, convs, bns))

    assert out.shape == (batch,), out.shape
    assert out.dtype == jnp.float32
    assert bool(jnp.all(jnp.isfinite(out)))
    assert bool(jnp.all((out >= 0.0) & (out <= 1.0)))  # post-sigmoid
    max_err = float(jnp.max(jnp.abs(out - ref)))
    # bf16 activations + batch-stat BN: expect ~1e-2 level agreement with f32.
    assert max_err < 5e-2, f"kernel deviates from f32 reference: {max_err}"
    print("KERNEL_OK")
</pallas_src>

<mosaic_0001>
module attributes {stable_mosaic.version = 11 : i64} {
  func.func @_matmul_bias_act_kernel(%arg0: i32, %arg1: i32, %arg2: memref<1024x75xbf16, #tpu.memory_space<vmem>>, %arg3: memref<75x8xbf16, #tpu.memory_space<vmem>>, %arg4: memref<1x8xf32, #tpu.memory_space<vmem>>, %arg5: memref<1024x8xbf16, #tpu.memory_space<vmem>>) attributes {dimension_semantics = [#tpu.dimension_semantics<parallel>, #tpu.dimension_semantics<parallel>], iteration_bounds = array<i64: 2, 1>, scalar_prefetch = 0 : i64, scratch_operands = 0 : i64, tpu.core_type = #tpu.core_type<tc>, window_params = [{transform_indices = @transform_0, window_bounds = array<i64: 1024, 75>}, {transform_indices = @transform_1, window_bounds = array<i64: 75, 8>}, {transform_indices = @transform_2, window_bounds = array<i64: 1, 8>}, {transform_indices = @transform_3, window_bounds = array<i64: 1024, 8>}]} {
    %c0 = arith.constant 0 : index
    %c0_0 = arith.constant 0 : index
    %0 = vector.load %arg2[%c0, %c0_0] : memref<1024x75xbf16, #tpu.memory_space<vmem>>, vector<1024x75xbf16>
    %c0_1 = arith.constant 0 : index
    %c0_2 = arith.constant 0 : index
    %1 = vector.load %arg3[%c0_1, %c0_2] : memref<75x8xbf16, #tpu.memory_space<vmem>>, vector<75x8xbf16>
    %cst = arith.constant dense<0.000000e+00> : vector<1024x8xf32>
    %2 = tpu.matmul %0, %1, %cst {dimension_numbers = #tpu.dot_dimension_numbers<[1], [0], [0], [1], [0, 0, 1, 1], [], []>} : vector<1024x75xbf16>, vector<75x8xbf16>, vector<1024x8xf32> -> vector<1024x8xf32>
    %c0_3 = arith.constant 0 : index
    %c0_4 = arith.constant 0 : index
    %3 = vector.load %arg4[%c0_3, %c0_4] : memref<1x8xf32, #tpu.memory_space<vmem>>, vector<1x8xf32>
    %4 = vector.broadcast %3 : vector<1x8xf32> to vector<1024x8xf32>
    %5 = arith.addf %2, %4 : vector<1024x8xf32>
    %cst_5 = arith.constant 0.000000e+00 : f32
    %6 = vector.broadcast %cst_5 : f32 to vector<1024x8xf32>
    %7 = arith.cmpf ogt, %5, %6 : vector<1024x8xf32>
    %cst_6 = arith.constant 2.000000e-01 : f32
    %8 = vector.broadcast %cst_6 : f32 to vector<1024x8xf32>
    %9 = arith.mulf %8, %5 : vector<1024x8xf32>
    %10 = arith.select %7, %5, %9 : vector<1024x8xi1>, vector<1024x8xf32>
    %11 = arith.truncf %10 : vector<1024x8xf32> to vector<1024x8xbf16>
    %c0_7 = arith.constant 0 : index
    %c0_8 = arith.constant 0 : index
    %12 = vector.load %arg5[%c0_7, %c0_8] : memref<1024x8xbf16, #tpu.memory_space<vmem>>, vector<1024x8xbf16>
    tpu.vector_store %arg5[%c0_7, %c0_8], %11 {strides = array<i32>} : memref<1024x8xbf16, #tpu.memory_space<vmem>>, vector<1024x8xbf16>,
    return
  }
  func.func @transform_0(%arg0: i32, %arg1: i32) -> (i32, i32) {
    %c0_i32 = arith.constant 0 : i32
    %c0_i32_0 = arith.constant 0 : i32
    return %arg0, %c0_i32 : i32, i32
  }
  func.func @transform_1(%arg0: i32, %arg1: i32) -> (i32, i32) {
    %c0_i32 = arith.constant 0 : i32
    %c0_i32_0 = arith.constant 0 : i32
    return %c0_i32, %arg1 : i32, i32
  }
  func.func @transform_2(%arg0: i32, %arg1: i32) -> (i32, i32) {
    %c0_i32 = arith.constant 0 : i32
    %c0_i32_0 = arith.constant 0 : i32
    return %c0_i32, %arg1 : i32, i32
  }
  func.func @transform_3(%arg0: i32, %arg1: i32) -> (i32, i32) {
    %c0_i32 = arith.constant 0 : i32
    return %arg0, %arg1 : i32, i32
  }
}

module attributes {stable_mosaic.version = 11 : i64} {
  func.func @_matmul_stats_kernel(%arg0: i32, %arg1: i32, %arg2: memref<256x200xbf16, #tpu.memory_space<vmem>>, %arg3: memref<200x16xbf16, #tpu.memory_space<vmem>>, %arg4: memref<256x16xbf16, #tpu.memory_space<vmem>>, %arg5: memref<8x16xf32, #tpu.memory_space<vmem>>, %arg6: memref<8x16xf32, #tpu.memory_space<vmem>>) attributes {dimension_semantics = [#tpu.dimension_semantics<parallel>, #tpu.dimension_semantics<parallel>], iteration_bounds = array<i64: 2, 1>, scalar_prefetch = 0 : i64, scratch_operands = 0 : i64, tpu.core_type = #tpu.core_type<tc>, window_params = [{transform_indices = @transform_0, window_bounds = array<i64: 256, 200>}, {transform_indices = @transform_1, window_bounds = array<i64: 200, 16>}, {transform_indices = @transform_2, window_bounds = array<i64: 256, 16>}, {transform_indices = @transform_3, window_bounds = array<i64: 8, 16>}, {transform_indices = @transform_4, window_bounds = array<i64: 8, 16>}]} {
    %c0 = arith.constant 0 : index
    %c0_0 = arith.constant 0 : index
    %0 = vector.load %arg2[%c0, %c0_0] : memref<256x200xbf16, #tpu.memory_space<vmem>>, vector<256x200xbf16>
    %c0_1 = arith.constant 0 : index
    %c0_2 = arith.constant 0 : index
    %1 = vector.load %arg3[%c0_1, %c0_2] : memref<200x16xbf16, #tpu.memory_space<vmem>>, vector<200x16xbf16>
    %cst = arith.constant dense<0.000000e+00> : vector<256x16xf32>
    %2 = tpu.matmul %0, %1, %cst {dimension_numbers = #tpu.dot_dimension_numbers<[1], [0], [0], [1], [0, 0, 1, 1], [], []>} : vector<256x200xbf16>, vector<200x16xbf16>, vector<256x16xf32> -> vector<256x16xf32>
    %3 = arith.truncf %2 : vector<256x16xf32> to vector<256x16xbf16>
    %c0_3 = arith.constant 0 : index
    %c0_4 = arith.constant 0 : index
    %4 = vector.load %arg4[%c0_3, %c0_4] : memref<256x16xbf16, #tpu.memory_space<vmem>>, vector<256x16xbf16>
    tpu.vector_store %arg4[%c0_3, %c0_4], %3 {strides = array<i32>} : memref<256x16xbf16, #tpu.memory_space<vmem>>, vector<256x16xbf16>,
    %5 = vector.shape_cast %2 : vector<256x16xf32> to vector<32x8x16xf32>
    %cst_5 = arith.constant dense<0.000000e+00> : vector<8x16xf32>
    %6 = vector.multi_reduction <add>, %5, %cst_5 [0] : vector<32x8x16xf32> to vector<8x16xf32>
    %c0_6 = arith.constant 0 : index
    %c0_7 = arith.constant 0 : index
    %7 = vector.load %arg5[%c0_6, %c0_7] : memref<8x16xf32, #tpu.memory_space<vmem>>, vector<8x16xf32>
    tpu.vector_store %arg5[%c0_6, %c0_7], %6 {strides = array<i32>} : memref<8x16xf32, #tpu.memory_space<vmem>>, vector<8x16xf32>,
    %8 = arith.mulf %5, %5 : vector<32x8x16xf32>
    %cst_8 = arith.constant dense<0.000000e+00> : vector<8x16xf32>
    %9 = vector.multi_reduction <add>, %8, %cst_8 [0] : vector<32x8x16xf32> to vector<8x16xf32>
    %c0_9 = arith.constant 0 : index
    %c0_10 = arith.constant 0 : index
    %10 = vector.load %arg6[%c0_9, %c0_10] : memref<8x16xf32, #tpu.memory_space<vmem>>, vector<8x16xf32>
    tpu.vector_store %arg6[%c0_9, %c0_10], %9 {strides = array<i32>} : memref<8x16xf32, #tpu.memory_space<vmem>>, vector<8x16xf32>,
    return
  }
  func.func @transform_0(%arg0: i32, %arg1: i32) -> (i32, i32) {
    %c0_i32 = arith.constant 0 : i32
    %c0_i32_0 = arith.constant 0 : i32
    return %arg0, %c0_i32 : i32, i32
  }
  func.func @transform_1(%arg0: i32, %arg1: i32) -> (i32, i32) {
    %c0_i32 = arith.constant 0 : i32
    %c0_i32_0 = arith.constant 0 : i32
    return %c0_i32, %arg1 : i32, i32
  }
  func.func @transform_2(%arg0: i32, %arg1: i32) -> (i32, i32) {
    %c0_i32 = arith.constant 0 : i32
    return %arg0, %arg1 : i32, i32
  }
  func.func @transform_3(%arg0: i32, %arg1: i32) -> (i32, i32) {
    %c0_i32 = arith.constant 0 : i32
    return %arg0, %arg1 : i32, i32
  }
  func.func @transform_4(%arg0: i32, %arg1: i32) -> (i32, i32) {
    %c0_i32 = arith.constant 0 : i32
    return %arg0, %arg1 : i32, i32
  }
}

module attributes {stable_mosaic.version = 11 : i64} {
  func.func @_affine_lrelu_kernel(%arg0: i32, %arg1: i32, %arg2: memref<256x16xbf16, #tpu.memory_space<vmem>>, %arg3: memref<1x16xf32, #tpu.memory_space<vmem>>, %arg4: memref<1x16xf32, #tpu.memory_space<vmem>>, %arg5: memref<256x16xbf16, #tpu.memory_space<vmem>>) attributes {dimension_semantics = [#tpu.dimension_semantics<parallel>, #tpu.dimension_semantics<parallel>], iteration_bounds = array<i64: 2, 1>, scalar_prefetch = 0 : i64, scratch_operands = 0 : i64, tpu.core_type = #tpu.core_type<tc>, window_params = [{transform_indices = @transform_0, window_bounds = array<i64: 256, 16>}, {transform_indices = @transform_1, window_bounds = array<i64: 1, 16>}, {transform_indices = @transform_2, window_bounds = array<i64: 1, 16>}, {transform_indices = @transform_3, window_bounds = array<i64: 256, 16>}]} {
    %c0 = arith.constant 0 : index
    %c0_0 = arith.constant 0 : index
    %0 = vector.load %arg2[%c0, %c0_0] : memref<256x16xbf16, #tpu.memory_space<vmem>>, vector<256x16xbf16>
    %1 = arith.extf %0 : vector<256x16xbf16> to vector<256x16xf32>
    %c0_1 = arith.constant 0 : index
    %c0_2 = arith.constant 0 : index
    %2 = vector.load %arg3[%c0_1, %c0_2] : memref<1x16xf32, #tpu.memory_space<vmem>>, vector<1x16xf32>
    %3 = vector.broadcast %2 : vector<1x16xf32> to vector<256x16xf32>
    %4 = arith.mulf %1, %3 : vector<256x16xf32>
    %c0_3 = arith.constant 0 : index
    %c0_4 = arith.constant 0 : index
    %5 = vector.load %arg4[%c0_3, %c0_4] : memref<1x16xf32, #tpu.memory_space<vmem>>, vector<1x16xf32>
    %6 = vector.broadcast %5 : vector<1x16xf32> to vector<256x16xf32>
    %7 = arith.addf %4, %6 : vector<256x16xf32>
    %cst = arith.constant 0.000000e+00 : f32
    %8 = vector.broadcast %cst : f32 to vector<256x16xf32>
    %9 = arith.cmpf ogt, %7, %8 : vector<256x16xf32>
    %cst_5 = arith.constant 2.000000e-01 : f32
    %10 = vector.broadcast %cst_5 : f32 to vector<256x16xf32>
    %11 = arith.mulf %10, %7 : vector<256x16xf32>
    %12 = arith.select %9, %7, %11 : vector<256x16xi1>, vector<256x16xf32>
    %13 = arith.truncf %12 : vector<256x16xf32> to vector<256x16xbf16>
    %c0_6 = arith.constant 0 : index
    %c0_7 = arith.constant 0 : index
    %14 = vector.load %arg5[%c0_6, %c0_7] : memref<256x16xbf16, #tpu.memory_space<vmem>>, vector<256x16xbf16>
    tpu.vector_store %arg5[%c0_6, %c0_7], %13 {strides = array<i32>} : memref<256x16xbf16, #tpu.memory_space<vmem>>, vector<256x16xbf16>,
    return
  }
  func.func @transform_0(%arg0: i32, %arg1: i32) -> (i32, i32) {
    %c0_i32 = arith.constant 0 : i32
    return %arg0, %arg1 : i32, i32
  }
  func.func @transform_1(%arg0: i32, %arg1: i32) -> (i32, i32) {
    %c0_i32 = arith.constant 0 : i32
    %c0_i32_0 = arith.constant 0 : i32
    return %c0_i32, %arg1 : i32, i32
  }
  func.func @transform_2(%arg0: i32, %arg1: i32) -> (i32, i32) {
    %c0_i32 = arith.constant 0 : i32
    %c0_i32_0 = arith.constant 0 : i32
    return %c0_i32, %arg1 : i32, i32
  }
  func.func @transform_3(%arg0: i32, %arg1: i32) -> (i32, i32) {
    %c0_i32 = arith.constant 0 : i32
    return %arg0, %arg1 : i32, i32
  }
}

module attributes {stable_mosaic.version = 11 : i64} {
  func.func @_matmul_stats_kernel(%arg0: i32, %arg1: i32, %arg2: memref<64x400xbf16, #tpu.memory_space<vmem>>, %arg3: memref<400x32xbf16, #tpu.memory_space<vmem>>, %arg4: memref<64x32xbf16, #tpu.memory_space<vmem>>, %arg5: memref<8x32xf32, #tpu.memory_space<vmem>>, %arg6: memref<8x32xf32, #tpu.memory_space<vmem>>) attributes {dimension_semantics = [#tpu.dimension_semantics<parallel>, #tpu.dimension_semantics<parallel>], iteration_bounds = array<i64: 2, 1>, scalar_prefetch = 0 : i64, scratch_operands = 0 : i64, tpu.core_type = #tpu.core_type<tc>, window_params = [{transform_indices = @transform_0, window_bounds = array<i64: 64, 400>}, {transform_indices = @transform_1, window_bounds = array<i64: 400, 32>}, {transform_indices = @transform_2, window_bounds = array<i64: 64, 32>}, {transform_indices = @transform_3, window_bounds = array<i64: 8, 32>}, {transform_indices = @transform_4, window_bounds = array<i64: 8, 32>}]} {
    %c0 = arith.constant 0 : index
    %c0_0 = arith.constant 0 : index
    %0 = vector.load %arg2[%c0, %c0_0] : memref<64x400xbf16, #tpu.memory_space<vmem>>, vector<64x400xbf16>
    %c0_1 = arith.constant 0 : index
    %c0_2 = arith.constant 0 : index
    %1 = vector.load %arg3[%c0_1, %c0_2] : memref<400x32xbf16, #tpu.memory_space<vmem>>, vector<400x32xbf16>
    %cst = arith.constant dense<0.000000e+00> : vector<64x32xf32>
    %2 = tpu.matmul %0, %1, %cst {dimension_numbers = #tpu.dot_dimension_numbers<[1], [0], [0], [1], [0, 0, 1, 1], [], []>} : vector<64x400xbf16>, vector<400x32xbf16>, vector<64x32xf32> -> vector<64x32xf32>
    %3 = arith.truncf %2 : vector<64x32xf32> to vector<64x32xbf16>
    %c0_3 = arith.constant 0 : index
    %c0_4 = arith.constant 0 : index
    %4 = vector.load %arg4[%c0_3, %c0_4] : memref<64x32xbf16, #tpu.memory_space<vmem>>, vector<64x32xbf16>
    tpu.vector_store %arg4[%c0_3, %c0_4], %3 {strides = array<i32>} : memref<64x32xbf16, #tpu.memory_space<vmem>>, vector<64x32xbf16>,
    %5 = vector.shape_cast %2 : vector<64x32xf32> to vector<8x8x32xf32>
    %cst_5 = arith.constant dense<0.000000e+00> : vector<8x32xf32>
    %6 = vector.multi_reduction <add>, %5, %cst_5 [0] : vector<8x8x32xf32> to vector<8x32xf32>
    %c0_6 = arith.constant 0 : index
    %c0_7 = arith.constant 0 : index
    %7 = vector.load %arg5[%c0_6, %c0_7] : memref<8x32xf32, #tpu.memory_space<vmem>>, vector<8x32xf32>
    tpu.vector_store %arg5[%c0_6, %c0_7], %6 {strides = array<i32>} : memref<8x32xf32, #tpu.memory_space<vmem>>, vector<8x32xf32>,
    %8 = arith.mulf %5, %5 : vector<8x8x32xf32>
    %cst_8 = arith.constant dense<0.000000e+00> : vector<8x32xf32>
    %9 = vector.multi_reduction <add>, %8, %cst_8 [0] : vector<8x8x32xf32> to vector<8x32xf32>
    %c0_9 = arith.constant 0 : index
    %c0_10 = arith.constant 0 : index
    %10 = vector.load %arg6[%c0_9, %c0_10] : memref<8x32xf32, #tpu.memory_space<vmem>>, vector<8x32xf32>
    tpu.vector_store %arg6[%c0_9, %c0_10], %9 {strides = array<i32>} : memref<8x32xf32, #tpu.memory_space<vmem>>, vector<8x32xf32>,
    return
  }
  func.func @transform_0(%arg0: i32, %arg1: i32) -> (i32, i32) {
    %c0_i32 = arith.constant 0 : i32
    %c0_i32_0 = arith.constant 0 : i32
    return %arg0, %c0_i32 : i32, i32
  }
  func.func @transform_1(%arg0: i32, %arg1: i32) -> (i32, i32) {
    %c0_i32 = arith.constant 0 : i32
    %c0_i32_0 = arith.constant 0 : i32
    return %c0_i32, %arg1 : i32, i32
  }
  func.func @transform_2(%arg0: i32, %arg1: i32) -> (i32, i32) {
    %c0_i32 = arith.constant 0 : i32
    return %arg0, %arg1 : i32, i32
  }
  func.func @transform_3(%arg0: i32, %arg1: i32) -> (i32, i32) {
    %c0_i32 = arith.constant 0 : i32
    return %arg0, %arg1 : i32, i32
  }
  func.func @transform_4(%arg0: i32, %arg1: i32) -> (i32, i32) {
    %c0_i32 = arith.constant 0 : i32
    return %arg0, %arg1 : i32, i32
  }
}

module attributes {stable_mosaic.version = 11 : i64} {
  func.func @_affine_lrelu_kernel(%arg0: i32, %arg1: i32, %arg2: memref<64x32xbf16, #tpu.memory_space<vmem>>, %arg3: memref<1x32xf32, #tpu.memory_space<vmem>>, %arg4: memref<1x32xf32, #tpu.memory_space<vmem>>, %arg5: memref<64x32xbf16, #tpu.memory_space<vmem>>) attributes {dimension_semantics = [#tpu.dimension_semantics<parallel>, #tpu.dimension_semantics<parallel>], iteration_bounds = array<i64: 2, 1>, scalar_prefetch = 0 : i64, scratch_operands = 0 : i64, tpu.core_type = #tpu.core_type<tc>, window_params = [{transform_indices = @transform_0, window_bounds = array<i64: 64, 32>}, {transform_indices = @transform_1, window_bounds = array<i64: 1, 32>}, {transform_indices = @transform_2, window_bounds = array<i64: 1, 32>}, {transform_indices = @transform_3, window_bounds = array<i64: 64, 32>}]} {
    %c0 = arith.constant 0 : index
    %c0_0 = arith.constant 0 : index
    %0 = vector.load %arg2[%c0, %c0_0] : memref<64x32xbf16, #tpu.memory_space<vmem>>, vector<64x32xbf16>
    %1 = arith.extf %0 : vector<64x32xbf16> to vector<64x32xf32>
    %c0_1 = arith.constant 0 : index
    %c0_2 = arith.constant 0 : index
    %2 = vector.load %arg3[%c0_1, %c0_2] : memref<1x32xf32, #tpu.memory_space<vmem>>, vector<1x32xf32>
    %3 = vector.broadcast %2 : vector<1x32xf32> to vector<64x32xf32>
    %4 = arith.mulf %1, %3 : vector<64x32xf32>
    %c0_3 = arith.constant 0 : index
    %c0_4 = arith.constant 0 : index
    %5 = vector.load %arg4[%c0_3, %c0_4] : memref<1x32xf32, #tpu.memory_space<vmem>>, vector<1x32xf32>
    %6 = vector.broadcast %5 : vector<1x32xf32> to vector<64x32xf32>
    %7 = arith.addf %4, %6 : vector<64x32xf32>
    %cst = arith.constant 0.000000e+00 : f32
    %8 = vector.broadcast %cst : f32 to vector<64x32xf32>
    %9 = arith.cmpf ogt, %7, %8 : vector<64x32xf32>
    %cst_5 = arith.constant 2.000000e-01 : f32
    %10 = vector.broadcast %cst_5 : f32 to vector<64x32xf32>
    %11 = arith.mulf %10, %7 : vector<64x32xf32>
    %12 = arith.select %9, %7, %11 : vector<64x32xi1>, vector<64x32xf32>
    %13 = arith.truncf %12 : vector<64x32xf32> to vector<64x32xbf16>
    %c0_6 = arith.constant 0 : index
    %c0_7 = arith.constant 0 : index
    %14 = vector.load %arg5[%c0_6, %c0_7] : memref<64x32xbf16, #tpu.memory_space<vmem>>, vector<64x32xbf16>
    tpu.vector_store %arg5[%c0_6, %c0_7], %13 {strides = array<i32>} : memref<64x32xbf16, #tpu.memory_space<vmem>>, vector<64x32xbf16>,
    return
  }
  func.func @transform_0(%arg0: i32, %arg1: i32) -> (i32, i32) {
    %c0_i32 = arith.constant 0 : i32
    return %arg0, %arg1 : i32, i32
  }
  func.func @transform_1(%arg0: i32, %arg1: i32) -> (i32, i32) {
    %c0_i32 = arith.constant 0 : i32
    %c0_i32_0 = arith.constant 0 : i32
    return %c0_i32, %arg1 : i32, i32
  }
  func.func @transform_2(%arg0: i32, %arg1: i32) -> (i32, i32) {
    %c0_i32 = arith.constant 0 : i32
    %c0_i32_0 = arith.constant 0 : i32
    return %c0_i32, %arg1 : i32, i32
  }
  func.func @transform_3(%arg0: i32, %arg1: i32) -> (i32, i32) {
    %c0_i32 = arith.constant 0 : i32
    return %arg0, %arg1 : i32, i32
  }
}

module attributes {stable_mosaic.version = 11 : i64} {
  func.func @_matmul_stats_kernel(%arg0: i32, %arg1: i32, %arg2: memref<16x800xbf16, #tpu.memory_space<vmem>>, %arg3: memref<800x64xbf16, #tpu.memory_space<vmem>>, %arg4: memref<16x64xbf16, #tpu.memory_space<vmem>>, %arg5: memref<8x64xf32, #tpu.memory_space<vmem>>, %arg6: memref<8x64xf32, #tpu.memory_space<vmem>>) attributes {dimension_semantics = [#tpu.dimension_semantics<parallel>, #tpu.dimension_semantics<parallel>], iteration_bounds = array<i64: 2, 1>, scalar_prefetch = 0 : i64, scratch_operands = 0 : i64, tpu.core_type = #tpu.core_type<tc>, window_params = [{transform_indices = @transform_0, window_bounds = array<i64: 16, 800>}, {transform_indices = @transform_1, window_bounds = array<i64: 800, 64>}, {transform_indices = @transform_2, window_bounds = array<i64: 16, 64>}, {transform_indices = @transform_3, window_bounds = array<i64: 8, 64>}, {transform_indices = @transform_4, window_bounds = array<i64: 8, 64>}]} {
    %c0 = arith.constant 0 : index
    %c0_0 = arith.constant 0 : index
    %0 = vector.load %arg2[%c0, %c0_0] : memref<16x800xbf16, #tpu.memory_space<vmem>>, vector<16x800xbf16>
    %c0_1 = arith.constant 0 : index
    %c0_2 = arith.constant 0 : index
    %1 = vector.load %arg3[%c0_1, %c0_2] : memref<800x64xbf16, #tpu.memory_space<vmem>>, vector<800x64xbf16>
    %cst = arith.constant dense<0.000000e+00> : vector<16x64xf32>
    %2 = tpu.matmul %0, %1, %cst {dimension_numbers = #tpu.dot_dimension_numbers<[1], [0], [0], [1], [0, 0, 1, 1], [], []>} : vector<16x800xbf16>, vector<800x64xbf16>, vector<16x64xf32> -> vector<16x64xf32>
    %3 = arith.truncf %2 : vector<16x64xf32> to vector<16x64xbf16>
    %c0_3 = arith.constant 0 : index
    %c0_4 = arith.constant 0 : index
    %4 = vector.load %arg4[%c0_3, %c0_4] : memref<16x64xbf16, #tpu.memory_space<vmem>>, vector<16x64xbf16>
    tpu.vector_store %arg4[%c0_3, %c0_4], %3 {strides = array<i32>} : memref<16x64xbf16, #tpu.memory_space<vmem>>, vector<16x64xbf16>,
    %5 = vector.shape_cast %2 : vector<16x64xf32> to vector<2x8x64xf32>
    %cst_5 = arith.constant dense<0.000000e+00> : vector<8x64xf32>
    %6 = vector.multi_reduction <add>, %5, %cst_5 [0] : vector<2x8x64xf32> to vector<8x64xf32>
    %c0_6 = arith.constant 0 : index
    %c0_7 = arith.constant 0 : index
    %7 = vector.load %arg5[%c0_6, %c0_7] : memref<8x64xf32, #tpu.memory_space<vmem>>, vector<8x64xf32>
    tpu.vector_store %arg5[%c0_6, %c0_7], %6 {strides = array<i32>} : memref<8x64xf32, #tpu.memory_space<vmem>>, vector<8x64xf32>,
    %8 = arith.mulf %5, %5 : vector<2x8x64xf32>
    %cst_8 = arith.constant dense<0.000000e+00> : vector<8x64xf32>
    %9 = vector.multi_reduction <add>, %8, %cst_8 [0] : vector<2x8x64xf32> to vector<8x64xf32>
    %c0_9 = arith.constant 0 : index
    %c0_10 = arith.constant 0 : index
    %10 = vector.load %arg6[%c0_9, %c0_10] : memref<8x64xf32, #tpu.memory_space<vmem>>, vector<8x64xf32>
    tpu.vector_store %arg6[%c0_9, %c0_10], %9 {strides = array<i32>} : memref<8x64xf32, #tpu.memory_space<vmem>>, vector<8x64xf32>,
    return
  }
  func.func @transform_0(%arg0: i32, %arg1: i32) -> (i32, i32) {
    %c0_i32 = arith.constant 0 : i32
    %c0_i32_0 = arith.constant 0 : i32
    return %arg0, %c0_i32 : i32, i32
  }
  func.func @transform_1(%arg0: i32, %arg1: i32) -> (i32, i32) {
    %c0_i32 = arith.constant 0 : i32
    %c0_i32_0 = arith.constant 0 : i32
    return %c0_i32, %arg1 : i32, i32
  }
  func.func @transform_2(%arg0: i32, %arg1: i32) -> (i32, i32) {
    %c0_i32 = arith.constant 0 : i32
    return %arg0, %arg1 : i32, i32
  }
  func.func @transform_3(%arg0: i32, %arg1: i32) -> (i32, i32) {
    %c0_i32 = arith.constant 0 : i32
    return %arg0, %arg1 : i32, i32
  }
  func.func @transform_4(%arg0: i32, %arg1: i32) -> (i32, i32) {
    %c0_i32 = arith.constant 0 : i32
    return %arg0, %arg1 : i32, i32
  }
}

module attributes {stable_mosaic.version = 11 : i64} {
  func.func @_affine_lrelu_kernel(%arg0: i32, %arg1: i32, %arg2: memref<16x64xbf16, #tpu.memory_space<vmem>>, %arg3: memref<1x64xf32, #tpu.memory_space<vmem>>, %arg4: memref<1x64xf32, #tpu.memory_space<vmem>>, %arg5: memref<16x64xbf16, #tpu.memory_space<vmem>>) attributes {dimension_semantics = [#tpu.dimension_semantics<parallel>, #tpu.dimension_semantics<parallel>], iteration_bounds = array<i64: 2, 1>, scalar_prefetch = 0 : i64, scratch_operands = 0 : i64, tpu.core_type = #tpu.core_type<tc>, window_params = [{transform_indices = @transform_0, window_bounds = array<i64: 16, 64>}, {transform_indices = @transform_1, window_bounds = array<i64: 1, 64>}, {transform_indices = @transform_2, window_bounds = array<i64: 1, 64>}, {transform_indices = @transform_3, window_bounds = array<i64: 16, 64>}]} {
    %c0 = arith.constant 0 : index
    %c0_0 = arith.constant 0 : index
    %0 = vector.load %arg2[%c0, %c0_0] : memref<16x64xbf16, #tpu.memory_space<vmem>>, vector<16x64xbf16>
    %1 = arith.extf %0 : vector<16x64xbf16> to vector<16x64xf32>
    %c0_1 = arith.constant 0 : index
    %c0_2 = arith.constant 0 : index
    %2 = vector.load %arg3[%c0_1, %c0_2] : memref<1x64xf32, #tpu.memory_space<vmem>>, vector<1x64xf32>
    %3 = vector.broadcast %2 : vector<1x64xf32> to vector<16x64xf32>
    %4 = arith.mulf %1, %3 : vector<16x64xf32>
    %c0_3 = arith.constant 0 : index
    %c0_4 = arith.constant 0 : index
    %5 = vector.load %arg4[%c0_3, %c0_4] : memref<1x64xf32, #tpu.memory_space<vmem>>, vector<1x64xf32>
    %6 = vector.broadcast %5 : vector<1x64xf32> to vector<16x64xf32>
    %7 = arith.addf %4, %6 : vector<16x64xf32>
    %cst = arith.constant 0.000000e+00 : f32
    %8 = vector.broadcast %cst : f32 to vector<16x64xf32>
    %9 = arith.cmpf ogt, %7, %8 : vector<16x64xf32>
    %cst_5 = arith.constant 2.000000e-01 : f32
    %10 = vector.broadcast %cst_5 : f32 to vector<16x64xf32>
    %11 = arith.mulf %10, %7 : vector<16x64xf32>
    %12 = arith.select %9, %7, %11 : vector<16x64xi1>, vector<16x64xf32>
    %13 = arith.truncf %12 : vector<16x64xf32> to vector<16x64xbf16>
    %c0_6 = arith.constant 0 : index
    %c0_7 = arith.constant 0 : index
    %14 = vector.load %arg5[%c0_6, %c0_7] : memref<16x64xbf16, #tpu.memory_space<vmem>>, vector<16x64xbf16>
    tpu.vector_store %arg5[%c0_6, %c0_7], %13 {strides = array<i32>} : memref<16x64xbf16, #tpu.memory_space<vmem>>, vector<16x64xbf16>,
    return
  }
  func.func @transform_0(%arg0: i32, %arg1: i32) -> (i32, i32) {
    %c0_i32 = arith.constant 0 : i32
    return %arg0, %arg1 : i32, i32
  }
  func.func @transform_1(%arg0: i32, %arg1: i32) -> (i32, i32) {
    %c0_i32 = arith.constant 0 : i32
    %c0_i32_0 = arith.constant 0 : i32
    return %c0_i32, %arg1 : i32, i32
  }
  func.func @transform_2(%arg0: i32, %arg1: i32) -> (i32, i32) {
    %c0_i32 = arith.constant 0 : i32
    %c0_i32_0 = arith.constant 0 : i32
    return %c0_i32, %arg1 : i32, i32
  }
  func.func @transform_3(%arg0: i32, %arg1: i32) -> (i32, i32) {
    %c0_i32 = arith.constant 0 : i32
    return %arg0, %arg1 : i32, i32
  }
}

module attributes {stable_mosaic.version = 11 : i64} {
  func.func @_matmul_bias_act_kernel(%arg0: i32, %arg1: i32, %arg2: memref<2x1024xbf16, #tpu.memory_space<vmem>>, %arg3: memref<1024x8xbf16, #tpu.memory_space<vmem>>, %arg4: memref<1x8xf32, #tpu.memory_space<vmem>>, %arg5: memref<2x8xf32, #tpu.memory_space<vmem>>) attributes {dimension_semantics = [#tpu.dimension_semantics<parallel>, #tpu.dimension_semantics<parallel>], iteration_bounds = array<i64: 1, 1>, scalar_prefetch = 0 : i64, scratch_operands = 0 : i64, tpu.core_type = #tpu.core_type<tc>, window_params = [{transform_indices = @transform_0, window_bounds = array<i64: 2, 1024>}, {transform_indices = @transform_1, window_bounds = array<i64: 1024, 8>}, {transform_indices = @transform_2, window_bounds = array<i64: 1, 8>}, {transform_indices = @transform_3, window_bounds = array<i64: 2, 8>}]} {
    %c0 = arith.constant 0 : index
    %c0_0 = arith.constant 0 : index
    %0 = vector.load %arg2[%c0, %c0_0] : memref<2x1024xbf16, #tpu.memory_space<vmem>>, vector<2x1024xbf16>
    %c0_1 = arith.constant 0 : index
    %c0_2 = arith.constant 0 : index
    %1 = vector.load %arg3[%c0_1, %c0_2] : memref<1024x8xbf16, #tpu.memory_space<vmem>>, vector<1024x8xbf16>
    %cst = arith.constant dense<0.000000e+00> : vector<2x8xf32>
    %2 = tpu.matmul %0, %1, %cst {dimension_numbers = #tpu.dot_dimension_numbers<[1], [0], [0], [1], [0, 0, 1, 1], [], []>} : vector<2x1024xbf16>, vector<1024x8xbf16>, vector<2x8xf32> -> vector<2x8xf32>
    %c0_3 = arith.constant 0 : index
    %c0_4 = arith.constant 0 : index
    %3 = vector.load %arg4[%c0_3, %c0_4] : memref<1x8xf32, #tpu.memory_space<vmem>>, vector<1x8xf32>
    %4 = vector.broadcast %3 : vector<1x8xf32> to vector<2x8xf32>
    %5 = arith.addf %2, %4 : vector<2x8xf32>
    %cst_5 = arith.constant 0.000000e+00 : f32
    %6 = vector.broadcast %cst_5 : f32 to vector<2x8xf32>
    %7 = arith.subf %6, %5 : vector<2x8xf32>
    %8 = math.exp %7 : vector<2x8xf32>
    %cst_6 = arith.constant 1.000000e+00 : f32
    %9 = vector.broadcast %cst_6 : f32 to vector<2x8xf32>
    %10 = arith.addf %9, %8 : vector<2x8xf32>
    %cst_7 = arith.constant 1.000000e+00 : f32
    %11 = vector.broadcast %cst_7 : f32 to vector<2x8xf32>
    %12 = arith.divf %11, %10 : vector<2x8xf32>
    %c0_8 = arith.constant 0 : index
    %c0_9 = arith.constant 0 : index
    %13 = vector.load %arg5[%c0_8, %c0_9] : memref<2x8xf32, #tpu.memory_space<vmem>>, vector<2x8xf32>
    tpu.vector_store %arg5[%c0_8, %c0_9], %12 {strides = array<i32>} : memref<2x8xf32, #tpu.memory_space<vmem>>, vector<2x8xf32>,
    return
  }
  func.func @transform_0(%arg0: i32, %arg1: i32) -> (i32, i32) {
    %c0_i32 = arith.constant 0 : i32
    %c0_i32_0 = arith.constant 0 : i32
    return %arg0, %c0_i32 : i32, i32
  }
  func.func @transform_1(%arg0: i32, %arg1: i32) -> (i32, i32) {
    %c0_i32 = arith.constant 0 : i32
    %c0_i32_0 = arith.constant 0 : i32
    return %c0_i32, %arg1 : i32, i32
  }
  func.func @transform_2(%arg0: i32, %arg1: i32) -> (i32, i32) {
    %c0_i32 = arith.constant 0 : i32
    %c0_i32_0 = arith.constant 0 : i32
    return %c0_i32, %arg1 : i32, i32
  }
  func.func @transform_3(%arg0: i32, %arg1: i32) -> (i32, i32) {
    %c0_i32 = arith.constant 0 : i32
    return %arg0, %arg1 : i32, i32
  }
}

</mosaic_0001>

<llo_original>
// kernel: discriminator_forward.8
$region0: #{discriminator_forward.8}
  #allocation0 [shape = 'u32[]', space=smem, size = 0x4, offset = 0x4, fixed_abs, tag = 'smem constant byte address 0x4 - core index']
  #allocation1 [shape = 'u32[144,128]{1,0:T(1,128)}', space=vmem, size = 0x12000, scoped, tag = 'internal scratch']
  %s0 = inlined_call_operand.vmem [shape: bf16[2048,75], index: 0, kind: input, shape index: {}]
  %s1 = inlined_call_operand.vmem [shape: bf16[75,8], index: 1, kind: input, shape index: {}]
  %s2 = inlined_call_operand.vmem [shape: f32[1,8], index: 2, kind: input, shape index: {}]
  %s3 = inlined_call_operand.vmem [shape: bf16[2048,8], index: 3, kind: output, shape index: {}]
  %s4 = sld [smem:[#allocation0]]
  $region45: #{discriminator_forward.8} parent=0
    _
  %s6 = ssub.s32 1, %s4
  %s7 = scalar_select 0, %s6, %s4
  loop: start=0, step=1, limit=4
  $region2: #{discriminator_forward.8} parent=0 // loop_pre_header
    _
  $region3: #{discriminator_forward.8} parent=0 // loop_header
    %s9 = sphi 0, %s13
    %p10 = scmp.ge.s32.totalorder %s9, 4
    %s16 = sphi 0, %s28
    %s17 = sphi 0, %s24
    %s18 = sphi 0, %s16
    %s19 = sphi 0, %s17
    %s20 = sphi 0, %s18
    %s21 = sphi 0, %s19
    %s31 = sphi 0, %s33
    %s34 = sphi 0, %s31
    %s35 = sphi 0, %s34
    %s51 = sphi 0, %s35
    %s57 = sphi 0, %s59
    %s60 = sphi 0, %s57
    %s61 = sphi 0, %s60
    %s77 = sphi 0, %s61
    %s83 = sphi 0, %s85
    %s86 = sphi 0, %s83
    %s87 = sphi 0, %s86
    %s103 = sphi 0, %s87
    %s111 = sphi 0, %s113
    %s114 = sphi 0, %s111
    %s115 = sphi 0, %s114
    %s131 = sphi 0, %s115
  $region4: #{discriminator_forward.8} parent=0 // loop_header_branch
    %12 = sbr.rel (%p10) target = $region8
  $region5: #{discriminator_forward.8} parent=0 // loop_body
    %s14 = ssub.s32 %s9, 1
    %s15 = ssub.s32 %s9, 2
    %s22 = sadd.s32 1, %s17
    %p23 = scmp.ge.s32.totalorder %s22, 1
    %s24 = scalar_select %p23, 0, %s22
    %s25 = sadd.s32 1, %s16
    %s26 = scalar_select %p23, %s25, %s16
    %p27 = scmp.ge.s32.totalorder %s26, 2
    %s28 = scalar_select %p27, 0, %s26
    %s29 = ssub.s32 %s16, %s28
    %p30 = scmp.eq.s32.totalorder %s29, 0
    %s32 = sadd.s32 %s31, 1
    %s33 = scalar_select %p30, %s31, %s32
    %p36 = pneg %p30
    %p37 = scmp.eq.s32.totalorder %s9, 1
    %p38 = por %p36, %p37
    %p39 = scmp.ne.s32.totalorder %s31, %s34
    %p40 = scmp.eq.s32.totalorder %s9, 0
    %p41 = por %p39, %p40
    %p42 = scmp.ne.s32.totalorder %s31, %s34
    %p43 = scmp.eq.s32.totalorder %s14, 1
    %p44 = por %p42, %p43
    %p45 = scmp.ne.s32.totalorder %s34, %s35
    %p46 = scmp.eq.s32.totalorder %s14, 0
    %p47 = por %p45, %p46
    %p48 = scmp.ne.s32.totalorder %s34, %s35
    %p49 = scmp.eq.s32.totalorder %s15, 1
    %p50 = por %p48, %p49
    %p52 = scmp.ne.s32.totalorder %s35, %s51
    %p53 = scmp.eq.s32.totalorder %s15, 0
    %p54 = por %p52, %p53
    %s55 = ssub.s32 %s17, %s24
    %p56 = scmp.eq.s32.totalorder %s55, 0
    %s58 = sadd.s32 %s57, 1
    %s59 = scalar_select %p56, %s57, %s58
    %p62 = pneg %p56
    %p63 = scmp.eq.s32.totalorder %s9, 1
    %p64 = por %p62, %p63
    %p65 = scmp.ne.s32.totalorder %s57, %s60
    %p66 = scmp.eq.s32.totalorder %s9, 0
    %p67 = por %p65, %p66
    %p68 = scmp.ne.s32.totalorder %s57, %s60
    %p69 = scmp.eq.s32.totalorder %s14, 1
    %p70 = por %p68, %p69
    %p71 = scmp.ne.s32.totalorder %s60, %s61
    %p72 = scmp.eq.s32.totalorder %s14, 0
    %p73 = por %p71, %p72
    %p74 = scmp.ne.s32.totalorder %s60, %s61
    %p75 = scmp.eq.s32.totalorder %s15, 1
    %p76 = por %p74, %p75
    %p78 = scmp.ne.s32.totalorder %s61, %s77
    %p79 = scmp.eq.s32.totalorder %s15, 0
    %p80 = por %p78, %p79
    %s81 = ssub.s32 %s17, %s24
    %p82 = scmp.eq.s32.totalorder %s81, 0
    %s84 = sadd.s32 %s83, 1
    %s85 = scalar_select %p82, %s83, %s84
    %p88 = pneg %p82
    %p89 = scmp.eq.s32.totalorder %s9, 1
    %p90 = por %p88, %p89
    %p91 = scmp.ne.s32.totalorder %s83, %s86
    %p92 = scmp.eq.s32.totalorder %s9, 0
    %p93 = por %p91, %p92
    %p94 = scmp.ne.s32.totalorder %s83, %s86
    %p95 = scmp.eq.s32.totalorder %s14, 1
    %p96 = por %p94, %p95
    %p97 = scmp.ne.s32.totalorder %s86, %s87
    %p98 = scmp.eq.s32.totalorder %s14, 0
    %p99 = por %p97, %p98
    %p100 = scmp.ne.s32.totalorder %s86, %s87
    %p101 = scmp.eq.s32.totalorder %s15, 1
    %p102 = por %p100, %p101
    %p104 = scmp.ne.s32.totalorder %s87, %s103
    %p105 = scmp.eq.s32.totalorder %s15, 0
    %p106 = por %p104, %p105
    %s107 = ssub.s32 %s16, %s28
    %s108 = ssub.s32 %s17, %s24
    %s109 = sor.u32 %s107, %s108
    %p110 = scmp.eq.s32.totalorder %s109, 0
    %s112 = sadd.s32 %s111, 1
    %s113 = scalar_select %p110, %s111, %s112
    %p116 = pneg %p110
    %p117 = scmp.eq.s32.totalorder %s9, 1
    %p118 = por %p116, %p117
    %p119 = scmp.ne.s32.totalorder %s111, %s114
    %p120 = scmp.eq.s32.totalorder %s9, 0
    %p121 = por %p119, %p120
    %p122 = scmp.ne.s32.totalorder %s111, %s114
    %p123 = scmp.eq.s32.totalorder %s14, 1
    %p124 = por %p122, %p123
    %p125 = scmp.ne.s32.totalorder %s114, %s115
    %p126 = scmp.eq.s32.totalorder %s14, 0
    %p127 = por %p125, %p126
    %p128 = scmp.ne.s32.totalorder %s114, %s115
    %p129 = scmp.eq.s32.totalorder %s15, 1
    %p130 = por %p128, %p129
    %p132 = scmp.ne.s32.totalorder %s115, %s131
    %p133 = scmp.eq.s32.totalorder %s15, 0
    %p134 = por %p132, %p133
    %p135 = scmp.le.s32.totalorder 1, %s9
    %p136 = scmp.lt.s32.totalorder %s9, 3
    %p137 = pnand %p135, %p136
    %p138 = pneg %p137
    // Predicated region
    $region9: #{discriminator_forward.8} parent=5 // pred_check
      _
    $region10: #{discriminator_forward.8} parent=5 // pred_check_branch
      %140 = sbr.rel (%p137) target = $region12
    $region11: #{discriminator_forward.8} parent=5 // pred_region
      %s141 = ssub.s32 %s9, 1
      // Predicated region
      $region13: #{discriminator_forward.8} parent=11 // pred_check
        %p142 = pneg %p73
      $region14: #{discriminator_forward.8} parent=11 // pred_check_branch
        %144 = sbr.rel (%p142) target = $region16
      $region15: #{discriminator_forward.8} parent=11 // pred_region
        %p145 = scmp.lt.s32.totalorder %s19, 0
        %s146 = scalar_select %p145, %s19, 0
        %s147 = smul.addr %s146, 4
        %s148 = scalar_lea.vmem %s1, %s147
      $region16: #{discriminator_forward.8} parent=11 // pred_fallthru
        _
      // Predicated region
      $region17: #{discriminator_forward.8} parent=11 // pred_check
        %p149 = pneg %p99
      $region18: #{discriminator_forward.8} parent=11 // pred_check_branch
        %151 = sbr.rel (%p149) target = $region20
      $region19: #{discriminator_forward.8} parent=11 // pred_region
        %p152 = scmp.lt.s32.totalorder %s19, 0
        %s153 = scalar_select %p152, %s19, 0
        %s154 = scalar_lea.vmem %s2, %s153
      $region20: #{discriminator_forward.8} parent=11 // pred_fallthru
        _
    $region12: #{discriminator_forward.8} parent=5 // pred_fallthru
      _
    %p155 = scmp.lt.s32.totalorder %s9, 2
    // Predicated region
    $region21: #{discriminator_forward.8} parent=5 // pred_check
      %p156 = pneg %p155
    $region22: #{discriminator_forward.8} parent=5 // pred_check_branch
      %158 = sbr.rel (%p156) target = $region24
    $region23: #{discriminator_forward.8} parent=5 // pred_region
      // Predicated region
      $region25: #{discriminator_forward.8} parent=23 // pred_check
        %p159 = pneg %p41
      $region26: #{discriminator_forward.8} parent=23 // pred_check_branch
        %161 = sbr.rel (%p159) target = $region28
      $region27: #{discriminator_forward.8} parent=23 // pred_region
        %s162 = smul.u32 128, %s16
        %p163 = scmp.lt.s32.totalorder %s162, 255
        %s164 = scalar_select %p163, %s162, 255
        %s165 = smul.addr %s164, 4
        %s166 = scalar_lea.vmem %s0, %s165
        %s167 = smul.u32 128, %s16
      $region28: #{discriminator_forward.8} parent=23 // pred_fallthru
        _
    $region24: #{discriminator_forward.8} parent=5 // pred_fallthru
      _
    %p168 = scmp.le.s32.totalorder 1, %s9
    %p169 = scmp.lt.s32.totalorder %s9, 3
    %p170 = pnand %p168, %p169
    %p171 = pneg %p170
    // Predicated region
    $region29: #{discriminator_forward.8} parent=5 // pred_check
      _
    $region30: #{discriminator_forward.8} parent=5 // pred_check_branch
      %173 = sbr.rel (%p170) target = $region32
    $region31: #{discriminator_forward.8} parent=5 // pred_region
      %s174 = ssub.s32 %s9, 1
      %s175 = smul.u32 128, %s18
      %p176 = scmp.lt.s32.totalorder %s175, 255
      %s177 = scalar_select %p176, %s175, 255
      %s178 = smul.addr %s177, 4
      %s179 = scalar_lea.vmem %s0, %s178
      %p180 = pneg %p47
      %p181 = pneg %p44
      %p182 = scmp.lt.s32.totalorder %s19, 0
      %s183 = scalar_select %p182, %s19, 0
      %s184 = smul.addr %s183, 4
      %s185 = scalar_lea.vmem %s1, %s184
      %p186 = pneg %p73
      %p187 = pneg %p70
      %p188 = scmp.lt.s32.totalorder %s19, 0
      %s189 = scalar_select %p188, %s19, 0
      %s190 = scalar_lea.vmem %s2, %s189
      %p191 = pneg %p99
      %p192 = pneg %p96
      %p193 = pneg %p127
      %p194 = pneg %p124
      %s195 = smul.u32 128, %s18
      %p196 = scmp.lt.s32.totalorder %s195, 255
      %s197 = scalar_select %p196, %s195, 255
      %p198 = scmp.lt.s32.totalorder %s19, 0
      %s199 = scalar_select %p198, %s19, 0
      %s200 = sadd.s32 %s199, %s197
      %s201 = smul.addr %s200, 4
      %s202 = scalar_lea.vmem %s3, %s201
      %s203 = smul.u32 128, %s18
      %p204 = scmp.lt.s32.totalorder %s203, 255
      %s205 = scalar_select %p204, %s203, 255
      %s206 = smul.addr %s205, 4
      %s207 = scalar_lea.vmem %s0, %s206
      %s208 = smul.u32 128, %s18
      %p209 = scmp.lt.s32.totalorder %s19, 0
      %s210 = scalar_select %p209, %s19, 0
      %s211 = smul.addr %s210, 4
      %s212 = scalar_lea.vmem %s1, %s211
      %p213 = scmp.lt.s32.totalorder %s19, 0
      %s214 = scalar_select %p213, %s19, 0
      %s215 = scalar_lea.vmem %s2, %s214
      %s216 = smul.u32 128, %s18
      %p217 = scmp.lt.s32.totalorder %s216, 255
      %s218 = scalar_select %p217, %s216, 255
      %p219 = scmp.lt.s32.totalorder %s19, 0
      %s220 = scalar_select %p219, %s19, 0
      %s221 = sadd.s32 %s220, %s218
      %s222 = smul.addr %s221, 4
      %s223 = scalar_lea.vmem %s3, %s222
      %s224 = smul.u32 128, %s18
      %v226 = vld [vmem:[%s207] sm:$0xf]
      %v227 = vld [vmem:[%s207 + $0x4] sm:$0xf]
      %v228 = vld [vmem:[%s207 + $0x8] sm:$0xf]
      %v229 = vld [vmem:[%s207 + $0xc] sm:$0xf]
      %v230 = vld [vmem:[%s207 + $0x10] sm:$0xf]
      %v231 = vld [vmem:[%s207 + $0x14] sm:$0xf]
      %v232 = vld [vmem:[%s207 + $0x18] sm:$0xf]
      %v233 = vld [vmem:[%s207 + $0x1c] sm:$0xf]
      %v234 = vld [vmem:[%s207 + $0x20] sm:$0xf]
      %v235 = vld [vmem:[%s207 + $0x24] sm:$0xf]
      %v236 = vld [vmem:[%s207 + $0x28] sm:$0xf]
      %v237 = vld [vmem:[%s207 + $0x2c] sm:$0xf]
      %v238 = vld [vmem:[%s207 + $0x30] sm:$0xf]
      %v239 = vld [vmem:[%s207 + $0x34] sm:$0xf]
      %v240 = vld [vmem:[%s207 + $0x38] sm:$0xf]
      %v241 = vld [vmem:[%s207 + $0x3c] sm:$0xf]
      %v242 = vld [vmem:[%s207 + $0x40] sm:$0xf]
      %v243 = vld [vmem:[%s207 + $0x44] sm:$0xf]
      %v244 = vld [vmem:[%s207 + $0x48] sm:$0xf]
      %v245 = vld [vmem:[%s207 + $0x4c] sm:$0xf]
      %v246 = vld [vmem:[%s207 + $0x50] sm:$0xf]
      %v247 = vld [vmem:[%s207 + $0x54] sm:$0xf]
      %v248 = vld [vmem:[%s207 + $0x58] sm:$0xf]
      %v249 = vld [vmem:[%s207 + $0x5c] sm:$0xf]
      %v250 = vld [vmem:[%s207 + $0x60] sm:$0xf]
      %v251 = vld [vmem:[%s207 + $0x64] sm:$0xf]
      %v252 = vld [vmem:[%s207 + $0x68] sm:$0xf]
      %v253 = vld [vmem:[%s207 + $0x6c] sm:$0xf]
      %v254 = vld [vmem:[%s207 + $0x70] sm:$0xf]
      %v255 = vld [vmem:[%s207 + $0x74] sm:$0xf]
      %v256 = vld [vmem:[%s207 + $0x78] sm:$0xf]
      %v257 = vld [vmem:[%s207 + $0x7c] sm:$0xf]
      %v258 = vld [vmem:[%s207 + $0x80] sm:$0xf]
      %v259 = vld [vmem:[%s207 + $0x84] sm:$0xf]
      %v260 = vld [vmem:[%s207 + $0x88] sm:$0xf]
      %v261 = vld [vmem:[%s207 + $0x8c] sm:$0xf]
      %v262 = vld [vmem:[%s207 + $0x90] sm:$0xf]
      %v263 = vld [vmem:[%s207 + $0x94] sm:$0xf]
      %v264 = vld [vmem:[%s207 + $0x98] sm:$0xf]
      %v265 = vld [vmem:[%s207 + $0x9c] sm:$0xf]
      %v266 = vld [vmem:[%s207 + $0xa0] sm:$0xf]
      %v267 = vld [vmem:[%s207 + $0xa4] sm:$0xf]
      %v268 = vld [vmem:[%s207 + $0xa8] sm:$0xf]
      %v269 = vld [vmem:[%s207 + $0xac] sm:$0xf]
      %v270 = vld [vmem:[%s207 + $0xb0] sm:$0xf]
      %v271 = vld [vmem:[%s207 + $0xb4] sm:$0xf]
      %v272 = vld [vmem:[%s207 + $0xb8] sm:$0xf]
      %v273 = vld [vmem:[%s207 + $0xbc] sm:$0xf]
      %v274 = vld [vmem:[%s207 + $0xc0] sm:$0xf]
      %v275 = vld [vmem:[%s207 + $0xc4] sm:$0xf]
      %v276 = vld [vmem:[%s207 + $0xc8] sm:$0xf]
      %v277 = vld [vmem:[%s207 + $0xcc] sm:$0xf]
      %v278 = vld [vmem:[%s207 + $0xd0] sm:$0xf]
      %v279 = vld [vmem:[%s207 + $0xd4] sm:$0xf]
      %v280 = vld [vmem:[%s207 + $0xd8] sm:$0xf]
      %v281 = vld [vmem:[%s207 + $0xdc] sm:$0xf]
      %v282 = vld [vmem:[%s207 + $0xe0] sm:$0xf]
      %v283 = vld [vmem:[%s207 + $0xe4] sm:$0xf]
      %v284 = vld [vmem:[%s207 + $0xe8] sm:$0xf]
      %v285 = vld [vmem:[%s207 + $0xec] sm:$0xf]
      %v286 = vld [vmem:[%s207 + $0xf0] sm:$0xf]
      %v287 = vld [vmem:[%s207 + $0xf4] sm:$0xf]
      %v288 = vld [vmem:[%s207 + $0xf8] sm:$0xf]
      %v289 = vld [vmem:[%s207 + $0xfc] sm:$0xf]
      %v290 = vld [vmem:[%s207 + $0x100] sm:$0xf]
      %v291 = vld [vmem:[%s207 + $0x104] sm:$0xf]
      %v292 = vld [vmem:[%s207 + $0x108] sm:$0xf]
      %v293 = vld [vmem:[%s207 + $0x10c] sm:$0xf]
      %v294 = vld [vmem:[%s207 + $0x110] sm:$0xf]
      %v295 = vld [vmem:[%s207 + $0x114] sm:$0xf]
      %v296 = vld [vmem:[%s207 + $0x118] sm:$0xf]
      %v297 = vld [vmem:[%s207 + $0x11c] sm:$0xf]
      %v298 = vld [vmem:[%s207 + $0x120] sm:$0xf]
      %v299 = vld [vmem:[%s207 + $0x124] sm:$0xf]
      %v300 = vld [vmem:[%s207 + $0x128] sm:$0xf]
      %v301 = vld [vmem:[%s207 + $0x12c] sm:$0xf]
      %v302 = vld [vmem:[%s207 + $0x130] sm:$0xf]
      %v303 = vld [vmem:[%s207 + $0x134] sm:$0xf]
      %v304 = vld [vmem:[%s207 + $0x138] sm:$0xf]
      %v305 = vld [vmem:[%s207 + $0x13c] sm:$0xf]
      %v306 = vld [vmem:[%s207 + $0x140] sm:$0xf]
      %v307 = vld [vmem:[%s207 + $0x144] sm:$0xf]
      %v308 = vld [vmem:[%s207 + $0x148] sm:$0xf]
      %v309 = vld [vmem:[%s207 + $0x14c] sm:$0xf]
      %v310 = vld [vmem:[%s207 + $0x150] sm:$0xf]
      %v311 = vld [vmem:[%s207 + $0x154] sm:$0xf]
      %v312 = vld [vmem:[%s207 + $0x158] sm:$0xf]
      %v313 = vld [vmem:[%s207 + $0x15c] sm:$0xf]
      %v314 = vld [vmem:[%s207 + $0x160] sm:$0xf]
      %v315 = vld [vmem:[%s207 + $0x164] sm:$0xf]
      %v316 = vld [vmem:[%s207 + $0x168] sm:$0xf]
      %v317 = vld [vmem:[%s207 + $0x16c] sm:$0xf]
      %v318 = vld [vmem:[%s207 + $0x170] sm:$0xf]
      %v319 = vld [vmem:[%s207 + $0x174] sm:$0xf]
      %v320 = vld [vmem:[%s207 + $0x178] sm:$0xf]
      %v321 = vld [vmem:[%s207 + $0x17c] sm:$0xf]
      %v322 = vld [vmem:[%s207 + $0x180] sm:$0xf]
      %v323 = vld [vmem:[%s207 + $0x184] sm:$0xf]
      %v324 = vld [vmem:[%s207 + $0x188] sm:$0xf]
      %v325 = vld [vmem:[%s207 + $0x18c] sm:$0xf]
      %v326 = vld [vmem:[%s207 + $0x190] sm:$0xf]
      %v327 = vld [vmem:[%s207 + $0x194] sm:$0xf]
      %v328 = vld [vmem:[%s207 + $0x198] sm:$0xf]
      %v329 = vld [vmem:[%s207 + $0x19c] sm:$0xf]
      %v330 = vld [vmem:[%s207 + $0x1a0] sm:$0xf]
      %v331 = vld [vmem:[%s207 + $0x1a4] sm:$0xf]
      %v332 = vld [vmem:[%s207 + $0x1a8] sm:$0xf]
      %v333 = vld [vmem:[%s207 + $0x1ac] sm:$0xf]
      %v334 = vld [vmem:[%s207 + $0x1b0] sm:$0xf]
      %v335 = vld [vmem:[%s207 + $0x1b4] sm:$0xf]
      %v336 = vld [vmem:[%s207 + $0x1b8] sm:$0xf]
      %v337 = vld [vmem:[%s207 + $0x1bc] sm:$0xf]
      %v338 = vld [vmem:[%s207 + $0x1c0] sm:$0xf]
      %v339 = vld [vmem:[%s207 + $0x1c4] sm:$0xf]
      %v340 = vld [vmem:[%s207 + $0x1c8] sm:$0xf]
      %v341 = vld [vmem:[%s207 + $0x1cc] sm:$0xf]
      %v342 = vld [vmem:[%s207 + $0x1d0] sm:$0xf]
      %v343 = vld [vmem:[%s207 + $0x1d4] sm:$0xf]
      %v344 = vld [vmem:[%s207 + $0x1d8] sm:$0xf]
      %v345 = vld [vmem:[%s207 + $0x1dc] sm:$0xf]
      %v346 = vld [vmem:[%s207 + $0x1e0] sm:$0xf]
      %v347 = vld [vmem:[%s207 + $0x1e4] sm:$0xf]
      %v348 = vld [vmem:[%s207 + $0x1e8] sm:$0xf]
      %v349 = vld [vmem:[%s207 + $0x1ec] sm:$0xf]
      %v350 = vld [vmem:[%s207 + $0x1f0] sm:$0xf]
      %v351 = vld [vmem:[%s207 + $0x1f4] sm:$0xf]
      %v352 = vld [vmem:[%s207 + $0x1f8] sm:$0xf]
      %v353 = vld [vmem:[%s207 + $0x1fc] sm:$0xf]
      %v354 = vld [vmem:[%s212] sm:$0xf]
      %v355 = vld [vmem:[%s212 + $0x4] sm:$0xf]
      %v356 = vld [vmem:[%s212 + $0x8] sm:$0xf]
      %v357 = vld [vmem:[%s212 + $0xc] sm:$0xf]
      %v358 = vld [vmem:[%s212 + $0x10] sm:$0xf]
      %v359 = vld [vmem:[%s212 + $0x14] sm:$0xf]
      %v360 = vld [vmem:[%s212 + $0x18] sm:$0xf]
      %v361 = vld [vmem:[%s212 + $0x1c] sm:$0xf]
      %v362 = vld [vmem:[%s212 + $0x20] sm:$0xf]
      %v363 = vld [vmem:[%s212 + $0x24] sm:$0x3]
      %v364 = vld [vmem:[%s215] sm:$0x1]
      %v366 = vlaneseq
      %v367 = vshrl.u32 %v366, 7
      %v368 = vsub.s32 0, %v367
      %v369 = vrot.slane %v364, %v368
      %v499 = vunpack.c.l.b16 %v226
      %v500 = vunpack.c.l.b16 %v227
      %v501 = vunpack.c.l.b16 %v228
      %v502 = vunpack.c.l.b16 %v229
      %v503 = vunpack.c.l.b16 %v230
      %v504 = vunpack.c.l.b16 %v231
      %v505 = vunpack.c.l.b16 %v232
      %v506 = vunpack.c.l.b16 %v233
      %v507 = vunpack.c.l.b16 %v234
      %v508 = vunpack.c.l.b16 %v235
      %v509 = vunpack.c.l.b16 %v236
      %v510 = vunpack.c.l.b16 %v237
      %v511 = vunpack.c.l.b16 %v238
      %v512 = vunpack.c.l.b16 %v239
      %v513 = vunpack.c.l.b16 %v240
      %v514 = vunpack.c.l.b16 %v241
      %v515 = vunpack.c.l.b16 %v242
      %v516 = vunpack.c.l.b16 %v243
      %v517 = vunpack.c.l.b16 %v244
      %v518 = vunpack.c.l.b16 %v245
      %v519 = vunpack.c.l.b16 %v246
      %v520 = vunpack.c.l.b16 %v247
      %v521 = vunpack.c.l.b16 %v248
      %v522 = vunpack.c.l.b16 %v249
      %v523 = vunpack.c.l.b16 %v250
      %v524 = vunpack.c.l.b16 %v251
      %v525 = vunpack.c.l.b16 %v252
      %v526 = vunpack.c.l.b16 %v253
      %v527 = vunpack.c.l.b16 %v254
      %v528 = vunpack.c.l.b16 %v255
      %v529 = vunpack.c.l.b16 %v256
      %v530 = vunpack.c.l.b16 %v257
      %v531 = vunpack.c.l.b16 %v258
      %v532 = vunpack.c.l.b16 %v259
      %v533 = vunpack.c.l.b16 %v260
      %v534 = vunpack.c.l.b16 %v261
      %v535 = vunpack.c.l.b16 %v262
      %v536 = vunpack.c.l.b16 %v263
      %v537 = vunpack.c.l.b16 %v264
      %v538 = vunpack.c.l.b16 %v265
      %v539 = vunpack.c.l.b16 %v266
      %v540 = vunpack.c.l.b16 %v267
      %v541 = vunpack.c.l.b16 %v268
      %v542 = vunpack.c.l.b16 %v269
      %v543 = vunpack.c.l.b16 %v270
      %v544 = vunpack.c.l.b16 %v271
      %v545 = vunpack.c.l.b16 %v272
      %v546 = vunpack.c.l.b16 %v273
      %v547 = vunpack.c.l.b16 %v274
      %v548 = vunpack.c.l.b16 %v275
      %v549 = vunpack.c.l.b16 %v276
      %v550 = vunpack.c.l.b16 %v277
      %v551 = vunpack.c.l.b16 %v278
      %v552 = vunpack.c.l.b16 %v279
      %v553 = vunpack.c.l.b16 %v280
      %v554 = vunpack.c.l.b16 %v281
      %v555 = vunpack.c.l.b16 %v282
      %v556 = vunpack.c.l.b16 %v283
      %v557 = vunpack.c.l.b16 %v284
      %v558 = vunpack.c.l.b16 %v285
      %v559 = vunpack.c.l.b16 %v286
      %v560 = vunpack.c.l.b16 %v287
      %v561 = vunpack.c.l.b16 %v288
      %v562 = vunpack.c.l.b16 %v289
      %v563 = vunpack.c.l.b16 %v290
      %v564 = vunpack.c.l.b16 %v291
      %v565 = vunpack.c.l.b16 %v292
      %v566 = vunpack.c.l.b16 %v293
      %v567 = vunpack.c.l.b16 %v294
      %v568 = vunpack.c.l.b16 %v295
      %v569 = vunpack.c.l.b16 %v296
      %v570 = vunpack.c.l.b16 %v297
      %v571 = vunpack.c.l.b16 %v298
      %v572 = vunpack.c.l.b16 %v299
      %v573 = vunpack.c.l.b16 %v300
      %v574 = vunpack.c.l.b16 %v301
      %v575 = vunpack.c.l.b16 %v302
      %v576 = vunpack.c.l.b16 %v303
      %v577 = vunpack.c.l.b16 %v304
      %v578 = vunpack.c.l.b16 %v305
      %v579 = vunpack.c.l.b16 %v306
      %v580 = vunpack.c.l.b16 %v307
      %v581 = vunpack.c.l.b16 %v308
      %v582 = vunpack.c.l.b16 %v309
      %v583 = vunpack.c.l.b16 %v310
      %v584 = vunpack.c.l.b16 %v311
      %v585 = vunpack.c.l.b16 %v312
      %v586 = vunpack.c.l.b16 %v313
      %v587 = vunpack.c.l.b16 %v314
      %v588 = vunpack.c.l.b16 %v315
      %v589 = vunpack.c.l.b16 %v316
      %v590 = vunpack.c.l.b16 %v317
      %v591 = vunpack.c.l.b16 %v318
      %v592 = vunpack.c.l.b16 %v319
      %v593 = vunpack.c.l.b16 %v320
      %v594 = vunpack.c.l.b16 %v321
      %v595 = vunpack.c.l.b16 %v322
      %v596 = vunpack.c.l.b16 %v323
      %v597 = vunpack.c.l.b16 %v324
      %v598 = vunpack.c.l.b16 %v325
      %v599 = vunpack.c.l.b16 %v326
      %v600 = vunpack.c.l.b16 %v327
      %v601 = vunpack.c.l.b16 %v328
      %v602 = vunpack.c.l.b16 %v329
      %v603 = vunpack.c.l.b16 %v330
      %v604 = vunpack.c.l.b16 %v331
      %v605 = vunpack.c.l.b16 %v332
      %v606 = vunpack.c.l.b16 %v333
      %v607 = vunpack.c.l.b16 %v334
      %v608 = vunpack.c.l.b16 %v335
      %v609 = vunpack.c.l.b16 %v336
      %v610 = vunpack.c.l.b16 %v337
      %v611 = vunpack.c.l.b16 %v338
      %v612 = vunpack.c.l.b16 %v339
      %v613 = vunpack.c.l.b16 %v340
      %v614 = vunpack.c.l.b16 %v341
      %v615 = vunpack.c.l.b16 %v342
      %v616 = vunpack.c.l.b16 %v343
      %v617 = vunpack.c.l.b16 %v344
      %v618 = vunpack.c.l.b16 %v345
      %v619 = vunpack.c.l.b16 %v346
      %v620 = vunpack.c.l.b16 %v347
      %v621 = vunpack.c.l.b16 %v348
      %v622 = vunpack.c.l.b16 %v349
      %v623 = vunpack.c.l.b16 %v350
      %v624 = vunpack.c.l.b16 %v351
      %v625 = vunpack.c.l.b16 %v352
      %v626 = vunpack.c.l.b16 %v353
      %v627 = vpack.c.b16 %v500, %v499
      %v628 = vpack.c.b16 %v502, %v501
      %v629 = vpack.c.b16 %v504, %v503
      %v630 = vpack.c.b16 %v506, %v505
      %v631 = vpack.c.b16 %v508, %v507
      %v632 = vpack.c.b16 %v510, %v509
      %v633 = vpack.c.b16 %v512, %v511
      %v634 = vpack.c.b16 %v514, %v513
      %v635 = vpack.c.b16 %v516, %v515
      %v636 = vpack.c.b16 %v518, %v517
      %v637 = vpack.c.b16 %v520, %v519
      %v638 = vpack.c.b16 %v522, %v521
      %v639 = vpack.c.b16 %v524, %v523
      %v640 = vpack.c.b16 %v526, %v525
      %v641 = vpack.c.b16 %v528, %v527
      %v642 = vpack.c.b16 %v530, %v529
      %v643 = vpack.c.b16 %v532, %v531
      %v644 = vpack.c.b16 %v534, %v533
      %v645 = vpack.c.b16 %v536, %v535
      %v646 = vpack.c.b16 %v538, %v537
      %v647 = vpack.c.b16 %v540, %v539
      %v648 = vpack.c.b16 %v542, %v541
      %v649 = vpack.c.b16 %v544, %v543
      %v650 = vpack.c.b16 %v546, %v545
      %v651 = vpack.c.b16 %v548, %v547
      %v652 = vpack.c.b16 %v550, %v549
      %v653 = vpack.c.b16 %v552, %v551
      %v654 = vpack.c.b16 %v554, %v553
      %v655 = vpack.c.b16 %v556, %v555
      %v656 = vpack.c.b16 %v558, %v557
      %v657 = vpack.c.b16 %v560, %v559
      %v658 = vpack.c.b16 %v562, %v561
      %v659 = vpack.c.b16 %v564, %v563
      %v660 = vpack.c.b16 %v566, %v565
      %v661 = vpack.c.b16 %v568, %v567
      %v662 = vpack.c.b16 %v570, %v569
      %v663 = vpack.c.b16 %v572, %v571
      %v664 = vpack.c.b16 %v574, %v573
      %v665 = vpack.c.b16 %v576, %v575
      %v666 = vpack.c.b16 %v578, %v577
      %v667 = vpack.c.b16 %v580, %v579
      %v668 = vpack.c.b16 %v582, %v581
      %v669 = vpack.c.b16 %v584, %v583
      %v670 = vpack.c.b16 %v586, %v585
      %v671 = vpack.c.b16 %v588, %v587
      %v672 = vpack.c.b16 %v590, %v589
      %v673 = vpack.c.b16 %v592, %v591
      %v674 = vpack.c.b16 %v594, %v593
      %v675 = vpack.c.b16 %v596, %v595
      %v676 = vpack.c.b16 %v598, %v597
      %v677 = vpack.c.b16 %v600, %v599
      %v678 = vpack.c.b16 %v602, %v601
      %v679 = vpack.c.b16 %v604, %v603
      %v680 = vpack.c.b16 %v606, %v605
      %v681 = vpack.c.b16 %v608, %v607
      %v682 = vpack.c.b16 %v610, %v609
      %v683 = vpack.c.b16 %v612, %v611
      %v684 = vpack.c.b16 %v614, %v613
      %v685 = vpack.c.b16 %v616, %v615
      %v686 = vpack.c.b16 %v618, %v617
      %v687 = vpack.c.b16 %v620, %v619
      %v688 = vpack.c.b16 %v622, %v621
      %v689 = vpack.c.b16 %v624, %v623
      %v690 = vpack.c.b16 %v626, %v625
      %v701 = vunpack.c.l.b16 %v354
      %v702 = vunpack.c.l.b16 %v355
      %v703 = vunpack.c.l.b16 %v356
      %v704 = vunpack.c.l.b16 %v357
      %v705 = vunpack.c.l.b16 %v358
      %v706 = vunpack.c.l.b16 %v359
      %v707 = vunpack.c.l.b16 %v360
      %v708 = vunpack.c.l.b16 %v361
      %v709 = vunpack.c.l.b16 %v362
      %v710 = vunpack.c.l.b16 %v363
      %v711 = vpack.c.b16 %v702, %v701
      %v712 = vpack.c.b16 %v704, %v703
      %v713 = vpack.c.b16 %v706, %v705
      %v714 = vpack.c.b16 %v708, %v707
      %v715 = vpack.c.b16 %v710, %v709
      %vm720 = vcmask 613376
      %v722 = vsel %vm720, %v627, 0
      %v725 = vsel %vm720, %v628, 0
      %v728 = vsel %vm720, %v629, 0
      %v731 = vsel %vm720, %v630, 0
      %v734 = vsel %vm720, %v631, 0
      %v737 = vsel %vm720, %v632, 0
      %v740 = vsel %vm720, %v633, 0
      %v743 = vsel %vm720, %v634, 0
      %v746 = vsel %vm720, %v635, 0
      %v749 = vsel %vm720, %v636, 0
      %v752 = vsel %vm720, %v637, 0
      %v755 = vsel %vm720, %v638, 0
      %v758 = vsel %vm720, %v639, 0
      %v761 = vsel %vm720, %v640, 0
      %v764 = vsel %vm720, %v641, 0
      %v767 = vsel %vm720, %v642, 0
      %v770 = vsel %vm720, %v643, 0
      %v773 = vsel %vm720, %v644, 0
      %v776 = vsel %vm720, %v645, 0
      %v779 = vsel %vm720, %v646, 0
      %v782 = vsel %vm720, %v647, 0
      %v785 = vsel %vm720, %v648, 0
      %v788 = vsel %vm720, %v649, 0
      %v791 = vsel %vm720, %v650, 0
      %v794 = vsel %vm720, %v651, 0
      %v797 = vsel %vm720, %v652, 0
      %v800 = vsel %vm720, %v653, 0
      %v803 = vsel %vm720, %v654, 0
      %v806 = vsel %vm720, %v655, 0
      %v809 = vsel %vm720, %v656, 0
      %v812 = vsel %vm720, %v657, 0
      %v815 = vsel %vm720, %v658, 0
      %v818 = vsel %vm720, %v659, 0
      %v821 = vsel %vm720, %v660, 0
      %v824 = vsel %vm720, %v661, 0
      %v827 = vsel %vm720, %v662, 0
      %v830 = vsel %vm720, %v663, 0
      %v833 = vsel %vm720, %v664, 0
      %v836 = vsel %vm720, %v665, 0
      %v839 = vsel %vm720, %v666, 0
      %v842 = vsel %vm720, %v667, 0
      %v845 = vsel %vm720, %v668, 0
      %v848 = vsel %vm720, %v669, 0
      %v851 = vsel %vm720, %v670, 0
      %v854 = vsel %vm720, %v671, 0
      %v857 = vsel %vm720, %v672, 0
      %v860 = vsel %vm720, %v673, 0
      %v863 = vsel %vm720, %v674, 0
      %v866 = vsel %vm720, %v675, 0
      %v869 = vsel %vm720, %v676, 0
      %v872 = vsel %vm720, %v677, 0
      %v875 = vsel %vm720, %v678, 0
      %v878 = vsel %vm720, %v679, 0
      %v881 = vsel %vm720, %v680, 0
      %v884 = vsel %vm720, %v681, 0
      %v887 = vsel %vm720, %v682, 0
      %v890 = vsel %vm720, %v683, 0
      %v893 = vsel %vm720, %v684, 0
      %v896 = vsel %vm720, %v685, 0
      %v899 = vsel %vm720, %v686, 0
      %v902 = vsel %vm720, %v687, 0
      %v905 = vsel %vm720, %v688, 0
      %v908 = vsel %vm720, %v689, 0
      %v911 = vsel %vm720, %v690, 0
      %vm913 = vcmask 1044480
      %vm914 = vcmask 1045504
      %v915 = vsel %vm913, 4294967295, 65535
      %v916 = vsel %vm914, %v915, 0
      %v918 = vand.u32 %v715, %v916
      %920 = vmatprep.subr.bf16.mxu0 0
      %921 = vmatpush1.bf16.msra.mxu0 %v711
      %922 = vmatprep.subr.bf16.mxu0 0
      %923 = vmatpush1.bf16.msra.mxu0 %v712
      %924 = vmatprep.subr.bf16.mxu0 0
      %925 = vmatpush1.bf16.msra.mxu0 %v713
      %926 = vmatprep.subr.bf16.mxu0 0
      %927 = vmatpush1.bf16.msra.mxu0 %v714
      %928 = vmatprep.subr.bf16.mxu0 0
      %929 = vmatpush1.bf16.msra.mxu0 %v918
      %930 = vmatprep.subr.bf16.mxu0 0
      %931 = vmatpush1.bf16.msra.mxu0 0
      %932 = vmatprep.subr.bf16.mxu0 0
      %933 = vmatpush1.bf16.msra.mxu0 0
      %934 = vmatprep.subr.bf16.mxu0 0
      %935 = vmatpush1.bf16.msra.mxu0 0
      %936 = vmatprep.subr.bf16.mxu0 0
      %937 = vmatpush1.bf16.msra.mxu0 0
      %938 = vmatprep.subr.bf16.mxu0 0
      %939 = vmatpush1.bf16.msra.mxu0 0
      %940 = vmatprep.subr.bf16.mxu0 0
      %941 = vmatpush1.bf16.msra.mxu0 0
      %942 = vmatprep.subr.bf16.mxu0 0
      %943 = vmatpush1.bf16.msra.mxu0 0
      %944 = vmatprep.subr.bf16.mxu0 0
      %945 = vmatpush1.bf16.msra.mxu0 0
      %946 = vmatprep.subr.bf16.mxu0 0
      %947 = vmatpush1.bf16.msra.mxu0 0
      %948 = vmatprep.subr.bf16.mxu0 0
      %949 = vmatpush1.bf16.msra.mxu0 0
      %950 = vmatprep.subr.bf16.mxu0 0
      %951 = vmatpush1.bf16.msra.mxu0 0
      %952 = vmatprep.mubr.bf16.mxu0 0
      %953 = vmatmul.mubr.bf16.gmra.mrb[0].mxu0 %v722
      %v954 = vpop.f32.mrb[0].mxu0
      %v955 = vadd.f32 %v369, %v954
      %v956 = vpop.f32.mrb[0].mxu0
      %v957 = vpop.f32.mrb[0].mxu0
      %v958 = vadd.f32 %v369, %v957
      %v959 = vpop.f32.mrb[0].mxu0
      %960 = vmatprep.mubr.bf16.mxu0 0
      %961 = vmatmul.mubr.bf16.gmra.mrb[0].mxu0 %v725
      %v962 = vpop.f32.mrb[0].mxu0
      %v963 = vadd.f32 %v369, %v962
      %v964 = vpop.f32.mrb[0].mxu0
      %v965 = vpop.f32.mrb[0].mxu0
      %v966 = vadd.f32 %v369, %v965
      %v967 = vpop.f32.mrb[0].mxu0
      %968 = vmatprep.mubr.bf16.mxu0 0
      %969 = vmatmul.mubr.bf16.gmra.mrb[0].mxu0 %v728
      %v970 = vpop.f32.mrb[0].mxu0
      %v971 = vadd.f32 %v369, %v970
      %v972 = vpop.f32.mrb[0].mxu0
      %v973 = vpop.f32.mrb[0].mxu0
      %v974 = vadd.f32 %v369, %v973
      %v975 = vpop.f32.mrb[0].mxu0
      %976 = vmatprep.mubr.bf16.mxu0 0
      %977 = vmatmul.mubr.bf16.gmra.mrb[0].mxu0 %v731
      %v978 = vpop.f32.mrb[0].mxu0
      %v979 = vadd.f32 %v369, %v978
      %v980 = vpop.f32.mrb[0].mxu0
      %v981 = vpop.f32.mrb[0].mxu0
      %v982 = vadd.f32 %v369, %v981
      %v983 = vpop.f32.mrb[0].mxu0
      %984 = vmatprep.mubr.bf16.mxu0 0
      %985 = vmatmul.mubr.bf16.gmra.mrb[0].mxu0 %v734
      %v986 = vpop.f32.mrb[0].mxu0
      %v987 = vadd.f32 %v369, %v986
      %v988 = vpop.f32.mrb[0].mxu0
      %v989 = vpop.f32.mrb[0].mxu0
      %v990 = vadd.f32 %v369, %v989
      %v991 = vpop.f32.mrb[0].mxu0
      %992 = vmatprep.mubr.bf16.mxu0 0
      %993 = vmatmul.mubr.bf16.gmra.mrb[0].mxu0 %v737
      %v994 = vpop.f32.mrb[0].mxu0
      %v995 = vadd.f32 %v369, %v994
      %v996 = vpop.f32.mrb[0].mxu0
      %v997 = vpop.f32.mrb[0].mxu0
      %v998 = vadd.f32 %v369, %v997
      %v999 = vpop.f32.mrb[0].mxu0
      %1000 = vmatprep.mubr.bf16.mxu0 0
      %1001 = vmatmul.mubr.bf16.gmra.mrb[0].mxu0 %v740
      %v1002 = vpop.f32.mrb[0].mxu0
      %v1003 = vadd.f32 %v369, %v1002
      %v1004 = vpop.f32.mrb[0].mxu0
      %v1005 = vpop.f32.mrb[0].mxu0
      %v1006 = vadd.f32 %v369, %v1005
      %v1007 = vpop.f32.mrb[0].mxu0
      %1008 = vmatprep.mubr.bf16.mxu0 0
      %1009 = vmatmul.mubr.bf16.gmra.mrb[0].mxu0 %v743
      %v1010 = vpop.f32.mrb[0].mxu0
      %v1011 = vadd.f32 %v369, %v1010
      %v1012 = vpop.f32.mrb[0].mxu0
      %v1013 = vpop.f32.mrb[0].mxu0
      %v1014 = vadd.f32 %v369, %v1013
      %v1015 = vpop.f32.mrb[0].mxu0
      %1016 = vmatprep.mubr.bf16.mxu0 0
      %1017 = vmatmul.mubr.bf16.gmra.mrb[0].mxu0 %v746
      %v1018 = vpop.f32.mrb[0].mxu0
      %v1019 = vadd.f32 %v369, %v1018
      %v1020 = vpop.f32.mrb[0].mxu0
      %v1021 = vpop.f32.mrb[0].mxu0
      %v1022 = vadd.f32 %v369, %v1021
      %v1023 = vpop.f32.mrb[0].mxu0
      %1024 = vmatprep.mubr.bf16.mxu0 0
      %1025 = vmatmul.mubr.bf16.gmra.mrb[0].mxu0 %v749
      %v1026 = vpop.f32.mrb[0].mxu0
      %v1027 = vadd.f32 %v369, %v1026
      %v1028 = vpop.f32.mrb[0].mxu0
      %v1029 = vpop.f32.mrb[0].mxu0
      %v1030 = vadd.f32 %v369, %v1029
      %v1031 = vpop.f32.mrb[0].mxu0
      %1032 = vmatprep.mubr.bf16.mxu0 0
      %1033 = vmatmul.mubr.bf16.gmra.mrb[0].mxu0 %v752
      %v1034 = vpop.f32.mrb[0].mxu0
      %v1035 = vadd.f32 %v369, %v1034
      %v1036 = vpop.f32.mrb[0].mxu0
      %v1037 = vpop.f32.mrb[0].mxu0
      %v1038 = vadd.f32 %v369, %v1037
      %v1039 = vpop.f32.mrb[0].mxu0
      %1040 = vmatprep.mubr.bf16.mxu0 0
      %1041 = vmatmul.mubr.bf16.gmra.mrb[0].mxu0 %v755
      %v1042 = vpop.f32.mrb[0].mxu0
      %v1043 = vadd.f32 %v369, %v1042
      %v1044 = vpop.f32.mrb[0].mxu0
      %v1045 = vpop.f32.mrb[0].mxu0
      %v1046 = vadd.f32 %v369, %v1045
      %v1047 = vpop.f32.mrb[0].mxu0
      %1048 = vmatprep.mubr.bf16.mxu0 0
      %1049 = vmatmul.mubr.bf16.gmra.mrb[0].mxu0 %v758
      %v1050 = vpop.f32.mrb[0].mxu0
      %v1051 = vadd.f32 %v369, %v1050
      %v1052 = vpop.f32.mrb[0].mxu0
      %v1053 = vpop.f32.mrb[0].mxu0
      %v1054 = vadd.f32 %v369, %v1053
      %v1055 = vpop.f32.mrb[0].mxu0
      %1056 = vmatprep.mubr.bf16.mxu0 0
      %1057 = vmatmul.mubr.bf16.gmra.mrb[0].mxu0 %v761
      %v1058 = vpop.f32.mrb[0].mxu0
      %v1059 = vadd.f32 %v369, %v1058
      %v1060 = vpop.f32.mrb[0].mxu0
      %v1061 = vpop.f32.mrb[0].mxu0
      %v1062 = vadd.f32 %v369, %v1061
      %v1063 = vpop.f32.mrb[0].mxu0
      %1064 = vmatprep.mubr.bf16.mxu0 0
      %1065 = vmatmul.mubr.bf16.gmra.mrb[0].mxu0 %v764
      %v1066 = vpop.f32.mrb[0].mxu0
      %v1067 = vadd.f32 %v369, %v1066
      %v1068 = vpop.f32.mrb[0].mxu0
      %v1069 = vpop.f32.mrb[0].mxu0
      %v1070 = vadd.f32 %v369, %v1069
      %v1071 = vpop.f32.mrb[0].mxu0
      %1072 = vmatprep.mubr.bf16.mxu0 0
      %1073 = vmatmul.mubr.bf16.gmra.mrb[0].mxu0 %v767
      %v1074 = vpop.f32.mrb[0].mxu0
      %v1075 = vadd.f32 %v369, %v1074
      %v1076 = vpop.f32.mrb[0].mxu0
      %v1077 = vpop.f32.mrb[0].mxu0
      %v1078 = vadd.f32 %v369, %v1077
      %v1079 = vpop.f32.mrb[0].mxu0
      %1080 = vmatprep.mubr.bf16.mxu0 0
      %1081 = vmatmul.mubr.bf16.gmra.mrb[0].mxu0 %v770
      %v1082 = vpop.f32.mrb[0].mxu0
      %v1083 = vadd.f32 %v369, %v1082
      %v1084 = vpop.f32.mrb[0].mxu0
      %v1085 = vpop.f32.mrb[0].mxu0
      %v1086 = vadd.f32 %v369, %v1085
      %v1087 = vpop.f32.mrb[0].mxu0
      %1088 = vmatprep.mubr.bf16.mxu0 0
      %1089 = vmatmul.mubr.bf16.gmra.mrb[0].mxu0 %v773
      %v1090 = vpop.f32.mrb[0].mxu0
      %v1091 = vadd.f32 %v369, %v1090
      %v1092 = vpop.f32.mrb[0].mxu0
      %v1093 = vpop.f32.mrb[0].mxu0
      %v1094 = vadd.f32 %v369, %v1093
      %v1095 = vpop.f32.mrb[0].mxu0
      %1096 = vmatprep.mubr.bf16.mxu0 0
      %1097 = vmatmul.mubr.bf16.gmra.mrb[0].mxu0 %v776
      %v1098 = vpop.f32.mrb[0].mxu0
      %v1099 = vadd.f32 %v369, %v1098
      %v1100 = vpop.f32.mrb[0].mxu0
      %v1101 = vpop.f32.mrb[0].mxu0
      %v1102 = vadd.f32 %v369, %v1101
      %v1103 = vpop.f32.mrb[0].mxu0
      %1104 = vmatprep.mubr.bf16.mxu0 0
      %1105 = vmatmul.mubr.bf16.gmra.mrb[0].mxu0 %v779
      %v1106 = vpop.f32.mrb[0].mxu0
      %v1107 = vadd.f32 %v369, %v1106
      %v1108 = vpop.f32.mrb[0].mxu0
      %v1109 = vpop.f32.mrb[0].mxu0
      %v1110 = vadd.f32 %v369, %v1109
      %v1111 = vpop.f32.mrb[0].mxu0
      %1112 = vmatprep.mubr.bf16.mxu0 0
      %1113 = vmatmul.mubr.bf16.gmra.mrb[0].mxu0 %v782
      %v1114 = vpop.f32.mrb[0].mxu0
      %v1115 = vadd.f32 %v369, %v1114
      %v1116 = vpop.f32.mrb[0].mxu0
      %v1117 = vpop.f32.mrb[0].mxu0
      %v1118 = vadd.f32 %v369, %v1117
      %v1119 = vpop.f32.mrb[0].mxu0
      %1120 = vmatprep.mubr.bf16.mxu0 0
      %1121 = vmatmul.mubr.bf16.gmra.mrb[0].mxu0 %v785
      %v1122 = vpop.f32.mrb[0].mxu0
      %v1123 = vadd.f32 %v369, %v1122
      %v1124 = vpop.f32.mrb[0].mxu0
      %v1125 = vpop.f32.mrb[0].mxu0
      %v1126 = vadd.f32 %v369, %v1125
      %v1127 = vpop.f32.mrb[0].mxu0
      %1128 = vmatprep.mubr.bf16.mxu0 0
      %1129 = vmatmul.mubr.bf16.gmra.mrb[0].mxu0 %v788
      %v1130 = vpop.f32.mrb[0].mxu0
      %v1131 = vadd.f32 %v369, %v1130
      %v1132 = vpop.f32.mrb[0].mxu0
      %v1133 = vpop.f32.mrb[0].mxu0
      %v1134 = vadd.f32 %v369, %v1133
      %v1135 = vpop.f32.mrb[0].mxu0
      %1136 = vmatprep.mubr.bf16.mxu0 0
      %1137 = vmatmul.mubr.bf16.gmra.mrb[0].mxu0 %v791
      %v1138 = vpop.f32.mrb[0].mxu0
      %v1139 = vadd.f32 %v369, %v1138
      %v1140 = vpop.f32.mrb[0].mxu0
      %v1141 = vpop.f32.mrb[0].mxu0
      %v1142 = vadd.f32 %v369, %v1141
      %v1143 = vpop.f32.mrb[0].mxu0
      %1144 = vmatprep.mubr.bf16.mxu0 0
      %1145 = vmatmul.mubr.bf16.gmra.mrb[0].mxu0 %v794
      %v1146 = vpop.f32.mrb[0].mxu0
      %v1147 = vadd.f32 %v369, %v1146
      %v1148 = vpop.f32.mrb[0].mxu0
      %v1149 = vpop.f32.mrb[0].mxu0
      %v1150 = vadd.f32 %v369, %v1149
      %v1151 = vpop.f32.mrb[0].mxu0
      %1152 = vmatprep.mubr.bf16.mxu0 0
      %1153 = vmatmul.mubr.bf16.gmra.mrb[0].mxu0 %v797
      %v1154 = vpop.f32.mrb[0].mxu0
      %v1155 = vadd.f32 %v369, %v1154
      %v1156 = vpop.f32.mrb[0].mxu0
      %v1157 = vpop.f32.mrb[0].mxu0
      %v1158 = vadd.f32 %v369, %v1157
      %v1159 = vpop.f32.mrb[0].mxu0
      %1160 = vmatprep.mubr.bf16.mxu0 0
      %1161 = vmatmul.mubr.bf16.gmra.mrb[0].mxu0 %v800
      %v1162 = vpop.f32.mrb[0].mxu0
      %v1163 = vadd.f32 %v369, %v1162
      %v1164 = vpop.f32.mrb[0].mxu0
      %v1165 = vpop.f32.mrb[0].mxu0
      %v1166 = vadd.f32 %v369, %v1165
      %v1167 = vpop.f32.mrb[0].mxu0
      %1168 = vmatprep.mubr.bf16.mxu0 0
      %1169 = vmatmul.mubr.bf16.gmra.mrb[0].mxu0 %v803
      %v1170 = vpop.f32.mrb[0].mxu0
      %v1171 = vadd.f32 %v369, %v1170
      %v1172 = vpop.f32.mrb[0].mxu0
      %v1173 = vpop.f32.mrb[0].mxu0
      %v1174 = vadd.f32 %v369, %v1173
      %v1175 = vpop.f32.mrb[0].mxu0
      %1176 = vmatprep.mubr.bf16.mxu0 0
      %1177 = vmatmul.mubr.bf16.gmra.mrb[0].mxu0 %v806
      %v1178 = vpop.f32.mrb[0].mxu0
      %v1179 = vadd.f32 %v369, %v1178
      %v1180 = vpop.f32.mrb[0].mxu0
      %v1181 = vpop.f32.mrb[0].mxu0
      %v1182 = vadd.f32 %v369, %v1181
      %v1183 = vpop.f32.mrb[0].mxu0
      %1184 = vmatprep.mubr.bf16.mxu0 0
      %1185 = vmatmul.mubr.bf16.gmra.mrb[0].mxu0 %v809
      %v1186 = vpop.f32.mrb[0].mxu0
      %v1187 = vadd.f32 %v369, %v1186
      %v1188 = vpop.f32.mrb[0].mxu0
      %v1189 = vpop.f32.mrb[0].mxu0
      %v1190 = vadd.f32 %v369, %v1189
      %v1191 = vpop.f32.mrb[0].mxu0
      %1192 = vmatprep.mubr.bf16.mxu0 0
      %1193 = vmatmul.mubr.bf16.gmra.mrb[0].mxu0 %v812
      %v1194 = vpop.f32.mrb[0].mxu0
      %v1195 = vadd.f32 %v369, %v1194
      %v1196 = vpop.f32.mrb[0].mxu0
      %v1197 = vpop.f32.mrb[0].mxu0
      %v1198 = vadd.f32 %v369, %v1197
      %v1199 = vpop.f32.mrb[0].mxu0
      %1200 = vmatprep.mubr.bf16.mxu0 0
      %1201 = vmatmul.mubr.bf16.gmra.mrb[0].mxu0 %v815
      %v1202 = vpop.f32.mrb[0].mxu0
      %v1203 = vadd.f32 %v369, %v1202
      %v1204 = vpop.f32.mrb[0].mxu0
      %v1205 = vpop.f32.mrb[0].mxu0
      %v1206 = vadd.f32 %v369, %v1205
      %v1207 = vpop.f32.mrb[0].mxu0
      %1208 = vmatprep.mubr.bf16.mxu0 0
      %1209 = vmatmul.mubr.bf16.gmra.mrb[0].mxu0 %v818
      %v1210 = vpop.f32.mrb[0].mxu0
      %v1211 = vadd.f32 %v369, %v1210
      %v1212 = vpop.f32.mrb[0].mxu0
      %v1213 = vpop.f32.mrb[0].mxu0
      %v1214 = vadd.f32 %v369, %v1213
      %v1215 = vpop.f32.mrb[0].mxu0
      %1216 = vmatprep.mubr.bf16.mxu0 0
      %1217 = vmatmul.mubr.bf16.gmra.mrb[0].mxu0 %v821
      %v1218 = vpop.f32.mrb[0].mxu0
      %v1219 = vadd.f32 %v369, %v1218
      %v1220 = vpop.f32.mrb[0].mxu0
      %v1221 = vpop.f32.mrb[0].mxu0
      %v1222 = vadd.f32 %v369, %v1221
      %v1223 = vpop.f32.mrb[0].mxu0
      %1224 = vmatprep.mubr.bf16.mxu0 0
      %1225 = vmatmul.mubr.bf16.gmra.mrb[0].mxu0 %v824
      %v1226 = vpop.f32.mrb[0].mxu0
      %v1227 = vadd.f32 %v369, %v1226
      %v1228 = vpop.f32.mrb[0].mxu0
      %v1229 = vpop.f32.mrb[0].mxu0
      %v1230 = vadd.f32 %v369, %v1229
      %v1231 = vpop.f32.mrb[0].mxu0
      %1232 = vmatprep.mubr.bf16.mxu0 0
      %1233 = vmatmul.mubr.bf16.gmra.mrb[0].mxu0 %v827
      %v1234 = vpop.f32.mrb[0].mxu0
      %v1235 = vadd.f32 %v369, %v1234
      %v1236 = vpop.f32.mrb[0].mxu0
      %v1237 = vpop.f32.mrb[0].mxu0
      %v1238 = vadd.f32 %v369, %v1237
      %v1239 = vpop.f32.mrb[0].mxu0
      %1240 = vmatprep.mubr.bf16.mxu0 0
      %1241 = vmatmul.mubr.bf16.gmra.mrb[0].mxu0 %v830
      %v1242 = vpop.f32.mrb[0].mxu0
      %v1243 = vadd.f32 %v369, %v1242
      %v1244 = vpop.f32.mrb[0].mxu0
      %v1245 = vpop.f32.mrb[0].mxu0
      %v1246 = vadd.f32 %v369, %v1245
      %v1247 = vpop.f32.mrb[0].mxu0
      %1248 = vmatprep.mubr.bf16.mxu0 0
      %1249 = vmatmul.mubr.bf16.gmra.mrb[0].mxu0 %v833
      %v1250 = vpop.f32.mrb[0].mxu0
      %v1251 = vadd.f32 %v369, %v1250
      %v1252 = vpop.f32.mrb[0].mxu0
      %v1253 = vpop.f32.mrb[0].mxu0
      %v1254 = vadd.f32 %v369, %v1253
      %v1255 = vpop.f32.mrb[0].mxu0
      %1256 = vmatprep.mubr.bf16.mxu0 0
      %1257 = vmatmul.mubr.bf16.gmra.mrb[0].mxu0 %v836
      %v1258 = vpop.f32.mrb[0].mxu0
      %v1259 = vadd.f32 %v369, %v1258
      %v1260 = vpop.f32.mrb[0].mxu0
      %v1261 = vpop.f32.mrb[0].mxu0
      %v1262 = vadd.f32 %v369, %v1261
      %v1263 = vpop.f32.mrb[0].mxu0
      %1264 = vmatprep.mubr.bf16.mxu0 0
      %1265 = vmatmul.mubr.bf16.gmra.mrb[0].mxu0 %v839
      %v1266 = vpop.f32.mrb[0].mxu0
      %v1267 = vadd.f32 %v369, %v1266
      %v1268 = vpop.f32.mrb[0].mxu0
      %v1269 = vpop.f32.mrb[0].mxu0
      %v1270 = vadd.f32 %v369, %v1269
      %v1271 = vpop.f32.mrb[0].mxu0
      %1272 = vmatprep.mubr.bf16.mxu0 0
      %1273 = vmatmul.mubr.bf16.gmra.mrb[0].mxu0 %v842
      %v1274 = vpop.f32.mrb[0].mxu0
      %v1275 = vadd.f32 %v369, %v1274
      %v1276 = vpop.f32.mrb[0].mxu0
      %v1277 = vpop.f32.mrb[0].mxu0
      %v1278 = vadd.f32 %v369, %v1277
      %v1279 = vpop.f32.mrb[0].mxu0
      %1280 = vmatprep.mubr.bf16.mxu0 0
      %1281 = vmatmul.mubr.bf16.gmra.mrb[0].mxu0 %v845
      %v1282 = vpop.f32.mrb[0].mxu0
      %v1283 = vadd.f32 %v369, %v1282
      %v1284 = vpop.f32.mrb[0].mxu0
      %v1285 = vpop.f32.mrb[0].mxu0
      %v1286 = vadd.f32 %v369, %v1285
      %v1287 = vpop.f32.mrb[0].mxu0
      %1288 = vmatprep.mubr.bf16.mxu0 0
      %1289 = vmatmul.mubr.bf16.gmra.mrb[0].mxu0 %v848
      %v1290 = vpop.f32.mrb[0].mxu0
      %v1291 = vadd.f32 %v369, %v1290
      %v1292 = vpop.f32.mrb[0].mxu0
      %v1293 = vpop.f32.mrb[0].mxu0
      %v1294 = vadd.f32 %v369, %v1293
      %v1295 = vpop.f32.mrb[0].mxu0
      %1296 = vmatprep.mubr.bf16.mxu0 0
      %1297 = vmatmul.mubr.bf16.gmra.mrb[0].mxu0 %v851
      %v1298 = vpop.f32.mrb[0].mxu0
      %v1299 = vadd.f32 %v369, %v1298
      %v1300 = vpop.f32.mrb[0].mxu0
      %v1301 = vpop.f32.mrb[0].mxu0
      %v1302 = vadd.f32 %v369, %v1301
      %v1303 = vpop.f32.mrb[0].mxu0
      %1304 = vmatprep.mubr.bf16.mxu0 0
      %1305 = vmatmul.mubr.bf16.gmra.mrb[0].mxu0 %v854
      %v1306 = vpop.f32.mrb[0].mxu0
      %v1307 = vadd.f32 %v369, %v1306
      %v1308 = vpop.f32.mrb[0].mxu0
      %v1309 = vpop.f32.mrb[0].mxu0
      %v1310 = vadd.f32 %v369, %v1309
      %v1311 = vpop.f32.mrb[0].mxu0
      %1312 = vmatprep.mubr.bf16.mxu0 0
      %1313 = vmatmul.mubr.bf16.gmra.mrb[0].mxu0 %v857
      %v1314 = vpop.f32.mrb[0].mxu0
      %v1315 = vadd.f32 %v369, %v1314
      %v1316 = vpop.f32.mrb[0].mxu0
      %v1317 = vpop.f32.mrb[0].mxu0
      %v1318 = vadd.f32 %v369, %v1317
      %v1319 = vpop.f32.mrb[0].mxu0
      %1320 = vmatprep.mubr.bf16.mxu0 0
      %1321 = vmatmul.mubr.bf16.gmra.mrb[0].mxu0 %v860
      %v1322 = vpop.f32.mrb[0].mxu0
      %v1323 = vadd.f32 %v369, %v1322
      %v1324 = vpop.f32.mrb[0].mxu0
      %v1325 = vpop.f32.mrb[0].mxu0
      %v1326 = vadd.f32 %v369, %v1325
      %v1327 = vpop.f32.mrb[0].mxu0
      %1328 = vmatprep.mubr.bf16.mxu0 0
      %1329 = vmatmul.mubr.bf16.gmra.mrb[0].mxu0 %v863
      %v1330 = vpop.f32.mrb[0].mxu0
      %v1331 = vadd.f32 %v369, %v1330
      %v1332 = vpop.f32.mrb[0].mxu0
      %v1333 = vpop.f32.mrb[0].mxu0
      %v1334 = vadd.f32 %v369, %v1333
      %v1335 = vpop.f32.mrb[0].mxu0
      %1336 = vmatprep.mubr.bf16.mxu0 0
      %1337 = vmatmul.mubr.bf16.gmra.mrb[0].mxu0 %v866
      %v1338 = vpop.f32.mrb[0].mxu0
      %v1339 = vadd.f32 %v369, %v1338
      %v1340 = vpop.f32.mrb[0].mxu0
      %v1341 = vpop.f32.mrb[0].mxu0
      %v1342 = vadd.f32 %v369, %v1341
      %v1343 = vpop.f32.mrb[0].mxu0
      %1344 = vmatprep.mubr.bf16.mxu0 0
      %1345 = vmatmul.mubr.bf16.gmra.mrb[0].mxu0 %v869
      %v1346 = vpop.f32.mrb[0].mxu0
      %v1347 = vadd.f32 %v369, %v1346
      %v1348 = vpop.f32.mrb[0].mxu0
      %v1349 = vpop.f32.mrb[0].mxu0
      %v1350 = vadd.f32 %v369, %v1349
      %v1351 = vpop.f32.mrb[0].mxu0
      %1352 = vmatprep.mubr.bf16.mxu0 0
      %1353 = vmatmul.mubr.bf16.gmra.mrb[0].mxu0 %v872
      %v1354 = vpop.f32.mrb[0].mxu0
      %v1355 = vadd.f32 %v369, %v1354
      %v1356 = vpop.f32.mrb[0].mxu0
      %v1357 = vpop.f32.mrb[0].mxu0
      %v1358 = vadd.f32 %v369, %v1357
      %v1359 = vpop.f32.mrb[0].mxu0
      %1360 = vmatprep.mubr.bf16.mxu0 0
      %1361 = vmatmul.mubr.bf16.gmra.mrb[0].mxu0 %v875
      %v1362 = vpop.f32.mrb[0].mxu0
      %v1363 = vadd.f32 %v369, %v1362
      %v1364 = vpop.f32.mrb[0].mxu0
      %v1365 = vpop.f32.mrb[0].mxu0
      %v1366 = vadd.f32 %v369, %v1365
      %v1367 = vpop.f32.mrb[0].mxu0
      %1368 = vmatprep.mubr.bf16.mxu0 0
      %1369 = vmatmul.mubr.bf16.gmra.mrb[0].mxu0 %v878
      %v1370 = vpop.f32.mrb[0].mxu0
      %v1371 = vadd.f32 %v369, %v1370
      %v1372 = vpop.f32.mrb[0].mxu0
      %v1373 = vpop.f32.mrb[0].mxu0
      %v1374 = vadd.f32 %v369, %v1373
      %v1375 = vpop.f32.mrb[0].mxu0
      %1376 = vmatprep.mubr.bf16.mxu0 0
      %1377 = vmatmul.mubr.bf16.gmra.mrb[0].mxu0 %v881
      %v1378 = vpop.f32.mrb[0].mxu0
      %v1379 = vadd.f32 %v369, %v1378
      %v1380 = vpop.f32.mrb[0].mxu0
      %v1381 = vpop.f32.mrb[0].mxu0
      %v1382 = vadd.f32 %v369, %v1381
      %v1383 = vpop.f32.mrb[0].mxu0
      %1384 = vmatprep.mubr.bf16.mxu0 0
      %1385 = vmatmul.mubr.bf16.gmra.mrb[0].mxu0 %v884
      %v1386 = vpop.f32.mrb[0].mxu0
      %v1387 = vadd.f32 %v369, %v1386
      %v1388 = vpop.f32.mrb[0].mxu0
      %v1389 = vpop.f32.mrb[0].mxu0
      %v1390 = vadd.f32 %v369, %v1389
      %v1391 = vpop.f32.mrb[0].mxu0
      %1392 = vmatprep.mubr.bf16.mxu0 0
      %1393 = vmatmul.mubr.bf16.gmra.mrb[0].mxu0 %v887
      %v1394 = vpop.f32.mrb[0].mxu0
      %v1395 = vadd.f32 %v369, %v1394
      %v1396 = vpop.f32.mrb[0].mxu0
      %v1397 = vpop.f32.mrb[0].mxu0
      %v1398 = vadd.f32 %v369, %v1397
      %v1399 = vpop.f32.mrb[0].mxu0
      %1400 = vmatprep.mubr.bf16.mxu0 0
      %1401 = vmatmul.mubr.bf16.gmra.mrb[0].mxu0 %v890
      %v1402 = vpop.f32.mrb[0].mxu0
      %v1403 = vadd.f32 %v369, %v1402
      %v1404 = vpop.f32.mrb[0].mxu0
      %v1405 = vpop.f32.mrb[0].mxu0
      %v1406 = vadd.f32 %v369, %v1405
      %v1407 = vpop.f32.mrb[0].mxu0
      %1408 = vmatprep.mubr.bf16.mxu0 0
      %1409 = vmatmul.mubr.bf16.gmra.mrb[0].mxu0 %v893
      %v1410 = vpop.f32.mrb[0].mxu0
      %v1411 = vadd.f32 %v369, %v1410
      %v1412 = vpop.f32.mrb[0].mxu0
      %v1413 = vpop.f32.mrb[0].mxu0
      %v1414 = vadd.f32 %v369, %v1413
      %v1415 = vpop.f32.mrb[0].mxu0
      %1416 = vmatprep.mubr.bf16.mxu0 0
      %1417 = vmatmul.mubr.bf16.gmra.mrb[0].mxu0 %v896
      %v1418 = vpop.f32.mrb[0].mxu0
      %v1419 = vadd.f32 %v369, %v1418
      %v1420 = vpop.f32.mrb[0].mxu0
      %v1421 = vpop.f32.mrb[0].mxu0
      %v1422 = vadd.f32 %v369, %v1421
      %v1423 = vpop.f32.mrb[0].mxu0
      %1424 = vmatprep.mubr.bf16.mxu0 0
      %1425 = vmatmul.mubr.bf16.gmra.mrb[0].mxu0 %v899
      %v1426 = vpop.f32.mrb[0].mxu0
      %v1427 = vadd.f32 %v369, %v1426
      %v1428 = vpop.f32.mrb[0].mxu0
      %v1429 = vpop.f32.mrb[0].mxu0
      %v1430 = vadd.f32 %v369, %v1429
      %v1431 = vpop.f32.mrb[0].mxu0
      %1432 = vmatprep.mubr.bf16.mxu0 0
      %1433 = vmatmul.mubr.bf16.gmra.mrb[0].mxu0 %v902
      %v1434 = vpop.f32.mrb[0].mxu0
      %v1435 = vadd.f32 %v369, %v1434
      %v1436 = vpop.f32.mrb[0].mxu0
      %v1437 = vpop.f32.mrb[0].mxu0
      %v1438 = vadd.f32 %v369, %v1437
      %v1439 = vpop.f32.mrb[0].mxu0
      %1440 = vmatprep.mubr.bf16.mxu0 0
      %1441 = vmatmul.mubr.bf16.gmra.mrb[0].mxu0 %v905
      %v1442 = vpop.f32.mrb[0].mxu0
      %v1443 = vadd.f32 %v369, %v1442
      %v1444 = vpop.f32.mrb[0].mxu0
      %v1445 = vpop.f32.mrb[0].mxu0
      %v1446 = vadd.f32 %v369, %v1445
      %v1447 = vpop.f32.mrb[0].mxu0
      %1448 = vmatprep.mubr.bf16.mxu0 0
      %1449 = vmatmul.mubr.bf16.gmra.mrb[0].mxu0 %v908
      %v1450 = vpop.f32.mrb[0].mxu0
      %v1451 = vadd.f32 %v369, %v1450
      %v1452 = vpop.f32.mrb[0].mxu0
      %v1453 = vpop.f32.mrb[0].mxu0
      %v1454 = vadd.f32 %v369, %v1453
      %v1455 = vpop.f32.mrb[0].mxu0
      %1456 = vmatprep.mubr.bf16.mxu0 0
      %1457 = vmatmul.mubr.bf16.gmra.mrb[0].mxu0 %v911
      %v1458 = vpop.f32.mrb[0].mxu0
      %v1459 = vadd.f32 %v369, %v1458
      %v1460 = vpop.f32.mrb[0].mxu0
      %v1461 = vpop.f32.mrb[0].mxu0
      %v1462 = vadd.f32 %v369, %v1461
      %v1463 = vpop.f32.mrb[0].mxu0
      %1464 = vdwg.mxu0
      %vm1465 = vcmp.gt.f32.partialorder %v955, 0.0
      %vm1466 = vcmp.gt.f32.partialorder %v958, 0.0
      %vm1467 = vcmp.gt.f32.partialorder %v963, 0.0
      %vm1468 = vcmp.gt.f32.partialorder %v966, 0.0
      %vm1469 = vcmp.gt.f32.partialorder %v971, 0.0
      %vm1470 = vcmp.gt.f32.partialorder %v974, 0.0
      %vm1471 = vcmp.gt.f32.partialorder %v979, 0.0
      %vm1472 = vcmp.gt.f32.partialorder %v982, 0.0
      %vm1473 = vcmp.gt.f32.partialorder %v987, 0.0
      %vm1474 = vcmp.gt.f32.partialorder %v990, 0.0
      %vm1475 = vcmp.gt.f32.partialorder %v995, 0.0
      %vm1476 = vcmp.gt.f32.partialorder %v998, 0.0
      %vm1477 = vcmp.gt.f32.partialorder %v1003, 0.0
      %vm1478 = vcmp.gt.f32.partialorder %v1006, 0.0
      %vm1479 = vcmp.gt.f32.partialorder %v1011, 0.0
      %vm1480 = vcmp.gt.f32.partialorder %v1014, 0.0
      %vm1481 = vcmp.gt.f32.partialorder %v1019, 0.0
      %vm1482 = vcmp.gt.f32.partialorder %v1022, 0.0
      %vm1483 = vcmp.gt.f32.partialorder %v1027, 0.0
      %vm1484 = vcmp.gt.f32.partialorder %v1030, 0.0
      %vm1485 = vcmp.gt.f32.partialorder %v1035, 0.0
      %vm1486 = vcmp.gt.f32.partialorder %v1038, 0.0
      %vm1487 = vcmp.gt.f32.partialorder %v1043, 0.0
      %vm1488 = vcmp.gt.f32.partialorder %v1046, 0.0
      %vm1489 = vcmp.gt.f32.partialorder %v1051, 0.0
      %vm1490 = vcmp.gt.f32.partialorder %v1054, 0.0
      %vm1491 = vcmp.gt.f32.partialorder %v1059, 0.0
      %vm1492 = vcmp.gt.f32.partialorder %v1062, 0.0
      %vm1493 = vcmp.gt.f32.partialorder %v1067, 0.0
      %vm1494 = vcmp.gt.f32.partialorder %v1070, 0.0
      %vm1495 = vcmp.gt.f32.partialorder %v1075, 0.0
      %vm1496 = vcmp.gt.f32.partialorder %v1078, 0.0
      %vm1497 = vcmp.gt.f32.partialorder %v1083, 0.0
      %vm1498 = vcmp.gt.f32.partialorder %v1086, 0.0
      %vm1499 = vcmp.gt.f32.partialorder %v1091, 0.0
      %vm1500 = vcmp.gt.f32.partialorder %v1094, 0.0
      %vm1501 = vcmp.gt.f32.partialorder %v1099, 0.0
      %vm1502 = vcmp.gt.f32.partialorder %v1102, 0.0
      %vm1503 = vcmp.gt.f32.partialorder %v1107, 0.0
      %vm1504 = vcmp.gt.f32.partialorder %v1110, 0.0
      %vm1505 = vcmp.gt.f32.partialorder %v1115, 0.0
      %vm1506 = vcmp.gt.f32.partialorder %v1118, 0.0
      %vm1507 = vcmp.gt.f32.partialorder %v1123, 0.0
      %vm1508 = vcmp.gt.f32.partialorder %v1126, 0.0
      %vm1509 = vcmp.gt.f32.partialorder %v1131, 0.0
      %vm1510 = vcmp.gt.f32.partialorder %v1134, 0.0
      %vm1511 = vcmp.gt.f32.partialorder %v1139, 0.0
      %vm1512 = vcmp.gt.f32.partialorder %v1142, 0.0
      %vm1513 = vcmp.gt.f32.partialorder %v1147, 0.0
      %vm1514 = vcmp.gt.f32.partialorder %v1150, 0.0
      %vm1515 = vcmp.gt.f32.partialorder %v1155, 0.0
      %vm1516 = vcmp.gt.f32.partialorder %v1158, 0.0
      %vm1517 = vcmp.gt.f32.partialorder %v1163, 0.0
      %vm1518 = vcmp.gt.f32.partialorder %v1166, 0.0
      %vm1519 = vcmp.gt.f32.partialorder %v1171, 0.0
      %vm1520 = vcmp.gt.f32.partialorder %v1174, 0.0
      %vm1521 = vcmp.gt.f32.partialorder %v1179, 0.0
      %vm1522 = vcmp.gt.f32.partialorder %v1182, 0.0
      %vm1523 = vcmp.gt.f32.partialorder %v1187, 0.0
      %vm1524 = vcmp.gt.f32.partialorder %v1190, 0.0
      %vm1525 = vcmp.gt.f32.partialorder %v1195, 0.0
      %vm1526 = vcmp.gt.f32.partialorder %v1198, 0.0
      %vm1527 = vcmp.gt.f32.partialorder %v1203, 0.0
      %vm1528 = vcmp.gt.f32.partialorder %v1206, 0.0
      %vm1529 = vcmp.gt.f32.partialorder %v1211, 0.0
      %vm1530 = vcmp.gt.f32.partialorder %v1214, 0.0
      %vm1531 = vcmp.gt.f32.partialorder %v1219, 0.0
      %vm1532 = vcmp.gt.f32.partialorder %v1222, 0.0
      %vm1533 = vcmp.gt.f32.partialorder %v1227, 0.0
      %vm1534 = vcmp.gt.f32.partialorder %v1230, 0.0
      %vm1535 = vcmp.gt.f32.partialorder %v1235, 0.0
      %vm1536 = vcmp.gt.f32.partialorder %v1238, 0.0
      %vm1537 = vcmp.gt.f32.partialorder %v1243, 0.0
      %vm1538 = vcmp.gt.f32.partialorder %v1246, 0.0
      %vm1539 = vcmp.gt.f32.partialorder %v1251, 0.0
      %vm1540 = vcmp.gt.f32.partialorder %v1254, 0.0
      %vm1541 = vcmp.gt.f32.partialorder %v1259, 0.0
      %vm1542 = vcmp.gt.f32.partialorder %v1262, 0.0
      %vm1543 = vcmp.gt.f32.partialorder %v1267, 0.0
      %vm1544 = vcmp.gt.f32.partialorder %v1270, 0.0
      %vm1545 = vcmp.gt.f32.partialorder %v1275, 0.0
      %vm1546 = vcmp.gt.f32.partialorder %v1278, 0.0
      %vm1547 = vcmp.gt.f32.partialorder %v1283, 0.0
      %vm1548 = vcmp.gt.f32.partialorder %v1286, 0.0
      %vm1549 = vcmp.gt.f32.partialorder %v1291, 0.0
      %vm1550 = vcmp.gt.f32.partialorder %v1294, 0.0
      %vm1551 = vcmp.gt.f32.partialorder %v1299, 0.0
      %vm1552 = vcmp.gt.f32.partialorder %v1302, 0.0
      %vm1553 = vcmp.gt.f32.partialorder %v1307, 0.0
      %vm1554 = vcmp.gt.f32.partialorder %v1310, 0.0
      %vm1555 = vcmp.gt.f32.partialorder %v1315, 0.0
      %vm1556 = vcmp.gt.f32.partialorder %v1318, 0.0
      %vm1557 = vcmp.gt.f32.partialorder %v1323, 0.0
      %vm1558 = vcmp.gt.f32.partialorder %v1326, 0.0
      %vm1559 = vcmp.gt.f32.partialorder %v1331, 0.0
      %vm1560 = vcmp.gt.f32.partialorder %v1334, 0.0
      %vm1561 = vcmp.gt.f32.partialorder %v1339, 0.0
      %vm1562 = vcmp.gt.f32.partialorder %v1342, 0.0
      %vm1563 = vcmp.gt.f32.partialorder %v1347, 0.0
      %vm1564 = vcmp.gt.f32.partialorder %v1350, 0.0
      %vm1565 = vcmp.gt.f32.partialorder %v1355, 0.0
      %vm1566 = vcmp.gt.f32.partialorder %v1358, 0.0
      %vm1567 = vcmp.gt.f32.partialorder %v1363, 0.0
      %vm1568 = vcmp.gt.f32.partialorder %v1366, 0.0
      %vm1569 = vcmp.gt.f32.partialorder %v1371, 0.0
      %vm1570 = vcmp.gt.f32.partialorder %v1374, 0.0
      %vm1571 = vcmp.gt.f32.partialorder %v1379, 0.0
      %vm1572 = vcmp.gt.f32.partialorder %v1382, 0.0
      %vm1573 = vcmp.gt.f32.partialorder %v1387, 0.0
      %vm1574 = vcmp.gt.f32.partialorder %v1390, 0.0
      %vm1575 = vcmp.gt.f32.partialorder %v1395, 0.0
      %vm1576 = vcmp.gt.f32.partialorder %v1398, 0.0
      %vm1577 = vcmp.gt.f32.partialorder %v1403, 0.0
      %vm1578 = vcmp.gt.f32.partialorder %v1406, 0.0
      %vm1579 = vcmp.gt.f32.partialorder %v1411, 0.0
      %vm1580 = vcmp.gt.f32.partialorder %v1414, 0.0
      %vm1581 = vcmp.gt.f32.partialorder %v1419, 0.0
      %vm1582 = vcmp.gt.f32.partialorder %v1422, 0.0
      %vm1583 = vcmp.gt.f32.partialorder %v1427, 0.0
      %vm1584 = vcmp.gt.f32.partialorder %v1430, 0.0
      %vm1585 = vcmp.gt.f32.partialorder %v1435, 0.0
      %vm1586 = vcmp.gt.f32.partialorder %v1438, 0.0
      %vm1587 = vcmp.gt.f32.partialorder %v1443, 0.0
      %vm1588 = vcmp.gt.f32.partialorder %v1446, 0.0
      %vm1589 = vcmp.gt.f32.partialorder %v1451, 0.0
      %vm1590 = vcmp.gt.f32.partialorder %v1454, 0.0
      %vm1591 = vcmp.gt.f32.partialorder %v1459, 0.0
      %vm1592 = vcmp.gt.f32.partialorder %v1462, 0.0
      %v1593 = vmul.f32 %v955, 0.2
      %v1594 = vmul.f32 %v958, 0.2
      %v1595 = vmul.f32 %v963, 0.2
      %v1596 = vmul.f32 %v966, 0.2
      %v1597 = vmul.f32 %v971, 0.2
      %v1598 = vmul.f32 %v974, 0.2
      %v1599 = vmul.f32 %v979, 0.2
      %v1600 = vmul.f32 %v982, 0.2
      %v1601 = vmul.f32 %v987, 0.2
      %v1602 = vmul.f32 %v990, 0.2
      %v1603 = vmul.f32 %v995, 0.2
      %v1604 = vmul.f32 %v998, 0.2
      %v1605 = vmul.f32 %v1003, 0.2
      %v1606 = vmul.f32 %v1006, 0.2
      %v1607 = vmul.f32 %v1011, 0.2
      %v1608 = vmul.f32 %v1014, 0.2
      %v1609 = vmul.f32 %v1019, 0.2
      %v1610 = vmul.f32 %v1022, 0.2
      %v1611 = vmul.f32 %v1027, 0.2
      %v1612 = vmul.f32 %v1030, 0.2
      %v1613 = vmul.f32 %v1035, 0.2
      %v1614 = vmul.f32 %v1038, 0.2
      %v1615 = vmul.f32 %v1043, 0.2
      %v1616 = vmul.f32 %v1046, 0.2
      %v1617 = vmul.f32 %v1051, 0.2
      %v1618 = vmul.f32 %v1054, 0.2
      %v1619 = vmul.f32 %v1059, 0.2
      %v1620 = vmul.f32 %v1062, 0.2
      %v1621 = vmul.f32 %v1067, 0.2
      %v1622 = vmul.f32 %v1070, 0.2
      %v1623 = vmul.f32 %v1075, 0.2
      %v1624 = vmul.f32 %v1078, 0.2
      %v1625 = vmul.f32 %v1083, 0.2
      %v1626 = vmul.f32 %v1086, 0.2
      %v1627 = vmul.f32 %v1091, 0.2
      %v1628 = vmul.f32 %v1094, 0.2
      %v1629 = vmul.f32 %v1099, 0.2
      %v1630 = vmul.f32 %v1102, 0.2
      %v1631 = vmul.f32 %v1107, 0.2
      %v1632 = vmul.f32 %v1110, 0.2
      %v1633 = vmul.f32 %v1115, 0.2
      %v1634 = vmul.f32 %v1118, 0.2
      %v1635 = vmul.f32 %v1123, 0.2
      %v1636 = vmul.f32 %v1126, 0.2
      %v1637 = vmul.f32 %v1131, 0.2
      %v1638 = vmul.f32 %v1134, 0.2
      %v1639 = vmul.f32 %v1139, 0.2
      %v1640 = vmul.f32 %v1142, 0.2
      %v1641 = vmul.f32 %v1147, 0.2
      %v1642 = vmul.f32 %v1150, 0.2
      %v1643 = vmul.f32 %v1155, 0.2
      %v1644 = vmul.f32 %v1158, 0.2
      %v1645 = vmul.f32 %v1163, 0.2
      %v1646 = vmul.f32 %v1166, 0.2
      %v1647 = vmul.f32 %v1171, 0.2
      %v1648 = vmul.f32 %v1174, 0.2
      %v1649 = vmul.f32 %v1179, 0.2
      %v1650 = vmul.f32 %v1182, 0.2
      %v1651 = vmul.f32 %v1187, 0.2
      %v1652 = vmul.f32 %v1190, 0.2
      %v1653 = vmul.f32 %v1195, 0.2
      %v1654 = vmul.f32 %v1198, 0.2
      %v1655 = vmul.f32 %v1203, 0.2
      %v1656 = vmul.f32 %v1206, 0.2
      %v1657 = vmul.f32 %v1211, 0.2
      %v1658 = vmul.f32 %v1214, 0.2
      %v1659 = vmul.f32 %v1219, 0.2
      %v1660 = vmul.f32 %v1222, 0.2
      %v1661 = vmul.f32 %v1227, 0.2
      %v1662 = vmul.f32 %v1230, 0.2
      %v1663 = vmul.f32 %v1235, 0.2
      %v1664 = vmul.f32 %v1238, 0.2
      %v1665 = vmul.f32 %v1243, 0.2
      %v1666 = vmul.f32 %v1246, 0.2
      %v1667 = vmul.f32 %v1251, 0.2
      %v1668 = vmul.f32 %v1254, 0.2
      %v1669 = vmul.f32 %v1259, 0.2
      %v1670 = vmul.f32 %v1262, 0.2
      %v1671 = vmul.f32 %v1267, 0.2
      %v1672 = vmul.f32 %v1270, 0.2
      %v1673 = vmul.f32 %v1275, 0.2
      %v1674 = vmul.f32 %v1278, 0.2
      %v1675 = vmul.f32 %v1283, 0.2
      %v1676 = vmul.f32 %v1286, 0.2
      %v1677 = vmul.f32 %v1291, 0.2
      %v1678 = vmul.f32 %v1294, 0.2
      %v1679 = vmul.f32 %v1299, 0.2
      %v1680 = vmul.f32 %v1302, 0.2
      %v1681 = vmul.f32 %v1307, 0.2
      %v1682 = vmul.f32 %v1310, 0.2
      %v1683 = vmul.f32 %v1315, 0.2
      %v1684 = vmul.f32 %v1318, 0.2
      %v1685 = vmul.f32 %v1323, 0.2
      %v1686 = vmul.f32 %v1326, 0.2
      %v1687 = vmul.f32 %v1331, 0.2
      %v1688 = vmul.f32 %v1334, 0.2
      %v1689 = vmul.f32 %v1339, 0.2
      %v1690 = vmul.f32 %v1342, 0.2
      %v1691 = vmul.f32 %v1347, 0.2
      %v1692 = vmul.f32 %v1350, 0.2
      %v1693 = vmul.f32 %v1355, 0.2
      %v1694 = vmul.f32 %v1358, 0.2
      %v1695 = vmul.f32 %v1363, 0.2
      %v1696 = vmul.f32 %v1366, 0.2
      %v1697 = vmul.f32 %v1371, 0.2
      %v1698 = vmul.f32 %v1374, 0.2
      %v1699 = vmul.f32 %v1379, 0.2
      %v1700 = vmul.f32 %v1382, 0.2
      %v1701 = vmul.f32 %v1387, 0.2
      %v1702 = vmul.f32 %v1390, 0.2
      %v1703 = vmul.f32 %v1395, 0.2
      %v1704 = vmul.f32 %v1398, 0.2
      %v1705 = vmul.f32 %v1403, 0.2
      %v1706 = vmul.f32 %v1406, 0.2
      %v1707 = vmul.f32 %v1411, 0.2
      %v1708 = vmul.f32 %v1414, 0.2
      %v1709 = vmul.f32 %v1419, 0.2
      %v1710 = vmul.f32 %v1422, 0.2
      %v1711 = vmul.f32 %v1427, 0.2
      %v1712 = vmul.f32 %v1430, 0.2
      %v1713 = vmul.f32 %v1435, 0.2
      %v1714 = vmul.f32 %v1438, 0.2
      %v1715 = vmul.f32 %v1443, 0.2
      %v1716 = vmul.f32 %v1446, 0.2
      %v1717 = vmul.f32 %v1451, 0.2
      %v1718 = vmul.f32 %v1454, 0.2
      %v1719 = vmul.f32 %v1459, 0.2
      %v1720 = vmul.f32 %v1462, 0.2
      %v1721 = vsel %vm1465, %v955, %v1593
      %v1722 = vsel %vm1466, %v958, %v1594
      %v1723 = vsel %vm1467, %v963, %v1595
      %v1724 = vsel %vm1468, %v966, %v1596
      %v1725 = vsel %vm1469, %v971, %v1597
      %v1726 = vsel %vm1470, %v974, %v1598
      %v1727 = vsel %vm1471, %v979, %v1599
      %v1728 = vsel %vm1472, %v982, %v1600
      %v1729 = vsel %vm1473, %v987, %v1601
      %v1730 = vsel %vm1474, %v990, %v1602
      %v1731 = vsel %vm1475, %v995, %v1603
      %v1732 = vsel %vm1476, %v998, %v1604
      %v1733 = vsel %vm1477, %v1003, %v1605
      %v1734 = vsel %vm1478, %v1006, %v1606
      %v1735 = vsel %vm1479, %v1011, %v1607
      %v1736 = vsel %vm1480, %v1014, %v1608
      %v1737 = vsel %vm1481, %v1019, %v1609
      %v1738 = vsel %vm1482, %v1022, %v1610
      %v1739 = vsel %vm1483, %v1027, %v1611
      %v1740 = vsel %vm1484, %v1030, %v1612
      %v1741 = vsel %vm1485, %v1035, %v1613
      %v1742 = vsel %vm1486, %v1038, %v1614
      %v1743 = vsel %vm1487, %v1043, %v1615
      %v1744 = vsel %vm1488, %v1046, %v1616
      %v1745 = vsel %vm1489, %v1051, %v1617
      %v1746 = vsel %vm1490, %v1054, %v1618
      %v1747 = vsel %vm1491, %v1059, %v1619
      %v1748 = vsel %vm1492, %v1062, %v1620
      %v1749 = vsel %vm1493, %v1067, %v1621
      %v1750 = vsel %vm1494, %v1070, %v1622
      %v1751 = vsel %vm1495, %v1075, %v1623
      %v1752 = vsel %vm1496, %v1078, %v1624
      %v1753 = vsel %vm1497, %v1083, %v1625
      %v1754 = vsel %vm1498, %v1086, %v1626
      %v1755 = vsel %vm1499, %v1091, %v1627
      %v1756 = vsel %vm1500, %v1094, %v1628
      %v1757 = vsel %vm1501, %v1099, %v1629
      %v1758 = vsel %vm1502, %v1102, %v1630
      %v1759 = vsel %vm1503, %v1107, %v1631
      %v1760 = vsel %vm1504, %v1110, %v1632
      %v1761 = vsel %vm1505, %v1115, %v1633
      %v1762 = vsel %vm1506, %v1118, %v1634
      %v1763 = vsel %vm1507, %v1123, %v1635
      %v1764 = vsel %vm1508, %v1126, %v1636
      %v1765 = vsel %vm1509, %v1131, %v1637
      %v1766 = vsel %vm1510, %v1134, %v1638
      %v1767 = vsel %vm1511, %v1139, %v1639
      %v1768 = vsel %vm1512, %v1142, %v1640
      %v1769 = vsel %vm1513, %v1147, %v1641
      %v1770 = vsel %vm1514, %v1150, %v1642
      %v1771 = vsel %vm1515, %v1155, %v1643
      %v1772 = vsel %vm1516, %v1158, %v1644
      %v1773 = vsel %vm1517, %v1163, %v1645
      %v1774 = vsel %vm1518, %v1166, %v1646
      %v1775 = vsel %vm1519, %v1171, %v1647
      %v1776 = vsel %vm1520, %v1174, %v1648
      %v1777 = vsel %vm1521, %v1179, %v1649
      %v1778 = vsel %vm1522, %v1182, %v1650
      %v1779 = vsel %vm1523, %v1187, %v1651
      %v1780 = vsel %vm1524, %v1190, %v1652
      %v1781 = vsel %vm1525, %v1195, %v1653
      %v1782 = vsel %vm1526, %v1198, %v1654
      %v1783 = vsel %vm1527, %v1203, %v1655
      %v1784 = vsel %vm1528, %v1206, %v1656
      %v1785 = vsel %vm1529, %v1211, %v1657
      %v1786 = vsel %vm1530, %v1214, %v1658
      %v1787 = vsel %vm1531, %v1219, %v1659
      %v1788 = vsel %vm1532, %v1222, %v1660
      %v1789 = vsel %vm1533, %v1227, %v1661
      %v1790 = vsel %vm1534, %v1230, %v1662
      %v1791 = vsel %vm1535, %v1235, %v1663
      %v1792 = vsel %vm1536, %v1238, %v1664
      %v1793 = vsel %vm1537, %v1243, %v1665
      %v1794 = vsel %vm1538, %v1246, %v1666
      %v1795 = vsel %vm1539, %v1251, %v1667
      %v1796 = vsel %vm1540, %v1254, %v1668
      %v1797 = vsel %vm1541, %v1259, %v1669
      %v1798 = vsel %vm1542, %v1262, %v1670
      %v1799 = vsel %vm1543, %v1267, %v1671
      %v1800 = vsel %vm1544, %v1270, %v1672
      %v1801 = vsel %vm1545, %v1275, %v1673
      %v1802 = vsel %vm1546, %v1278, %v1674
      %v1803 = vsel %vm1547, %v1283, %v1675
      %v1804 = vsel %vm1548, %v1286, %v1676
      %v1805 = vsel %vm1549, %v1291, %v1677
      %v1806 = vsel %vm1550, %v1294, %v1678
      %v1807 = vsel %vm1551, %v1299, %v1679
      %v1808 = vsel %vm1552, %v1302, %v1680
      %v1809 = vsel %vm1553, %v1307, %v1681
      %v1810 = vsel %vm1554, %v1310, %v1682
      %v1811 = vsel %vm1555, %v1315, %v1683
      %v1812 = vsel %vm1556, %v1318, %v1684
      %v1813 = vsel %vm1557, %v1323, %v1685
      %v1814 = vsel %vm1558, %v1326, %v1686
      %v1815 = vsel %vm1559, %v1331, %v1687
      %v1816 = vsel %vm1560, %v1334, %v1688
      %v1817 = vsel %vm1561, %v1339, %v1689
      %v1818 = vsel %vm1562, %v1342, %v1690
      %v1819 = vsel %vm1563, %v1347, %v1691
      %v1820 = vsel %vm1564, %v1350, %v1692
      %v1821 = vsel %vm1565, %v1355, %v1693
      %v1822 = vsel %vm1566, %v1358, %v1694
      %v1823 = vsel %vm1567, %v1363, %v1695
      %v1824 = vsel %vm1568, %v1366, %v1696
      %v1825 = vsel %vm1569, %v1371, %v1697
      %v1826 = vsel %vm1570, %v1374, %v1698
      %v1827 = vsel %vm1571, %v1379, %v1699
      %v1828 = vsel %vm1572, %v1382, %v1700
      %v1829 = vsel %vm1573, %v1387, %v1701
      %v1830 = vsel %vm1574, %v1390, %v1702
      %v1831 = vsel %vm1575, %v1395, %v1703
      %v1832 = vsel %vm1576, %v1398, %v1704
      %v1833 = vsel %vm1577, %v1403, %v1705
      %v1834 = vsel %vm1578, %v1406, %v1706
      %v1835 = vsel %vm1579, %v1411, %v1707
      %v1836 = vsel %vm1580, %v1414, %v1708
      %v1837 = vsel %vm1581, %v1419, %v1709
      %v1838 = vsel %vm1582, %v1422, %v1710
      %v1839 = vsel %vm1583, %v1427, %v1711
      %v1840 = vsel %vm1584, %v1430, %v1712
      %v1841 = vsel %vm1585, %v1435, %v1713
      %v1842 = vsel %vm1586, %v1438, %v1714
      %v1843 = vsel %vm1587, %v1443, %v1715
      %v1844 = vsel %vm1588, %v1446, %v1716
      %v1845 = vsel %vm1589, %v1451, %v1717
      %v1846 = vsel %vm1590, %v1454, %v1718
      %v1847 = vsel %vm1591, %v1459, %v1719
      %v1848 = vsel %vm1592, %v1462, %v1720
      %v1849 = vpack.c.bf16 %v1722, %v1721
      %v1850 = vpack.c.bf16 %v1724, %v1723
      %v1851 = vpack.c.bf16 %v1726, %v1725
      %v1852 = vpack.c.bf16 %v1728, %v1727
      %v1853 = vpack.c.bf16 %v1730, %v1729
      %v1854 = vpack.c.bf16 %v1732, %v1731
      %v1855 = vpack.c.bf16 %v1734, %v1733
      %v1856 = vpack.c.bf16 %v1736, %v1735
      %v1857 = vpack.c.bf16 %v1738, %v1737
      %v1858 = vpack.c.bf16 %v1740, %v1739
      %v1859 = vpack.c.bf16 %v1742, %v1741
      %v1860 = vpack.c.bf16 %v1744, %v1743
      %v1861 = vpack.c.bf16 %v1746, %v1745
      %v1862 = vpack.c.bf16 %v1748, %v1747
      %v1863 = vpack.c.bf16 %v1750, %v1749
      %v1864 = vpack.c.bf16 %v1752, %v1751
      %v1865 = vpack.c.bf16 %v1754, %v1753
      %v1866 = vpack.c.bf16 %v1756, %v1755
      %v1867 = vpack.c.bf16 %v1758, %v1757
      %v1868 = vpack.c.bf16 %v1760, %v1759
      %v1869 = vpack.c.bf16 %v1762, %v1761
      %v1870 = vpack.c.bf16 %v1764, %v1763
      %v1871 = vpack.c.bf16 %v1766, %v1765
      %v1872 = vpack.c.bf16 %v1768, %v1767
      %v1873 = vpack.c.bf16 %v1770, %v1769
      %v1874 = vpack.c.bf16 %v1772, %v1771
      %v1875 = vpack.c.bf16 %v1774, %v1773
      %v1876 = vpack.c.bf16 %v1776, %v1775
      %v1877 = vpack.c.bf16 %v1778, %v1777
      %v1878 = vpack.c.bf16 %v1780, %v1779
      %v1879 = vpack.c.bf16 %v1782, %v1781
      %v1880 = vpack.c.bf16 %v1784, %v1783
      %v1881 = vpack.c.bf16 %v1786, %v1785
      %v1882 = vpack.c.bf16 %v1788, %v1787
      %v1883 = vpack.c.bf16 %v1790, %v1789
      %v1884 = vpack.c.bf16 %v1792, %v1791
      %v1885 = vpack.c.bf16 %v1794, %v1793
      %v1886 = vpack.c.bf16 %v1796, %v1795
      %v1887 = vpack.c.bf16 %v1798, %v1797
      %v1888 = vpack.c.bf16 %v1800, %v1799
      %v1889 = vpack.c.bf16 %v1802, %v1801
      %v1890 = vpack.c.bf16 %v1804, %v1803
      %v1891 = vpack.c.bf16 %v1806, %v1805
      %v1892 = vpack.c.bf16 %v1808, %v1807
      %v1893 = vpack.c.bf16 %v1810, %v1809
      %v1894 = vpack.c.bf16 %v1812, %v1811
      %v1895 = vpack.c.bf16 %v1814, %v1813
      %v1896 = vpack.c.bf16 %v1816, %v1815
      %v1897 = vpack.c.bf16 %v1818, %v1817
      %v1898 = vpack.c.bf16 %v1820, %v1819
      %v1899 = vpack.c.bf16 %v1822, %v1821
      %v1900 = vpack.c.bf16 %v1824, %v1823
      %v1901 = vpack.c.bf16 %v1826, %v1825
      %v1902 = vpack.c.bf16 %v1828, %v1827
      %v1903 = vpack.c.bf16 %v1830, %v1829
      %v1904 = vpack.c.bf16 %v1832, %v1831
      %v1905 = vpack.c.bf16 %v1834, %v1833
      %v1906 = vpack.c.bf16 %v1836, %v1835
      %v1907 = vpack.c.bf16 %v1838, %v1837
      %v1908 = vpack.c.bf16 %v1840, %v1839
      %v1909 = vpack.c.bf16 %v1842, %v1841
      %v1910 = vpack.c.bf16 %v1844, %v1843
      %v1911 = vpack.c.bf16 %v1846, %v1845
      %v1912 = vpack.c.bf16 %v1848, %v1847
      %v1977 = vunpack.c.l.b16 %v1849
      %v1978 = vunpack.c.h.b16 %v1849
      %v1979 = vunpack.c.l.b16 %v1850
      %v1980 = vunpack.c.h.b16 %v1850
      %v1981 = vunpack.c.l.b16 %v1851
      %v1982 = vunpack.c.h.b16 %v1851
      %v1983 = vunpack.c.l.b16 %v1852
      %v1984 = vunpack.c.h.b16 %v1852
      %v1985 = vunpack.c.l.b16 %v1853
      %v1986 = vunpack.c.h.b16 %v1853
      %v1987 = vunpack.c.l.b16 %v1854
      %v1988 = vunpack.c.h.b16 %v1854
      %v1989 = vunpack.c.l.b16 %v1855
      %v1990 = vunpack.c.h.b16 %v1855
      %v1991 = vunpack.c.l.b16 %v1856
      %v1992 = vunpack.c.h.b16 %v1856
      %v1993 = vunpack.c.l.b16 %v1857
      %v1994 = vunpack.c.h.b16 %v1857
      %v1995 = vunpack.c.l.b16 %v1858
      %v1996 = vunpack.c.h.b16 %v1858
      %v1997 = vunpack.c.l.b16 %v1859
      %v1998 = vunpack.c.h.b16 %v1859
      %v1999 = vunpack.c.l.b16 %v1860
      %v2000 = vunpack.c.h.b16 %v1860
      %v2001 = vunpack.c.l.b16 %v1861
      %v2002 = vunpack.c.h.b16 %v1861
      %v2003 = vunpack.c.l.b16 %v1862
      %v2004 = vunpack.c.h.b16 %v1862
      %v2005 = vunpack.c.l.b16 %v1863
      %v2006 = vunpack.c.h.b16 %v1863
      %v2007 = vunpack.c.l.b16 %v1864
      %v2008 = vunpack.c.h.b16 %v1864
      %v2009 = vunpack.c.l.b16 %v1865
      %v2010 = vunpack.c.h.b16 %v1865
      %v2011 = vunpack.c.l.b16 %v1866
      %v2012 = vunpack.c.h.b16 %v1866
      %v2013 = vunpack.c.l.b16 %v1867
      %v2014 = vunpack.c.h.b16 %v1867
      %v2015 = vunpack.c.l.b16 %v1868
      %v2016 = vunpack.c.h.b16 %v1868
      %v2017 = vunpack.c.l.b16 %v1869
      %v2018 = vunpack.c.h.b16 %v1869
      %v2019 = vunpack.c.l.b16 %v1870
      %v2020 = vunpack.c.h.b16 %v1870
      %v2021 = vunpack.c.l.b16 %v1871
      %v2022 = vunpack.c.h.b16 %v1871
      %v2023 = vunpack.c.l.b16 %v1872
      %v2024 = vunpack.c.h.b16 %v1872
      %v2025 = vunpack.c.l.b16 %v1873
      %v2026 = vunpack.c.h.b16 %v1873
      %v2027 = vunpack.c.l.b16 %v1874
      %v2028 = vunpack.c.h.b16 %v1874
      %v2029 = vunpack.c.l.b16 %v1875
      %v2030 = vunpack.c.h.b16 %v1875
      %v2031 = vunpack.c.l.b16 %v1876
      %v2032 = vunpack.c.h.b16 %v1876
      %v2033 = vunpack.c.l.b16 %v1877
      %v2034 = vunpack.c.h.b16 %v1877
      %v2035 = vunpack.c.l.b16 %v1878
      %v2036 = vunpack.c.h.b16 %v1878
      %v2037 = vunpack.c.l.b16 %v1879
      %v2038 = vunpack.c.h.b16 %v1879
      %v2039 = vunpack.c.l.b16 %v1880
      %v2040 = vunpack.c.h.b16 %v1880
      %v2041 = vunpack.c.l.b16 %v1881
      %v2042 = vunpack.c.h.b16 %v1881
      %v2043 = vunpack.c.l.b16 %v1882
      %v2044 = vunpack.c.h.b16 %v1882
      %v2045 = vunpack.c.l.b16 %v1883
      %v2046 = vunpack.c.h.b16 %v1883
      %v2047 = vunpack.c.l.b16 %v1884
      %v2048 = vunpack.c.h.b16 %v1884
      %v2049 = vunpack.c.l.b16 %v1885
      %v2050 = vunpack.c.h.b16 %v1885
      %v2051 = vunpack.c.l.b16 %v1886
      %v2052 = vunpack.c.h.b16 %v1886
      %v2053 = vunpack.c.l.b16 %v1887
      %v2054 = vunpack.c.h.b16 %v1887
      %v2055 = vunpack.c.l.b16 %v1888
      %v2056 = vunpack.c.h.b16 %v1888
      %v2057 = vunpack.c.l.b16 %v1889
      %v2058 = vunpack.c.h.b16 %v1889
      %v2059 = vunpack.c.l.b16 %v1890
      %v2060 = vunpack.c.h.b16 %v1890
      %v2061 = vunpack.c.l.b16 %v1891
      %v2062 = vunpack.c.h.b16 %v1891
      %v2063 = vunpack.c.l.b16 %v1892
      %v2064 = vunpack.c.h.b16 %v1892
      %v2065 = vunpack.c.l.b16 %v1893
      %v2066 = vunpack.c.h.b16 %v1893
      %v2067 = vunpack.c.l.b16 %v1894
      %v2068 = vunpack.c.h.b16 %v1894
      %v2069 = vunpack.c.l.b16 %v1895
      %v2070 = vunpack.c.h.b16 %v1895
      %v2071 = vunpack.c.l.b16 %v1896
      %v2072 = vunpack.c.h.b16 %v1896
      %v2073 = vunpack.c.l.b16 %v1897
      %v2074 = vunpack.c.h.b16 %v1897
      %v2075 = vunpack.c.l.b16 %v1898
      %v2076 = vunpack.c.h.b16 %v1898
      %v2077 = vunpack.c.l.b16 %v1899
      %v2078 = vunpack.c.h.b16 %v1899
      %v2079 = vunpack.c.l.b16 %v1900
      %v2080 = vunpack.c.h.b16 %v1900
      %v2081 = vunpack.c.l.b16 %v1901
      %v2082 = vunpack.c.h.b16 %v1901
      %v2083 = vunpack.c.l.b16 %v1902
      %v2084 = vunpack.c.h.b16 %v1902
      %v2085 = vunpack.c.l.b16 %v1903
      %v2086 = vunpack.c.h.b16 %v1903
      %v2087 = vunpack.c.l.b16 %v1904
      %v2088 = vunpack.c.h.b16 %v1904
      %v2089 = vunpack.c.l.b16 %v1905
      %v2090 = vunpack.c.h.b16 %v1905
      %v2091 = vunpack.c.l.b16 %v1906
      %v2092 = vunpack.c.h.b16 %v1906
      %v2093 = vunpack.c.l.b16 %v1907
      %v2094 = vunpack.c.h.b16 %v1907
      %v2095 = vunpack.c.l.b16 %v1908
      %v2096 = vunpack.c.h.b16 %v1908
      %v2097 = vunpack.c.l.b16 %v1909
      %v2098 = vunpack.c.h.b16 %v1909
      %v2099 = vunpack.c.l.b16 %v1910
      %v2100 = vunpack.c.h.b16 %v1910
      %v2101 = vunpack.c.l.b16 %v1911
      %v2102 = vunpack.c.h.b16 %v1911
      %v2103 = vunpack.c.l.b16 %v1912
      %v2104 = vunpack.c.h.b16 %v1912
      %v2105 = vpack.c.b16 %v1977, %v1977
      %v2106 = vpack.c.b16 %v1978, %v1978
      %v2107 = vpack.c.b16 %v1979, %v1979
      %v2108 = vpack.c.b16 %v1980, %v1980
      %v2109 = vpack.c.b16 %v1981, %v1981
      %v2110 = vpack.c.b16 %v1982, %v1982
      %v2111 = vpack.c.b16 %v1983, %v1983
      %v2112 = vpack.c.b16 %v1984, %v1984
      %v2113 = vpack.c.b16 %v1985, %v1985
      %v2114 = vpack.c.b16 %v1986, %v1986
      %v2115 = vpack.c.b16 %v1987, %v1987
      %v2116 = vpack.c.b16 %v1988, %v1988
      %v2117 = vpack.c.b16 %v1989, %v1989
      %v2118 = vpack.c.b16 %v1990, %v1990
      %v2119 = vpack.c.b16 %v1991, %v1991
      %v2120 = vpack.c.b16 %v1992, %v1992
      %v2121 = vpack.c.b16 %v1993, %v1993
      %v2122 = vpack.c.b16 %v1994, %v1994
      %v2123 = vpack.c.b16 %v1995, %v1995
      %v2124 = vpack.c.b16 %v1996, %v1996
      %v2125 = vpack.c.b16 %v1997, %v1997
      %v2126 = vpack.c.b16 %v1998, %v1998
      %v2127 = vpack.c.b16 %v1999, %v1999
      %v2128 = vpack.c.b16 %v2000, %v2000
      %v2129 = vpack.c.b16 %v2001, %v2001
      %v2130 = vpack.c.b16 %v2002, %v2002
      %v2131 = vpack.c.b16 %v2003, %v2003
      %v2132 = vpack.c.b16 %v2004, %v2004
      %v2133 = vpack.c.b16 %v2005, %v2005
      %v2134 = vpack.c.b16 %v2006, %v2006
      %v2135 = vpack.c.b16 %v2007, %v2007
      %v2136 = vpack.c.b16 %v2008, %v2008
      %v2137 = vpack.c.b16 %v2009, %v2009
      %v2138 = vpack.c.b16 %v2010, %v2010
      %v2139 = vpack.c.b16 %v2011, %v2011
      %v2140 = vpack.c.b16 %v2012, %v2012
      %v2141 = vpack.c.b16 %v2013, %v2013
      %v2142 = vpack.c.b16 %v2014, %v2014
      %v2143 = vpack.c.b16 %v2015, %v2015
      %v2144 = vpack.c.b16 %v2016, %v2016
      %v2145 = vpack.c.b16 %v2017, %v2017
      %v2146 = vpack.c.b16 %v2018, %v2018
      %v2147 = vpack.c.b16 %v2019, %v2019
      %v2148 = vpack.c.b16 %v2020, %v2020
      %v2149 = vpack.c.b16 %v2021, %v2021
      %v2150 = vpack.c.b16 %v2022, %v2022
      %v2151 = vpack.c.b16 %v2023, %v2023
      %v2152 = vpack.c.b16 %v2024, %v2024
      %v2153 = vpack.c.b16 %v2025, %v2025
      %v2154 = vpack.c.b16 %v2026, %v2026
      %v2155 = vpack.c.b16 %v2027, %v2027
      %v2156 = vpack.c.b16 %v2028, %v2028
      %v2157 = vpack.c.b16 %v2029, %v2029
      %v2158 = vpack.c.b16 %v2030, %v2030
      %v2159 = vpack.c.b16 %v2031, %v2031
      %v2160 = vpack.c.b16 %v2032, %v2032
      %v2161 = vpack.c.b16 %v2033, %v2033
      %v2162 = vpack.c.b16 %v2034, %v2034
      %v2163 = vpack.c.b16 %v2035, %v2035
      %v2164 = vpack.c.b16 %v2036, %v2036
      %v2165 = vpack.c.b16 %v2037, %v2037
      %v2166 = vpack.c.b16 %v2038, %v2038
      %v2167 = vpack.c.b16 %v2039, %v2039
      %v2168 = vpack.c.b16 %v2040, %v2040
      %v2169 = vpack.c.b16 %v2041, %v2041
      %v2170 = vpack.c.b16 %v2042, %v2042
      %v2171 = vpack.c.b16 %v2043, %v2043
      %v2172 = vpack.c.b16 %v2044, %v2044
      %v2173 = vpack.c.b16 %v2045, %v2045
      %v2174 = vpack.c.b16 %v2046, %v2046
      %v2175 = vpack.c.b16 %v2047, %v2047
      %v2176 = vpack.c.b16 %v2048, %v2048
      %v2177 = vpack.c.b16 %v2049, %v2049
      %v2178 = vpack.c.b16 %v2050, %v2050
      %v2179 = vpack.c.b16 %v2051, %v2051
      %v2180 = vpack.c.b16 %v2052, %v2052
      %v2181 = vpack.c.b16 %v2053, %v2053
      %v2182 = vpack.c.b16 %v2054, %v2054
      %v2183 = vpack.c.b16 %v2055, %v2055
      %v2184 = vpack.c.b16 %v2056, %v2056
      %v2185 = vpack.c.b16 %v2057, %v2057
      %v2186 = vpack.c.b16 %v2058, %v2058
      %v2187 = vpack.c.b16 %v2059, %v2059
      %v2188 = vpack.c.b16 %v2060, %v2060
      %v2189 = vpack.c.b16 %v2061, %v2061
      %v2190 = vpack.c.b16 %v2062, %v2062
      %v2191 = vpack.c.b16 %v2063, %v2063
      %v2192 = vpack.c.b16 %v2064, %v2064
      %v2193 = vpack.c.b16 %v2065, %v2065
      %v2194 = vpack.c.b16 %v2066, %v2066
      %v2195 = vpack.c.b16 %v2067, %v2067
      %v2196 = vpack.c.b16 %v2068, %v2068
      %v2197 = vpack.c.b16 %v2069, %v2069
      %v2198 = vpack.c.b16 %v2070, %v2070
      %v2199 = vpack.c.b16 %v2071, %v2071
      %v2200 = vpack.c.b16 %v2072, %v2072
      %v2201 = vpack.c.b16 %v2073, %v2073
      %v2202 = vpack.c.b16 %v2074, %v2074
      %v2203 = vpack.c.b16 %v2075, %v2075
      %v2204 = vpack.c.b16 %v2076, %v2076
      %v2205 = vpack.c.b16 %v2077, %v2077
      %v2206 = vpack.c.b16 %v2078, %v2078
      %v2207 = vpack.c.b16 %v2079, %v2079
      %v2208 = vpack.c.b16 %v2080, %v2080
      %v2209 = vpack.c.b16 %v2081, %v2081
      %v2210 = vpack.c.b16 %v2082, %v2082
      %v2211 = vpack.c.b16 %v2083, %v2083
      %v2212 = vpack.c.b16 %v2084, %v2084
      %v2213 = vpack.c.b16 %v2085, %v2085
      %v2214 = vpack.c.b16 %v2086, %v2086
      %v2215 = vpack.c.b16 %v2087, %v2087
      %v2216 = vpack.c.b16 %v2088, %v2088
      %v2217 = vpack.c.b16 %v2089, %v2089
      %v2218 = vpack.c.b16 %v2090, %v2090
      %v2219 = vpack.c.b16 %v2091, %v2091
      %v2220 = vpack.c.b16 %v2092, %v2092
      %v2221 = vpack.c.b16 %v2093, %v2093
      %v2222 = vpack.c.b16 %v2094, %v2094
      %v2223 = vpack.c.b16 %v2095, %v2095
      %v2224 = vpack.c.b16 %v2096, %v2096
      %v2225 = vpack.c.b16 %v2097, %v2097
      %v2226 = vpack.c.b16 %v2098, %v2098
      %v2227 = vpack.c.b16 %v2099, %v2099
      %v2228 = vpack.c.b16 %v2100, %v2100
      %v2229 = vpack.c.b16 %v2101, %v2101
      %v2230 = vpack.c.b16 %v2102, %v2102
      %v2231 = vpack.c.b16 %v2103, %v2103
      %v2232 = vpack.c.b16 %v2104, %v2104
      %vm2361 = vcmask 60416
      %2362 = vst.msk [vmem:[%s223] sm:$0xf] %vm2361, %v2105
      %2363 = vst.msk [vmem:[%s223 + $0x4] sm:$0xf] %vm2361, %v2106
      %2364 = vst.msk [vmem:[%s223 + $0x8] sm:$0xf] %vm2361, %v2107
      %2365 = vst.msk [vmem:[%s223 + $0xc] sm:$0xf] %vm2361, %v2108
      %2366 = vst.msk [vmem:[%s223 + $0x10] sm:$0xf] %vm2361, %v2109
      %2367 = vst.msk [vmem:[%s223 + $0x14] sm:$0xf] %vm2361, %v2110
      %2368 = vst.msk [vmem:[%s223 + $0x18] sm:$0xf] %vm2361, %v2111
      %2369 = vst.msk [vmem:[%s223 + $0x1c] sm:$0xf] %vm2361, %v2112
      %2370 = vst.msk [vmem:[%s223 + $0x20] sm:$0xf] %vm2361, %v2113
      %2371 = vst.msk [vmem:[%s223 + $0x24] sm:$0xf] %vm2361, %v2114
      %2372 = vst.msk [vmem:[%s223 + $0x28] sm:$0xf] %vm2361, %v2115
      %2373 = vst.msk [vmem:[%s223 + $0x2c] sm:$0xf] %vm2361, %v2116
      %2374 = vst.msk [vmem:[%s223 + $0x30] sm:$0xf] %vm2361, %v2117
      %2375 = vst.msk [vmem:[%s223 + $0x34] sm:$0xf] %vm2361, %v2118
      %2376 = vst.msk [vmem:[%s223 + $0x38] sm:$0xf] %vm2361, %v2119
      %2377 = vst.msk [vmem:[%s223 + $0x3c] sm:$0xf] %vm2361, %v2120
      %2378 = vst.msk [vmem:[%s223 + $0x40] sm:$0xf] %vm2361, %v2121
      %2379 = vst.msk [vmem:[%s223 + $0x44] sm:$0xf] %vm2361, %v2122
      %2380 = vst.msk [vmem:[%s223 + $0x48] sm:$0xf] %vm2361, %v2123
      %2381 = vst.msk [vmem:[%s223 + $0x4c] sm:$0xf] %vm2361, %v2124
      %2382 = vst.msk [vmem:[%s223 + $0x50] sm:$0xf] %vm2361, %v2125
      %2383 = vst.msk [vmem:[%s223 + $0x54] sm:$0xf] %vm2361, %v2126
      %2384 = vst.msk [vmem:[%s223 + $0x58] sm:$0xf] %vm2361, %v2127
      %2385 = vst.msk [vmem:[%s223 + $0x5c] sm:$0xf] %vm2361, %v2128
      %2386 = vst.msk [vmem:[%s223 + $0x60] sm:$0xf] %vm2361, %v2129
      %2387 = vst.msk [vmem:[%s223 + $0x64] sm:$0xf] %vm2361, %v2130
      %2388 = vst.msk [vmem:[%s223 + $0x68] sm:$0xf] %vm2361, %v2131
      %2389 = vst.msk [vmem:[%s223 + $0x6c] sm:$0xf] %vm2361, %v2132
      %2390 = vst.msk [vmem:[%s223 + $0x70] sm:$0xf] %vm2361, %v2133
      %2391 = vst.msk [vmem:[%s223 + $0x74] sm:$0xf] %vm2361, %v2134
      %2392 = vst.msk [vmem:[%s223 + $0x78] sm:$0xf] %vm2361, %v2135
      %2393 = vst.msk [vmem:[%s223 + $0x7c] sm:$0xf] %vm2361, %v2136
      %2394 = vst.msk [vmem:[%s223 + $0x80] sm:$0xf] %vm2361, %v2137
      %2395 = vst.msk [vmem:[%s223 + $0x84] sm:$0xf] %vm2361, %v2138
      %2396 = vst.msk [vmem:[%s223 + $0x88] sm:$0xf] %vm2361, %v2139
      %2397 = vst.msk [vmem:[%s223 + $0x8c] sm:$0xf] %vm2361, %v2140
      %2398 = vst.msk [vmem:[%s223 + $0x90] sm:$0xf] %vm2361, %v2141
      %2399 = vst.msk [vmem:[%s223 + $0x94] sm:$0xf] %vm2361, %v2142
      %2400 = vst.msk [vmem:[%s223 + $0x98] sm:$0xf] %vm2361, %v2143
      %2401 = vst.msk [vmem:[%s223 + $0x9c] sm:$0xf] %vm2361, %v2144
      %2402 = vst.msk [vmem:[%s223 + $0xa0] sm:$0xf] %vm2361, %v2145
      %2403 = vst.msk [vmem:[%s223 + $0xa4] sm:$0xf] %vm2361, %v2146
      %2404 = vst.msk [vmem:[%s223 + $0xa8] sm:$0xf] %vm2361, %v2147
      %2405 = vst.msk [vmem:[%s223 + $0xac] sm:$0xf] %vm2361, %v2148
      %2406 = vst.msk [vmem:[%s223 + $0xb0] sm:$0xf] %vm2361, %v2149
      %2407 = vst.msk [vmem:[%s223 + $0xb4] sm:$0xf] %vm2361, %v2150
      %2408 = vst.msk [vmem:[%s223 + $0xb8] sm:$0xf] %vm2361, %v2151
      %2409 = vst.msk [vmem:[%s223 + $0xbc] sm:$0xf] %vm2361, %v2152
      %2410 = vst.msk [vmem:[%s223 + $0xc0] sm:$0xf] %vm2361, %v2153
      %2411 = vst.msk [vmem:[%s223 + $0xc4] sm:$0xf] %vm2361, %v2154
      %2412 = vst.msk [vmem:[%s223 + $0xc8] sm:$0xf] %vm2361, %v2155
      %2413 = vst.msk [vmem:[%s223 + $0xcc] sm:$0xf] %vm2361, %v2156
      %2414 = vst.msk [vmem:[%s223 + $0xd0] sm:$0xf] %vm2361, %v2157
      %2415 = vst.msk [vmem:[%s223 + $0xd4] sm:$0xf] %vm2361, %v2158
      %2416 = vst.msk [vmem:[%s223 + $0xd8] sm:$0xf] %vm2361, %v2159
      %2417 = vst.msk [vmem:[%s223 + $0xdc] sm:$0xf] %vm2361, %v2160
      %2418 = vst.msk [vmem:[%s223 + $0xe0] sm:$0xf] %vm2361, %v2161
      %2419 = vst.msk [vmem:[%s223 + $0xe4] sm:$0xf] %vm2361, %v2162
      %2420 = vst.msk [vmem:[%s223 + $0xe8] sm:$0xf] %vm2361, %v2163
      %2421 = vst.msk [vmem:[%s223 + $0xec] sm:$0xf] %vm2361, %v2164
      %2422 = vst.msk [vmem:[%s223 + $0xf0] sm:$0xf] %vm2361, %v2165
      %2423 = vst.msk [vmem:[%s223 + $0xf4] sm:$0xf] %vm2361, %v2166
      %2424 = vst.msk [vmem:[%s223 + $0xf8] sm:$0xf] %vm2361, %v2167
      %2425 = vst.msk [vmem:[%s223 + $0xfc] sm:$0xf] %vm2361, %v2168
      %2426 = vst.msk [vmem:[%s223 + $0x100] sm:$0xf] %vm2361, %v2169
      %2427 = vst.msk [vmem:[%s223 + $0x104] sm:$0xf] %vm2361, %v2170
      %2428 = vst.msk [vmem:[%s223 + $0x108] sm:$0xf] %vm2361, %v2171
      %2429 = vst.msk [vmem:[%s223 + $0x10c] sm:$0xf] %vm2361, %v2172
      %2430 = vst.msk [vmem:[%s223 + $0x110] sm:$0xf] %vm2361, %v2173
      %2431 = vst.msk [vmem:[%s223 + $0x114] sm:$0xf] %vm2361, %v2174
      %2432 = vst.msk [vmem:[%s223 + $0x118] sm:$0xf] %vm2361, %v2175
      %2433 = vst.msk [vmem:[%s223 + $0x11c] sm:$0xf] %vm2361, %v2176
      %2434 = vst.msk [vmem:[%s223 + $0x120] sm:$0xf] %vm2361, %v2177
      %2435 = vst.msk [vmem:[%s223 + $0x124] sm:$0xf] %vm2361, %v2178
      %2436 = vst.msk [vmem:[%s223 + $0x128] sm:$0xf] %vm2361, %v2179
      %2437 = vst.msk [vmem:[%s223 + $0x12c] sm:$0xf] %vm2361, %v2180
      %2438 = vst.msk [vmem:[%s223 + $0x130] sm:$0xf] %vm2361, %v2181
      %2439 = vst.msk [vmem:[%s223 + $0x134] sm:$0xf] %vm2361, %v2182
      %2440 = vst.msk [vmem:[%s223 + $0x138] sm:$0xf] %vm2361, %v2183
      %2441 = vst.msk [vmem:[%s223 + $0x13c] sm:$0xf] %vm2361, %v2184
      %2442 = vst.msk [vmem:[%s223 + $0x140] sm:$0xf] %vm2361, %v2185
      %2443 = vst.msk [vmem:[%s223 + $0x144] sm:$0xf] %vm2361, %v2186
      %2444 = vst.msk [vmem:[%s223 + $0x148] sm:$0xf] %vm2361, %v2187
      %2445 = vst.msk [vmem:[%s223 + $0x14c] sm:$0xf] %vm2361, %v2188
      %2446 = vst.msk [vmem:[%s223 + $0x150] sm:$0xf] %vm2361, %v2189
      %2447 = vst.msk [vmem:[%s223 + $0x154] sm:$0xf] %vm2361, %v2190
      %2448 = vst.msk [vmem:[%s223 + $0x158] sm:$0xf] %vm2361, %v2191
      %2449 = vst.msk [vmem:[%s223 + $0x15c] sm:$0xf] %vm2361, %v2192
      %2450 = vst.msk [vmem:[%s223 + $0x160] sm:$0xf] %vm2361, %v2193
      %2451 = vst.msk [vmem:[%s223 + $0x164] sm:$0xf] %vm2361, %v2194
      %2452 = vst.msk [vmem:[%s223 + $0x168] sm:$0xf] %vm2361, %v2195
      %2453 = vst.msk [vmem:[%s223 + $0x16c] sm:$0xf] %vm2361, %v2196
      %2454 = vst.msk [vmem:[%s223 + $0x170] sm:$0xf] %vm2361, %v2197
      %2455 = vst.msk [vmem:[%s223 + $0x174] sm:$0xf] %vm2361, %v2198
      %2456 = vst.msk [vmem:[%s223 + $0x178] sm:$0xf] %vm2361, %v2199
      %2457 = vst.msk [vmem:[%s223 + $0x17c] sm:$0xf] %vm2361, %v2200
      %2458 = vst.msk [vmem:[%s223 + $0x180] sm:$0xf] %vm2361, %v2201
      %2459 = vst.msk [vmem:[%s223 + $0x184] sm:$0xf] %vm2361, %v2202
      %2460 = vst.msk [vmem:[%s223 + $0x188] sm:$0xf] %vm2361, %v2203
      %2461 = vst.msk [vmem:[%s223 + $0x18c] sm:$0xf] %vm2361, %v2204
      %2462 = vst.msk [vmem:[%s223 + $0x190] sm:$0xf] %vm2361, %v2205
      %2463 = vst.msk [vmem:[%s223 + $0x194] sm:$0xf] %vm2361, %v2206
      %2464 = vst.msk [vmem:[%s223 + $0x198] sm:$0xf] %vm2361, %v2207
      %2465 = vst.msk [vmem:[%s223 + $0x19c] sm:$0xf] %vm2361, %v2208
      %2466 = vst.msk [vmem:[%s223 + $0x1a0] sm:$0xf] %vm2361, %v2209
      %2467 = vst.msk [vmem:[%s223 + $0x1a4] sm:$0xf] %vm2361, %v2210
      %2468 = vst.msk [vmem:[%s223 + $0x1a8] sm:$0xf] %vm2361, %v2211
      %2469 = vst.msk [vmem:[%s223 + $0x1ac] sm:$0xf] %vm2361, %v2212
      %2470 = vst.msk [vmem:[%s223 + $0x1b0] sm:$0xf] %vm2361, %v2213
      %2471 = vst.msk [vmem:[%s223 + $0x1b4] sm:$0xf] %vm2361, %v2214
      %2472 = vst.msk [vmem:[%s223 + $0x1b8] sm:$0xf] %vm2361, %v2215
      %2473 = vst.msk [vmem:[%s223 + $0x1bc] sm:$0xf] %vm2361, %v2216
      %2474 = vst.msk [vmem:[%s223 + $0x1c0] sm:$0xf] %vm2361, %v2217
      %2475 = vst.msk [vmem:[%s223 + $0x1c4] sm:$0xf] %vm2361, %v2218
      %2476 = vst.msk [vmem:[%s223 + $0x1c8] sm:$0xf] %vm2361, %v2219
      %2477 = vst.msk [vmem:[%s223 + $0x1cc] sm:$0xf] %vm2361, %v2220
      %2478 = vst.msk [vmem:[%s223 + $0x1d0] sm:$0xf] %vm2361, %v2221
      %2479 = vst.msk [vmem:[%s223 + $0x1d4] sm:$0xf] %vm2361, %v2222
      %2480 = vst.msk [vmem:[%s223 + $0x1d8] sm:$0xf] %vm2361, %v2223
      %2481 = vst.msk [vmem:[%s223 + $0x1dc] sm:$0xf] %vm2361, %v2224
      %2482 = vst.msk [vmem:[%s223 + $0x1e0] sm:$0xf] %vm2361, %v2225
      %2483 = vst.msk [vmem:[%s223 + $0x1e4] sm:$0xf] %vm2361, %v2226
      %2484 = vst.msk [vmem:[%s223 + $0x1e8] sm:$0xf] %vm2361, %v2227
      %2485 = vst.msk [vmem:[%s223 + $0x1ec] sm:$0xf] %vm2361, %v2228
      %2486 = vst.msk [vmem:[%s223 + $0x1f0] sm:$0xf] %vm2361, %v2229
      %2487 = vst.msk [vmem:[%s223 + $0x1f4] sm:$0xf] %vm2361, %v2230
      %2488 = vst.msk [vmem:[%s223 + $0x1f8] sm:$0xf] %vm2361, %v2231
      %2489 = vst.msk [vmem:[%s223 + $0x1fc] sm:$0xf] %vm2361, %v2232
      %s2490 = smul.u32 128, %s18
      %p2491 = scmp.lt.s32.totalorder %s2490, 255
      %s2492 = scalar_select %p2491, %s2490, 255
      %p2493 = scmp.lt.s32.totalorder %s19, 0
      %s2494 = scalar_select %p2493, %s19, 0
      %s2495 = sadd.s32 %s2494, %s2492
      %s2496 = smul.addr %s2495, 4
      %s2497 = scalar_lea.vmem %s3, %s2496
      // Predicated region
      $region33: #{discriminator_forward.8} parent=31 // pred_check
        %p2498 = pneg %p124
      $region34: #{discriminator_forward.8} parent=31 // pred_check_branch
        %2500 = sbr.rel (%p2498) target = $region36
      $region35: #{discriminator_forward.8} parent=31 // pred_region
        %s2501 = smul.u32 128, %s18
      $region36: #{discriminator_forward.8} parent=31 // pred_fallthru
        _
    $region32: #{discriminator_forward.8} parent=5 // pred_fallthru
      _
    %p2502 = scmp.le.s32.totalorder 2, %s9
    // Predicated region
    $region37: #{discriminator_forward.8} parent=5 // pred_check
      %p2503 = pneg %p2502
    $region38: #{discriminator_forward.8} parent=5 // pred_check_branch
      %2505 = sbr.rel (%p2503) target = $region40
    $region39: #{discriminator_forward.8} parent=5 // pred_region
      %s2506 = ssub.s32 %s9, 2
      // Predicated region
      $region41: #{discriminator_forward.8} parent=39 // pred_check
        %p2507 = pneg %p130
      $region42: #{discriminator_forward.8} parent=39 // pred_check_branch
        %2509 = sbr.rel (%p2507) target = $region44
      $region43: #{discriminator_forward.8} parent=39 // pred_region
        %s2510 = smul.u32 128, %s20
        %p2511 = scmp.lt.s32.totalorder %s2510, 255
        %s2512 = scalar_select %p2511, %s2510, 255
        %p2513 = scmp.lt.s32.totalorder %s21, 0
        %s2514 = scalar_select %p2513, %s21, 0
        %s2515 = sadd.s32 %s2514, %s2512
        %s2516 = smul.addr %s2515, 4
        %s2517 = scalar_lea.vmem %s3, %s2516
      $region44: #{discriminator_forward.8} parent=39 // pred_fallthru
        _
    $region40: #{discriminator_forward.8} parent=5 // pred_fallthru
      _
  $region6: #{discriminator_forward.8} parent=0 // loop_footer
    %s13 = sadd.s32 1, %s9
  $region7: #{discriminator_forward.8} parent=0 // loop_footer_branch
    %8 = sbr.rel target = $region3
  $region8: #{discriminator_forward.8} parent=0 // loop_exit
    _

// kernel: discriminator_forward.9
$region0: #{discriminator_forward.9}
  #allocation0 [shape = 'u32[]', space=smem, size = 0x4, offset = 0x4, fixed_abs, tag = 'smem constant byte address 0x4 - core index']
  #allocation1 [shape = 'u32[144,128]{1,0:T(1,128)}', space=vmem, size = 0x12000, scoped, tag = 'internal scratch']
  %s0 = inlined_call_operand.vmem [shape: bf16[512,200], index: 0, kind: input, shape index: {}]
  %s1 = inlined_call_operand.vmem [shape: bf16[200,16], index: 1, kind: input, shape index: {}]
  %s2 = inlined_call_operand.vmem [shape: bf16[512,16], index: 2, kind: output, shape index: {0}]
  %s3 = inlined_call_operand.vmem [shape: f32[16,16], index: 3, kind: output, shape index: {1}]
  %s4 = inlined_call_operand.vmem [shape: f32[16,16], index: 4, kind: output, shape index: {2}]
  %5 = xla_tuple %s2, %s3, %s4
  %s6 = sld [smem:[#allocation0]]
  $region57: #{discriminator_forward.9} parent=0
    _
  %s8 = ssub.s32 1, %s6
  %s9 = scalar_select 0, %s8, %s6
  loop: start=0, step=1, limit=4
  $region2: #{discriminator_forward.9} parent=0 // loop_pre_header
    _
  $region3: #{discriminator_forward.9} parent=0 // loop_header
    %s11 = sphi 0, %s15
    %p12 = scmp.ge.s32.totalorder %s11, 4
    %s18 = sphi 0, %s30
    %s19 = sphi 0, %s26
    %s20 = sphi 0, %s18
    %s21 = sphi 0, %s19
    %s22 = sphi 0, %s20
    %s23 = sphi 0, %s21
    %s33 = sphi 0, %s35
    %s36 = sphi 0, %s33
    %s37 = sphi 0, %s36
    %s53 = sphi 0, %s37
    %s59 = sphi 0, %s61
    %s62 = sphi 0, %s59
    %s63 = sphi 0, %s62
    %s79 = sphi 0, %s63
    %s87 = sphi 0, %s89
    %s90 = sphi 0, %s87
    %s91 = sphi 0, %s90
    %s107 = sphi 0, %s91
    %s115 = sphi 0, %s117
    %s118 = sphi 0, %s115
    %s119 = sphi 0, %s118
    %s135 = sphi 0, %s119
    %s143 = sphi 0, %s145
    %s146 = sphi 0, %s143
    %s147 = sphi 0, %s146
    %s163 = sphi 0, %s147
  $region4: #{discriminator_forward.9} parent=0 // loop_header_branch
    %14 = sbr.rel (%p12) target = $region8
  $region5: #{discriminator_forward.9} parent=0 // loop_body
    %s16 = ssub.s32 %s11, 1
    %s17 = ssub.s32 %s11, 2
    %s24 = sadd.s32 1, %s19
    %p25 = scmp.ge.s32.totalorder %s24, 1
    %s26 = scalar_select %p25, 0, %s24
    %s27 = sadd.s32 1, %s18
    %s28 = scalar_select %p25, %s27, %s18
    %p29 = scmp.ge.s32.totalorder %s28, 2
    %s30 = scalar_select %p29, 0, %s28
    %s31 = ssub.s32 %s18, %s30
    %p32 = scmp.eq.s32.totalorder %s31, 0
    %s34 = sadd.s32 %s33, 1
    %s35 = scalar_select %p32, %s33, %s34
    %p38 = pneg %p32
    %p39 = scmp.eq.s32.totalorder %s11, 1
    %p40 = por %p38, %p39
    %p41 = scmp.ne.s32.totalorder %s33, %s36
    %p42 = scmp.eq.s32.totalorder %s11, 0
    %p43 = por %p41, %p42
    %p44 = scmp.ne.s32.totalorder %s33, %s36
    %p45 = scmp.eq.s32.totalorder %s16, 1
    %p46 = por %p44, %p45
    %p47 = scmp.ne.s32.totalorder %s36, %s37
    %p48 = scmp.eq.s32.totalorder %s16, 0
    %p49 = por %p47, %p48
    %p50 = scmp.ne.s32.totalorder %s36, %s37
    %p51 = scmp.eq.s32.totalorder %s17, 1
    %p52 = por %p50, %p51
    %p54 = scmp.ne.s32.totalorder %s37, %s53
    %p55 = scmp.eq.s32.totalorder %s17, 0
    %p56 = por %p54, %p55
    %s57 = ssub.s32 %s19, %s26
    %p58 = scmp.eq.s32.totalorder %s57, 0
    %s60 = sadd.s32 %s59, 1
    %s61 = scalar_select %p58, %s59, %s60
    %p64 = pneg %p58
    %p65 = scmp.eq.s32.totalorder %s11, 1
    %p66 = por %p64, %p65
    %p67 = scmp.ne.s32.totalorder %s59, %s62
    %p68 = scmp.eq.s32.totalorder %s11, 0
    %p69 = por %p67, %p68
    %p70 = scmp.ne.s32.totalorder %s59, %s62
    %p71 = scmp.eq.s32.totalorder %s16, 1
    %p72 = por %p70, %p71
    %p73 = scmp.ne.s32.totalorder %s62, %s63
    %p74 = scmp.eq.s32.totalorder %s16, 0
    %p75 = por %p73, %p74
    %p76 = scmp.ne.s32.totalorder %s62, %s63
    %p77 = scmp.eq.s32.totalorder %s17, 1
    %p78 = por %p76, %p77
    %p80 = scmp.ne.s32.totalorder %s63, %s79
    %p81 = scmp.eq.s32.totalorder %s17, 0
    %p82 = por %p80, %p81
    %s83 = ssub.s32 %s18, %s30
    %s84 = ssub.s32 %s19, %s26
    %s85 = sor.u32 %s83, %s84
    %p86 = scmp.eq.s32.totalorder %s85, 0
    %s88 = sadd.s32 %s87, 1
    %s89 = scalar_select %p86, %s87, %s88
    %p92 = pneg %p86
    %p93 = scmp.eq.s32.totalorder %s11, 1
    %p94 = por %p92, %p93
    %p95 = scmp.ne.s32.totalorder %s87, %s90
    %p96 = scmp.eq.s32.totalorder %s11, 0
    %p97 = por %p95, %p96
    %p98 = scmp.ne.s32.totalorder %s87, %s90
    %p99 = scmp.eq.s32.totalorder %s16, 1
    %p100 = por %p98, %p99
    %p101 = scmp.ne.s32.totalorder %s90, %s91
    %p102 = scmp.eq.s32.totalorder %s16, 0
    %p103 = por %p101, %p102
    %p104 = scmp.ne.s32.totalorder %s90, %s91
    %p105 = scmp.eq.s32.totalorder %s17, 1
    %p106 = por %p104, %p105
    %p108 = scmp.ne.s32.totalorder %s91, %s107
    %p109 = scmp.eq.s32.totalorder %s17, 0
    %p110 = por %p108, %p109
    %s111 = ssub.s32 %s18, %s30
    %s112 = ssub.s32 %s19, %s26
    %s113 = sor.u32 %s111, %s112
    %p114 = scmp.eq.s32.totalorder %s113, 0
    %s116 = sadd.s32 %s115, 1
    %s117 = scalar_select %p114, %s115, %s116
    %p120 = pneg %p114
    %p121 = scmp.eq.s32.totalorder %s11, 1
    %p122 = por %p120, %p121
    %p123 = scmp.ne.s32.totalorder %s115, %s118
    %p124 = scmp.eq.s32.totalorder %s11, 0
    %p125 = por %p123, %p124
    %p126 = scmp.ne.s32.totalorder %s115, %s118
    %p127 = scmp.eq.s32.totalorder %s16, 1
    %p128 = por %p126, %p127
    %p129 = scmp.ne.s32.totalorder %s118, %s119
    %p130 = scmp.eq.s32.totalorder %s16, 0
    %p131 = por %p129, %p130
    %p132 = scmp.ne.s32.totalorder %s118, %s119
    %p133 = scmp.eq.s32.totalorder %s17, 1
    %p134 = por %p132, %p133
    %p136 = scmp.ne.s32.totalorder %s119, %s135
    %p137 = scmp.eq.s32.totalorder %s17, 0
    %p138 = por %p136, %p137
    %s139 = ssub.s32 %s18, %s30
    %s140 = ssub.s32 %s19, %s26
    %s141 = sor.u32 %s139, %s140
    %p142 = scmp.eq.s32.totalorder %s141, 0
    %s144 = sadd.s32 %s143, 1
    %s145 = scalar_select %p142, %s143, %s144
    %p148 = pneg %p142
    %p149 = scmp.eq.s32.totalorder %s11, 1
    %p150 = por %p148, %p149
    %p151 = scmp.ne.s32.totalorder %s143, %s146
    %p152 = scmp.eq.s32.totalorder %s11, 0
    %p153 = por %p151, %p152
    %p154 = scmp.ne.s32.totalorder %s143, %s146
    %p155 = scmp.eq.s32.totalorder %s16, 1
    %p156 = por %p154, %p155
    %p157 = scmp.ne.s32.totalorder %s146, %s147
    %p158 = scmp.eq.s32.totalorder %s16, 0
    %p159 = por %p157, %p158
    %p160 = scmp.ne.s32.totalorder %s146, %s147
    %p161 = scmp.eq.s32.totalorder %s17, 1
    %p162 = por %p160, %p161
    %p164 = scmp.ne.s32.totalorder %s147, %s163
    %p165 = scmp.eq.s32.totalorder %s17, 0
    %p166 = por %p164, %p165
    %p167 = scmp.le.s32.totalorder 1, %s11
    %p168 = scmp.lt.s32.totalorder %s11, 3
    %p169 = pnand %p167, %p168
    %p170 = pneg %p169
    // Predicated region
    $region9: #{discriminator_forward.9} parent=5 // pred_check
      _
    $region10: #{discriminator_forward.9} parent=5 // pred_check_branch
      %172 = sbr.rel (%p169) target = $region12
    $region11: #{discriminator_forward.9} parent=5 // pred_region
      %s173 = ssub.s32 %s11, 1
      // Predicated region
      $region13: #{discriminator_forward.9} parent=11 // pred_check
        %p174 = pneg %p75
      $region14: #{discriminator_forward.9} parent=11 // pred_check_branch
        %176 = sbr.rel (%p174) target = $region16
      $region15: #{discriminator_forward.9} parent=11 // pred_region
        %p177 = scmp.lt.s32.totalorder %s21, 0
        %s178 = scalar_select %p177, %s21, 0
        %s179 = smul.addr %s178, 4
        %s180 = scalar_lea.vmem %s1, %s179
      $region16: #{discriminator_forward.9} parent=11 // pred_fallthru
        _
    $region12: #{discriminator_forward.9} parent=5 // pred_fallthru
      _
    %p181 = scmp.lt.s32.totalorder %s11, 2
    // Predicated region
    $region17: #{discriminator_forward.9} parent=5 // pred_check
      %p182 = pneg %p181
    $region18: #{discriminator_forward.9} parent=5 // pred_check_branch
      %184 = sbr.rel (%p182) target = $region20
    $region19: #{discriminator_forward.9} parent=5 // pred_region
      // Predicated region
      $region21: #{discriminator_forward.9} parent=19 // pred_check
        %p185 = pneg %p43
      $region22: #{discriminator_forward.9} parent=19 // pred_check_branch
        %187 = sbr.rel (%p185) target = $region24
      $region23: #{discriminator_forward.9} parent=19 // pred_region
        %s188 = smul.u32 32, %s18
        %p189 = scmp.lt.s32.totalorder %s188, 63
        %s190 = scalar_select %p189, %s188, 63
        %s191 = smul.addr %s190, 2
        %s192 = smul.addr %s191, 4
        %s193 = scalar_lea.vmem %s0, %s192
        %s194 = smul.u32 32, %s18
      $region24: #{discriminator_forward.9} parent=19 // pred_fallthru
        _
    $region20: #{discriminator_forward.9} parent=5 // pred_fallthru
      _
    %p195 = scmp.le.s32.totalorder 1, %s11
    %p196 = scmp.lt.s32.totalorder %s11, 3
    %p197 = pnand %p195, %p196
    %p198 = pneg %p197
    // Predicated region
    $region25: #{discriminator_forward.9} parent=5 // pred_check
      _
    $region26: #{discriminator_forward.9} parent=5 // pred_check_branch
      %200 = sbr.rel (%p197) target = $region28
    $region27: #{discriminator_forward.9} parent=5 // pred_region
      %s201 = ssub.s32 %s11, 1
      %s202 = smul.u32 32, %s20
      %p203 = scmp.lt.s32.totalorder %s202, 63
      %s204 = scalar_select %p203, %s202, 63
      %s205 = smul.addr %s204, 2
      %s206 = smul.addr %s205, 4
      %s207 = scalar_lea.vmem %s0, %s206
      %p208 = pneg %p49
      %p209 = pneg %p46
      %p210 = scmp.lt.s32.totalorder %s21, 0
      %s211 = scalar_select %p210, %s21, 0
      %s212 = smul.addr %s211, 4
      %s213 = scalar_lea.vmem %s1, %s212
      %p214 = pneg %p75
      %p215 = pneg %p72
      %p216 = pneg %p103
      %p217 = pneg %p100
      %s218 = smul.u32 32, %s20
      %p219 = scmp.lt.s32.totalorder %s218, 63
      %s220 = scalar_select %p219, %s218, 63
      %p221 = scmp.lt.s32.totalorder %s21, 0
      %s222 = scalar_select %p221, %s21, 0
      %s223 = sadd.s32 %s222, %s220
      %s224 = smul.addr %s223, 4
      %s225 = scalar_lea.vmem %s2, %s224
      %p226 = pneg %p131
      %p227 = pneg %p128
      %p228 = scmp.lt.s32.totalorder %s20, 1
      %s229 = scalar_select %p228, %s20, 1
      %p230 = scmp.lt.s32.totalorder %s21, 0
      %s231 = scalar_select %p230, %s21, 0
      %s232 = sadd.s32 %s231, %s229
      %s233 = smul.addr %s232, 8
      %s234 = scalar_lea.vmem %s3, %s233
      %p235 = pneg %p159
      %p236 = pneg %p156
      %p237 = scmp.lt.s32.totalorder %s20, 1
      %s238 = scalar_select %p237, %s20, 1
      %p239 = scmp.lt.s32.totalorder %s21, 0
      %s240 = scalar_select %p239, %s21, 0
      %s241 = sadd.s32 %s240, %s238
      %s242 = smul.addr %s241, 8
      %s243 = scalar_lea.vmem %s4, %s242
      %s244 = smul.u32 32, %s20
      %p245 = scmp.lt.s32.totalorder %s244, 63
      %s246 = scalar_select %p245, %s244, 63
      %s247 = smul.addr %s246, 2
      %s248 = smul.addr %s247, 4
      %s249 = scalar_lea.vmem %s0, %s248
      %s250 = smul.u32 32, %s20
      %p251 = scmp.lt.s32.totalorder %s21, 0
      %s252 = scalar_select %p251, %s21, 0
      %s253 = smul.addr %s252, 4
      %s254 = scalar_lea.vmem %s1, %s253
      %s255 = smul.u32 32, %s20
      %p256 = scmp.lt.s32.totalorder %s255, 63
      %s257 = scalar_select %p256, %s255, 63
      %p258 = scmp.lt.s32.totalorder %s21, 0
      %s259 = scalar_select %p258, %s21, 0
      %s260 = sadd.s32 %s259, %s257
      %s261 = smul.addr %s260, 4
      %s262 = scalar_lea.vmem %s2, %s261
      %s263 = smul.u32 32, %s20
      %p264 = scmp.lt.s32.totalorder %s20, 1
      %s265 = scalar_select %p264, %s20, 1
      %p266 = scmp.lt.s32.totalorder %s21, 0
      %s267 = scalar_select %p266, %s21, 0
      %s268 = sadd.s32 %s267, %s265
      %s269 = smul.addr %s268, 8
      %s270 = scalar_lea.vmem %s3, %s269
      %p271 = scmp.lt.s32.totalorder %s20, 1
      %s272 = scalar_select %p271, %s20, 1
      %p273 = scmp.lt.s32.totalorder %s21, 0
      %s274 = scalar_select %p273, %s21, 0
      %s275 = sadd.s32 %s274, %s272
      %s276 = smul.addr %s275, 8
      %s277 = scalar_lea.vmem %s4, %s276
      %v279 = vld [vmem:[%s249] sm:$0xff]
      %v280 = vld [vmem:[%s249 + $0x8] sm:$0xff]
      %v281 = vld [vmem:[%s249 + $0x10] sm:$0xff]
      %v282 = vld [vmem:[%s249 + $0x18] sm:$0xff]
      %v283 = vld [vmem:[%s249 + $0x20] sm:$0xff]
      %v284 = vld [vmem:[%s249 + $0x28] sm:$0xff]
      %v285 = vld [vmem:[%s249 + $0x30] sm:$0xff]
      %v286 = vld [vmem:[%s249 + $0x38] sm:$0xff]
      %v287 = vld [vmem:[%s249 + $0x40] sm:$0xff]
      %v288 = vld [vmem:[%s249 + $0x48] sm:$0xff]
      %v289 = vld [vmem:[%s249 + $0x50] sm:$0xff]
      %v290 = vld [vmem:[%s249 + $0x58] sm:$0xff]
      %v291 = vld [vmem:[%s249 + $0x60] sm:$0xff]
      %v292 = vld [vmem:[%s249 + $0x68] sm:$0xff]
      %v293 = vld [vmem:[%s249 + $0x70] sm:$0xff]
      %v294 = vld [vmem:[%s249 + $0x78] sm:$0xff]
      %v295 = vld [vmem:[%s249 + $0x80] sm:$0xff]
      %v296 = vld [vmem:[%s249 + $0x88] sm:$0xff]
      %v297 = vld [vmem:[%s249 + $0x90] sm:$0xff]
      %v298 = vld [vmem:[%s249 + $0x98] sm:$0xff]
      %v299 = vld [vmem:[%s249 + $0xa0] sm:$0xff]
      %v300 = vld [vmem:[%s249 + $0xa8] sm:$0xff]
      %v301 = vld [vmem:[%s249 + $0xb0] sm:$0xff]
      %v302 = vld [vmem:[%s249 + $0xb8] sm:$0xff]
      %v303 = vld [vmem:[%s249 + $0xc0] sm:$0xff]
      %v304 = vld [vmem:[%s249 + $0xc8] sm:$0xff]
      %v305 = vld [vmem:[%s249 + $0xd0] sm:$0xff]
      %v306 = vld [vmem:[%s249 + $0xd8] sm:$0xff]
      %v307 = vld [vmem:[%s249 + $0xe0] sm:$0xff]
      %v308 = vld [vmem:[%s249 + $0xe8] sm:$0xff]
      %v309 = vld [vmem:[%s249 + $0xf0] sm:$0xff]
      %v310 = vld [vmem:[%s249 + $0xf8] sm:$0xff]
      %v311 = vld [vmem:[%s254] sm:$0xf]
      %v312 = vld [vmem:[%s254 + $0x4] sm:$0xf]
      %v313 = vld [vmem:[%s254 + $0x8] sm:$0xf]
      %v314 = vld [vmem:[%s254 + $0xc] sm:$0xf]
      %v315 = vld [vmem:[%s254 + $0x10] sm:$0xf]
      %v316 = vld [vmem:[%s254 + $0x14] sm:$0xf]
      %v317 = vld [vmem:[%s254 + $0x18] sm:$0xf]
      %v318 = vld [vmem:[%s254 + $0x1c] sm:$0xf]
      %v319 = vld [vmem:[%s254 + $0x20] sm:$0xf]
      %v320 = vld [vmem:[%s254 + $0x24] sm:$0xf]
      %v321 = vld [vmem:[%s254 + $0x28] sm:$0xf]
      %v322 = vld [vmem:[%s254 + $0x2c] sm:$0xf]
      %v323 = vld [vmem:[%s254 + $0x30] sm:$0xf]
      %v324 = vld [vmem:[%s254 + $0x34] sm:$0xf]
      %v325 = vld [vmem:[%s254 + $0x38] sm:$0xf]
      %v326 = vld [vmem:[%s254 + $0x3c] sm:$0xf]
      %v327 = vld [vmem:[%s254 + $0x40] sm:$0xf]
      %v328 = vld [vmem:[%s254 + $0x44] sm:$0xf]
      %v329 = vld [vmem:[%s254 + $0x48] sm:$0xf]
      %v330 = vld [vmem:[%s254 + $0x4c] sm:$0xf]
      %v331 = vld [vmem:[%s254 + $0x50] sm:$0xf]
      %v332 = vld [vmem:[%s254 + $0x54] sm:$0xf]
      %v333 = vld [vmem:[%s254 + $0x58] sm:$0xf]
      %v334 = vld [vmem:[%s254 + $0x5c] sm:$0xf]
      %v335 = vld [vmem:[%s254 + $0x60] sm:$0xf]
      %v368 = vunpack.c.l.b16 %v279
      %v369 = vunpack.c.h.b16 %v279
      %v370 = vunpack.c.l.b16 %v280
      %v371 = vunpack.c.h.b16 %v280
      %v372 = vunpack.c.l.b16 %v281
      %v373 = vunpack.c.h.b16 %v281
      %v374 = vunpack.c.l.b16 %v282
      %v375 = vunpack.c.h.b16 %v282
      %v376 = vunpack.c.l.b16 %v283
      %v377 = vunpack.c.h.b16 %v283
      %v378 = vunpack.c.l.b16 %v284
      %v379 = vunpack.c.h.b16 %v284
      %v380 = vunpack.c.l.b16 %v285
      %v381 = vunpack.c.h.b16 %v285
      %v382 = vunpack.c.l.b16 %v286
      %v383 = vunpack.c.h.b16 %v286
      %v384 = vunpack.c.l.b16 %v287
      %v385 = vunpack.c.h.b16 %v287
      %v386 = vunpack.c.l.b16 %v288
      %v387 = vunpack.c.h.b16 %v288
      %v388 = vunpack.c.l.b16 %v289
      %v389 = vunpack.c.h.b16 %v289
      %v390 = vunpack.c.l.b16 %v290
      %v391 = vunpack.c.h.b16 %v290
      %v392 = vunpack.c.l.b16 %v291
      %v393 = vunpack.c.h.b16 %v291
      %v394 = vunpack.c.l.b16 %v292
      %v395 = vunpack.c.h.b16 %v292
      %v396 = vunpack.c.l.b16 %v293
      %v397 = vunpack.c.h.b16 %v293
      %v398 = vunpack.c.l.b16 %v294
      %v399 = vunpack.c.h.b16 %v294
      %v400 = vunpack.c.l.b16 %v295
      %v401 = vunpack.c.h.b16 %v295
      %v402 = vunpack.c.l.b16 %v296
      %v403 = vunpack.c.h.b16 %v296
      %v404 = vunpack.c.l.b16 %v297
      %v405 = vunpack.c.h.b16 %v297
      %v406 = vunpack.c.l.b16 %v298
      %v407 = vunpack.c.h.b16 %v298
      %v408 = vunpack.c.l.b16 %v299
      %v409 = vunpack.c.h.b16 %v299
      %v410 = vunpack.c.l.b16 %v300
      %v411 = vunpack.c.h.b16 %v300
      %v412 = vunpack.c.l.b16 %v301
      %v413 = vunpack.c.h.b16 %v301
      %v414 = vunpack.c.l.b16 %v302
      %v415 = vunpack.c.h.b16 %v302
      %v416 = vunpack.c.l.b16 %v303
      %v417 = vunpack.c.h.b16 %v303
      %v418 = vunpack.c.l.b16 %v304
      %v419 = vunpack.c.h.b16 %v304
      %v420 = vunpack.c.l.b16 %v305
      %v421 = vunpack.c.h.b16 %v305
      %v422 = vunpack.c.l.b16 %v306
      %v423 = vunpack.c.h.b16 %v306
      %v424 = vunpack.c.l.b16 %v307
      %v425 = vunpack.c.h.b16 %v307
      %v426 = vunpack.c.l.b16 %v308
      %v427 = vunpack.c.h.b16 %v308
      %v428 = vunpack.c.l.b16 %v309
      %v429 = vunpack.c.h.b16 %v309
      %v430 = vunpack.c.l.b16 %v310
      %v431 = vunpack.c.h.b16 %v310
      %v432 = vpack.c.b16 %v370, %v368
      %v433 = vpack.c.b16 %v371, %v369
      %v434 = vpack.c.b16 %v374, %v372
      %v435 = vpack.c.b16 %v375, %v373
      %v436 = vpack.c.b16 %v378, %v376
      %v437 = vpack.c.b16 %v379, %v377
      %v438 = vpack.c.b16 %v382, %v380
      %v439 = vpack.c.b16 %v383, %v381
      %v440 = vpack.c.b16 %v386, %v384
      %v441 = vpack.c.b16 %v387, %v385
      %v442 = vpack.c.b16 %v390, %v388
      %v443 = vpack.c.b16 %v391, %v389
      %v444 = vpack.c.b16 %v394, %v392
      %v445 = vpack.c.b16 %v395, %v393
      %v446 = vpack.c.b16 %v398, %v396
      %v447 = vpack.c.b16 %v399, %v397
      %v448 = vpack.c.b16 %v402, %v400
      %v449 = vpack.c.b16 %v403, %v401
      %v450 = vpack.c.b16 %v406, %v404
      %v451 = vpack.c.b16 %v407, %v405
      %v452 = vpack.c.b16 %v410, %v408
      %v453 = vpack.c.b16 %v411, %v409
      %v454 = vpack.c.b16 %v414, %v412
      %v455 = vpack.c.b16 %v415, %v413
      %v456 = vpack.c.b16 %v418, %v416
      %v457 = vpack.c.b16 %v419, %v417
      %v458 = vpack.c.b16 %v422, %v420
      %v459 = vpack.c.b16 %v423, %v421
      %v460 = vpack.c.b16 %v426, %v424
      %v461 = vpack.c.b16 %v427, %v425
      %v462 = vpack.c.b16 %v430, %v428
      %v463 = vpack.c.b16 %v431, %v429
      %v505 = vunpack.c.l.b16 %v311
      %v506 = vunpack.c.l.b16 %v312
      %v507 = vunpack.c.l.b16 %v313
      %v508 = vunpack.c.l.b16 %v314
      %v509 = vunpack.c.l.b16 %v315
      %v510 = vunpack.c.l.b16 %v316
      %v511 = vunpack.c.l.b16 %v317
      %v512 = vunpack.c.l.b16 %v318
      %v513 = vunpack.c.l.b16 %v319
      %v514 = vunpack.c.l.b16 %v320
      %v515 = vunpack.c.l.b16 %v321
      %v516 = vunpack.c.l.b16 %v322
      %v517 = vunpack.c.l.b16 %v323
      %v518 = vunpack.c.l.b16 %v324
      %v519 = vunpack.c.l.b16 %v325
      %v520 = vunpack.c.l.b16 %v326
      %v521 = vunpack.c.l.b16 %v327
      %v522 = vunpack.c.l.b16 %v328
      %v523 = vunpack.c.l.b16 %v329
      %v524 = vunpack.c.l.b16 %v330
      %v525 = vunpack.c.l.b16 %v331
      %v526 = vunpack.c.l.b16 %v332
      %v527 = vunpack.c.l.b16 %v333
      %v528 = vunpack.c.l.b16 %v334
      %v529 = vunpack.c.l.b16 %v335
      %v530 = vpack.c.b16 %v506, %v505
      %v531 = vpack.c.b16 %v508, %v507
      %v532 = vpack.c.b16 %v510, %v509
      %v533 = vpack.c.b16 %v512, %v511
      %v534 = vpack.c.b16 %v514, %v513
      %v535 = vpack.c.b16 %v516, %v515
      %v536 = vpack.c.b16 %v518, %v517
      %v537 = vpack.c.b16 %v520, %v519
      %v538 = vpack.c.b16 %v522, %v521
      %v539 = vpack.c.b16 %v524, %v523
      %v540 = vpack.c.b16 %v526, %v525
      %v541 = vpack.c.b16 %v528, %v527
      %v542 = vpack.c.b16 %v529, %v529
      %vm555 = vcmask 588800
      %v557 = vsel %vm555, %v433, 0
      %v560 = vsel %vm555, %v435, 0
      %v563 = vsel %vm555, %v437, 0
      %v566 = vsel %vm555, %v439, 0
      %v569 = vsel %vm555, %v441, 0
      %v572 = vsel %vm555, %v443, 0
      %v575 = vsel %vm555, %v445, 0
      %v578 = vsel %vm555, %v447, 0
      %v581 = vsel %vm555, %v449, 0
      %v584 = vsel %vm555, %v451, 0
      %v587 = vsel %vm555, %v453, 0
      %v590 = vsel %vm555, %v455, 0
      %v593 = vsel %vm555, %v457, 0
      %v596 = vsel %vm555, %v459, 0
      %v599 = vsel %vm555, %v461, 0
      %v602 = vsel %vm555, %v463, 0
      %vm604 = vcmask 1043456
      %v606 = vsel %vm604, %v542, 0
      %608 = vmatprep.subr.bf16.mxu0 0
      %609 = vmatpush1.bf16.msra.mxu0 %v530
      %610 = vmatprep.subr.bf16.mxu0 0
      %611 = vmatpush1.bf16.msra.mxu0 %v531
      %612 = vmatprep.subr.bf16.mxu0 0
      %613 = vmatpush1.bf16.msra.mxu0 %v532
      %614 = vmatprep.subr.bf16.mxu0 0
      %615 = vmatpush1.bf16.msra.mxu0 %v533
      %616 = vmatprep.subr.bf16.mxu0 0
      %617 = vmatpush1.bf16.msra.mxu0 %v534
      %618 = vmatprep.subr.bf16.mxu0 0
      %619 = vmatpush1.bf16.msra.mxu0 %v535
      %620 = vmatprep.subr.bf16.mxu0 0
      %621 = vmatpush1.bf16.msra.mxu0 %v536
      %622 = vmatprep.subr.bf16.mxu0 0
      %623 = vmatpush1.bf16.msra.mxu0 %v537
      %624 = vmatprep.subr.bf16.mxu0 0
      %625 = vmatpush1.bf16.msra.mxu0 %v538
      %626 = vmatprep.subr.bf16.mxu0 0
      %627 = vmatpush1.bf16.msra.mxu0 %v539
      %628 = vmatprep.subr.bf16.mxu0 0
      %629 = vmatpush1.bf16.msra.mxu0 %v540
      %630 = vmatprep.subr.bf16.mxu0 0
      %631 = vmatpush1.bf16.msra.mxu0 %v541
      %632 = vmatprep.subr.bf16.mxu0 0
      %633 = vmatpush1.bf16.msra.mxu0 %v606
      %634 = vmatprep.subr.bf16.mxu0 0
      %635 = vmatpush1.bf16.msra.mxu0 0
      %636 = vmatprep.subr.bf16.mxu0 0
      %637 = vmatpush1.bf16.msra.mxu0 0
      %638 = vmatprep.subr.bf16.mxu0 0
      %639 = vmatpush1.bf16.msra.mxu0 0
      %640 = vmatprep.mubr.bf16.mxu0 %v557
      %641 = vmatmul.mubr.bf16.gmra.mrb[0].mxu0 %v432
      %v642 = vpop.f32.mrb[0].mxu0
      %v643 = vadd.f32 0.0, %v642
      %v644 = vpop.f32.mrb[0].mxu0
      %v645 = vpop.f32.mrb[0].mxu0
      %v646 = vadd.f32 0.0, %v645
      %v647 = vpop.f32.mrb[0].mxu0
      %648 = vmatprep.mubr.bf16.mxu0 %v560
      %649 = vmatmul.mubr.bf16.gmra.mrb[0].mxu0 %v434
      %v650 = vpop.f32.mrb[0].mxu0
      %v651 = vadd.f32 0.0, %v650
      %v652 = vpop.f32.mrb[0].mxu0
      %v653 = vpop.f32.mrb[0].mxu0
      %v654 = vadd.f32 0.0, %v653
      %v655 = vpop.f32.mrb[0].mxu0
      %656 = vmatprep.mubr.bf16.mxu0 %v563
      %657 = vmatmul.mubr.bf16.gmra.mrb[0].mxu0 %v436
      %v658 = vpop.f32.mrb[0].mxu0
      %v659 = vadd.f32 0.0, %v658
      %v660 = vpop.f32.mrb[0].mxu0
      %v661 = vpop.f32.mrb[0].mxu0
      %v662 = vadd.f32 0.0, %v661
      %v663 = vpop.f32.mrb[0].mxu0
      %664 = vmatprep.mubr.bf16.mxu0 %v566
      %665 = vmatmul.mubr.bf16.gmra.mrb[0].mxu0 %v438
      %v666 = vpop.f32.mrb[0].mxu0
      %v667 = vadd.f32 0.0, %v666
      %v668 = vpop.f32.mrb[0].mxu0
      %v669 = vpop.f32.mrb[0].mxu0
      %v670 = vadd.f32 0.0, %v669
      %v671 = vpop.f32.mrb[0].mxu0
      %672 = vmatprep.mubr.bf16.mxu0 %v569
      %673 = vmatmul.mubr.bf16.gmra.mrb[0].mxu0 %v440
      %v674 = vpop.f32.mrb[0].mxu0
      %v675 = vadd.f32 0.0, %v674
      %v676 = vpop.f32.mrb[0].mxu0
      %v677 = vpop.f32.mrb[0].mxu0
      %v678 = vadd.f32 0.0, %v677
      %v679 = vpop.f32.mrb[0].mxu0
      %680 = vmatprep.mubr.bf16.mxu0 %v572
      %681 = vmatmul.mubr.bf16.gmra.mrb[0].mxu0 %v442
      %v682 = vpop.f32.mrb[0].mxu0
      %v683 = vadd.f32 0.0, %v682
      %v684 = vpop.f32.mrb[0].mxu0
      %v685 = vpop.f32.mrb[0].mxu0
      %v686 = vadd.f32 0.0, %v685
      %v687 = vpop.f32.mrb[0].mxu0
      %688 = vmatprep.mubr.bf16.mxu0 %v575
      %689 = vmatmul.mubr.bf16.gmra.mrb[0].mxu0 %v444
      %v690 = vpop.f32.mrb[0].mxu0
      %v691 = vadd.f32 0.0, %v690
      %v692 = vpop.f32.mrb[0].mxu0
      %v693 = vpop.f32.mrb[0].mxu0
      %v694 = vadd.f32 0.0, %v693
      %v695 = vpop.f32.mrb[0].mxu0
      %696 = vmatprep.mubr.bf16.mxu0 %v578
      %697 = vmatmul.mubr.bf16.gmra.mrb[0].mxu0 %v446
      %v698 = vpop.f32.mrb[0].mxu0
      %v699 = vadd.f32 0.0, %v698
      %v700 = vpop.f32.mrb[0].mxu0
      %v701 = vpop.f32.mrb[0].mxu0
      %v702 = vadd.f32 0.0, %v701
      %v703 = vpop.f32.mrb[0].mxu0
      %704 = vmatprep.mubr.bf16.mxu0 %v581
      %705 = vmatmul.mubr.bf16.gmra.mrb[0].mxu0 %v448
      %v706 = vpop.f32.mrb[0].mxu0
      %v707 = vadd.f32 0.0, %v706
      %v708 = vpop.f32.mrb[0].mxu0
      %v709 = vpop.f32.mrb[0].mxu0
      %v710 = vadd.f32 0.0, %v709
      %v711 = vpop.f32.mrb[0].mxu0
      %712 = vmatprep.mubr.bf16.mxu0 %v584
      %713 = vmatmul.mubr.bf16.gmra.mrb[0].mxu0 %v450
      %v714 = vpop.f32.mrb[0].mxu0
      %v715 = vadd.f32 0.0, %v714
      %v716 = vpop.f32.mrb[0].mxu0
      %v717 = vpop.f32.mrb[0].mxu0
      %v718 = vadd.f32 0.0, %v717
      %v719 = vpop.f32.mrb[0].mxu0
      %720 = vmatprep.mubr.bf16.mxu0 %v587
      %721 = vmatmul.mubr.bf16.gmra.mrb[0].mxu0 %v452
      %v722 = vpop.f32.mrb[0].mxu0
      %v723 = vadd.f32 0.0, %v722
      %v724 = vpop.f32.mrb[0].mxu0
      %v725 = vpop.f32.mrb[0].mxu0
      %v726 = vadd.f32 0.0, %v725
      %v727 = vpop.f32.mrb[0].mxu0
      %728 = vmatprep.mubr.bf16.mxu0 %v590
      %729 = vmatmul.mubr.bf16.gmra.mrb[0].mxu0 %v454
      %v730 = vpop.f32.mrb[0].mxu0
      %v731 = vadd.f32 0.0, %v730
      %v732 = vpop.f32.mrb[0].mxu0
      %v733 = vpop.f32.mrb[0].mxu0
      %v734 = vadd.f32 0.0, %v733
      %v735 = vpop.f32.mrb[0].mxu0
      %736 = vmatprep.mubr.bf16.mxu0 %v593
      %737 = vmatmul.mubr.bf16.gmra.mrb[0].mxu0 %v456
      %v738 = vpop.f32.mrb[0].mxu0
      %v739 = vadd.f32 0.0, %v738
      %v740 = vpop.f32.mrb[0].mxu0
      %v741 = vpop.f32.mrb[0].mxu0
      %v742 = vadd.f32 0.0, %v741
      %v743 = vpop.f32.mrb[0].mxu0
      %744 = vmatprep.mubr.bf16.mxu0 %v596
      %745 = vmatmul.mubr.bf16.gmra.mrb[0].mxu0 %v458
      %v746 = vpop.f32.mrb[0].mxu0
      %v747 = vadd.f32 0.0, %v746
      %v748 = vpop.f32.mrb[0].mxu0
      %v749 = vpop.f32.mrb[0].mxu0
      %v750 = vadd.f32 0.0, %v749
      %v751 = vpop.f32.mrb[0].mxu0
      %752 = vmatprep.mubr.bf16.mxu0 %v599
      %753 = vmatmul.mubr.bf16.gmra.mrb[0].mxu0 %v460
      %v754 = vpop.f32.mrb[0].mxu0
      %v755 = vadd.f32 0.0, %v754
      %v756 = vpop.f32.mrb[0].mxu0
      %v757 = vpop.f32.mrb[0].mxu0
      %v758 = vadd.f32 0.0, %v757
      %v759 = vpop.f32.mrb[0].mxu0
      %760 = vmatprep.mubr.bf16.mxu0 %v602
      %761 = vmatmul.mubr.bf16.gmra.mrb[0].mxu0 %v462
      %v762 = vpop.f32.mrb[0].mxu0
      %v763 = vadd.f32 0.0, %v762
      %v764 = vpop.f32.mrb[0].mxu0
      %v765 = vpop.f32.mrb[0].mxu0
      %v766 = vadd.f32 0.0, %v765
      %v767 = vpop.f32.mrb[0].mxu0
      %768 = vdwg.mxu0
      %v769 = vpack.c.bf16 %v646, %v643
      %v770 = vpack.c.bf16 %v654, %v651
      %v771 = vpack.c.bf16 %v662, %v659
      %v772 = vpack.c.bf16 %v670, %v667
      %v773 = vpack.c.bf16 %v678, %v675
      %v774 = vpack.c.bf16 %v686, %v683
      %v775 = vpack.c.bf16 %v694, %v691
      %v776 = vpack.c.bf16 %v702, %v699
      %v777 = vpack.c.bf16 %v710, %v707
      %v778 = vpack.c.bf16 %v718, %v715
      %v779 = vpack.c.bf16 %v726, %v723
      %v780 = vpack.c.bf16 %v734, %v731
      %v781 = vpack.c.bf16 %v742, %v739
      %v782 = vpack.c.bf16 %v750, %v747
      %v783 = vpack.c.bf16 %v758, %v755
      %v784 = vpack.c.bf16 %v766, %v763
      %v801 = vunpack.c.l.b16 %v769
      %v802 = vunpack.c.h.b16 %v769
      %v803 = vunpack.c.l.b16 %v770
      %v804 = vunpack.c.h.b16 %v770
      %v805 = vunpack.c.l.b16 %v771
      %v806 = vunpack.c.h.b16 %v771
      %v807 = vunpack.c.l.b16 %v772
      %v808 = vunpack.c.h.b16 %v772
      %v809 = vunpack.c.l.b16 %v773
      %v810 = vunpack.c.h.b16 %v773
      %v811 = vunpack.c.l.b16 %v774
      %v812 = vunpack.c.h.b16 %v774
      %v813 = vunpack.c.l.b16 %v775
      %v814 = vunpack.c.h.b16 %v775
      %v815 = vunpack.c.l.b16 %v776
      %v816 = vunpack.c.h.b16 %v776
      %v817 = vunpack.c.l.b16 %v777
      %v818 = vunpack.c.h.b16 %v777
      %v819 = vunpack.c.l.b16 %v778
      %v820 = vunpack.c.h.b16 %v778
      %v821 = vunpack.c.l.b16 %v779
      %v822 = vunpack.c.h.b16 %v779
      %v823 = vunpack.c.l.b16 %v780
      %v824 = vunpack.c.h.b16 %v780
      %v825 = vunpack.c.l.b16 %v781
      %v826 = vunpack.c.h.b16 %v781
      %v827 = vunpack.c.l.b16 %v782
      %v828 = vunpack.c.h.b16 %v782
      %v829 = vunpack.c.l.b16 %v783
      %v830 = vunpack.c.h.b16 %v783
      %v831 = vunpack.c.l.b16 %v784
      %v832 = vunpack.c.h.b16 %v784
      %v833 = vpack.c.b16 %v801, %v801
      %v834 = vpack.c.b16 %v802, %v802
      %v835 = vpack.c.b16 %v803, %v803
      %v836 = vpack.c.b16 %v804, %v804
      %v837 = vpack.c.b16 %v805, %v805
      %v838 = vpack.c.b16 %v806, %v806
      %v839 = vpack.c.b16 %v807, %v807
      %v840 = vpack.c.b16 %v808, %v808
      %v841 = vpack.c.b16 %v809, %v809
      %v842 = vpack.c.b16 %v810, %v810
      %v843 = vpack.c.b16 %v811, %v811
      %v844 = vpack.c.b16 %v812, %v812
      %v845 = vpack.c.b16 %v813, %v813
      %v846 = vpack.c.b16 %v814, %v814
      %v847 = vpack.c.b16 %v815, %v815
      %v848 = vpack.c.b16 %v816, %v816
      %v849 = vpack.c.b16 %v817, %v817
      %v850 = vpack.c.b16 %v818, %v818
      %v851 = vpack.c.b16 %v819, %v819
      %v852 = vpack.c.b16 %v820, %v820
      %v853 = vpack.c.b16 %v821, %v821
      %v854 = vpack.c.b16 %v822, %v822
      %v855 = vpack.c.b16 %v823, %v823
      %v856 = vpack.c.b16 %v824, %v824
      %v857 = vpack.c.b16 %v825, %v825
      %v858 = vpack.c.b16 %v826, %v826
      %v859 = vpack.c.b16 %v827, %v827
      %v860 = vpack.c.b16 %v828, %v828
      %v861 = vpack.c.b16 %v829, %v829
      %v862 = vpack.c.b16 %v830, %v830
      %v863 = vpack.c.b16 %v831, %v831
      %v864 = vpack.c.b16 %v832, %v832
      %vm897 = vcmask 125952
      %898 = vst.msk [vmem:[%s262] sm:$0xf] %vm897, %v833
      %899 = vst.msk [vmem:[%s262 + $0x4] sm:$0xf] %vm897, %v834
      %900 = vst.msk [vmem:[%s262 + $0x8] sm:$0xf] %vm897, %v835
      %901 = vst.msk [vmem:[%s262 + $0xc] sm:$0xf] %vm897, %v836
      %902 = vst.msk [vmem:[%s262 + $0x10] sm:$0xf] %vm897, %v837
      %903 = vst.msk [vmem:[%s262 + $0x14] sm:$0xf] %vm897, %v838
      %904 = vst.msk [vmem:[%s262 + $0x18] sm:$0xf] %vm897, %v839
      %905 = vst.msk [vmem:[%s262 + $0x1c] sm:$0xf] %vm897, %v840
      %906 = vst.msk [vmem:[%s262 + $0x20] sm:$0xf] %vm897, %v841
      %907 = vst.msk [vmem:[%s262 + $0x24] sm:$0xf] %vm897, %v842
      %908 = vst.msk [vmem:[%s262 + $0x28] sm:$0xf] %vm897, %v843
      %909 = vst.msk [vmem:[%s262 + $0x2c] sm:$0xf] %vm897, %v844
      %910 = vst.msk [vmem:[%s262 + $0x30] sm:$0xf] %vm897, %v845
      %911 = vst.msk [vmem:[%s262 + $0x34] sm:$0xf] %vm897, %v846
      %912 = vst.msk [vmem:[%s262 + $0x38] sm:$0xf] %vm897, %v847
      %913 = vst.msk [vmem:[%s262 + $0x3c] sm:$0xf] %vm897, %v848
      %914 = vst.msk [vmem:[%s262 + $0x40] sm:$0xf] %vm897, %v849
      %915 = vst.msk [vmem:[%s262 + $0x44] sm:$0xf] %vm897, %v850
      %916 = vst.msk [vmem:[%s262 + $0x48] sm:$0xf] %vm897, %v851
      %917 = vst.msk [vmem:[%s262 + $0x4c] sm:$0xf] %vm897, %v852
      %918 = vst.msk [vmem:[%s262 + $0x50] sm:$0xf] %vm897, %v853
      %919 = vst.msk [vmem:[%s262 + $0x54] sm:$0xf] %vm897, %v854
      %920 = vst.msk [vmem:[%s262 + $0x58] sm:$0xf] %vm897, %v855
      %921 = vst.msk [vmem:[%s262 + $0x5c] sm:$0xf] %vm897, %v856
      %922 = vst.msk [vmem:[%s262 + $0x60] sm:$0xf] %vm897, %v857
      %923 = vst.msk [vmem:[%s262 + $0x64] sm:$0xf] %vm897, %v858
      %924 = vst.msk [vmem:[%s262 + $0x68] sm:$0xf] %vm897, %v859
      %925 = vst.msk [vmem:[%s262 + $0x6c] sm:$0xf] %vm897, %v860
      %926 = vst.msk [vmem:[%s262 + $0x70] sm:$0xf] %vm897, %v861
      %927 = vst.msk [vmem:[%s262 + $0x74] sm:$0xf] %vm897, %v862
      %928 = vst.msk [vmem:[%s262 + $0x78] sm:$0xf] %vm897, %v863
      %929 = vst.msk [vmem:[%s262 + $0x7c] sm:$0xf] %vm897, %v864
      %vm930 = vcmask 130048
      %v931 = vsel %vm930, %v643, 0.0
      %v932 = vsel %vm930, %v646, 0.0
      %v933 = vadd.f32 %v931, %v932
      %v934 = vsel %vm930, %v651, 0.0
      %v935 = vadd.f32 %v933, %v934
      %v936 = vsel %vm930, %v654, 0.0
      %v937 = vadd.f32 %v935, %v936
      %v938 = vsel %vm930, %v659, 0.0
      %v939 = vadd.f32 %v937, %v938
      %v940 = vsel %vm930, %v662, 0.0
      %v941 = vadd.f32 %v939, %v940
      %v942 = vsel %vm930, %v667, 0.0
      %v943 = vadd.f32 %v941, %v942
      %v944 = vsel %vm930, %v670, 0.0
      %v945 = vadd.f32 %v943, %v944
      %v946 = vsel %vm930, %v675, 0.0
      %v947 = vadd.f32 %v945, %v946
      %v948 = vsel %vm930, %v678, 0.0
      %v949 = vadd.f32 %v947, %v948
      %v950 = vsel %vm930, %v683, 0.0
      %v951 = vadd.f32 %v949, %v950
      %v952 = vsel %vm930, %v686, 0.0
      %v953 = vadd.f32 %v951, %v952
      %v954 = vsel %vm930, %v691, 0.0
      %v955 = vadd.f32 %v953, %v954
      %v956 = vsel %vm930, %v694, 0.0
      %v957 = vadd.f32 %v955, %v956
      %v958 = vsel %vm930, %v699, 0.0
      %v959 = vadd.f32 %v957, %v958
      %v960 = vsel %vm930, %v702, 0.0
      %v961 = vadd.f32 %v959, %v960
      %v962 = vsel %vm930, %v707, 0.0
      %v963 = vadd.f32 %v961, %v962
      %v964 = vsel %vm930, %v710, 0.0
      %v965 = vadd.f32 %v963, %v964
      %v966 = vsel %vm930, %v715, 0.0
      %v967 = vadd.f32 %v965, %v966
      %v968 = vsel %vm930, %v718, 0.0
      %v969 = vadd.f32 %v967, %v968
      %v970 = vsel %vm930, %v723, 0.0
      %v971 = vadd.f32 %v969, %v970
      %v972 = vsel %vm930, %v726, 0.0
      %v973 = vadd.f32 %v971, %v972
      %v974 = vsel %vm930, %v731, 0.0
      %v975 = vadd.f32 %v973, %v974
      %v976 = vsel %vm930, %v734, 0.0
      %v977 = vadd.f32 %v975, %v976
      %v978 = vsel %vm930, %v739, 0.0
      %v979 = vadd.f32 %v977, %v978
      %v980 = vsel %vm930, %v742, 0.0
      %v981 = vadd.f32 %v979, %v980
      %v982 = vsel %vm930, %v747, 0.0
      %v983 = vadd.f32 %v981, %v982
      %v984 = vsel %vm930, %v750, 0.0
      %v985 = vadd.f32 %v983, %v984
      %v986 = vsel %vm930, %v755, 0.0
      %v987 = vadd.f32 %v985, %v986
      %v988 = vsel %vm930, %v758, 0.0
      %v989 = vadd.f32 %v987, %v988
      %v990 = vsel %vm930, %v763, 0.0
      %v991 = vadd.f32 %v989, %v990
      %v992 = vsel %vm930, %v766, 0.0
      %v993 = vadd.f32 %v991, %v992
      %994 = vst.msk [vmem:[%s270] sm:$0xff] %vm930, %v993
      %v995 = vmul.f32 %v643, %v643
      %v996 = vmul.f32 %v646, %v646
      %v997 = vmul.f32 %v651, %v651
      %v998 = vmul.f32 %v654, %v654
      %v999 = vmul.f32 %v659, %v659
      %v1000 = vmul.f32 %v662, %v662
      %v1001 = vmul.f32 %v667, %v667
      %v1002 = vmul.f32 %v670, %v670
      %v1003 = vmul.f32 %v675, %v675
      %v1004 = vmul.f32 %v678, %v678
      %v1005 = vmul.f32 %v683, %v683
      %v1006 = vmul.f32 %v686, %v686
      %v1007 = vmul.f32 %v691, %v691
      %v1008 = vmul.f32 %v694, %v694
      %v1009 = vmul.f32 %v699, %v699
      %v1010 = vmul.f32 %v702, %v702
      %v1011 = vmul.f32 %v707, %v707
      %v1012 = vmul.f32 %v710, %v710
      %v1013 = vmul.f32 %v715, %v715
      %v1014 = vmul.f32 %v718, %v718
      %v1015 = vmul.f32 %v723, %v723
      %v1016 = vmul.f32 %v726, %v726
      %v1017 = vmul.f32 %v731, %v731
      %v1018 = vmul.f32 %v734, %v734
      %v1019 = vmul.f32 %v739, %v739
      %v1020 = vmul.f32 %v742, %v742
      %v1021 = vmul.f32 %v747, %v747
      %v1022 = vmul.f32 %v750, %v750
      %v1023 = vmul.f32 %v755, %v755
      %v1024 = vmul.f32 %v758, %v758
      %v1025 = vmul.f32 %v763, %v763
      %v1026 = vmul.f32 %v766, %v766
      %v1027 = vsel %vm930, %v995, 0.0
      %v1028 = vsel %vm930, %v996, 0.0
      %v1029 = vadd.f32 %v1027, %v1028
      %v1030 = vsel %vm930, %v997, 0.0
      %v1031 = vadd.f32 %v1029, %v1030
      %v1032 = vsel %vm930, %v998, 0.0
      %v1033 = vadd.f32 %v1031, %v1032
      %v1034 = vsel %vm930, %v999, 0.0
      %v1035 = vadd.f32 %v1033, %v1034
      %v1036 = vsel %vm930, %v1000, 0.0
      %v1037 = vadd.f32 %v1035, %v1036
      %v1038 = vsel %vm930, %v1001, 0.0
      %v1039 = vadd.f32 %v1037, %v1038
      %v1040 = vsel %vm930, %v1002, 0.0
      %v1041 = vadd.f32 %v1039, %v1040
      %v1042 = vsel %vm930, %v1003, 0.0
      %v1043 = vadd.f32 %v1041, %v1042
      %v1044 = vsel %vm930, %v1004, 0.0
      %v1045 = vadd.f32 %v1043, %v1044
      %v1046 = vsel %vm930, %v1005, 0.0
      %v1047 = vadd.f32 %v1045, %v1046
      %v1048 = vsel %vm930, %v1006, 0.0
      %v1049 = vadd.f32 %v1047, %v1048
      %v1050 = vsel %vm930, %v1007, 0.0
      %v1051 = vadd.f32 %v1049, %v1050
      %v1052 = vsel %vm930, %v1008, 0.0
      %v1053 = vadd.f32 %v1051, %v1052
      %v1054 = vsel %vm930, %v1009, 0.0
      %v1055 = vadd.f32 %v1053, %v1054
      %v1056 = vsel %vm930, %v1010, 0.0
      %v1057 = vadd.f32 %v1055, %v1056
      %v1058 = vsel %vm930, %v1011, 0.0
      %v1059 = vadd.f32 %v1057, %v1058
      %v1060 = vsel %vm930, %v1012, 0.0
      %v1061 = vadd.f32 %v1059, %v1060
      %v1062 = vsel %vm930, %v1013, 0.0
      %v1063 = vadd.f32 %v1061, %v1062
      %v1064 = vsel %vm930, %v1014, 0.0
      %v1065 = vadd.f32 %v1063, %v1064
      %v1066 = vsel %vm930, %v1015, 0.0
      %v1067 = vadd.f32 %v1065, %v1066
      %v1068 = vsel %vm930, %v1016, 0.0
      %v1069 = vadd.f32 %v1067, %v1068
      %v1070 = vsel %vm930, %v1017, 0.0
      %v1071 = vadd.f32 %v1069, %v1070
      %v1072 = vsel %vm930, %v1018, 0.0
      %v1073 = vadd.f32 %v1071, %v1072
      %v1074 = vsel %vm930, %v1019, 0.0
      %v1075 = vadd.f32 %v1073, %v1074
      %v1076 = vsel %vm930, %v1020, 0.0
      %v1077 = vadd.f32 %v1075, %v1076
      %v1078 = vsel %vm930, %v1021, 0.0
      %v1079 = vadd.f32 %v1077, %v1078
      %v1080 = vsel %vm930, %v1022, 0.0
      %v1081 = vadd.f32 %v1079, %v1080
      %v1082 = vsel %vm930, %v1023, 0.0
      %v1083 = vadd.f32 %v1081, %v1082
      %v1084 = vsel %vm930, %v1024, 0.0
      %v1085 = vadd.f32 %v1083, %v1084
      %v1086 = vsel %vm930, %v1025, 0.0
      %v1087 = vadd.f32 %v1085, %v1086
      %v1088 = vsel %vm930, %v1026, 0.0
      %v1089 = vadd.f32 %v1087, %v1088
      %1090 = vst.msk [vmem:[%s277] sm:$0xff] %vm930, %v1089
      %s1091 = smul.u32 32, %s20
      %p1092 = scmp.lt.s32.totalorder %s1091, 63
      %s1093 = scalar_select %p1092, %s1091, 63
      %p1094 = scmp.lt.s32.totalorder %s21, 0
      %s1095 = scalar_select %p1094, %s21, 0
      %s1096 = sadd.s32 %s1095, %s1093
      %s1097 = smul.addr %s1096, 4
      %s1098 = scalar_lea.vmem %s2, %s1097
      %p1099 = scmp.lt.s32.totalorder %s20, 1
      %s1100 = scalar_select %p1099, %s20, 1
      %p1101 = scmp.lt.s32.totalorder %s21, 0
      %s1102 = scalar_select %p1101, %s21, 0
      %s1103 = sadd.s32 %s1102, %s1100
      %s1104 = smul.addr %s1103, 8
      %s1105 = scalar_lea.vmem %s3, %s1104
      %p1106 = scmp.lt.s32.totalorder %s20, 1
      %s1107 = scalar_select %p1106, %s20, 1
      %p1108 = scmp.lt.s32.totalorder %s21, 0
      %s1109 = scalar_select %p1108, %s21, 0
      %s1110 = sadd.s32 %s1109, %s1107
      %s1111 = smul.addr %s1110, 8
      %s1112 = scalar_lea.vmem %s4, %s1111
      // Predicated region
      $region29: #{discriminator_forward.9} parent=27 // pred_check
        %p1113 = pneg %p100
      $region30: #{discriminator_forward.9} parent=27 // pred_check_branch
        %1115 = sbr.rel (%p1113) target = $region32
      $region31: #{discriminator_forward.9} parent=27 // pred_region
        %s1116 = smul.u32 32, %s20
      $region32: #{discriminator_forward.9} parent=27 // pred_fallthru
        _
      // Predicated region
      $region33: #{discriminator_forward.9} parent=27 // pred_check
        %p1117 = pneg %p128
      $region34: #{discriminator_forward.9} parent=27 // pred_check_branch
        %1119 = sbr.rel (%p1117) target = $region36
      $region35: #{discriminator_forward.9} parent=27 // pred_region
        _
      $region36: #{discriminator_forward.9} parent=27 // pred_fallthru
        _
      // Predicated region
      $region37: #{discriminator_forward.9} parent=27 // pred_check
        %p1120 = pneg %p156
      $region38: #{discriminator_forward.9} parent=27 // pred_check_branch
        %1122 = sbr.rel (%p1120) target = $region40
      $region39: #{discriminator_forward.9} parent=27 // pred_region
        _
      $region40: #{discriminator_forward.9} parent=27 // pred_fallthru
        _
    $region28: #{discriminator_forward.9} parent=5 // pred_fallthru
      _
    %p1123 = scmp.le.s32.totalorder 2, %s11
    // Predicated region
    $region41: #{discriminator_forward.9} parent=5 // pred_check
      %p1124 = pneg %p1123
    $region42: #{discriminator_forward.9} parent=5 // pred_check_branch
      %1126 = sbr.rel (%p1124) target = $region44
    $region43: #{discriminator_forward.9} parent=5 // pred_region
      %s1127 = ssub.s32 %s11, 2
      // Predicated region
      $region45: #{discriminator_forward.9} parent=43 // pred_check
        %p1128 = pneg %p106
      $region46: #{discriminator_forward.9} parent=43 // pred_check_branch
        %1130 = sbr.rel (%p1128) target = $region48
      $region47: #{discriminator_forward.9} parent=43 // pred_region
        %s1131 = smul.u32 32, %s22
        %p1132 = scmp.lt.s32.totalorder %s1131, 63
        %s1133 = scalar_select %p1132, %s1131, 63
        %p1134 = scmp.lt.s32.totalorder %s23, 0
        %s1135 = scalar_select %p1134, %s23, 0
        %s1136 = sadd.s32 %s1135, %s1133
        %s1137 = smul.addr %s1136, 4
        %s1138 = scalar_lea.vmem %s2, %s1137
      $region48: #{discriminator_forward.9} parent=43 // pred_fallthru
        _
      // Predicated region
      $region49: #{discriminator_forward.9} parent=43 // pred_check
        %p1139 = pneg %p134
      $region50: #{discriminator_forward.9} parent=43 // pred_check_branch
        %1141 = sbr.rel (%p1139) target = $region52
      $region51: #{discriminator_forward.9} parent=43 // pred_region
        %p1142 = scmp.lt.s32.totalorder %s22, 1
        %s1143 = scalar_select %p1142, %s22, 1
        %p1144 = scmp.lt.s32.totalorder %s23, 0
        %s1145 = scalar_select %p1144, %s23, 0
        %s1146 = sadd.s32 %s1145, %s1143
        %s1147 = smul.addr %s1146, 8
        %s1148 = scalar_lea.vmem %s3, %s1147
      $region52: #{discriminator_forward.9} parent=43 // pred_fallthru
        _
      // Predicated region
      $region53: #{discriminator_forward.9} parent=43 // pred_check
        %p1149 = pneg %p162
      $region54: #{discriminator_forward.9} parent=43 // pred_check_branch
        %1151 = sbr.rel (%p1149) target = $region56
      $region55: #{discriminator_forward.9} parent=43 // pred_region
        %p1152 = scmp.lt.s32.totalorder %s22, 1
        %s1153 = scalar_select %p1152, %s22, 1
        %p1154 = scmp.lt.s32.totalorder %s23, 0
        %s1155 = scalar_select %p1154, %s23, 0
        %s1156 = sadd.s32 %s1155, %s1153
        %s1157 = smul.addr %s1156, 8
        %s1158 = scalar_lea.vmem %s4, %s1157
      $region56: #{discriminator_forward.9} parent=43 // pred_fallthru
        _
    $region44: #{discriminator_forward.9} parent=5 // pred_fallthru
      _
  $region6: #{discriminator_forward.9} parent=0 // loop_footer
    %s15 = sadd.s32 1, %s11
  $region7: #{discriminator_forward.9} parent=0 // loop_footer_branch
    %10 = sbr.rel target = $region3
  $region8: #{discriminator_forward.9} parent=0 // loop_exit
    _

// kernel: discriminator_forward.10
$region0: #{discriminator_forward.10}
  #allocation0 [shape = 'u32[]', space=smem, size = 0x4, offset = 0x4, fixed_abs, tag = 'smem constant byte address 0x4 - core index']
  #allocation1 [shape = 'u32[144,128]{1,0:T(1,128)}', space=vmem, size = 0x12000, scoped, tag = 'internal scratch']
  %s0 = inlined_call_operand.vmem [shape: bf16[512,16], index: 0, kind: input, shape index: {}]
  %s1 = inlined_call_operand.vmem [shape: f32[1,16], index: 1, kind: input, shape index: {}]
  %s2 = inlined_call_operand.vmem [shape: f32[1,16], index: 2, kind: input, shape index: {}]
  %s3 = inlined_call_operand.vmem [shape: bf16[512,16], index: 3, kind: output, shape index: {}]
  %s4 = sld [smem:[#allocation0]]
  $region45: #{discriminator_forward.10} parent=0
    _
  %s6 = ssub.s32 1, %s4
  %s7 = scalar_select 0, %s6, %s4
  loop: start=0, step=1, limit=4
  $region2: #{discriminator_forward.10} parent=0 // loop_pre_header
    _
  $region3: #{discriminator_forward.10} parent=0 // loop_header
    %s9 = sphi 0, %s13
    %p10 = scmp.ge.s32.totalorder %s9, 4
    %s16 = sphi 0, %s28
    %s17 = sphi 0, %s24
    %s18 = sphi 0, %s16
    %s19 = sphi 0, %s17
    %s20 = sphi 0, %s18
    %s21 = sphi 0, %s19
    %s33 = sphi 0, %s35
    %s36 = sphi 0, %s33
    %s37 = sphi 0, %s36
    %s53 = sphi 0, %s37
    %s59 = sphi 0, %s61
    %s62 = sphi 0, %s59
    %s63 = sphi 0, %s62
    %s79 = sphi 0, %s63
    %s85 = sphi 0, %s87
    %s88 = sphi 0, %s85
    %s89 = sphi 0, %s88
    %s105 = sphi 0, %s89
    %s113 = sphi 0, %s115
    %s116 = sphi 0, %s113
    %s117 = sphi 0, %s116
    %s133 = sphi 0, %s117
  $region4: #{discriminator_forward.10} parent=0 // loop_header_branch
    %12 = sbr.rel (%p10) target = $region8
  $region5: #{discriminator_forward.10} parent=0 // loop_body
    %s14 = ssub.s32 %s9, 1
    %s15 = ssub.s32 %s9, 2
    %s22 = sadd.s32 1, %s17
    %p23 = scmp.ge.s32.totalorder %s22, 1
    %s24 = scalar_select %p23, 0, %s22
    %s25 = sadd.s32 1, %s16
    %s26 = scalar_select %p23, %s25, %s16
    %p27 = scmp.ge.s32.totalorder %s26, 2
    %s28 = scalar_select %p27, 0, %s26
    %s29 = ssub.s32 %s16, %s28
    %s30 = ssub.s32 %s17, %s24
    %s31 = sor.u32 %s29, %s30
    %p32 = scmp.eq.s32.totalorder %s31, 0
    %s34 = sadd.s32 %s33, 1
    %s35 = scalar_select %p32, %s33, %s34
    %p38 = pneg %p32
    %p39 = scmp.eq.s32.totalorder %s9, 1
    %p40 = por %p38, %p39
    %p41 = scmp.ne.s32.totalorder %s33, %s36
    %p42 = scmp.eq.s32.totalorder %s9, 0
    %p43 = por %p41, %p42
    %p44 = scmp.ne.s32.totalorder %s33, %s36
    %p45 = scmp.eq.s32.totalorder %s14, 1
    %p46 = por %p44, %p45
    %p47 = scmp.ne.s32.totalorder %s36, %s37
    %p48 = scmp.eq.s32.totalorder %s14, 0
    %p49 = por %p47, %p48
    %p50 = scmp.ne.s32.totalorder %s36, %s37
    %p51 = scmp.eq.s32.totalorder %s15, 1
    %p52 = por %p50, %p51
    %p54 = scmp.ne.s32.totalorder %s37, %s53
    %p55 = scmp.eq.s32.totalorder %s15, 0
    %p56 = por %p54, %p55
    %s57 = ssub.s32 %s17, %s24
    %p58 = scmp.eq.s32.totalorder %s57, 0
    %s60 = sadd.s32 %s59, 1
    %s61 = scalar_select %p58, %s59, %s60
    %p64 = pneg %p58
    %p65 = scmp.eq.s32.totalorder %s9, 1
    %p66 = por %p64, %p65
    %p67 = scmp.ne.s32.totalorder %s59, %s62
    %p68 = scmp.eq.s32.totalorder %s9, 0
    %p69 = por %p67, %p68
    %p70 = scmp.ne.s32.totalorder %s59, %s62
    %p71 = scmp.eq.s32.totalorder %s14, 1
    %p72 = por %p70, %p71
    %p73 = scmp.ne.s32.totalorder %s62, %s63
    %p74 = scmp.eq.s32.totalorder %s14, 0
    %p75 = por %p73, %p74
    %p76 = scmp.ne.s32.totalorder %s62, %s63
    %p77 = scmp.eq.s32.totalorder %s15, 1
    %p78 = por %p76, %p77
    %p80 = scmp.ne.s32.totalorder %s63, %s79
    %p81 = scmp.eq.s32.totalorder %s15, 0
    %p82 = por %p80, %p81
    %s83 = ssub.s32 %s17, %s24
    %p84 = scmp.eq.s32.totalorder %s83, 0
    %s86 = sadd.s32 %s85, 1
    %s87 = scalar_select %p84, %s85, %s86
    %p90 = pneg %p84
    %p91 = scmp.eq.s32.totalorder %s9, 1
    %p92 = por %p90, %p91
    %p93 = scmp.ne.s32.totalorder %s85, %s88
    %p94 = scmp.eq.s32.totalorder %s9, 0
    %p95 = por %p93, %p94
    %p96 = scmp.ne.s32.totalorder %s85, %s88
    %p97 = scmp.eq.s32.totalorder %s14, 1
    %p98 = por %p96, %p97
    %p99 = scmp.ne.s32.totalorder %s88, %s89
    %p100 = scmp.eq.s32.totalorder %s14, 0
    %p101 = por %p99, %p100
    %p102 = scmp.ne.s32.totalorder %s88, %s89
    %p103 = scmp.eq.s32.totalorder %s15, 1
    %p104 = por %p102, %p103
    %p106 = scmp.ne.s32.totalorder %s89, %s105
    %p107 = scmp.eq.s32.totalorder %s15, 0
    %p108 = por %p106, %p107
    %s109 = ssub.s32 %s16, %s28
    %s110 = ssub.s32 %s17, %s24
    %s111 = sor.u32 %s109, %s110
    %p112 = scmp.eq.s32.totalorder %s111, 0
    %s114 = sadd.s32 %s113, 1
    %s115 = scalar_select %p112, %s113, %s114
    %p118 = pneg %p112
    %p119 = scmp.eq.s32.totalorder %s9, 1
    %p120 = por %p118, %p119
    %p121 = scmp.ne.s32.totalorder %s113, %s116
    %p122 = scmp.eq.s32.totalorder %s9, 0
    %p123 = por %p121, %p122
    %p124 = scmp.ne.s32.totalorder %s113, %s116
    %p125 = scmp.eq.s32.totalorder %s14, 1
    %p126 = por %p124, %p125
    %p127 = scmp.ne.s32.totalorder %s116, %s117
    %p128 = scmp.eq.s32.totalorder %s14, 0
    %p129 = por %p127, %p128
    %p130 = scmp.ne.s32.totalorder %s116, %s117
    %p131 = scmp.eq.s32.totalorder %s15, 1
    %p132 = por %p130, %p131
    %p134 = scmp.ne.s32.totalorder %s117, %s133
    %p135 = scmp.eq.s32.totalorder %s15, 0
    %p136 = por %p134, %p135
    %p137 = scmp.le.s32.totalorder 1, %s9
    %p138 = scmp.lt.s32.totalorder %s9, 3
    %p139 = pnand %p137, %p138
    %p140 = pneg %p139
    // Predicated region
    $region9: #{discriminator_forward.10} parent=5 // pred_check
      _
    $region10: #{discriminator_forward.10} parent=5 // pred_check_branch
      %142 = sbr.rel (%p139) target = $region12
    $region11: #{discriminator_forward.10} parent=5 // pred_region
      %s143 = ssub.s32 %s9, 1
      // Predicated region
      $region13: #{discriminator_forward.10} parent=11 // pred_check
        %p144 = pneg %p75
      $region14: #{discriminator_forward.10} parent=11 // pred_check_branch
        %146 = sbr.rel (%p144) target = $region16
      $region15: #{discriminator_forward.10} parent=11 // pred_region
        %p147 = scmp.lt.s32.totalorder %s19, 0
        %s148 = scalar_select %p147, %s19, 0
        %s149 = scalar_lea.vmem %s1, %s148
      $region16: #{discriminator_forward.10} parent=11 // pred_fallthru
        _
      // Predicated region
      $region17: #{discriminator_forward.10} parent=11 // pred_check
        %p150 = pneg %p101
      $region18: #{discriminator_forward.10} parent=11 // pred_check_branch
        %152 = sbr.rel (%p150) target = $region20
      $region19: #{discriminator_forward.10} parent=11 // pred_region
        %p153 = scmp.lt.s32.totalorder %s19, 0
        %s154 = scalar_select %p153, %s19, 0
        %s155 = scalar_lea.vmem %s2, %s154
      $region20: #{discriminator_forward.10} parent=11 // pred_fallthru
        _
    $region12: #{discriminator_forward.10} parent=5 // pred_fallthru
      _
    %p156 = scmp.lt.s32.totalorder %s9, 2
    // Predicated region
    $region21: #{discriminator_forward.10} parent=5 // pred_check
      %p157 = pneg %p156
    $region22: #{discriminator_forward.10} parent=5 // pred_check_branch
      %159 = sbr.rel (%p157) target = $region24
    $region23: #{discriminator_forward.10} parent=5 // pred_region
      // Predicated region
      $region25: #{discriminator_forward.10} parent=23 // pred_check
        %p160 = pneg %p43
      $region26: #{discriminator_forward.10} parent=23 // pred_check_branch
        %162 = sbr.rel (%p160) target = $region28
      $region27: #{discriminator_forward.10} parent=23 // pred_region
        %s163 = smul.u32 32, %s16
        %p164 = scmp.lt.s32.totalorder %s163, 63
        %s165 = scalar_select %p164, %s163, 63
        %p166 = scmp.lt.s32.totalorder %s17, 0
        %s167 = scalar_select %p166, %s17, 0
        %s168 = sadd.s32 %s167, %s165
        %s169 = smul.addr %s168, 4
        %s170 = scalar_lea.vmem %s0, %s169
        %s171 = smul.u32 32, %s16
      $region28: #{discriminator_forward.10} parent=23 // pred_fallthru
        _
    $region24: #{discriminator_forward.10} parent=5 // pred_fallthru
      _
    %p172 = scmp.le.s32.totalorder 1, %s9
    %p173 = scmp.lt.s32.totalorder %s9, 3
    %p174 = pnand %p172, %p173
    %p175 = pneg %p174
    // Predicated region
    $region29: #{discriminator_forward.10} parent=5 // pred_check
      _
    $region30: #{discriminator_forward.10} parent=5 // pred_check_branch
      %177 = sbr.rel (%p174) target = $region32
    $region31: #{discriminator_forward.10} parent=5 // pred_region
      %s178 = ssub.s32 %s9, 1
      %s179 = smul.u32 32, %s18
      %p180 = scmp.lt.s32.totalorder %s179, 63
      %s181 = scalar_select %p180, %s179, 63
      %p182 = scmp.lt.s32.totalorder %s19, 0
      %s183 = scalar_select %p182, %s19, 0
      %s184 = sadd.s32 %s183, %s181
      %s185 = smul.addr %s184, 4
      %s186 = scalar_lea.vmem %s0, %s185
      %p187 = pneg %p49
      %p188 = pneg %p46
      %p189 = scmp.lt.s32.totalorder %s19, 0
      %s190 = scalar_select %p189, %s19, 0
      %s191 = scalar_lea.vmem %s1, %s190
      %p192 = pneg %p75
      %p193 = pneg %p72
      %p194 = scmp.lt.s32.totalorder %s19, 0
      %s195 = scalar_select %p194, %s19, 0
      %s196 = scalar_lea.vmem %s2, %s195
      %p197 = pneg %p101
      %p198 = pneg %p98
      %p199 = pneg %p129
      %p200 = pneg %p126
      %s201 = smul.u32 32, %s18
      %p202 = scmp.lt.s32.totalorder %s201, 63
      %s203 = scalar_select %p202, %s201, 63
      %p204 = scmp.lt.s32.totalorder %s19, 0
      %s205 = scalar_select %p204, %s19, 0
      %s206 = sadd.s32 %s205, %s203
      %s207 = smul.addr %s206, 4
      %s208 = scalar_lea.vmem %s3, %s207
      %s209 = smul.u32 32, %s18
      %p210 = scmp.lt.s32.totalorder %s209, 63
      %s211 = scalar_select %p210, %s209, 63
      %p212 = scmp.lt.s32.totalorder %s19, 0
      %s213 = scalar_select %p212, %s19, 0
      %s214 = sadd.s32 %s213, %s211
      %s215 = smul.addr %s214, 4
      %s216 = scalar_lea.vmem %s0, %s215
      %s217 = smul.u32 32, %s18
      %p218 = scmp.lt.s32.totalorder %s19, 0
      %s219 = scalar_select %p218, %s19, 0
      %s220 = scalar_lea.vmem %s1, %s219
      %p221 = scmp.lt.s32.totalorder %s19, 0
      %s222 = scalar_select %p221, %s19, 0
      %s223 = scalar_lea.vmem %s2, %s222
      %s224 = smul.u32 32, %s18
      %p225 = scmp.lt.s32.totalorder %s224, 63
      %s226 = scalar_select %p225, %s224, 63
      %p227 = scmp.lt.s32.totalorder %s19, 0
      %s228 = scalar_select %p227, %s19, 0
      %s229 = sadd.s32 %s228, %s226
      %s230 = smul.addr %s229, 4
      %s231 = scalar_lea.vmem %s3, %s230
      %s232 = smul.u32 32, %s18
      %v233 = vld [vmem:[%s216] sm:$0xf]
      %v234 = vld [vmem:[%s216 + $0x4] sm:$0xf]
      %v235 = vld [vmem:[%s216 + $0x8] sm:$0xf]
      %v236 = vld [vmem:[%s216 + $0xc] sm:$0xf]
      %v237 = vld [vmem:[%s216 + $0x10] sm:$0xf]
      %v238 = vld [vmem:[%s216 + $0x14] sm:$0xf]
      %v239 = vld [vmem:[%s216 + $0x18] sm:$0xf]
      %v240 = vld [vmem:[%s216 + $0x1c] sm:$0xf]
      %v241 = vld [vmem:[%s216 + $0x20] sm:$0xf]
      %v242 = vld [vmem:[%s216 + $0x24] sm:$0xf]
      %v243 = vld [vmem:[%s216 + $0x28] sm:$0xf]
      %v244 = vld [vmem:[%s216 + $0x2c] sm:$0xf]
      %v245 = vld [vmem:[%s216 + $0x30] sm:$0xf]
      %v246 = vld [vmem:[%s216 + $0x34] sm:$0xf]
      %v247 = vld [vmem:[%s216 + $0x38] sm:$0xf]
      %v248 = vld [vmem:[%s216 + $0x3c] sm:$0xf]
      %v249 = vld [vmem:[%s216 + $0x40] sm:$0xf]
      %v250 = vld [vmem:[%s216 + $0x44] sm:$0xf]
      %v251 = vld [vmem:[%s216 + $0x48] sm:$0xf]
      %v252 = vld [vmem:[%s216 + $0x4c] sm:$0xf]
      %v253 = vld [vmem:[%s216 + $0x50] sm:$0xf]
      %v254 = vld [vmem:[%s216 + $0x54] sm:$0xf]
      %v255 = vld [vmem:[%s216 + $0x58] sm:$0xf]
      %v256 = vld [vmem:[%s216 + $0x5c] sm:$0xf]
      %v257 = vld [vmem:[%s216 + $0x60] sm:$0xf]
      %v258 = vld [vmem:[%s216 + $0x64] sm:$0xf]
      %v259 = vld [vmem:[%s216 + $0x68] sm:$0xf]
      %v260 = vld [vmem:[%s216 + $0x6c] sm:$0xf]
      %v261 = vld [vmem:[%s216 + $0x70] sm:$0xf]
      %v262 = vld [vmem:[%s216 + $0x74] sm:$0xf]
      %v263 = vld [vmem:[%s216 + $0x78] sm:$0xf]
      %v264 = vld [vmem:[%s216 + $0x7c] sm:$0xf]
      %v265 = vunpack.c.l.bf16 %v233
      %v266 = vunpack.c.l.bf16 %v234
      %v267 = vunpack.c.l.bf16 %v235
      %v268 = vunpack.c.l.bf16 %v236
      %v269 = vunpack.c.l.bf16 %v237
      %v270 = vunpack.c.l.bf16 %v238
      %v271 = vunpack.c.l.bf16 %v239
      %v272 = vunpack.c.l.bf16 %v240
      %v273 = vunpack.c.l.bf16 %v241
      %v274 = vunpack.c.l.bf16 %v242
      %v275 = vunpack.c.l.bf16 %v243
      %v276 = vunpack.c.l.bf16 %v244
      %v277 = vunpack.c.l.bf16 %v245
      %v278 = vunpack.c.l.bf16 %v246
      %v279 = vunpack.c.l.bf16 %v247
      %v280 = vunpack.c.l.bf16 %v248
      %v281 = vunpack.c.l.bf16 %v249
      %v282 = vunpack.c.l.bf16 %v250
      %v283 = vunpack.c.l.bf16 %v251
      %v284 = vunpack.c.l.bf16 %v252
      %v285 = vunpack.c.l.bf16 %v253
      %v286 = vunpack.c.l.bf16 %v254
      %v287 = vunpack.c.l.bf16 %v255
      %v288 = vunpack.c.l.bf16 %v256
      %v289 = vunpack.c.l.bf16 %v257
      %v290 = vunpack.c.l.bf16 %v258
      %v291 = vunpack.c.l.bf16 %v259
      %v292 = vunpack.c.l.bf16 %v260
      %v293 = vunpack.c.l.bf16 %v261
      %v294 = vunpack.c.l.bf16 %v262
      %v295 = vunpack.c.l.bf16 %v263
      %v296 = vunpack.c.l.bf16 %v264
      %v297 = vld [vmem:[%s220] sm:$0x1]
      %v299 = vlaneseq
      %v300 = vshrl.u32 %v299, 7
      %v301 = vsub.s32 0, %v300
      %v302 = vrot.slane %v297, %v301
      %v304 = vmul.f32 %v265, %v302
      %v305 = vmul.f32 %v266, %v302
      %v306 = vmul.f32 %v267, %v302
      %v307 = vmul.f32 %v268, %v302
      %v308 = vmul.f32 %v269, %v302
      %v309 = vmul.f32 %v270, %v302
      %v310 = vmul.f32 %v271, %v302
      %v311 = vmul.f32 %v272, %v302
      %v312 = vmul.f32 %v273, %v302
      %v313 = vmul.f32 %v274, %v302
      %v314 = vmul.f32 %v275, %v302
      %v315 = vmul.f32 %v276, %v302
      %v316 = vmul.f32 %v277, %v302
      %v317 = vmul.f32 %v278, %v302
      %v318 = vmul.f32 %v279, %v302
      %v319 = vmul.f32 %v280, %v302
      %v320 = vmul.f32 %v281, %v302
      %v321 = vmul.f32 %v282, %v302
      %v322 = vmul.f32 %v283, %v302
      %v323 = vmul.f32 %v284, %v302
      %v324 = vmul.f32 %v285, %v302
      %v325 = vmul.f32 %v286, %v302
      %v326 = vmul.f32 %v287, %v302
      %v327 = vmul.f32 %v288, %v302
      %v328 = vmul.f32 %v289, %v302
      %v329 = vmul.f32 %v290, %v302
      %v330 = vmul.f32 %v291, %v302
      %v331 = vmul.f32 %v292, %v302
      %v332 = vmul.f32 %v293, %v302
      %v333 = vmul.f32 %v294, %v302
      %v334 = vmul.f32 %v295, %v302
      %v335 = vmul.f32 %v296, %v302
      %v336 = vld [vmem:[%s223] sm:$0x1]
      %v338 = vlaneseq
      %v339 = vshrl.u32 %v338, 7
      %v340 = vsub.s32 0, %v339
      %v341 = vrot.slane %v336, %v340
      %v343 = vadd.f32 %v304, %v341
      %v344 = vadd.f32 %v305, %v341
      %v345 = vadd.f32 %v306, %v341
      %v346 = vadd.f32 %v307, %v341
      %v347 = vadd.f32 %v308, %v341
      %v348 = vadd.f32 %v309, %v341
      %v349 = vadd.f32 %v310, %v341
      %v350 = vadd.f32 %v311, %v341
      %v351 = vadd.f32 %v312, %v341
      %v352 = vadd.f32 %v313, %v341
      %v353 = vadd.f32 %v314, %v341
      %v354 = vadd.f32 %v315, %v341
      %v355 = vadd.f32 %v316, %v341
      %v356 = vadd.f32 %v317, %v341
      %v357 = vadd.f32 %v318, %v341
      %v358 = vadd.f32 %v319, %v341
      %v359 = vadd.f32 %v320, %v341
      %v360 = vadd.f32 %v321, %v341
      %v361 = vadd.f32 %v322, %v341
      %v362 = vadd.f32 %v323, %v341
      %v363 = vadd.f32 %v324, %v341
      %v364 = vadd.f32 %v325, %v341
      %v365 = vadd.f32 %v326, %v341
      %v366 = vadd.f32 %v327, %v341
      %v367 = vadd.f32 %v328, %v341
      %v368 = vadd.f32 %v329, %v341
      %v369 = vadd.f32 %v330, %v341
      %v370 = vadd.f32 %v331, %v341
      %v371 = vadd.f32 %v332, %v341
      %v372 = vadd.f32 %v333, %v341
      %v373 = vadd.f32 %v334, %v341
      %v374 = vadd.f32 %v335, %v341
      %vm375 = vcmp.gt.f32.partialorder %v343, 0.0
      %vm376 = vcmp.gt.f32.partialorder %v344, 0.0
      %vm377 = vcmp.gt.f32.partialorder %v345, 0.0
      %vm378 = vcmp.gt.f32.partialorder %v346, 0.0
      %vm379 = vcmp.gt.f32.partialorder %v347, 0.0
      %vm380 = vcmp.gt.f32.partialorder %v348, 0.0
      %vm381 = vcmp.gt.f32.partialorder %v349, 0.0
      %vm382 = vcmp.gt.f32.partialorder %v350, 0.0
      %vm383 = vcmp.gt.f32.partialorder %v351, 0.0
      %vm384 = vcmp.gt.f32.partialorder %v352, 0.0
      %vm385 = vcmp.gt.f32.partialorder %v353, 0.0
      %vm386 = vcmp.gt.f32.partialorder %v354, 0.0
      %vm387 = vcmp.gt.f32.partialorder %v355, 0.0
      %vm388 = vcmp.gt.f32.partialorder %v356, 0.0
      %vm389 = vcmp.gt.f32.partialorder %v357, 0.0
      %vm390 = vcmp.gt.f32.partialorder %v358, 0.0
      %vm391 = vcmp.gt.f32.partialorder %v359, 0.0
      %vm392 = vcmp.gt.f32.partialorder %v360, 0.0
      %vm393 = vcmp.gt.f32.partialorder %v361, 0.0
      %vm394 = vcmp.gt.f32.partialorder %v362, 0.0
      %vm395 = vcmp.gt.f32.partialorder %v363, 0.0
      %vm396 = vcmp.gt.f32.partialorder %v364, 0.0
      %vm397 = vcmp.gt.f32.partialorder %v365, 0.0
      %vm398 = vcmp.gt.f32.partialorder %v366, 0.0
      %vm399 = vcmp.gt.f32.partialorder %v367, 0.0
      %vm400 = vcmp.gt.f32.partialorder %v368, 0.0
      %vm401 = vcmp.gt.f32.partialorder %v369, 0.0
      %vm402 = vcmp.gt.f32.partialorder %v370, 0.0
      %vm403 = vcmp.gt.f32.partialorder %v371, 0.0
      %vm404 = vcmp.gt.f32.partialorder %v372, 0.0
      %vm405 = vcmp.gt.f32.partialorder %v373, 0.0
      %vm406 = vcmp.gt.f32.partialorder %v374, 0.0
      %v407 = vmul.f32 %v343, 0.2
      %v408 = vmul.f32 %v344, 0.2
      %v409 = vmul.f32 %v345, 0.2
      %v410 = vmul.f32 %v346, 0.2
      %v411 = vmul.f32 %v347, 0.2
      %v412 = vmul.f32 %v348, 0.2
      %v413 = vmul.f32 %v349, 0.2
      %v414 = vmul.f32 %v350, 0.2
      %v415 = vmul.f32 %v351, 0.2
      %v416 = vmul.f32 %v352, 0.2
      %v417 = vmul.f32 %v353, 0.2
      %v418 = vmul.f32 %v354, 0.2
      %v419 = vmul.f32 %v355, 0.2
      %v420 = vmul.f32 %v356, 0.2
      %v421 = vmul.f32 %v357, 0.2
      %v422 = vmul.f32 %v358, 0.2
      %v423 = vmul.f32 %v359, 0.2
      %v424 = vmul.f32 %v360, 0.2
      %v425 = vmul.f32 %v361, 0.2
      %v426 = vmul.f32 %v362, 0.2
      %v427 = vmul.f32 %v363, 0.2
      %v428 = vmul.f32 %v364, 0.2
      %v429 = vmul.f32 %v365, 0.2
      %v430 = vmul.f32 %v366, 0.2
      %v431 = vmul.f32 %v367, 0.2
      %v432 = vmul.f32 %v368, 0.2
      %v433 = vmul.f32 %v369, 0.2
      %v434 = vmul.f32 %v370, 0.2
      %v435 = vmul.f32 %v371, 0.2
      %v436 = vmul.f32 %v372, 0.2
      %v437 = vmul.f32 %v373, 0.2
      %v438 = vmul.f32 %v374, 0.2
      %v439 = vsel %vm375, %v343, %v407
      %v440 = vsel %vm376, %v344, %v408
      %v441 = vsel %vm377, %v345, %v409
      %v442 = vsel %vm378, %v346, %v410
      %v443 = vsel %vm379, %v347, %v411
      %v444 = vsel %vm380, %v348, %v412
      %v445 = vsel %vm381, %v349, %v413
      %v446 = vsel %vm382, %v350, %v414
      %v447 = vsel %vm383, %v351, %v415
      %v448 = vsel %vm384, %v352, %v416
      %v449 = vsel %vm385, %v353, %v417
      %v450 = vsel %vm386, %v354, %v418
      %v451 = vsel %vm387, %v355, %v419
      %v452 = vsel %vm388, %v356, %v420
      %v453 = vsel %vm389, %v357, %v421
      %v454 = vsel %vm390, %v358, %v422
      %v455 = vsel %vm391, %v359, %v423
      %v456 = vsel %vm392, %v360, %v424
      %v457 = vsel %vm393, %v361, %v425
      %v458 = vsel %vm394, %v362, %v426
      %v459 = vsel %vm395, %v363, %v427
      %v460 = vsel %vm396, %v364, %v428
      %v461 = vsel %vm397, %v365, %v429
      %v462 = vsel %vm398, %v366, %v430
      %v463 = vsel %vm399, %v367, %v431
      %v464 = vsel %vm400, %v368, %v432
      %v465 = vsel %vm401, %v369, %v433
      %v466 = vsel %vm402, %v370, %v434
      %v467 = vsel %vm403, %v371, %v435
      %v468 = vsel %vm404, %v372, %v436
      %v469 = vsel %vm405, %v373, %v437
      %v470 = vsel %vm406, %v374, %v438
      %v471 = vpack.c.bf16 %v440, %v439
      %v472 = vpack.c.bf16 %v442, %v441
      %v473 = vpack.c.bf16 %v444, %v443
      %v474 = vpack.c.bf16 %v446, %v445
      %v475 = vpack.c.bf16 %v448, %v447
      %v476 = vpack.c.bf16 %v450, %v449
      %v477 = vpack.c.bf16 %v452, %v451
      %v478 = vpack.c.bf16 %v454, %v453
      %v479 = vpack.c.bf16 %v456, %v455
      %v480 = vpack.c.bf16 %v458, %v457
      %v481 = vpack.c.bf16 %v460, %v459
      %v482 = vpack.c.bf16 %v462, %v461
      %v483 = vpack.c.bf16 %v464, %v463
      %v484 = vpack.c.bf16 %v466, %v465
      %v485 = vpack.c.bf16 %v468, %v467
      %v486 = vpack.c.bf16 %v470, %v469
      %v503 = vunpack.c.l.b16 %v471
      %v504 = vunpack.c.h.b16 %v471
      %v505 = vunpack.c.l.b16 %v472
      %v506 = vunpack.c.h.b16 %v472
      %v507 = vunpack.c.l.b16 %v473
      %v508 = vunpack.c.h.b16 %v473
      %v509 = vunpack.c.l.b16 %v474
      %v510 = vunpack.c.h.b16 %v474
      %v511 = vunpack.c.l.b16 %v475
      %v512 = vunpack.c.h.b16 %v475
      %v513 = vunpack.c.l.b16 %v476
      %v514 = vunpack.c.h.b16 %v476
      %v515 = vunpack.c.l.b16 %v477
      %v516 = vunpack.c.h.b16 %v477
      %v517 = vunpack.c.l.b16 %v478
      %v518 = vunpack.c.h.b16 %v478
      %v519 = vunpack.c.l.b16 %v479
      %v520 = vunpack.c.h.b16 %v479
      %v521 = vunpack.c.l.b16 %v480
      %v522 = vunpack.c.h.b16 %v480
      %v523 = vunpack.c.l.b16 %v481
      %v524 = vunpack.c.h.b16 %v481
      %v525 = vunpack.c.l.b16 %v482
      %v526 = vunpack.c.h.b16 %v482
      %v527 = vunpack.c.l.b16 %v483
      %v528 = vunpack.c.h.b16 %v483
      %v529 = vunpack.c.l.b16 %v484
      %v530 = vunpack.c.h.b16 %v484
      %v531 = vunpack.c.l.b16 %v485
      %v532 = vunpack.c.h.b16 %v485
      %v533 = vunpack.c.l.b16 %v486
      %v534 = vunpack.c.h.b16 %v486
      %v535 = vpack.c.b16 %v503, %v503
      %v536 = vpack.c.b16 %v504, %v504
      %v537 = vpack.c.b16 %v505, %v505
      %v538 = vpack.c.b16 %v506, %v506
      %v539 = vpack.c.b16 %v507, %v507
      %v540 = vpack.c.b16 %v508, %v508
      %v541 = vpack.c.b16 %v509, %v509
      %v542 = vpack.c.b16 %v510, %v510
      %v543 = vpack.c.b16 %v511, %v511
      %v544 = vpack.c.b16 %v512, %v512
      %v545 = vpack.c.b16 %v513, %v513
      %v546 = vpack.c.b16 %v514, %v514
      %v547 = vpack.c.b16 %v515, %v515
      %v548 = vpack.c.b16 %v516, %v516
      %v549 = vpack.c.b16 %v517, %v517
      %v550 = vpack.c.b16 %v518, %v518
      %v551 = vpack.c.b16 %v519, %v519
      %v552 = vpack.c.b16 %v520, %v520
      %v553 = vpack.c.b16 %v521, %v521
      %v554 = vpack.c.b16 %v522, %v522
      %v555 = vpack.c.b16 %v523, %v523
      %v556 = vpack.c.b16 %v524, %v524
      %v557 = vpack.c.b16 %v525, %v525
      %v558 = vpack.c.b16 %v526, %v526
      %v559 = vpack.c.b16 %v527, %v527
      %v560 = vpack.c.b16 %v528, %v528
      %v561 = vpack.c.b16 %v529, %v529
      %v562 = vpack.c.b16 %v530, %v530
      %v563 = vpack.c.b16 %v531, %v531
      %v564 = vpack.c.b16 %v532, %v532
      %v565 = vpack.c.b16 %v533, %v533
      %v566 = vpack.c.b16 %v534, %v534
      %vm599 = vcmask 125952
      %600 = vst.msk [vmem:[%s231] sm:$0xf] %vm599, %v535
      %601 = vst.msk [vmem:[%s231 + $0x4] sm:$0xf] %vm599, %v536
      %602 = vst.msk [vmem:[%s231 + $0x8] sm:$0xf] %vm599, %v537
      %603 = vst.msk [vmem:[%s231 + $0xc] sm:$0xf] %vm599, %v538
      %604 = vst.msk [vmem:[%s231 + $0x10] sm:$0xf] %vm599, %v539
      %605 = vst.msk [vmem:[%s231 + $0x14] sm:$0xf] %vm599, %v540
      %606 = vst.msk [vmem:[%s231 + $0x18] sm:$0xf] %vm599, %v541
      %607 = vst.msk [vmem:[%s231 + $0x1c] sm:$0xf] %vm599, %v542
      %608 = vst.msk [vmem:[%s231 + $0x20] sm:$0xf] %vm599, %v543
      %609 = vst.msk [vmem:[%s231 + $0x24] sm:$0xf] %vm599, %v544
      %610 = vst.msk [vmem:[%s231 + $0x28] sm:$0xf] %vm599, %v545
      %611 = vst.msk [vmem:[%s231 + $0x2c] sm:$0xf] %vm599, %v546
      %612 = vst.msk [vmem:[%s231 + $0x30] sm:$0xf] %vm599, %v547
      %613 = vst.msk [vmem:[%s231 + $0x34] sm:$0xf] %vm599, %v548
      %614 = vst.msk [vmem:[%s231 + $0x38] sm:$0xf] %vm599, %v549
      %615 = vst.msk [vmem:[%s231 + $0x3c] sm:$0xf] %vm599, %v550
      %616 = vst.msk [vmem:[%s231 + $0x40] sm:$0xf] %vm599, %v551
      %617 = vst.msk [vmem:[%s231 + $0x44] sm:$0xf] %vm599, %v552
      %618 = vst.msk [vmem:[%s231 + $0x48] sm:$0xf] %vm599, %v553
      %619 = vst.msk [vmem:[%s231 + $0x4c] sm:$0xf] %vm599, %v554
      %620 = vst.msk [vmem:[%s231 + $0x50] sm:$0xf] %vm599, %v555
      %621 = vst.msk [vmem:[%s231 + $0x54] sm:$0xf] %vm599, %v556
      %622 = vst.msk [vmem:[%s231 + $0x58] sm:$0xf] %vm599, %v557
      %623 = vst.msk [vmem:[%s231 + $0x5c] sm:$0xf] %vm599, %v558
      %624 = vst.msk [vmem:[%s231 + $0x60] sm:$0xf] %vm599, %v559
      %625 = vst.msk [vmem:[%s231 + $0x64] sm:$0xf] %vm599, %v560
      %626 = vst.msk [vmem:[%s231 + $0x68] sm:$0xf] %vm599, %v561
      %627 = vst.msk [vmem:[%s231 + $0x6c] sm:$0xf] %vm599, %v562
      %628 = vst.msk [vmem:[%s231 + $0x70] sm:$0xf] %vm599, %v563
      %629 = vst.msk [vmem:[%s231 + $0x74] sm:$0xf] %vm599, %v564
      %630 = vst.msk [vmem:[%s231 + $0x78] sm:$0xf] %vm599, %v565
      %631 = vst.msk [vmem:[%s231 + $0x7c] sm:$0xf] %vm599, %v566
      %s632 = smul.u32 32, %s18
      %p633 = scmp.lt.s32.totalorder %s632, 63
      %s634 = scalar_select %p633, %s632, 63
      %p635 = scmp.lt.s32.totalorder %s19, 0
      %s636 = scalar_select %p635, %s19, 0
      %s637 = sadd.s32 %s636, %s634
      %s638 = smul.addr %s637, 4
      %s639 = scalar_lea.vmem %s3, %s638
      // Predicated region
      $region33: #{discriminator_forward.10} parent=31 // pred_check
        %p640 = pneg %p126
      $region34: #{discriminator_forward.10} parent=31 // pred_check_branch
        %642 = sbr.rel (%p640) target = $region36
      $region35: #{discriminator_forward.10} parent=31 // pred_region
        %s643 = smul.u32 32, %s18
      $region36: #{discriminator_forward.10} parent=31 // pred_fallthru
        _
    $region32: #{discriminator_forward.10} parent=5 // pred_fallthru
      _
    %p644 = scmp.le.s32.totalorder 2, %s9
    // Predicated region
    $region37: #{discriminator_forward.10} parent=5 // pred_check
      %p645 = pneg %p644
    $region38: #{discriminator_forward.10} parent=5 // pred_check_branch
      %647 = sbr.rel (%p645) target = $region40
    $region39: #{discriminator_forward.10} parent=5 // pred_region
      %s648 = ssub.s32 %s9, 2
      // Predicated region
      $region41: #{discriminator_forward.10} parent=39 // pred_check
        %p649 = pneg %p132
      $region42: #{discriminator_forward.10} parent=39 // pred_check_branch
        %651 = sbr.rel (%p649) target = $region44
      $region43: #{discriminator_forward.10} parent=39 // pred_region
        %s652 = smul.u32 32, %s20
        %p653 = scmp.lt.s32.totalorder %s652, 63
        %s654 = scalar_select %p653, %s652, 63
        %p655 = scmp.lt.s32.totalorder %s21, 0
        %s656 = scalar_select %p655, %s21, 0
        %s657 = sadd.s32 %s656, %s654
        %s658 = smul.addr %s657, 4
        %s659 = scalar_lea.vmem %s3, %s658
      $region44: #{discriminator_forward.10} parent=39 // pred_fallthru
        _
    $region40: #{discriminator_forward.10} parent=5 // pred_fallthru
      _
  $region6: #{discriminator_forward.10} parent=0 // loop_footer
    %s13 = sadd.s32 1, %s9
  $region7: #{discriminator_forward.10} parent=0 // loop_footer_branch
    %8 = sbr.rel target = $region3
  $region8: #{discriminator_forward.10} parent=0 // loop_exit
    _

// kernel: discriminator_forward.11
$region0: #{discriminator_forward.11}
  #allocation0 [shape = 'u32[]', space=smem, size = 0x4, offset = 0x4, fixed_abs, tag = 'smem constant byte address 0x4 - core index']
  #allocation1 [shape = 'u32[144,128]{1,0:T(1,128)}', space=vmem, size = 0x12000, scoped, tag = 'internal scratch']
  %s0 = inlined_call_operand.vmem [shape: bf16[128,400], index: 0, kind: input, shape index: {}]
  %s1 = inlined_call_operand.vmem [shape: bf16[400,32], index: 1, kind: input, shape index: {}]
  %s2 = inlined_call_operand.vmem [shape: bf16[128,32], index: 2, kind: output, shape index: {0}]
  %s3 = inlined_call_operand.vmem [shape: f32[16,32], index: 3, kind: output, shape index: {1}]
  %s4 = inlined_call_operand.vmem [shape: f32[16,32], index: 4, kind: output, shape index: {2}]
  %5 = xla_tuple %s2, %s3, %s4
  %s6 = sld [smem:[#allocation0]]
  $region57: #{discriminator_forward.11} parent=0
    _
  %s8 = ssub.s32 1, %s6
  %s9 = scalar_select 0, %s8, %s6
  loop: start=0, step=1, limit=4
  $region2: #{discriminator_forward.11} parent=0 // loop_pre_header
    _
  $region3: #{discriminator_forward.11} parent=0 // loop_header
    %s11 = sphi 0, %s15
    %p12 = scmp.ge.s32.totalorder %s11, 4
    %s18 = sphi 0, %s30
    %s19 = sphi 0, %s26
    %s20 = sphi 0, %s18
    %s21 = sphi 0, %s19
    %s22 = sphi 0, %s20
    %s23 = sphi 0, %s21
    %s33 = sphi 0, %s35
    %s36 = sphi 0, %s33
    %s37 = sphi 0, %s36
    %s53 = sphi 0, %s37
    %s59 = sphi 0, %s61
    %s62 = sphi 0, %s59
    %s63 = sphi 0, %s62
    %s79 = sphi 0, %s63
    %s87 = sphi 0, %s89
    %s90 = sphi 0, %s87
    %s91 = sphi 0, %s90
    %s107 = sphi 0, %s91
    %s115 = sphi 0, %s117
    %s118 = sphi 0, %s115
    %s119 = sphi 0, %s118
    %s135 = sphi 0, %s119
    %s143 = sphi 0, %s145
    %s146 = sphi 0, %s143
    %s147 = sphi 0, %s146
    %s163 = sphi 0, %s147
  $region4: #{discriminator_forward.11} parent=0 // loop_header_branch
    %14 = sbr.rel (%p12) target = $region8
  $region5: #{discriminator_forward.11} parent=0 // loop_body
    %s16 = ssub.s32 %s11, 1
    %s17 = ssub.s32 %s11, 2
    %s24 = sadd.s32 1, %s19
    %p25 = scmp.ge.s32.totalorder %s24, 1
    %s26 = scalar_select %p25, 0, %s24
    %s27 = sadd.s32 1, %s18
    %s28 = scalar_select %p25, %s27, %s18
    %p29 = scmp.ge.s32.totalorder %s28, 2
    %s30 = scalar_select %p29, 0, %s28
    %s31 = ssub.s32 %s18, %s30
    %p32 = scmp.eq.s32.totalorder %s31, 0
    %s34 = sadd.s32 %s33, 1
    %s35 = scalar_select %p32, %s33, %s34
    %p38 = pneg %p32
    %p39 = scmp.eq.s32.totalorder %s11, 1
    %p40 = por %p38, %p39
    %p41 = scmp.ne.s32.totalorder %s33, %s36
    %p42 = scmp.eq.s32.totalorder %s11, 0
    %p43 = por %p41, %p42
    %p44 = scmp.ne.s32.totalorder %s33, %s36
    %p45 = scmp.eq.s32.totalorder %s16, 1
    %p46 = por %p44, %p45
    %p47 = scmp.ne.s32.totalorder %s36, %s37
    %p48 = scmp.eq.s32.totalorder %s16, 0
    %p49 = por %p47, %p48
    %p50 = scmp.ne.s32.totalorder %s36, %s37
    %p51 = scmp.eq.s32.totalorder %s17, 1
    %p52 = por %p50, %p51
    %p54 = scmp.ne.s32.totalorder %s37, %s53
    %p55 = scmp.eq.s32.totalorder %s17, 0
    %p56 = por %p54, %p55
    %s57 = ssub.s32 %s19, %s26
    %p58 = scmp.eq.s32.totalorder %s57, 0
    %s60 = sadd.s32 %s59, 1
    %s61 = scalar_select %p58, %s59, %s60
    %p64 = pneg %p58
    %p65 = scmp.eq.s32.totalorder %s11, 1
    %p66 = por %p64, %p65
    %p67 = scmp.ne.s32.totalorder %s59, %s62
    %p68 = scmp.eq.s32.totalorder %s11, 0
    %p69 = por %p67, %p68
    %p70 = scmp.ne.s32.totalorder %s59, %s62
    %p71 = scmp.eq.s32.totalorder %s16, 1
    %p72 = por %p70, %p71
    %p73 = scmp.ne.s32.totalorder %s62, %s63
    %p74 = scmp.eq.s32.totalorder %s16, 0
    %p75 = por %p73, %p74
    %p76 = scmp.ne.s32.totalorder %s62, %s63
    %p77 = scmp.eq.s32.totalorder %s17, 1
    %p78 = por %p76, %p77
    %p80 = scmp.ne.s32.totalorder %s63, %s79
    %p81 = scmp.eq.s32.totalorder %s17, 0
    %p82 = por %p80, %p81
    %s83 = ssub.s32 %s18, %s30
    %s84 = ssub.s32 %s19, %s26
    %s85 = sor.u32 %s83, %s84
    %p86 = scmp.eq.s32.totalorder %s85, 0
    %s88 = sadd.s32 %s87, 1
    %s89 = scalar_select %p86, %s87, %s88
    %p92 = pneg %p86
    %p93 = scmp.eq.s32.totalorder %s11, 1
    %p94 = por %p92, %p93
    %p95 = scmp.ne.s32.totalorder %s87, %s90
    %p96 = scmp.eq.s32.totalorder %s11, 0
    %p97 = por %p95, %p96
    %p98 = scmp.ne.s32.totalorder %s87, %s90
    %p99 = scmp.eq.s32.totalorder %s16, 1
    %p100 = por %p98, %p99
    %p101 = scmp.ne.s32.totalorder %s90, %s91
    %p102 = scmp.eq.s32.totalorder %s16, 0
    %p103 = por %p101, %p102
    %p104 = scmp.ne.s32.totalorder %s90, %s91
    %p105 = scmp.eq.s32.totalorder %s17, 1
    %p106 = por %p104, %p105
    %p108 = scmp.ne.s32.totalorder %s91, %s107
    %p109 = scmp.eq.s32.totalorder %s17, 0
    %p110 = por %p108, %p109
    %s111 = ssub.s32 %s18, %s30
    %s112 = ssub.s32 %s19, %s26
    %s113 = sor.u32 %s111, %s112
    %p114 = scmp.eq.s32.totalorder %s113, 0
    %s116 = sadd.s32 %s115, 1
    %s117 = scalar_select %p114, %s115, %s116
    %p120 = pneg %p114
    %p121 = scmp.eq.s32.totalorder %s11, 1
    %p122 = por %p120, %p121
    %p123 = scmp.ne.s32.totalorder %s115, %s118
    %p124 = scmp.eq.s32.totalorder %s11, 0
    %p125 = por %p123, %p124
    %p126 = scmp.ne.s32.totalorder %s115, %s118
    %p127 = scmp.eq.s32.totalorder %s16, 1
    %p128 = por %p126, %p127
    %p129 = scmp.ne.s32.totalorder %s118, %s119
    %p130 = scmp.eq.s32.totalorder %s16, 0
    %p131 = por %p129, %p130
    %p132 = scmp.ne.s32.totalorder %s118, %s119
    %p133 = scmp.eq.s32.totalorder %s17, 1
    %p134 = por %p132, %p133
    %p136 = scmp.ne.s32.totalorder %s119, %s135
    %p137 = scmp.eq.s32.totalorder %s17, 0
    %p138 = por %p136, %p137
    %s139 = ssub.s32 %s18, %s30
    %s140 = ssub.s32 %s19, %s26
    %s141 = sor.u32 %s139, %s140
    %p142 = scmp.eq.s32.totalorder %s141, 0
    %s144 = sadd.s32 %s143, 1
    %s145 = scalar_select %p142, %s143, %s144
    %p148 = pneg %p142
    %p149 = scmp.eq.s32.totalorder %s11, 1
    %p150 = por %p148, %p149
    %p151 = scmp.ne.s32.totalorder %s143, %s146
    %p152 = scmp.eq.s32.totalorder %s11, 0
    %p153 = por %p151, %p152
    %p154 = scmp.ne.s32.totalorder %s143, %s146
    %p155 = scmp.eq.s32.totalorder %s16, 1
    %p156 = por %p154, %p155
    %p157 = scmp.ne.s32.totalorder %s146, %s147
    %p158 = scmp.eq.s32.totalorder %s16, 0
    %p159 = por %p157, %p158
    %p160 = scmp.ne.s32.totalorder %s146, %s147
    %p161 = scmp.eq.s32.totalorder %s17, 1
    %p162 = por %p160, %p161
    %p164 = scmp.ne.s32.totalorder %s147, %s163
    %p165 = scmp.eq.s32.totalorder %s17, 0
    %p166 = por %p164, %p165
    %p167 = scmp.le.s32.totalorder 1, %s11
    %p168 = scmp.lt.s32.totalorder %s11, 3
    %p169 = pnand %p167, %p168
    %p170 = pneg %p169
    // Predicated region
    $region9: #{discriminator_forward.11} parent=5 // pred_check
      _
    $region10: #{discriminator_forward.11} parent=5 // pred_check_branch
      %172 = sbr.rel (%p169) target = $region12
    $region11: #{discriminator_forward.11} parent=5 // pred_region
      %s173 = ssub.s32 %s11, 1
      // Predicated region
      $region13: #{discriminator_forward.11} parent=11 // pred_check
        %p174 = pneg %p75
      $region14: #{discriminator_forward.11} parent=11 // pred_check_branch
        %176 = sbr.rel (%p174) target = $region16
      $region15: #{discriminator_forward.11} parent=11 // pred_region
        %p177 = scmp.lt.s32.totalorder %s21, 0
        %s178 = scalar_select %p177, %s21, 0
        %s179 = smul.addr %s178, 4
        %s180 = scalar_lea.vmem %s1, %s179
      $region16: #{discriminator_forward.11} parent=11 // pred_fallthru
        _
    $region12: #{discriminator_forward.11} parent=5 // pred_fallthru
      _
    %p181 = scmp.lt.s32.totalorder %s11, 2
    // Predicated region
    $region17: #{discriminator_forward.11} parent=5 // pred_check
      %p182 = pneg %p181
    $region18: #{discriminator_forward.11} parent=5 // pred_check_branch
      %184 = sbr.rel (%p182) target = $region20
    $region19: #{discriminator_forward.11} parent=5 // pred_region
      // Predicated region
      $region21: #{discriminator_forward.11} parent=19 // pred_check
        %p185 = pneg %p43
      $region22: #{discriminator_forward.11} parent=19 // pred_check_branch
        %187 = sbr.rel (%p185) target = $region24
      $region23: #{discriminator_forward.11} parent=19 // pred_region
        %s188 = smul.u32 8, %s18
        %p189 = scmp.lt.s32.totalorder %s188, 15
        %s190 = scalar_select %p189, %s188, 15
        %s191 = smul.addr %s190, 4
        %s192 = smul.addr %s191, 4
        %s193 = scalar_lea.vmem %s0, %s192
        %s194 = smul.u32 8, %s18
      $region24: #{discriminator_forward.11} parent=19 // pred_fallthru
        _
    $region20: #{discriminator_forward.11} parent=5 // pred_fallthru
      _
    %p195 = scmp.le.s32.totalorder 1, %s11
    %p196 = scmp.lt.s32.totalorder %s11, 3
    %p197 = pnand %p195, %p196
    %p198 = pneg %p197
    // Predicated region
    $region25: #{discriminator_forward.11} parent=5 // pred_check
      _
    $region26: #{discriminator_forward.11} parent=5 // pred_check_branch
      %200 = sbr.rel (%p197) target = $region28
    $region27: #{discriminator_forward.11} parent=5 // pred_region
      %s201 = ssub.s32 %s11, 1
      %s202 = smul.u32 8, %s20
      %p203 = scmp.lt.s32.totalorder %s202, 15
      %s204 = scalar_select %p203, %s202, 15
      %s205 = smul.addr %s204, 4
      %s206 = smul.addr %s205, 4
      %s207 = scalar_lea.vmem %s0, %s206
      %p208 = pneg %p49
      %p209 = pneg %p46
      %p210 = scmp.lt.s32.totalorder %s21, 0
      %s211 = scalar_select %p210, %s21, 0
      %s212 = smul.addr %s211, 4
      %s213 = scalar_lea.vmem %s1, %s212
      %p214 = pneg %p75
      %p215 = pneg %p72
      %p216 = pneg %p103
      %p217 = pneg %p100
      %s218 = smul.u32 8, %s20
      %p219 = scmp.lt.s32.totalorder %s218, 15
      %s220 = scalar_select %p219, %s218, 15
      %p221 = scmp.lt.s32.totalorder %s21, 0
      %s222 = scalar_select %p221, %s21, 0
      %s223 = sadd.s32 %s222, %s220
      %s224 = smul.addr %s223, 4
      %s225 = scalar_lea.vmem %s2, %s224
      %p226 = pneg %p131
      %p227 = pneg %p128
      %p228 = scmp.lt.s32.totalorder %s20, 1
      %s229 = scalar_select %p228, %s20, 1
      %p230 = scmp.lt.s32.totalorder %s21, 0
      %s231 = scalar_select %p230, %s21, 0
      %s232 = sadd.s32 %s231, %s229
      %s233 = smul.addr %s232, 8
      %s234 = scalar_lea.vmem %s3, %s233
      %p235 = pneg %p159
      %p236 = pneg %p156
      %p237 = scmp.lt.s32.totalorder %s20, 1
      %s238 = scalar_select %p237, %s20, 1
      %p239 = scmp.lt.s32.totalorder %s21, 0
      %s240 = scalar_select %p239, %s21, 0
      %s241 = sadd.s32 %s240, %s238
      %s242 = smul.addr %s241, 8
      %s243 = scalar_lea.vmem %s4, %s242
      %s244 = smul.u32 8, %s20
      %p245 = scmp.lt.s32.totalorder %s244, 15
      %s246 = scalar_select %p245, %s244, 15
      %s247 = smul.addr %s246, 4
      %s248 = smul.addr %s247, 4
      %s249 = scalar_lea.vmem %s0, %s248
      %s250 = smul.u32 8, %s20
      %p251 = scmp.lt.s32.totalorder %s21, 0
      %s252 = scalar_select %p251, %s21, 0
      %s253 = smul.addr %s252, 4
      %s254 = scalar_lea.vmem %s1, %s253
      %s255 = smul.u32 8, %s20
      %p256 = scmp.lt.s32.totalorder %s255, 15
      %s257 = scalar_select %p256, %s255, 15
      %p258 = scmp.lt.s32.totalorder %s21, 0
      %s259 = scalar_select %p258, %s21, 0
      %s260 = sadd.s32 %s259, %s257
      %s261 = smul.addr %s260, 4
      %s262 = scalar_lea.vmem %s2, %s261
      %s263 = smul.u32 8, %s20
      %p264 = scmp.lt.s32.totalorder %s20, 1
      %s265 = scalar_select %p264, %s20, 1
      %p266 = scmp.lt.s32.totalorder %s21, 0
      %s267 = scalar_select %p266, %s21, 0
      %s268 = sadd.s32 %s267, %s265
      %s269 = smul.addr %s268, 8
      %s270 = scalar_lea.vmem %s3, %s269
      %p271 = scmp.lt.s32.totalorder %s20, 1
      %s272 = scalar_select %p271, %s20, 1
      %p273 = scmp.lt.s32.totalorder %s21, 0
      %s274 = scalar_select %p273, %s21, 0
      %s275 = sadd.s32 %s274, %s272
      %s276 = smul.addr %s275, 8
      %s277 = scalar_lea.vmem %s4, %s276
      %v279 = vld [vmem:[%s249] sm:$0xff]
      %v280 = vld [vmem:[%s249 + $0x8] sm:$0xff]
      %v281 = vld [vmem:[%s249 + $0x10] sm:$0xff]
      %v282 = vld [vmem:[%s249 + $0x18] sm:$0xff]
      %v283 = vld [vmem:[%s249 + $0x20] sm:$0xff]
      %v284 = vld [vmem:[%s249 + $0x28] sm:$0xff]
      %v285 = vld [vmem:[%s249 + $0x30] sm:$0xff]
      %v286 = vld [vmem:[%s249 + $0x38] sm:$0xff]
      %v287 = vld [vmem:[%s249 + $0x40] sm:$0xff]
      %v288 = vld [vmem:[%s249 + $0x48] sm:$0xff]
      %v289 = vld [vmem:[%s249 + $0x50] sm:$0xff]
      %v290 = vld [vmem:[%s249 + $0x58] sm:$0xff]
      %v291 = vld [vmem:[%s249 + $0x60] sm:$0xff]
      %v292 = vld [vmem:[%s249 + $0x68] sm:$0xff]
      %v293 = vld [vmem:[%s249 + $0x70] sm:$0xff]
      %v294 = vld [vmem:[%s249 + $0x78] sm:$0xff]
      %v295 = vld [vmem:[%s254] sm:$0xf]
      %v296 = vld [vmem:[%s254 + $0x4] sm:$0xf]
      %v297 = vld [vmem:[%s254 + $0x8] sm:$0xf]
      %v298 = vld [vmem:[%s254 + $0xc] sm:$0xf]
      %v299 = vld [vmem:[%s254 + $0x10] sm:$0xf]
      %v300 = vld [vmem:[%s254 + $0x14] sm:$0xf]
      %v301 = vld [vmem:[%s254 + $0x18] sm:$0xf]
      %v302 = vld [vmem:[%s254 + $0x1c] sm:$0xf]
      %v303 = vld [vmem:[%s254 + $0x20] sm:$0xf]
      %v304 = vld [vmem:[%s254 + $0x24] sm:$0xf]
      %v305 = vld [vmem:[%s254 + $0x28] sm:$0xf]
      %v306 = vld [vmem:[%s254 + $0x2c] sm:$0xf]
      %v307 = vld [vmem:[%s254 + $0x30] sm:$0xf]
      %v308 = vld [vmem:[%s254 + $0x34] sm:$0xf]
      %v309 = vld [vmem:[%s254 + $0x38] sm:$0xf]
      %v310 = vld [vmem:[%s254 + $0x3c] sm:$0xf]
      %v311 = vld [vmem:[%s254 + $0x40] sm:$0xf]
      %v312 = vld [vmem:[%s254 + $0x44] sm:$0xf]
      %v313 = vld [vmem:[%s254 + $0x48] sm:$0xf]
      %v314 = vld [vmem:[%s254 + $0x4c] sm:$0xf]
      %v315 = vld [vmem:[%s254 + $0x50] sm:$0xf]
      %v316 = vld [vmem:[%s254 + $0x54] sm:$0xf]
      %v317 = vld [vmem:[%s254 + $0x58] sm:$0xf]
      %v318 = vld [vmem:[%s254 + $0x5c] sm:$0xf]
      %v319 = vld [vmem:[%s254 + $0x60] sm:$0xf]
      %v320 = vld [vmem:[%s254 + $0x64] sm:$0xf]
      %v321 = vld [vmem:[%s254 + $0x68] sm:$0xf]
      %v322 = vld [vmem:[%s254 + $0x6c] sm:$0xf]
      %v323 = vld [vmem:[%s254 + $0x70] sm:$0xf]
      %v324 = vld [vmem:[%s254 + $0x74] sm:$0xf]
      %v325 = vld [vmem:[%s254 + $0x78] sm:$0xf]
      %v326 = vld [vmem:[%s254 + $0x7c] sm:$0xf]
      %v327 = vld [vmem:[%s254 + $0x80] sm:$0xf]
      %v328 = vld [vmem:[%s254 + $0x84] sm:$0xf]
      %v329 = vld [vmem:[%s254 + $0x88] sm:$0xf]
      %v330 = vld [vmem:[%s254 + $0x8c] sm:$0xf]
      %v331 = vld [vmem:[%s254 + $0x90] sm:$0xf]
      %v332 = vld [vmem:[%s254 + $0x94] sm:$0xf]
      %v333 = vld [vmem:[%s254 + $0x98] sm:$0xf]
      %v334 = vld [vmem:[%s254 + $0x9c] sm:$0xf]
      %v335 = vld [vmem:[%s254 + $0xa0] sm:$0xf]
      %v336 = vld [vmem:[%s254 + $0xa4] sm:$0xf]
      %v337 = vld [vmem:[%s254 + $0xa8] sm:$0xf]
      %v338 = vld [vmem:[%s254 + $0xac] sm:$0xf]
      %v339 = vld [vmem:[%s254 + $0xb0] sm:$0xf]
      %v340 = vld [vmem:[%s254 + $0xb4] sm:$0xf]
      %v341 = vld [vmem:[%s254 + $0xb8] sm:$0xf]
      %v342 = vld [vmem:[%s254 + $0xbc] sm:$0xf]
      %v343 = vld [vmem:[%s254 + $0xc0] sm:$0xf]
      %v344 = vld [vmem:[%s254 + $0xc4] sm:$0xf]
      %v361 = vunpack.c.l.b16 %v279
      %v362 = vunpack.c.h.b16 %v279
      %v363 = vunpack.c.l.b16 %v280
      %v364 = vunpack.c.h.b16 %v280
      %v365 = vunpack.c.l.b16 %v281
      %v366 = vunpack.c.h.b16 %v281
      %v367 = vunpack.c.l.b16 %v282
      %v368 = vunpack.c.h.b16 %v282
      %v369 = vunpack.c.l.b16 %v283
      %v370 = vunpack.c.h.b16 %v283
      %v371 = vunpack.c.l.b16 %v284
      %v372 = vunpack.c.h.b16 %v284
      %v373 = vunpack.c.l.b16 %v285
      %v374 = vunpack.c.h.b16 %v285
      %v375 = vunpack.c.l.b16 %v286
      %v376 = vunpack.c.h.b16 %v286
      %v377 = vunpack.c.l.b16 %v287
      %v378 = vunpack.c.h.b16 %v287
      %v379 = vunpack.c.l.b16 %v288
      %v380 = vunpack.c.h.b16 %v288
      %v381 = vunpack.c.l.b16 %v289
      %v382 = vunpack.c.h.b16 %v289
      %v383 = vunpack.c.l.b16 %v290
      %v384 = vunpack.c.h.b16 %v290
      %v385 = vunpack.c.l.b16 %v291
      %v386 = vunpack.c.h.b16 %v291
      %v387 = vunpack.c.l.b16 %v292
      %v388 = vunpack.c.h.b16 %v292
      %v389 = vunpack.c.l.b16 %v293
      %v390 = vunpack.c.h.b16 %v293
      %v391 = vunpack.c.l.b16 %v294
      %v392 = vunpack.c.h.b16 %v294
      %v393 = vpack.c.b16 %v365, %v361
      %v394 = vpack.c.b16 %v366, %v362
      %v395 = vpack.c.b16 %v367, %v363
      %v396 = vpack.c.b16 %v368, %v364
      %v397 = vpack.c.b16 %v373, %v369
      %v398 = vpack.c.b16 %v374, %v370
      %v399 = vpack.c.b16 %v375, %v371
      %v400 = vpack.c.b16 %v376, %v372
      %v401 = vpack.c.b16 %v381, %v377
      %v402 = vpack.c.b16 %v382, %v378
      %v403 = vpack.c.b16 %v383, %v379
      %v404 = vpack.c.b16 %v384, %v380
      %v405 = vpack.c.b16 %v389, %v385
      %v406 = vpack.c.b16 %v390, %v386
      %v407 = vpack.c.b16 %v391, %v387
      %v408 = vpack.c.b16 %v392, %v388
      %v471 = vunpack.c.l.b16 %v295
      %v472 = vunpack.c.l.b16 %v296
      %v473 = vunpack.c.l.b16 %v297
      %v474 = vunpack.c.l.b16 %v298
      %v475 = vunpack.c.l.b16 %v299
      %v476 = vunpack.c.l.b16 %v300
      %v477 = vunpack.c.l.b16 %v301
      %v478 = vunpack.c.l.b16 %v302
      %v479 = vunpack.c.l.b16 %v303
      %v480 = vunpack.c.l.b16 %v304
      %v481 = vunpack.c.l.b16 %v305
      %v482 = vunpack.c.l.b16 %v306
      %v483 = vunpack.c.l.b16 %v307
      %v484 = vunpack.c.l.b16 %v308
      %v485 = vunpack.c.l.b16 %v309
      %v486 = vunpack.c.l.b16 %v310
      %v487 = vunpack.c.l.b16 %v311
      %v488 = vunpack.c.l.b16 %v312
      %v489 = vunpack.c.l.b16 %v313
      %v490 = vunpack.c.l.b16 %v314
      %v491 = vunpack.c.l.b16 %v315
      %v492 = vunpack.c.l.b16 %v316
      %v493 = vunpack.c.l.b16 %v317
      %v494 = vunpack.c.l.b16 %v318
      %v495 = vunpack.c.l.b16 %v319
      %v496 = vunpack.c.l.b16 %v320
      %v497 = vunpack.c.l.b16 %v321
      %v498 = vunpack.c.l.b16 %v322
      %v499 = vunpack.c.l.b16 %v323
      %v500 = vunpack.c.l.b16 %v324
      %v501 = vunpack.c.l.b16 %v325
      %v502 = vunpack.c.l.b16 %v326
      %v503 = vunpack.c.l.b16 %v327
      %v504 = vunpack.c.l.b16 %v328
      %v505 = vunpack.c.l.b16 %v329
      %v506 = vunpack.c.l.b16 %v330
      %v507 = vunpack.c.l.b16 %v331
      %v508 = vunpack.c.l.b16 %v332
      %v509 = vunpack.c.l.b16 %v333
      %v510 = vunpack.c.l.b16 %v334
      %v511 = vunpack.c.l.b16 %v335
      %v512 = vunpack.c.l.b16 %v336
      %v513 = vunpack.c.l.b16 %v337
      %v514 = vunpack.c.l.b16 %v338
      %v515 = vunpack.c.l.b16 %v339
      %v516 = vunpack.c.l.b16 %v340
      %v517 = vunpack.c.l.b16 %v341
      %v518 = vunpack.c.l.b16 %v342
      %v519 = vunpack.c.l.b16 %v343
      %v520 = vunpack.c.l.b16 %v344
      %v521 = vpack.c.b16 %v472, %v471
      %v522 = vpack.c.b16 %v474, %v473
      %v523 = vpack.c.b16 %v476, %v475
      %v524 = vpack.c.b16 %v478, %v477
      %v525 = vpack.c.b16 %v480, %v479
      %v526 = vpack.c.b16 %v482, %v481
      %v527 = vpack.c.b16 %v484, %v483
      %v528 = vpack.c.b16 %v486, %v485
      %v529 = vpack.c.b16 %v488, %v487
      %v530 = vpack.c.b16 %v490, %v489
      %v531 = vpack.c.b16 %v492, %v491
      %v532 = vpack.c.b16 %v494, %v493
      %v533 = vpack.c.b16 %v496, %v495
      %v534 = vpack.c.b16 %v498, %v497
      %v535 = vpack.c.b16 %v500, %v499
      %v536 = vpack.c.b16 %v502, %v501
      %v537 = vpack.c.b16 %v504, %v503
      %v538 = vpack.c.b16 %v506, %v505
      %v539 = vpack.c.b16 %v508, %v507
      %v540 = vpack.c.b16 %v510, %v509
      %v541 = vpack.c.b16 %v512, %v511
      %v542 = vpack.c.b16 %v514, %v513
      %v543 = vpack.c.b16 %v516, %v515
      %v544 = vpack.c.b16 %v518, %v517
      %v545 = vpack.c.b16 %v520, %v519
      %vm571 = vcmask 130048
      %v573 = vsel %vm571, %v396, 0
      %v576 = vsel %vm571, %v400, 0
      %v579 = vsel %vm571, %v404, 0
      %v582 = vsel %vm571, %v408, 0
      %584 = vmatprep.subr.bf16.mxu0 0
      %585 = vmatpush1.bf16.msra.mxu0 %v521
      %586 = vmatprep.subr.bf16.mxu0 0
      %587 = vmatpush1.bf16.msra.mxu0 %v522
      %588 = vmatprep.subr.bf16.mxu0 0
      %589 = vmatpush1.bf16.msra.mxu0 %v523
      %590 = vmatprep.subr.bf16.mxu0 0
      %591 = vmatpush1.bf16.msra.mxu0 %v524
      %592 = vmatprep.subr.bf16.mxu0 0
      %593 = vmatpush1.bf16.msra.mxu0 %v525
      %594 = vmatprep.subr.bf16.mxu0 0
      %595 = vmatpush1.bf16.msra.mxu0 %v526
      %596 = vmatprep.subr.bf16.mxu0 0
      %597 = vmatpush1.bf16.msra.mxu0 %v527
      %598 = vmatprep.subr.bf16.mxu0 0
      %599 = vmatpush1.bf16.msra.mxu0 %v528
      %600 = vmatprep.subr.bf16.mxu0 0
      %601 = vmatpush1.bf16.msra.mxu0 %v529
      %602 = vmatprep.subr.bf16.mxu0 0
      %603 = vmatpush1.bf16.msra.mxu0 %v530
      %604 = vmatprep.subr.bf16.mxu0 0
      %605 = vmatpush1.bf16.msra.mxu0 %v531
      %606 = vmatprep.subr.bf16.mxu0 0
      %607 = vmatpush1.bf16.msra.mxu0 %v532
      %608 = vmatprep.subr.bf16.mxu0 0
      %609 = vmatpush1.bf16.msra.mxu0 %v533
      %610 = vmatprep.subr.bf16.mxu0 0
      %611 = vmatpush1.bf16.msra.mxu0 %v534
      %612 = vmatprep.subr.bf16.mxu0 0
      %613 = vmatpush1.bf16.msra.mxu0 %v535
      %614 = vmatprep.subr.bf16.mxu0 0
      %615 = vmatpush1.bf16.msra.mxu0 %v536
      %616 = vmatprep.mubr.bf16.mxu0 %v394
      %617 = vmatmul.mubr.bf16.gmra.mrb[0].mxu0 %v393
      %v618 = vpop.f32.mrb[0].mxu0
      %v619 = vadd.f32 0.0, %v618
      %v620 = vpop.f32.mrb[0].mxu0
      %v621 = vpop.f32.mrb[0].mxu0
      %v622 = vadd.f32 0.0, %v621
      %v623 = vpop.f32.mrb[0].mxu0
      %624 = vmatprep.mubr.bf16.mxu0 %v398
      %625 = vmatmul.mubr.bf16.gmra.mrb[0].mxu0 %v397
      %v626 = vpop.f32.mrb[0].mxu0
      %v627 = vadd.f32 0.0, %v626
      %v628 = vpop.f32.mrb[0].mxu0
      %v629 = vpop.f32.mrb[0].mxu0
      %v630 = vadd.f32 0.0, %v629
      %v631 = vpop.f32.mrb[0].mxu0
      %632 = vmatprep.mubr.bf16.mxu0 %v402
      %633 = vmatmul.mubr.bf16.gmra.mrb[0].mxu0 %v401
      %v634 = vpop.f32.mrb[0].mxu0
      %v635 = vadd.f32 0.0, %v634
      %v636 = vpop.f32.mrb[0].mxu0
      %v637 = vpop.f32.mrb[0].mxu0
      %v638 = vadd.f32 0.0, %v637
      %v639 = vpop.f32.mrb[0].mxu0
      %640 = vmatprep.mubr.bf16.mxu0 %v406
      %641 = vmatmul.mubr.bf16.gmra.mrb[0].mxu0 %v405
      %v642 = vpop.f32.mrb[0].mxu0
      %v643 = vadd.f32 0.0, %v642
      %v644 = vpop.f32.mrb[0].mxu0
      %v645 = vpop.f32.mrb[0].mxu0
      %v646 = vadd.f32 0.0, %v645
      %v647 = vpop.f32.mrb[0].mxu0
      %648 = vdwg.mxu0
      %649 = vmatprep.subr.bf16.mxu0 0
      %650 = vmatpush1.bf16.msra.mxu0 %v537
      %651 = vmatprep.subr.bf16.mxu0 0
      %652 = vmatpush1.bf16.msra.mxu0 %v538
      %653 = vmatprep.subr.bf16.mxu0 0
      %654 = vmatpush1.bf16.msra.mxu0 %v539
      %655 = vmatprep.subr.bf16.mxu0 0
      %656 = vmatpush1.bf16.msra.mxu0 %v540
      %657 = vmatprep.subr.bf16.mxu0 0
      %658 = vmatpush1.bf16.msra.mxu0 %v541
      %659 = vmatprep.subr.bf16.mxu0 0
      %660 = vmatpush1.bf16.msra.mxu0 %v542
      %661 = vmatprep.subr.bf16.mxu0 0
      %662 = vmatpush1.bf16.msra.mxu0 %v543
      %663 = vmatprep.subr.bf16.mxu0 0
      %664 = vmatpush1.bf16.msra.mxu0 %v544
      %665 = vmatprep.subr.bf16.mxu0 0
      %666 = vmatpush1.bf16.msra.mxu0 %v545
      %667 = vmatprep.subr.bf16.mxu0 0
      %668 = vmatpush1.bf16.msra.mxu0 0
      %669 = vmatprep.subr.bf16.mxu0 0
      %670 = vmatpush1.bf16.msra.mxu0 0
      %671 = vmatprep.subr.bf16.mxu0 0
      %672 = vmatpush1.bf16.msra.mxu0 0
      %673 = vmatprep.subr.bf16.mxu0 0
      %674 = vmatpush1.bf16.msra.mxu0 0
      %675 = vmatprep.subr.bf16.mxu0 0
      %676 = vmatpush1.bf16.msra.mxu0 0
      %677 = vmatprep.subr.bf16.mxu0 0
      %678 = vmatpush1.bf16.msra.mxu0 0
      %679 = vmatprep.subr.bf16.mxu0 0
      %680 = vmatpush1.bf16.msra.mxu0 0
      %681 = vmatprep.mubr.bf16.mxu0 %v573
      %682 = vmatmul.mubr.bf16.gmra.mrb[0].mxu0 %v395
      %v683 = vpop.f32.mrb[0].mxu0
      %v684 = vadd.f32 %v619, %v683
      %v685 = vpop.f32.mrb[0].mxu0
      %v686 = vpop.f32.mrb[0].mxu0
      %v687 = vadd.f32 %v622, %v686
      %v688 = vpop.f32.mrb[0].mxu0
      %689 = vmatprep.mubr.bf16.mxu0 %v576
      %690 = vmatmul.mubr.bf16.gmra.mrb[0].mxu0 %v399
      %v691 = vpop.f32.mrb[0].mxu0
      %v692 = vadd.f32 %v627, %v691
      %v693 = vpop.f32.mrb[0].mxu0
      %v694 = vpop.f32.mrb[0].mxu0
      %v695 = vadd.f32 %v630, %v694
      %v696 = vpop.f32.mrb[0].mxu0
      %697 = vmatprep.mubr.bf16.mxu0 %v579
      %698 = vmatmul.mubr.bf16.gmra.mrb[0].mxu0 %v403
      %v699 = vpop.f32.mrb[0].mxu0
      %v700 = vadd.f32 %v635, %v699
      %v701 = vpop.f32.mrb[0].mxu0
      %v702 = vpop.f32.mrb[0].mxu0
      %v703 = vadd.f32 %v638, %v702
      %v704 = vpop.f32.mrb[0].mxu0
      %705 = vmatprep.mubr.bf16.mxu0 %v582
      %706 = vmatmul.mubr.bf16.gmra.mrb[0].mxu0 %v407
      %v707 = vpop.f32.mrb[0].mxu0
      %v708 = vadd.f32 %v643, %v707
      %v709 = vpop.f32.mrb[0].mxu0
      %v710 = vpop.f32.mrb[0].mxu0
      %v711 = vadd.f32 %v646, %v710
      %v712 = vpop.f32.mrb[0].mxu0
      %713 = vdwg.mxu0
      %v714 = vpack.c.bf16 %v687, %v684
      %v715 = vpack.c.bf16 %v695, %v692
      %v716 = vpack.c.bf16 %v703, %v700
      %v717 = vpack.c.bf16 %v711, %v708
      %v722 = vunpack.c.l.b16 %v714
      %v723 = vunpack.c.h.b16 %v714
      %v724 = vunpack.c.l.b16 %v715
      %v725 = vunpack.c.h.b16 %v715
      %v726 = vunpack.c.l.b16 %v716
      %v727 = vunpack.c.h.b16 %v716
      %v728 = vunpack.c.l.b16 %v717
      %v729 = vunpack.c.h.b16 %v717
      %v730 = vpack.c.b16 %v722, %v722
      %v731 = vpack.c.b16 %v723, %v723
      %v732 = vpack.c.b16 %v724, %v724
      %v733 = vpack.c.b16 %v725, %v725
      %v734 = vpack.c.b16 %v726, %v726
      %v735 = vpack.c.b16 %v727, %v727
      %v736 = vpack.c.b16 %v728, %v728
      %v737 = vpack.c.b16 %v729, %v729
      %vm746 = vcmask 257024
      %747 = vst.msk [vmem:[%s262] sm:$0xf] %vm746, %v730
      %748 = vst.msk [vmem:[%s262 + $0x4] sm:$0xf] %vm746, %v731
      %749 = vst.msk [vmem:[%s262 + $0x8] sm:$0xf] %vm746, %v732
      %750 = vst.msk [vmem:[%s262 + $0xc] sm:$0xf] %vm746, %v733
      %751 = vst.msk [vmem:[%s262 + $0x10] sm:$0xf] %vm746, %v734
      %752 = vst.msk [vmem:[%s262 + $0x14] sm:$0xf] %vm746, %v735
      %753 = vst.msk [vmem:[%s262 + $0x18] sm:$0xf] %vm746, %v736
      %754 = vst.msk [vmem:[%s262 + $0x1c] sm:$0xf] %vm746, %v737
      %vm755 = vcmask 261120
      %v756 = vsel %vm755, %v684, 0.0
      %v757 = vsel %vm755, %v687, 0.0
      %v758 = vadd.f32 %v756, %v757
      %v759 = vsel %vm755, %v692, 0.0
      %v760 = vadd.f32 %v758, %v759
      %v761 = vsel %vm755, %v695, 0.0
      %v762 = vadd.f32 %v760, %v761
      %v763 = vsel %vm755, %v700, 0.0
      %v764 = vadd.f32 %v762, %v763
      %v765 = vsel %vm755, %v703, 0.0
      %v766 = vadd.f32 %v764, %v765
      %v767 = vsel %vm755, %v708, 0.0
      %v768 = vadd.f32 %v766, %v767
      %v769 = vsel %vm755, %v711, 0.0
      %v770 = vadd.f32 %v768, %v769
      %771 = vst.msk [vmem:[%s270] sm:$0xff] %vm755, %v770
      %v772 = vmul.f32 %v684, %v684
      %v773 = vmul.f32 %v687, %v687
      %v774 = vmul.f32 %v692, %v692
      %v775 = vmul.f32 %v695, %v695
      %v776 = vmul.f32 %v700, %v700
      %v777 = vmul.f32 %v703, %v703
      %v778 = vmul.f32 %v708, %v708
      %v779 = vmul.f32 %v711, %v711
      %v780 = vsel %vm755, %v772, 0.0
      %v781 = vsel %vm755, %v773, 0.0
      %v782 = vadd.f32 %v780, %v781
      %v783 = vsel %vm755, %v774, 0.0
      %v784 = vadd.f32 %v782, %v783
      %v785 = vsel %vm755, %v775, 0.0
      %v786 = vadd.f32 %v784, %v785
      %v787 = vsel %vm755, %v776, 0.0
      %v788 = vadd.f32 %v786, %v787
      %v789 = vsel %vm755, %v777, 0.0
      %v790 = vadd.f32 %v788, %v789
      %v791 = vsel %vm755, %v778, 0.0
      %v792 = vadd.f32 %v790, %v791
      %v793 = vsel %vm755, %v779, 0.0
      %v794 = vadd.f32 %v792, %v793
      %795 = vst.msk [vmem:[%s277] sm:$0xff] %vm755, %v794
      %s796 = smul.u32 8, %s20
      %p797 = scmp.lt.s32.totalorder %s796, 15
      %s798 = scalar_select %p797, %s796, 15
      %p799 = scmp.lt.s32.totalorder %s21, 0
      %s800 = scalar_select %p799, %s21, 0
      %s801 = sadd.s32 %s800, %s798
      %s802 = smul.addr %s801, 4
      %s803 = scalar_lea.vmem %s2, %s802
      %p804 = scmp.lt.s32.totalorder %s20, 1
      %s805 = scalar_select %p804, %s20, 1
      %p806 = scmp.lt.s32.totalorder %s21, 0
      %s807 = scalar_select %p806, %s21, 0
      %s808 = sadd.s32 %s807, %s805
      %s809 = smul.addr %s808, 8
      %s810 = scalar_lea.vmem %s3, %s809
      %p811 = scmp.lt.s32.totalorder %s20, 1
      %s812 = scalar_select %p811, %s20, 1
      %p813 = scmp.lt.s32.totalorder %s21, 0
      %s814 = scalar_select %p813, %s21, 0
      %s815 = sadd.s32 %s814, %s812
      %s816 = smul.addr %s815, 8
      %s817 = scalar_lea.vmem %s4, %s816
      // Predicated region
      $region29: #{discriminator_forward.11} parent=27 // pred_check
        %p818 = pneg %p100
      $region30: #{discriminator_forward.11} parent=27 // pred_check_branch
        %820 = sbr.rel (%p818) target = $region32
      $region31: #{discriminator_forward.11} parent=27 // pred_region
        %s821 = smul.u32 8, %s20
      $region32: #{discriminator_forward.11} parent=27 // pred_fallthru
        _
      // Predicated region
      $region33: #{discriminator_forward.11} parent=27 // pred_check
        %p822 = pneg %p128
      $region34: #{discriminator_forward.11} parent=27 // pred_check_branch
        %824 = sbr.rel (%p822) target = $region36
      $region35: #{discriminator_forward.11} parent=27 // pred_region
        _
      $region36: #{discriminator_forward.11} parent=27 // pred_fallthru
        _
      // Predicated region
      $region37: #{discriminator_forward.11} parent=27 // pred_check
        %p825 = pneg %p156
      $region38: #{discriminator_forward.11} parent=27 // pred_check_branch
        %827 = sbr.rel (%p825) target = $region40
      $region39: #{discriminator_forward.11} parent=27 // pred_region
        _
      $region40: #{discriminator_forward.11} parent=27 // pred_fallthru
        _
    $region28: #{discriminator_forward.11} parent=5 // pred_fallthru
      _
    %p828 = scmp.le.s32.totalorder 2, %s11
    // Predicated region
    $region41: #{discriminator_forward.11} parent=5 // pred_check
      %p829 = pneg %p828
    $region42: #{discriminator_forward.11} parent=5 // pred_check_branch
      %831 = sbr.rel (%p829) target = $region44
    $region43: #{discriminator_forward.11} parent=5 // pred_region
      %s832 = ssub.s32 %s11, 2
      // Predicated region
      $region45: #{discriminator_forward.11} parent=43 // pred_check
        %p833 = pneg %p106
      $region46: #{discriminator_forward.11} parent=43 // pred_check_branch
        %835 = sbr.rel (%p833) target = $region48
      $region47: #{discriminator_forward.11} parent=43 // pred_region
        %s836 = smul.u32 8, %s22
        %p837 = scmp.lt.s32.totalorder %s836, 15
        %s838 = scalar_select %p837, %s836, 15
        %p839 = scmp.lt.s32.totalorder %s23, 0
        %s840 = scalar_select %p839, %s23, 0
        %s841 = sadd.s32 %s840, %s838
        %s842 = smul.addr %s841, 4
        %s843 = scalar_lea.vmem %s2, %s842
      $region48: #{discriminator_forward.11} parent=43 // pred_fallthru
        _
      // Predicated region
      $region49: #{discriminator_forward.11} parent=43 // pred_check
        %p844 = pneg %p134
      $region50: #{discriminator_forward.11} parent=43 // pred_check_branch
        %846 = sbr.rel (%p844) target = $region52
      $region51: #{discriminator_forward.11} parent=43 // pred_region
        %p847 = scmp.lt.s32.totalorder %s22, 1
        %s848 = scalar_select %p847, %s22, 1
        %p849 = scmp.lt.s32.totalorder %s23, 0
        %s850 = scalar_select %p849, %s23, 0
        %s851 = sadd.s32 %s850, %s848
        %s852 = smul.addr %s851, 8
        %s853 = scalar_lea.vmem %s3, %s852
      $region52: #{discriminator_forward.11} parent=43 // pred_fallthru
        _
      // Predicated region
      $region53: #{discriminator_forward.11} parent=43 // pred_check
        %p854 = pneg %p162
      $region54: #{discriminator_forward.11} parent=43 // pred_check_branch
        %856 = sbr.rel (%p854) target = $region56
      $region55: #{discriminator_forward.11} parent=43 // pred_region
        %p857 = scmp.lt.s32.totalorder %s22, 1
        %s858 = scalar_select %p857, %s22, 1
        %p859 = scmp.lt.s32.totalorder %s23, 0
        %s860 = scalar_select %p859, %s23, 0
        %s861 = sadd.s32 %s860, %s858
        %s862 = smul.addr %s861, 8
        %s863 = scalar_lea.vmem %s4, %s862
      $region56: #{discriminator_forward.11} parent=43 // pred_fallthru
        _
    $region44: #{discriminator_forward.11} parent=5 // pred_fallthru
      _
  $region6: #{discriminator_forward.11} parent=0 // loop_footer
    %s15 = sadd.s32 1, %s11
  $region7: #{discriminator_forward.11} parent=0 // loop_footer_branch
    %10 = sbr.rel target = $region3
  $region8: #{discriminator_forward.11} parent=0 // loop_exit
    _

// kernel: discriminator_forward.12
$region0: #{discriminator_forward.12}
  #allocation0 [shape = 'u32[]', space=smem, size = 0x4, offset = 0x4, fixed_abs, tag = 'smem constant byte address 0x4 - core index']
  #allocation1 [shape = 'u32[144,128]{1,0:T(1,128)}', space=vmem, size = 0x12000, scoped, tag = 'internal scratch']
  %s0 = inlined_call_operand.vmem [shape: bf16[128,32], index: 0, kind: input, shape index: {}]
  %s1 = inlined_call_operand.vmem [shape: f32[1,32], index: 1, kind: input, shape index: {}]
  %s2 = inlined_call_operand.vmem [shape: f32[1,32], index: 2, kind: input, shape index: {}]
  %s3 = inlined_call_operand.vmem [shape: bf16[128,32], index: 3, kind: output, shape index: {}]
  %s4 = sld [smem:[#allocation0]]
  $region45: #{discriminator_forward.12} parent=0
    _
  %s6 = ssub.s32 1, %s4
  %s7 = scalar_select 0, %s6, %s4
  loop: start=0, step=1, limit=4
  $region2: #{discriminator_forward.12} parent=0 // loop_pre_header
    _
  $region3: #{discriminator_forward.12} parent=0 // loop_header
    %s9 = sphi 0, %s13
    %p10 = scmp.ge.s32.totalorder %s9, 4
    %s16 = sphi 0, %s28
    %s17 = sphi 0, %s24
    %s18 = sphi 0, %s16
    %s19 = sphi 0, %s17
    %s20 = sphi 0, %s18
    %s21 = sphi 0, %s19
    %s33 = sphi 0, %s35
    %s36 = sphi 0, %s33
    %s37 = sphi 0, %s36
    %s53 = sphi 0, %s37
    %s59 = sphi 0, %s61
    %s62 = sphi 0, %s59
    %s63 = sphi 0, %s62
    %s79 = sphi 0, %s63
    %s85 = sphi 0, %s87
    %s88 = sphi 0, %s85
    %s89 = sphi 0, %s88
    %s105 = sphi 0, %s89
    %s113 = sphi 0, %s115
    %s116 = sphi 0, %s113
    %s117 = sphi 0, %s116
    %s133 = sphi 0, %s117
  $region4: #{discriminator_forward.12} parent=0 // loop_header_branch
    %12 = sbr.rel (%p10) target = $region8
  $region5: #{discriminator_forward.12} parent=0 // loop_body
    %s14 = ssub.s32 %s9, 1
    %s15 = ssub.s32 %s9, 2
    %s22 = sadd.s32 1, %s17
    %p23 = scmp.ge.s32.totalorder %s22, 1
    %s24 = scalar_select %p23, 0, %s22
    %s25 = sadd.s32 1, %s16
    %s26 = scalar_select %p23, %s25, %s16
    %p27 = scmp.ge.s32.totalorder %s26, 2
    %s28 = scalar_select %p27, 0, %s26
    %s29 = ssub.s32 %s16, %s28
    %s30 = ssub.s32 %s17, %s24
    %s31 = sor.u32 %s29, %s30
    %p32 = scmp.eq.s32.totalorder %s31, 0
    %s34 = sadd.s32 %s33, 1
    %s35 = scalar_select %p32, %s33, %s34
    %p38 = pneg %p32
    %p39 = scmp.eq.s32.totalorder %s9, 1
    %p40 = por %p38, %p39
    %p41 = scmp.ne.s32.totalorder %s33, %s36
    %p42 = scmp.eq.s32.totalorder %s9, 0
    %p43 = por %p41, %p42
    %p44 = scmp.ne.s32.totalorder %s33, %s36
    %p45 = scmp.eq.s32.totalorder %s14, 1
    %p46 = por %p44, %p45
    %p47 = scmp.ne.s32.totalorder %s36, %s37
    %p48 = scmp.eq.s32.totalorder %s14, 0
    %p49 = por %p47, %p48
    %p50 = scmp.ne.s32.totalorder %s36, %s37
    %p51 = scmp.eq.s32.totalorder %s15, 1
    %p52 = por %p50, %p51
    %p54 = scmp.ne.s32.totalorder %s37, %s53
    %p55 = scmp.eq.s32.totalorder %s15, 0
    %p56 = por %p54, %p55
    %s57 = ssub.s32 %s17, %s24
    %p58 = scmp.eq.s32.totalorder %s57, 0
    %s60 = sadd.s32 %s59, 1
    %s61 = scalar_select %p58, %s59, %s60
    %p64 = pneg %p58
    %p65 = scmp.eq.s32.totalorder %s9, 1
    %p66 = por %p64, %p65
    %p67 = scmp.ne.s32.totalorder %s59, %s62
    %p68 = scmp.eq.s32.totalorder %s9, 0
    %p69 = por %p67, %p68
    %p70 = scmp.ne.s32.totalorder %s59, %s62
    %p71 = scmp.eq.s32.totalorder %s14, 1
    %p72 = por %p70, %p71
    %p73 = scmp.ne.s32.totalorder %s62, %s63
    %p74 = scmp.eq.s32.totalorder %s14, 0
    %p75 = por %p73, %p74
    %p76 = scmp.ne.s32.totalorder %s62, %s63
    %p77 = scmp.eq.s32.totalorder %s15, 1
    %p78 = por %p76, %p77
    %p80 = scmp.ne.s32.totalorder %s63, %s79
    %p81 = scmp.eq.s32.totalorder %s15, 0
    %p82 = por %p80, %p81
    %s83 = ssub.s32 %s17, %s24
    %p84 = scmp.eq.s32.totalorder %s83, 0
    %s86 = sadd.s32 %s85, 1
    %s87 = scalar_select %p84, %s85, %s86
    %p90 = pneg %p84
    %p91 = scmp.eq.s32.totalorder %s9, 1
    %p92 = por %p90, %p91
    %p93 = scmp.ne.s32.totalorder %s85, %s88
    %p94 = scmp.eq.s32.totalorder %s9, 0
    %p95 = por %p93, %p94
    %p96 = scmp.ne.s32.totalorder %s85, %s88
    %p97 = scmp.eq.s32.totalorder %s14, 1
    %p98 = por %p96, %p97
    %p99 = scmp.ne.s32.totalorder %s88, %s89
    %p100 = scmp.eq.s32.totalorder %s14, 0
    %p101 = por %p99, %p100
    %p102 = scmp.ne.s32.totalorder %s88, %s89
    %p103 = scmp.eq.s32.totalorder %s15, 1
    %p104 = por %p102, %p103
    %p106 = scmp.ne.s32.totalorder %s89, %s105
    %p107 = scmp.eq.s32.totalorder %s15, 0
    %p108 = por %p106, %p107
    %s109 = ssub.s32 %s16, %s28
    %s110 = ssub.s32 %s17, %s24
    %s111 = sor.u32 %s109, %s110
    %p112 = scmp.eq.s32.totalorder %s111, 0
    %s114 = sadd.s32 %s113, 1
    %s115 = scalar_select %p112, %s113, %s114
    %p118 = pneg %p112
    %p119 = scmp.eq.s32.totalorder %s9, 1
    %p120 = por %p118, %p119
    %p121 = scmp.ne.s32.totalorder %s113, %s116
    %p122 = scmp.eq.s32.totalorder %s9, 0
    %p123 = por %p121, %p122
    %p124 = scmp.ne.s32.totalorder %s113, %s116
    %p125 = scmp.eq.s32.totalorder %s14, 1
    %p126 = por %p124, %p125
    %p127 = scmp.ne.s32.totalorder %s116, %s117
    %p128 = scmp.eq.s32.totalorder %s14, 0
    %p129 = por %p127, %p128
    %p130 = scmp.ne.s32.totalorder %s116, %s117
    %p131 = scmp.eq.s32.totalorder %s15, 1
    %p132 = por %p130, %p131
    %p134 = scmp.ne.s32.totalorder %s117, %s133
    %p135 = scmp.eq.s32.totalorder %s15, 0
    %p136 = por %p134, %p135
    %p137 = scmp.le.s32.totalorder 1, %s9
    %p138 = scmp.lt.s32.totalorder %s9, 3
    %p139 = pnand %p137, %p138
    %p140 = pneg %p139
    // Predicated region
    $region9: #{discriminator_forward.12} parent=5 // pred_check
      _
    $region10: #{discriminator_forward.12} parent=5 // pred_check_branch
      %142 = sbr.rel (%p139) target = $region12
    $region11: #{discriminator_forward.12} parent=5 // pred_region
      %s143 = ssub.s32 %s9, 1
      // Predicated region
      $region13: #{discriminator_forward.12} parent=11 // pred_check
        %p144 = pneg %p75
      $region14: #{discriminator_forward.12} parent=11 // pred_check_branch
        %146 = sbr.rel (%p144) target = $region16
      $region15: #{discriminator_forward.12} parent=11 // pred_region
        %p147 = scmp.lt.s32.totalorder %s19, 0
        %s148 = scalar_select %p147, %s19, 0
        %s149 = scalar_lea.vmem %s1, %s148
      $region16: #{discriminator_forward.12} parent=11 // pred_fallthru
        _
      // Predicated region
      $region17: #{discriminator_forward.12} parent=11 // pred_check
        %p150 = pneg %p101
      $region18: #{discriminator_forward.12} parent=11 // pred_check_branch
        %152 = sbr.rel (%p150) target = $region20
      $region19: #{discriminator_forward.12} parent=11 // pred_region
        %p153 = scmp.lt.s32.totalorder %s19, 0
        %s154 = scalar_select %p153, %s19, 0
        %s155 = scalar_lea.vmem %s2, %s154
      $region20: #{discriminator_forward.12} parent=11 // pred_fallthru
        _
    $region12: #{discriminator_forward.12} parent=5 // pred_fallthru
      _
    %p156 = scmp.lt.s32.totalorder %s9, 2
    // Predicated region
    $region21: #{discriminator_forward.12} parent=5 // pred_check
      %p157 = pneg %p156
    $region22: #{discriminator_forward.12} parent=5 // pred_check_branch
      %159 = sbr.rel (%p157) target = $region24
    $region23: #{discriminator_forward.12} parent=5 // pred_region
      // Predicated region
      $region25: #{discriminator_forward.12} parent=23 // pred_check
        %p160 = pneg %p43
      $region26: #{discriminator_forward.12} parent=23 // pred_check_branch
        %162 = sbr.rel (%p160) target = $region28
      $region27: #{discriminator_forward.12} parent=23 // pred_region
        %s163 = smul.u32 8, %s16
        %p164 = scmp.lt.s32.totalorder %s163, 15
        %s165 = scalar_select %p164, %s163, 15
        %p166 = scmp.lt.s32.totalorder %s17, 0
        %s167 = scalar_select %p166, %s17, 0
        %s168 = sadd.s32 %s167, %s165
        %s169 = smul.addr %s168, 4
        %s170 = scalar_lea.vmem %s0, %s169
        %s171 = smul.u32 8, %s16
      $region28: #{discriminator_forward.12} parent=23 // pred_fallthru
        _
    $region24: #{discriminator_forward.12} parent=5 // pred_fallthru
      _
    %p172 = scmp.le.s32.totalorder 1, %s9
    %p173 = scmp.lt.s32.totalorder %s9, 3
    %p174 = pnand %p172, %p173
    %p175 = pneg %p174
    // Predicated region
    $region29: #{discriminator_forward.12} parent=5 // pred_check
      _
    $region30: #{discriminator_forward.12} parent=5 // pred_check_branch
      %177 = sbr.rel (%p174) target = $region32
    $region31: #{discriminator_forward.12} parent=5 // pred_region
      %s178 = ssub.s32 %s9, 1
      %s179 = smul.u32 8, %s18
      %p180 = scmp.lt.s32.totalorder %s179, 15
      %s181 = scalar_select %p180, %s179, 15
      %p182 = scmp.lt.s32.totalorder %s19, 0
      %s183 = scalar_select %p182, %s19, 0
      %s184 = sadd.s32 %s183, %s181
      %s185 = smul.addr %s184, 4
      %s186 = scalar_lea.vmem %s0, %s185
      %p187 = pneg %p49
      %p188 = pneg %p46
      %p189 = scmp.lt.s32.totalorder %s19, 0
      %s190 = scalar_select %p189, %s19, 0
      %s191 = scalar_lea.vmem %s1, %s190
      %p192 = pneg %p75
      %p193 = pneg %p72
      %p194 = scmp.lt.s32.totalorder %s19, 0
      %s195 = scalar_select %p194, %s19, 0
      %s196 = scalar_lea.vmem %s2, %s195
      %p197 = pneg %p101
      %p198 = pneg %p98
      %p199 = pneg %p129
      %p200 = pneg %p126
      %s201 = smul.u32 8, %s18
      %p202 = scmp.lt.s32.totalorder %s201, 15
      %s203 = scalar_select %p202, %s201, 15
      %p204 = scmp.lt.s32.totalorder %s19, 0
      %s205 = scalar_select %p204, %s19, 0
      %s206 = sadd.s32 %s205, %s203
      %s207 = smul.addr %s206, 4
      %s208 = scalar_lea.vmem %s3, %s207
      %s209 = smul.u32 8, %s18
      %p210 = scmp.lt.s32.totalorder %s209, 15
      %s211 = scalar_select %p210, %s209, 15
      %p212 = scmp.lt.s32.totalorder %s19, 0
      %s213 = scalar_select %p212, %s19, 0
      %s214 = sadd.s32 %s213, %s211
      %s215 = smul.addr %s214, 4
      %s216 = scalar_lea.vmem %s0, %s215
      %s217 = smul.u32 8, %s18
      %p218 = scmp.lt.s32.totalorder %s19, 0
      %s219 = scalar_select %p218, %s19, 0
      %s220 = scalar_lea.vmem %s1, %s219
      %p221 = scmp.lt.s32.totalorder %s19, 0
      %s222 = scalar_select %p221, %s19, 0
      %s223 = scalar_lea.vmem %s2, %s222
      %s224 = smul.u32 8, %s18
      %p225 = scmp.lt.s32.totalorder %s224, 15
      %s226 = scalar_select %p225, %s224, 15
      %p227 = scmp.lt.s32.totalorder %s19, 0
      %s228 = scalar_select %p227, %s19, 0
      %s229 = sadd.s32 %s228, %s226
      %s230 = smul.addr %s229, 4
      %s231 = scalar_lea.vmem %s3, %s230
      %s232 = smul.u32 8, %s18
      %v233 = vld [vmem:[%s216] sm:$0xf]
      %v234 = vld [vmem:[%s216 + $0x4] sm:$0xf]
      %v235 = vld [vmem:[%s216 + $0x8] sm:$0xf]
      %v236 = vld [vmem:[%s216 + $0xc] sm:$0xf]
      %v237 = vld [vmem:[%s216 + $0x10] sm:$0xf]
      %v238 = vld [vmem:[%s216 + $0x14] sm:$0xf]
      %v239 = vld [vmem:[%s216 + $0x18] sm:$0xf]
      %v240 = vld [vmem:[%s216 + $0x1c] sm:$0xf]
      %v241 = vunpack.c.l.bf16 %v233
      %v242 = vunpack.c.l.bf16 %v234
      %v243 = vunpack.c.l.bf16 %v235
      %v244 = vunpack.c.l.bf16 %v236
      %v245 = vunpack.c.l.bf16 %v237
      %v246 = vunpack.c.l.bf16 %v238
      %v247 = vunpack.c.l.bf16 %v239
      %v248 = vunpack.c.l.bf16 %v240
      %v249 = vld [vmem:[%s220] sm:$0x1]
      %v251 = vlaneseq
      %v252 = vshrl.u32 %v251, 7
      %v253 = vsub.s32 0, %v252
      %v254 = vrot.slane %v249, %v253
      %v256 = vmul.f32 %v241, %v254
      %v257 = vmul.f32 %v242, %v254
      %v258 = vmul.f32 %v243, %v254
      %v259 = vmul.f32 %v244, %v254
      %v260 = vmul.f32 %v245, %v254
      %v261 = vmul.f32 %v246, %v254
      %v262 = vmul.f32 %v247, %v254
      %v263 = vmul.f32 %v248, %v254
      %v264 = vld [vmem:[%s223] sm:$0x1]
      %v266 = vlaneseq
      %v267 = vshrl.u32 %v266, 7
      %v268 = vsub.s32 0, %v267
      %v269 = vrot.slane %v264, %v268
      %v271 = vadd.f32 %v256, %v269
      %v272 = vadd.f32 %v257, %v269
      %v273 = vadd.f32 %v258, %v269
      %v274 = vadd.f32 %v259, %v269
      %v275 = vadd.f32 %v260, %v269
      %v276 = vadd.f32 %v261, %v269
      %v277 = vadd.f32 %v262, %v269
      %v278 = vadd.f32 %v263, %v269
      %vm279 = vcmp.gt.f32.partialorder %v271, 0.0
      %vm280 = vcmp.gt.f32.partialorder %v272, 0.0
      %vm281 = vcmp.gt.f32.partialorder %v273, 0.0
      %vm282 = vcmp.gt.f32.partialorder %v274, 0.0
      %vm283 = vcmp.gt.f32.partialorder %v275, 0.0
      %vm284 = vcmp.gt.f32.partialorder %v276, 0.0
      %vm285 = vcmp.gt.f32.partialorder %v277, 0.0
      %vm286 = vcmp.gt.f32.partialorder %v278, 0.0
      %v287 = vmul.f32 %v271, 0.2
      %v288 = vmul.f32 %v272, 0.2
      %v289 = vmul.f32 %v273, 0.2
      %v290 = vmul.f32 %v274, 0.2
      %v291 = vmul.f32 %v275, 0.2
      %v292 = vmul.f32 %v276, 0.2
      %v293 = vmul.f32 %v277, 0.2
      %v294 = vmul.f32 %v278, 0.2
      %v295 = vsel %vm279, %v271, %v287
      %v296 = vsel %vm280, %v272, %v288
      %v297 = vsel %vm281, %v273, %v289
      %v298 = vsel %vm282, %v274, %v290
      %v299 = vsel %vm283, %v275, %v291
      %v300 = vsel %vm284, %v276, %v292
      %v301 = vsel %vm285, %v277, %v293
      %v302 = vsel %vm286, %v278, %v294
      %v303 = vpack.c.bf16 %v296, %v295
      %v304 = vpack.c.bf16 %v298, %v297
      %v305 = vpack.c.bf16 %v300, %v299
      %v306 = vpack.c.bf16 %v302, %v301
      %v311 = vunpack.c.l.b16 %v303
      %v312 = vunpack.c.h.b16 %v303
      %v313 = vunpack.c.l.b16 %v304
      %v314 = vunpack.c.h.b16 %v304
      %v315 = vunpack.c.l.b16 %v305
      %v316 = vunpack.c.h.b16 %v305
      %v317 = vunpack.c.l.b16 %v306
      %v318 = vunpack.c.h.b16 %v306
      %v319 = vpack.c.b16 %v311, %v311
      %v320 = vpack.c.b16 %v312, %v312
      %v321 = vpack.c.b16 %v313, %v313
      %v322 = vpack.c.b16 %v314, %v314
      %v323 = vpack.c.b16 %v315, %v315
      %v324 = vpack.c.b16 %v316, %v316
      %v325 = vpack.c.b16 %v317, %v317
      %v326 = vpack.c.b16 %v318, %v318
      %vm335 = vcmask 257024
      %336 = vst.msk [vmem:[%s231] sm:$0xf] %vm335, %v319
      %337 = vst.msk [vmem:[%s231 + $0x4] sm:$0xf] %vm335, %v320
      %338 = vst.msk [vmem:[%s231 + $0x8] sm:$0xf] %vm335, %v321
      %339 = vst.msk [vmem:[%s231 + $0xc] sm:$0xf] %vm335, %v322
      %340 = vst.msk [vmem:[%s231 + $0x10] sm:$0xf] %vm335, %v323
      %341 = vst.msk [vmem:[%s231 + $0x14] sm:$0xf] %vm335, %v324
      %342 = vst.msk [vmem:[%s231 + $0x18] sm:$0xf] %vm335, %v325
      %343 = vst.msk [vmem:[%s231 + $0x1c] sm:$0xf] %vm335, %v326
      %s344 = smul.u32 8, %s18
      %p345 = scmp.lt.s32.totalorder %s344, 15
      %s346 = scalar_select %p345, %s344, 15
      %p347 = scmp.lt.s32.totalorder %s19, 0
      %s348 = scalar_select %p347, %s19, 0
      %s349 = sadd.s32 %s348, %s346
      %s350 = smul.addr %s349, 4
      %s351 = scalar_lea.vmem %s3, %s350
      // Predicated region
      $region33: #{discriminator_forward.12} parent=31 // pred_check
        %p352 = pneg %p126
      $region34: #{discriminator_forward.12} parent=31 // pred_check_branch
        %354 = sbr.rel (%p352) target = $region36
      $region35: #{discriminator_forward.12} parent=31 // pred_region
        %s355 = smul.u32 8, %s18
      $region36: #{discriminator_forward.12} parent=31 // pred_fallthru
        _
    $region32: #{discriminator_forward.12} parent=5 // pred_fallthru
      _
    %p356 = scmp.le.s32.totalorder 2, %s9
    // Predicated region
    $region37: #{discriminator_forward.12} parent=5 // pred_check
      %p357 = pneg %p356
    $region38: #{discriminator_forward.12} parent=5 // pred_check_branch
      %359 = sbr.rel (%p357) target = $region40
    $region39: #{discriminator_forward.12} parent=5 // pred_region
      %s360 = ssub.s32 %s9, 2
      // Predicated region
      $region41: #{discriminator_forward.12} parent=39 // pred_check
        %p361 = pneg %p132
      $region42: #{discriminator_forward.12} parent=39 // pred_check_branch
        %363 = sbr.rel (%p361) target = $region44
      $region43: #{discriminator_forward.12} parent=39 // pred_region
        %s364 = smul.u32 8, %s20
        %p365 = scmp.lt.s32.totalorder %s364, 15
        %s366 = scalar_select %p365, %s364, 15
        %p367 = scmp.lt.s32.totalorder %s21, 0
        %s368 = scalar_select %p367, %s21, 0
        %s369 = sadd.s32 %s368, %s366
        %s370 = smul.addr %s369, 4
        %s371 = scalar_lea.vmem %s3, %s370
      $region44: #{discriminator_forward.12} parent=39 // pred_fallthru
        _
    $region40: #{discriminator_forward.12} parent=5 // pred_fallthru
      _
  $region6: #{discriminator_forward.12} parent=0 // loop_footer
    %s13 = sadd.s32 1, %s9
  $region7: #{discriminator_forward.12} parent=0 // loop_footer_branch
    %8 = sbr.rel target = $region3
  $region8: #{discriminator_forward.12} parent=0 // loop_exit
    _

// kernel: discriminator_forward.13
$region0: #{discriminator_forward.13}
  #allocation0 [shape = 'u32[]', space=smem, size = 0x4, offset = 0x4, fixed_abs, tag = 'smem constant byte address 0x4 - core index']
  #allocation1 [shape = 'u32[144,128]{1,0:T(1,128)}', space=vmem, size = 0x12000, scoped, tag = 'internal scratch']
  %s0 = inlined_call_operand.vmem [shape: bf16[32,800], index: 0, kind: input, shape index: {}]
  %s1 = inlined_call_operand.vmem [shape: bf16[800,64], index: 1, kind: input, shape index: {}]
  %s2 = inlined_call_operand.vmem [shape: bf16[32,64], index: 2, kind: output, shape index: {0}]
  %s3 = inlined_call_operand.vmem [shape: f32[16,64], index: 3, kind: output, shape index: {1}]
  %s4 = inlined_call_operand.vmem [shape: f32[16,64], index: 4, kind: output, shape index: {2}]
  %5 = xla_tuple %s2, %s3, %s4
  %s6 = sld [smem:[#allocation0]]
  $region57: #{discriminator_forward.13} parent=0
    _
  %s8 = ssub.s32 1, %s6
  %s9 = scalar_select 0, %s8, %s6
  loop: start=0, step=1, limit=4
  $region2: #{discriminator_forward.13} parent=0 // loop_pre_header
    _
  $region3: #{discriminator_forward.13} parent=0 // loop_header
    %s11 = sphi 0, %s15
    %p12 = scmp.ge.s32.totalorder %s11, 4
    %s18 = sphi 0, %s30
    %s19 = sphi 0, %s26
    %s20 = sphi 0, %s18
    %s21 = sphi 0, %s19
    %s22 = sphi 0, %s20
    %s23 = sphi 0, %s21
    %s33 = sphi 0, %s35
    %s36 = sphi 0, %s33
    %s37 = sphi 0, %s36
    %s53 = sphi 0, %s37
    %s59 = sphi 0, %s61
    %s62 = sphi 0, %s59
    %s63 = sphi 0, %s62
    %s79 = sphi 0, %s63
    %s87 = sphi 0, %s89
    %s90 = sphi 0, %s87
    %s91 = sphi 0, %s90
    %s107 = sphi 0, %s91
    %s115 = sphi 0, %s117
    %s118 = sphi 0, %s115
    %s119 = sphi 0, %s118
    %s135 = sphi 0, %s119
    %s143 = sphi 0, %s145
    %s146 = sphi 0, %s143
    %s147 = sphi 0, %s146
    %s163 = sphi 0, %s147
  $region4: #{discriminator_forward.13} parent=0 // loop_header_branch
    %14 = sbr.rel (%p12) target = $region8
  $region5: #{discriminator_forward.13} parent=0 // loop_body
    %s16 = ssub.s32 %s11, 1
    %s17 = ssub.s32 %s11, 2
    %s24 = sadd.s32 1, %s19
    %p25 = scmp.ge.s32.totalorder %s24, 1
    %s26 = scalar_select %p25, 0, %s24
    %s27 = sadd.s32 1, %s18
    %s28 = scalar_select %p25, %s27, %s18
    %p29 = scmp.ge.s32.totalorder %s28, 2
    %s30 = scalar_select %p29, 0, %s28
    %s31 = ssub.s32 %s18, %s30
    %p32 = scmp.eq.s32.totalorder %s31, 0
    %s34 = sadd.s32 %s33, 1
    %s35 = scalar_select %p32, %s33, %s34
    %p38 = pneg %p32
    %p39 = scmp.eq.s32.totalorder %s11, 1
    %p40 = por %p38, %p39
    %p41 = scmp.ne.s32.totalorder %s33, %s36
    %p42 = scmp.eq.s32.totalorder %s11, 0
    %p43 = por %p41, %p42
    %p44 = scmp.ne.s32.totalorder %s33, %s36
    %p45 = scmp.eq.s32.totalorder %s16, 1
    %p46 = por %p44, %p45
    %p47 = scmp.ne.s32.totalorder %s36, %s37
    %p48 = scmp.eq.s32.totalorder %s16, 0
    %p49 = por %p47, %p48
    %p50 = scmp.ne.s32.totalorder %s36, %s37
    %p51 = scmp.eq.s32.totalorder %s17, 1
    %p52 = por %p50, %p51
    %p54 = scmp.ne.s32.totalorder %s37, %s53
    %p55 = scmp.eq.s32.totalorder %s17, 0
    %p56 = por %p54, %p55
    %s57 = ssub.s32 %s19, %s26
    %p58 = scmp.eq.s32.totalorder %s57, 0
    %s60 = sadd.s32 %s59, 1
    %s61 = scalar_select %p58, %s59, %s60
    %p64 = pneg %p58
    %p65 = scmp.eq.s32.totalorder %s11, 1
    %p66 = por %p64, %p65
    %p67 = scmp.ne.s32.totalorder %s59, %s62
    %p68 = scmp.eq.s32.totalorder %s11, 0
    %p69 = por %p67, %p68
    %p70 = scmp.ne.s32.totalorder %s59, %s62
    %p71 = scmp.eq.s32.totalorder %s16, 1
    %p72 = por %p70, %p71
    %p73 = scmp.ne.s32.totalorder %s62, %s63
    %p74 = scmp.eq.s32.totalorder %s16, 0
    %p75 = por %p73, %p74
    %p76 = scmp.ne.s32.totalorder %s62, %s63
    %p77 = scmp.eq.s32.totalorder %s17, 1
    %p78 = por %p76, %p77
    %p80 = scmp.ne.s32.totalorder %s63, %s79
    %p81 = scmp.eq.s32.totalorder %s17, 0
    %p82 = por %p80, %p81
    %s83 = ssub.s32 %s18, %s30
    %s84 = ssub.s32 %s19, %s26
    %s85 = sor.u32 %s83, %s84
    %p86 = scmp.eq.s32.totalorder %s85, 0
    %s88 = sadd.s32 %s87, 1
    %s89 = scalar_select %p86, %s87, %s88
    %p92 = pneg %p86
    %p93 = scmp.eq.s32.totalorder %s11, 1
    %p94 = por %p92, %p93
    %p95 = scmp.ne.s32.totalorder %s87, %s90
    %p96 = scmp.eq.s32.totalorder %s11, 0
    %p97 = por %p95, %p96
    %p98 = scmp.ne.s32.totalorder %s87, %s90
    %p99 = scmp.eq.s32.totalorder %s16, 1
    %p100 = por %p98, %p99
    %p101 = scmp.ne.s32.totalorder %s90, %s91
    %p102 = scmp.eq.s32.totalorder %s16, 0
    %p103 = por %p101, %p102
    %p104 = scmp.ne.s32.totalorder %s90, %s91
    %p105 = scmp.eq.s32.totalorder %s17, 1
    %p106 = por %p104, %p105
    %p108 = scmp.ne.s32.totalorder %s91, %s107
    %p109 = scmp.eq.s32.totalorder %s17, 0
    %p110 = por %p108, %p109
    %s111 = ssub.s32 %s18, %s30
    %s112 = ssub.s32 %s19, %s26
    %s113 = sor.u32 %s111, %s112
    %p114 = scmp.eq.s32.totalorder %s113, 0
    %s116 = sadd.s32 %s115, 1
    %s117 = scalar_select %p114, %s115, %s116
    %p120 = pneg %p114
    %p121 = scmp.eq.s32.totalorder %s11, 1
    %p122 = por %p120, %p121
    %p123 = scmp.ne.s32.totalorder %s115, %s118
    %p124 = scmp.eq.s32.totalorder %s11, 0
    %p125 = por %p123, %p124
    %p126 = scmp.ne.s32.totalorder %s115, %s118
    %p127 = scmp.eq.s32.totalorder %s16, 1
    %p128 = por %p126, %p127
    %p129 = scmp.ne.s32.totalorder %s118, %s119
    %p130 = scmp.eq.s32.totalorder %s16, 0
    %p131 = por %p129, %p130
    %p132 = scmp.ne.s32.totalorder %s118, %s119
    %p133 = scmp.eq.s32.totalorder %s17, 1
    %p134 = por %p132, %p133
    %p136 = scmp.ne.s32.totalorder %s119, %s135
    %p137 = scmp.eq.s32.totalorder %s17, 0
    %p138 = por %p136, %p137
    %s139 = ssub.s32 %s18, %s30
    %s140 = ssub.s32 %s19, %s26
    %s141 = sor.u32 %s139, %s140
    %p142 = scmp.eq.s32.totalorder %s141, 0
    %s144 = sadd.s32 %s143, 1
    %s145 = scalar_select %p142, %s143, %s144
    %p148 = pneg %p142
    %p149 = scmp.eq.s32.totalorder %s11, 1
    %p150 = por %p148, %p149
    %p151 = scmp.ne.s32.totalorder %s143, %s146
    %p152 = scmp.eq.s32.totalorder %s11, 0
    %p153 = por %p151, %p152
    %p154 = scmp.ne.s32.totalorder %s143, %s146
    %p155 = scmp.eq.s32.totalorder %s16, 1
    %p156 = por %p154, %p155
    %p157 = scmp.ne.s32.totalorder %s146, %s147
    %p158 = scmp.eq.s32.totalorder %s16, 0
    %p159 = por %p157, %p158
    %p160 = scmp.ne.s32.totalorder %s146, %s147
    %p161 = scmp.eq.s32.totalorder %s17, 1
    %p162 = por %p160, %p161
    %p164 = scmp.ne.s32.totalorder %s147, %s163
    %p165 = scmp.eq.s32.totalorder %s17, 0
    %p166 = por %p164, %p165
    %p167 = scmp.le.s32.totalorder 1, %s11
    %p168 = scmp.lt.s32.totalorder %s11, 3
    %p169 = pnand %p167, %p168
    %p170 = pneg %p169
    // Predicated region
    $region9: #{discriminator_forward.13} parent=5 // pred_check
      _
    $region10: #{discriminator_forward.13} parent=5 // pred_check_branch
      %172 = sbr.rel (%p169) target = $region12
    $region11: #{discriminator_forward.13} parent=5 // pred_region
      %s173 = ssub.s32 %s11, 1
      // Predicated region
      $region13: #{discriminator_forward.13} parent=11 // pred_check
        %p174 = pneg %p75
      $region14: #{discriminator_forward.13} parent=11 // pred_check_branch
        %176 = sbr.rel (%p174) target = $region16
      $region15: #{discriminator_forward.13} parent=11 // pred_region
        %p177 = scmp.lt.s32.totalorder %s21, 0
        %s178 = scalar_select %p177, %s21, 0
        %s179 = smul.addr %s178, 4
        %s180 = scalar_lea.vmem %s1, %s179
      $region16: #{discriminator_forward.13} parent=11 // pred_fallthru
        _
    $region12: #{discriminator_forward.13} parent=5 // pred_fallthru
      _
    %p181 = scmp.lt.s32.totalorder %s11, 2
    // Predicated region
    $region17: #{discriminator_forward.13} parent=5 // pred_check
      %p182 = pneg %p181
    $region18: #{discriminator_forward.13} parent=5 // pred_check_branch
      %184 = sbr.rel (%p182) target = $region20
    $region19: #{discriminator_forward.13} parent=5 // pred_region
      // Predicated region
      $region21: #{discriminator_forward.13} parent=19 // pred_check
        %p185 = pneg %p43
      $region22: #{discriminator_forward.13} parent=19 // pred_check_branch
        %187 = sbr.rel (%p185) target = $region24
      $region23: #{discriminator_forward.13} parent=19 // pred_region
        %s188 = smul.u32 2, %s18
        %p189 = scmp.lt.s32.totalorder %s188, 3
        %s190 = scalar_select %p189, %s188, 3
        %s191 = smul.addr %s190, 7
        %s192 = smul.addr %s191, 4
        %s193 = scalar_lea.vmem %s0, %s192
        %s194 = smul.u32 2, %s18
      $region24: #{discriminator_forward.13} parent=19 // pred_fallthru
        _
    $region20: #{discriminator_forward.13} parent=5 // pred_fallthru
      _
    %p195 = scmp.le.s32.totalorder 1, %s11
    %p196 = scmp.lt.s32.totalorder %s11, 3
    %p197 = pnand %p195, %p196
    %p198 = pneg %p197
    // Predicated region
    $region25: #{discriminator_forward.13} parent=5 // pred_check
      _
    $region26: #{discriminator_forward.13} parent=5 // pred_check_branch
      %200 = sbr.rel (%p197) target = $region28
    $region27: #{discriminator_forward.13} parent=5 // pred_region
      %s201 = ssub.s32 %s11, 1
      %s202 = smul.u32 2, %s20
      %p203 = scmp.lt.s32.totalorder %s202, 3
      %s204 = scalar_select %p203, %s202, 3
      %s205 = smul.addr %s204, 7
      %s206 = smul.addr %s205, 4
      %s207 = scalar_lea.vmem %s0, %s206
      %p208 = pneg %p49
      %p209 = pneg %p46
      %p210 = scmp.lt.s32.totalorder %s21, 0
      %s211 = scalar_select %p210, %s21, 0
      %s212 = smul.addr %s211, 4
      %s213 = scalar_lea.vmem %s1, %s212
      %p214 = pneg %p75
      %p215 = pneg %p72
      %p216 = pneg %p103
      %p217 = pneg %p100
      %s218 = smul.u32 2, %s20
      %p219 = scmp.lt.s32.totalorder %s218, 3
      %s220 = scalar_select %p219, %s218, 3
      %p221 = scmp.lt.s32.totalorder %s21, 0
      %s222 = scalar_select %p221, %s21, 0
      %s223 = sadd.s32 %s222, %s220
      %s224 = smul.addr %s223, 4
      %s225 = scalar_lea.vmem %s2, %s224
      %p226 = pneg %p131
      %p227 = pneg %p128
      %p228 = scmp.lt.s32.totalorder %s20, 1
      %s229 = scalar_select %p228, %s20, 1
      %p230 = scmp.lt.s32.totalorder %s21, 0
      %s231 = scalar_select %p230, %s21, 0
      %s232 = sadd.s32 %s231, %s229
      %s233 = smul.addr %s232, 8
      %s234 = scalar_lea.vmem %s3, %s233
      %p235 = pneg %p159
      %p236 = pneg %p156
      %p237 = scmp.lt.s32.totalorder %s20, 1
      %s238 = scalar_select %p237, %s20, 1
      %p239 = scmp.lt.s32.totalorder %s21, 0
      %s240 = scalar_select %p239, %s21, 0
      %s241 = sadd.s32 %s240, %s238
      %s242 = smul.addr %s241, 8
      %s243 = scalar_lea.vmem %s4, %s242
      %s244 = smul.u32 2, %s20
      %p245 = scmp.lt.s32.totalorder %s244, 3
      %s246 = scalar_select %p245, %s244, 3
      %s247 = smul.addr %s246, 7
      %s248 = smul.addr %s247, 4
      %s249 = scalar_lea.vmem %s0, %s248
      %s250 = smul.u32 2, %s20
      %p251 = scmp.lt.s32.totalorder %s21, 0
      %s252 = scalar_select %p251, %s21, 0
      %s253 = smul.addr %s252, 4
      %s254 = scalar_lea.vmem %s1, %s253
      %s255 = smul.u32 2, %s20
      %p256 = scmp.lt.s32.totalorder %s255, 3
      %s257 = scalar_select %p256, %s255, 3
      %p258 = scmp.lt.s32.totalorder %s21, 0
      %s259 = scalar_select %p258, %s21, 0
      %s260 = sadd.s32 %s259, %s257
      %s261 = smul.addr %s260, 4
      %s262 = scalar_lea.vmem %s2, %s261
      %s263 = smul.u32 2, %s20
      %p264 = scmp.lt.s32.totalorder %s20, 1
      %s265 = scalar_select %p264, %s20, 1
      %p266 = scmp.lt.s32.totalorder %s21, 0
      %s267 = scalar_select %p266, %s21, 0
      %s268 = sadd.s32 %s267, %s265
      %s269 = smul.addr %s268, 8
      %s270 = scalar_lea.vmem %s3, %s269
      %p271 = scmp.lt.s32.totalorder %s20, 1
      %s272 = scalar_select %p271, %s20, 1
      %p273 = scmp.lt.s32.totalorder %s21, 0
      %s274 = scalar_select %p273, %s21, 0
      %s275 = sadd.s32 %s274, %s272
      %s276 = smul.addr %s275, 8
      %s277 = scalar_lea.vmem %s4, %s276
      %v279 = vld [vmem:[%s249] sm:$0xff]
      %v280 = vld [vmem:[%s249 + $0x8] sm:$0xff]
      %v281 = vld [vmem:[%s249 + $0x10] sm:$0xff]
      %v282 = vld [vmem:[%s249 + $0x18] sm:$0xf]
      %v283 = vld [vmem:[%s249 + $0x1c] sm:$0xff]
      %v284 = vld [vmem:[%s249 + $0x24] sm:$0xff]
      %v285 = vld [vmem:[%s249 + $0x2c] sm:$0xff]
      %v286 = vld [vmem:[%s249 + $0x34] sm:$0xf]
      %v287 = vld [vmem:[%s254] sm:$0xf]
      %v288 = vld [vmem:[%s254 + $0x4] sm:$0xf]
      %v289 = vld [vmem:[%s254 + $0x8] sm:$0xf]
      %v290 = vld [vmem:[%s254 + $0xc] sm:$0xf]
      %v291 = vld [vmem:[%s254 + $0x10] sm:$0xf]
      %v292 = vld [vmem:[%s254 + $0x14] sm:$0xf]
      %v293 = vld [vmem:[%s254 + $0x18] sm:$0xf]
      %v294 = vld [vmem:[%s254 + $0x1c] sm:$0xf]
      %v295 = vld [vmem:[%s254 + $0x20] sm:$0xf]
      %v296 = vld [vmem:[%s254 + $0x24] sm:$0xf]
      %v297 = vld [vmem:[%s254 + $0x28] sm:$0xf]
      %v298 = vld [vmem:[%s254 + $0x2c] sm:$0xf]
      %v299 = vld [vmem:[%s254 + $0x30] sm:$0xf]
      %v300 = vld [vmem:[%s254 + $0x34] sm:$0xf]
      %v301 = vld [vmem:[%s254 + $0x38] sm:$0xf]
      %v302 = vld [vmem:[%s254 + $0x3c] sm:$0xf]
      %v303 = vld [vmem:[%s254 + $0x40] sm:$0xf]
      %v304 = vld [vmem:[%s254 + $0x44] sm:$0xf]
      %v305 = vld [vmem:[%s254 + $0x48] sm:$0xf]
      %v306 = vld [vmem:[%s254 + $0x4c] sm:$0xf]
      %v307 = vld [vmem:[%s254 + $0x50] sm:$0xf]
      %v308 = vld [vmem:[%s254 + $0x54] sm:$0xf]
      %v309 = vld [vmem:[%s254 + $0x58] sm:$0xf]
      %v310 = vld [vmem:[%s254 + $0x5c] sm:$0xf]
      %v311 = vld [vmem:[%s254 + $0x60] sm:$0xf]
      %v312 = vld [vmem:[%s254 + $0x64] sm:$0xf]
      %v313 = vld [vmem:[%s254 + $0x68] sm:$0xf]
      %v314 = vld [vmem:[%s254 + $0x6c] sm:$0xf]
      %v315 = vld [vmem:[%s254 + $0x70] sm:$0xf]
      %v316 = vld [vmem:[%s254 + $0x74] sm:$0xf]
      %v317 = vld [vmem:[%s254 + $0x78] sm:$0xf]
      %v318 = vld [vmem:[%s254 + $0x7c] sm:$0xf]
      %v319 = vld [vmem:[%s254 + $0x80] sm:$0xf]
      %v320 = vld [vmem:[%s254 + $0x84] sm:$0xf]
      %v321 = vld [vmem:[%s254 + $0x88] sm:$0xf]
      %v322 = vld [vmem:[%s254 + $0x8c] sm:$0xf]
      %v323 = vld [vmem:[%s254 + $0x90] sm:$0xf]
      %v324 = vld [vmem:[%s254 + $0x94] sm:$0xf]
      %v325 = vld [vmem:[%s254 + $0x98] sm:$0xf]
      %v326 = vld [vmem:[%s254 + $0x9c] sm:$0xf]
      %v327 = vld [vmem:[%s254 + $0xa0] sm:$0xf]
      %v328 = vld [vmem:[%s254 + $0xa4] sm:$0xf]
      %v329 = vld [vmem:[%s254 + $0xa8] sm:$0xf]
      %v330 = vld [vmem:[%s254 + $0xac] sm:$0xf]
      %v331 = vld [vmem:[%s254 + $0xb0] sm:$0xf]
      %v332 = vld [vmem:[%s254 + $0xb4] sm:$0xf]
      %v333 = vld [vmem:[%s254 + $0xb8] sm:$0xf]
      %v334 = vld [vmem:[%s254 + $0xbc] sm:$0xf]
      %v335 = vld [vmem:[%s254 + $0xc0] sm:$0xf]
      %v336 = vld [vmem:[%s254 + $0xc4] sm:$0xf]
      %v337 = vld [vmem:[%s254 + $0xc8] sm:$0xf]
      %v338 = vld [vmem:[%s254 + $0xcc] sm:$0xf]
      %v339 = vld [vmem:[%s254 + $0xd0] sm:$0xf]
      %v340 = vld [vmem:[%s254 + $0xd4] sm:$0xf]
      %v341 = vld [vmem:[%s254 + $0xd8] sm:$0xf]
      %v342 = vld [vmem:[%s254 + $0xdc] sm:$0xf]
      %v343 = vld [vmem:[%s254 + $0xe0] sm:$0xf]
      %v344 = vld [vmem:[%s254 + $0xe4] sm:$0xf]
      %v345 = vld [vmem:[%s254 + $0xe8] sm:$0xf]
      %v346 = vld [vmem:[%s254 + $0xec] sm:$0xf]
      %v347 = vld [vmem:[%s254 + $0xf0] sm:$0xf]
      %v348 = vld [vmem:[%s254 + $0xf4] sm:$0xf]
      %v349 = vld [vmem:[%s254 + $0xf8] sm:$0xf]
      %v350 = vld [vmem:[%s254 + $0xfc] sm:$0xf]
      %v351 = vld [vmem:[%s254 + $0x100] sm:$0xf]
      %v352 = vld [vmem:[%s254 + $0x104] sm:$0xf]
      %v353 = vld [vmem:[%s254 + $0x108] sm:$0xf]
      %v354 = vld [vmem:[%s254 + $0x10c] sm:$0xf]
      %v355 = vld [vmem:[%s254 + $0x110] sm:$0xf]
      %v356 = vld [vmem:[%s254 + $0x114] sm:$0xf]
      %v357 = vld [vmem:[%s254 + $0x118] sm:$0xf]
      %v358 = vld [vmem:[%s254 + $0x11c] sm:$0xf]
      %v359 = vld [vmem:[%s254 + $0x120] sm:$0xf]
      %v360 = vld [vmem:[%s254 + $0x124] sm:$0xf]
      %v361 = vld [vmem:[%s254 + $0x128] sm:$0xf]
      %v362 = vld [vmem:[%s254 + $0x12c] sm:$0xf]
      %v363 = vld [vmem:[%s254 + $0x130] sm:$0xf]
      %v364 = vld [vmem:[%s254 + $0x134] sm:$0xf]
      %v365 = vld [vmem:[%s254 + $0x138] sm:$0xf]
      %v366 = vld [vmem:[%s254 + $0x13c] sm:$0xf]
      %v367 = vld [vmem:[%s254 + $0x140] sm:$0xf]
      %v368 = vld [vmem:[%s254 + $0x144] sm:$0xf]
      %v369 = vld [vmem:[%s254 + $0x148] sm:$0xf]
      %v370 = vld [vmem:[%s254 + $0x14c] sm:$0xf]
      %v371 = vld [vmem:[%s254 + $0x150] sm:$0xf]
      %v372 = vld [vmem:[%s254 + $0x154] sm:$0xf]
      %v373 = vld [vmem:[%s254 + $0x158] sm:$0xf]
      %v374 = vld [vmem:[%s254 + $0x15c] sm:$0xf]
      %v375 = vld [vmem:[%s254 + $0x160] sm:$0xf]
      %v376 = vld [vmem:[%s254 + $0x164] sm:$0xf]
      %v377 = vld [vmem:[%s254 + $0x168] sm:$0xf]
      %v378 = vld [vmem:[%s254 + $0x16c] sm:$0xf]
      %v379 = vld [vmem:[%s254 + $0x170] sm:$0xf]
      %v380 = vld [vmem:[%s254 + $0x174] sm:$0xf]
      %v381 = vld [vmem:[%s254 + $0x178] sm:$0xf]
      %v382 = vld [vmem:[%s254 + $0x17c] sm:$0xf]
      %v383 = vld [vmem:[%s254 + $0x180] sm:$0xf]
      %v384 = vld [vmem:[%s254 + $0x184] sm:$0xf]
      %v385 = vld [vmem:[%s254 + $0x188] sm:$0xf]
      %v386 = vld [vmem:[%s254 + $0x18c] sm:$0xf]
      %v395 = vunpack.c.l.b16 %v279
      %v396 = vunpack.c.h.b16 %v279
      %v397 = vunpack.c.l.b16 %v280
      %v398 = vunpack.c.h.b16 %v280
      %v399 = vunpack.c.l.b16 %v281
      %v400 = vunpack.c.h.b16 %v281
      %v401 = vunpack.c.l.b16 %v282
      %v402 = vunpack.c.l.b16 %v283
      %v403 = vunpack.c.h.b16 %v283
      %v404 = vunpack.c.l.b16 %v284
      %v405 = vunpack.c.h.b16 %v284
      %v406 = vunpack.c.l.b16 %v285
      %v407 = vunpack.c.h.b16 %v285
      %v408 = vunpack.c.l.b16 %v286
      %v409 = vpack.c.b16 %v402, %v395
      %v410 = vpack.c.b16 %v403, %v396
      %v411 = vpack.c.b16 %v404, %v397
      %v412 = vpack.c.b16 %v405, %v398
      %v413 = vpack.c.b16 %v406, %v399
      %v414 = vpack.c.b16 %v407, %v400
      %v415 = vpack.c.b16 %v408, %v401
      %v522 = vunpack.c.l.b16 %v287
      %v523 = vunpack.c.l.b16 %v288
      %v524 = vunpack.c.l.b16 %v289
      %v525 = vunpack.c.l.b16 %v290
      %v526 = vunpack.c.l.b16 %v291
      %v527 = vunpack.c.l.b16 %v292
      %v528 = vunpack.c.l.b16 %v293
      %v529 = vunpack.c.l.b16 %v294
      %v530 = vunpack.c.l.b16 %v295
      %v531 = vunpack.c.l.b16 %v296
      %v532 = vunpack.c.l.b16 %v297
      %v533 = vunpack.c.l.b16 %v298
      %v534 = vunpack.c.l.b16 %v299
      %v535 = vunpack.c.l.b16 %v300
      %v536 = vunpack.c.l.b16 %v301
      %v537 = vunpack.c.l.b16 %v302
      %v538 = vunpack.c.l.b16 %v303
      %v539 = vunpack.c.l.b16 %v304
      %v540 = vunpack.c.l.b16 %v305
      %v541 = vunpack.c.l.b16 %v306
      %v542 = vunpack.c.l.b16 %v307
      %v543 = vunpack.c.l.b16 %v308
      %v544 = vunpack.c.l.b16 %v309
      %v545 = vunpack.c.l.b16 %v310
      %v546 = vunpack.c.l.b16 %v311
      %v547 = vunpack.c.l.b16 %v312
      %v548 = vunpack.c.l.b16 %v313
      %v549 = vunpack.c.l.b16 %v314
      %v550 = vunpack.c.l.b16 %v315
      %v551 = vunpack.c.l.b16 %v316
      %v552 = vunpack.c.l.b16 %v317
      %v553 = vunpack.c.l.b16 %v318
      %v554 = vunpack.c.l.b16 %v319
      %v555 = vunpack.c.l.b16 %v320
      %v556 = vunpack.c.l.b16 %v321
      %v557 = vunpack.c.l.b16 %v322
      %v558 = vunpack.c.l.b16 %v323
      %v559 = vunpack.c.l.b16 %v324
      %v560 = vunpack.c.l.b16 %v325
      %v561 = vunpack.c.l.b16 %v326
      %v562 = vunpack.c.l.b16 %v327
      %v563 = vunpack.c.l.b16 %v328
      %v564 = vunpack.c.l.b16 %v329
      %v565 = vunpack.c.l.b16 %v330
      %v566 = vunpack.c.l.b16 %v331
      %v567 = vunpack.c.l.b16 %v332
      %v568 = vunpack.c.l.b16 %v333
      %v569 = vunpack.c.l.b16 %v334
      %v570 = vunpack.c.l.b16 %v335
      %v571 = vunpack.c.l.b16 %v336
      %v572 = vunpack.c.l.b16 %v337
      %v573 = vunpack.c.l.b16 %v338
      %v574 = vunpack.c.l.b16 %v339
      %v575 = vunpack.c.l.b16 %v340
      %v576 = vunpack.c.l.b16 %v341
      %v577 = vunpack.c.l.b16 %v342
      %v578 = vunpack.c.l.b16 %v343
      %v579 = vunpack.c.l.b16 %v344
      %v580 = vunpack.c.l.b16 %v345
      %v581 = vunpack.c.l.b16 %v346
      %v582 = vunpack.c.l.b16 %v347
      %v583 = vunpack.c.l.b16 %v348
      %v584 = vunpack.c.l.b16 %v349
      %v585 = vunpack.c.l.b16 %v350
      %v586 = vunpack.c.l.b16 %v351
      %v587 = vunpack.c.l.b16 %v352
      %v588 = vunpack.c.l.b16 %v353
      %v589 = vunpack.c.l.b16 %v354
      %v590 = vunpack.c.l.b16 %v355
      %v591 = vunpack.c.l.b16 %v356
      %v592 = vunpack.c.l.b16 %v357
      %v593 = vunpack.c.l.b16 %v358
      %v594 = vunpack.c.l.b16 %v359
      %v595 = vunpack.c.l.b16 %v360
      %v596 = vunpack.c.l.b16 %v361
      %v597 = vunpack.c.l.b16 %v362
      %v598 = vunpack.c.l.b16 %v363
      %v599 = vunpack.c.l.b16 %v364
      %v600 = vunpack.c.l.b16 %v365
      %v601 = vunpack.c.l.b16 %v366
      %v602 = vunpack.c.l.b16 %v367
      %v603 = vunpack.c.l.b16 %v368
      %v604 = vunpack.c.l.b16 %v369
      %v605 = vunpack.c.l.b16 %v370
      %v606 = vunpack.c.l.b16 %v371
      %v607 = vunpack.c.l.b16 %v372
      %v608 = vunpack.c.l.b16 %v373
      %v609 = vunpack.c.l.b16 %v374
      %v610 = vunpack.c.l.b16 %v375
      %v611 = vunpack.c.l.b16 %v376
      %v612 = vunpack.c.l.b16 %v377
      %v613 = vunpack.c.l.b16 %v378
      %v614 = vunpack.c.l.b16 %v379
      %v615 = vunpack.c.l.b16 %v380
      %v616 = vunpack.c.l.b16 %v381
      %v617 = vunpack.c.l.b16 %v382
      %v618 = vunpack.c.l.b16 %v383
      %v619 = vunpack.c.l.b16 %v384
      %v620 = vunpack.c.l.b16 %v385
      %v621 = vunpack.c.l.b16 %v386
      %v622 = vpack.c.b16 %v523, %v522
      %v623 = vpack.c.b16 %v525, %v524
      %v624 = vpack.c.b16 %v527, %v526
      %v625 = vpack.c.b16 %v529, %v528
      %v626 = vpack.c.b16 %v531, %v530
      %v627 = vpack.c.b16 %v533, %v532
      %v628 = vpack.c.b16 %v535, %v534
      %v629 = vpack.c.b16 %v537, %v536
      %v630 = vpack.c.b16 %v539, %v538
      %v631 = vpack.c.b16 %v541, %v540
      %v632 = vpack.c.b16 %v543, %v542
      %v633 = vpack.c.b16 %v545, %v544
      %v634 = vpack.c.b16 %v547, %v546
      %v635 = vpack.c.b16 %v549, %v548
      %v636 = vpack.c.b16 %v551, %v550
      %v637 = vpack.c.b16 %v553, %v552
      %v638 = vpack.c.b16 %v555, %v554
      %v639 = vpack.c.b16 %v557, %v556
      %v640 = vpack.c.b16 %v559, %v558
      %v641 = vpack.c.b16 %v561, %v560
      %v642 = vpack.c.b16 %v563, %v562
      %v643 = vpack.c.b16 %v565, %v564
      %v644 = vpack.c.b16 %v567, %v566
      %v645 = vpack.c.b16 %v569, %v568
      %v646 = vpack.c.b16 %v571, %v570
      %v647 = vpack.c.b16 %v573, %v572
      %v648 = vpack.c.b16 %v575, %v574
      %v649 = vpack.c.b16 %v577, %v576
      %v650 = vpack.c.b16 %v579, %v578
      %v651 = vpack.c.b16 %v581, %v580
      %v652 = vpack.c.b16 %v583, %v582
      %v653 = vpack.c.b16 %v585, %v584
      %v654 = vpack.c.b16 %v587, %v586
      %v655 = vpack.c.b16 %v589, %v588
      %v656 = vpack.c.b16 %v591, %v590
      %v657 = vpack.c.b16 %v593, %v592
      %v658 = vpack.c.b16 %v595, %v594
      %v659 = vpack.c.b16 %v597, %v596
      %v660 = vpack.c.b16 %v599, %v598
      %v661 = vpack.c.b16 %v601, %v600
      %v662 = vpack.c.b16 %v603, %v602
      %v663 = vpack.c.b16 %v605, %v604
      %v664 = vpack.c.b16 %v607, %v606
      %v665 = vpack.c.b16 %v609, %v608
      %v666 = vpack.c.b16 %v611, %v610
      %v667 = vpack.c.b16 %v613, %v612
      %v668 = vpack.c.b16 %v615, %v614
      %v669 = vpack.c.b16 %v617, %v616
      %v670 = vpack.c.b16 %v619, %v618
      %v671 = vpack.c.b16 %v621, %v620
      %vm722 = vcmask 261120
      %v724 = vsel %vm722, %v415, 0
      %726 = vmatprep.subr.bf16.mxu0 0
      %727 = vmatpush1.bf16.msra.mxu0 %v622
      %728 = vmatprep.subr.bf16.mxu0 0
      %729 = vmatpush1.bf16.msra.mxu0 %v623
      %730 = vmatprep.subr.bf16.mxu0 0
      %731 = vmatpush1.bf16.msra.mxu0 %v624
      %732 = vmatprep.subr.bf16.mxu0 0
      %733 = vmatpush1.bf16.msra.mxu0 %v625
      %734 = vmatprep.subr.bf16.mxu0 0
      %735 = vmatpush1.bf16.msra.mxu0 %v626
      %736 = vmatprep.subr.bf16.mxu0 0
      %737 = vmatpush1.bf16.msra.mxu0 %v627
      %738 = vmatprep.subr.bf16.mxu0 0
      %739 = vmatpush1.bf16.msra.mxu0 %v628
      %740 = vmatprep.subr.bf16.mxu0 0
      %741 = vmatpush1.bf16.msra.mxu0 %v629
      %742 = vmatprep.subr.bf16.mxu0 0
      %743 = vmatpush1.bf16.msra.mxu0 %v630
      %744 = vmatprep.subr.bf16.mxu0 0
      %745 = vmatpush1.bf16.msra.mxu0 %v631
      %746 = vmatprep.subr.bf16.mxu0 0
      %747 = vmatpush1.bf16.msra.mxu0 %v632
      %748 = vmatprep.subr.bf16.mxu0 0
      %749 = vmatpush1.bf16.msra.mxu0 %v633
      %750 = vmatprep.subr.bf16.mxu0 0
      %751 = vmatpush1.bf16.msra.mxu0 %v634
      %752 = vmatprep.subr.bf16.mxu0 0
      %753 = vmatpush1.bf16.msra.mxu0 %v635
      %754 = vmatprep.subr.bf16.mxu0 0
      %755 = vmatpush1.bf16.msra.mxu0 %v636
      %756 = vmatprep.subr.bf16.mxu0 0
      %757 = vmatpush1.bf16.msra.mxu0 %v637
      %758 = vmatprep.mubr.bf16.mxu0 %v410
      %759 = vmatmul.mubr.bf16.gmra.mrb[0].mxu0 %v409
      %v760 = vpop.f32.mrb[0].mxu0
      %v761 = vadd.f32 0.0, %v760
      %v762 = vpop.f32.mrb[0].mxu0
      %v763 = vpop.f32.mrb[0].mxu0
      %v764 = vadd.f32 0.0, %v763
      %v765 = vpop.f32.mrb[0].mxu0
      %766 = vdwg.mxu0
      %767 = vmatprep.subr.bf16.mxu0 0
      %768 = vmatpush1.bf16.msra.mxu0 %v638
      %769 = vmatprep.subr.bf16.mxu0 0
      %770 = vmatpush1.bf16.msra.mxu0 %v639
      %771 = vmatprep.subr.bf16.mxu0 0
      %772 = vmatpush1.bf16.msra.mxu0 %v640
      %773 = vmatprep.subr.bf16.mxu0 0
      %774 = vmatpush1.bf16.msra.mxu0 %v641
      %775 = vmatprep.subr.bf16.mxu0 0
      %776 = vmatpush1.bf16.msra.mxu0 %v642
      %777 = vmatprep.subr.bf16.mxu0 0
      %778 = vmatpush1.bf16.msra.mxu0 %v643
      %779 = vmatprep.subr.bf16.mxu0 0
      %780 = vmatpush1.bf16.msra.mxu0 %v644
      %781 = vmatprep.subr.bf16.mxu0 0
      %782 = vmatpush1.bf16.msra.mxu0 %v645
      %783 = vmatprep.subr.bf16.mxu0 0
      %784 = vmatpush1.bf16.msra.mxu0 %v646
      %785 = vmatprep.subr.bf16.mxu0 0
      %786 = vmatpush1.bf16.msra.mxu0 %v647
      %787 = vmatprep.subr.bf16.mxu0 0
      %788 = vmatpush1.bf16.msra.mxu0 %v648
      %789 = vmatprep.subr.bf16.mxu0 0
      %790 = vmatpush1.bf16.msra.mxu0 %v649
      %791 = vmatprep.subr.bf16.mxu0 0
      %792 = vmatpush1.bf16.msra.mxu0 %v650
      %793 = vmatprep.subr.bf16.mxu0 0
      %794 = vmatpush1.bf16.msra.mxu0 %v651
      %795 = vmatprep.subr.bf16.mxu0 0
      %796 = vmatpush1.bf16.msra.mxu0 %v652
      %797 = vmatprep.subr.bf16.mxu0 0
      %798 = vmatpush1.bf16.msra.mxu0 %v653
      %799 = vmatprep.mubr.bf16.mxu0 %v412
      %800 = vmatmul.mubr.bf16.gmra.mrb[0].mxu0 %v411
      %v801 = vpop.f32.mrb[0].mxu0
      %v802 = vadd.f32 %v761, %v801
      %v803 = vpop.f32.mrb[0].mxu0
      %v804 = vpop.f32.mrb[0].mxu0
      %v805 = vadd.f32 %v764, %v804
      %v806 = vpop.f32.mrb[0].mxu0
      %807 = vdwg.mxu0
      %808 = vmatprep.subr.bf16.mxu0 0
      %809 = vmatpush1.bf16.msra.mxu0 %v654
      %810 = vmatprep.subr.bf16.mxu0 0
      %811 = vmatpush1.bf16.msra.mxu0 %v655
      %812 = vmatprep.subr.bf16.mxu0 0
      %813 = vmatpush1.bf16.msra.mxu0 %v656
      %814 = vmatprep.subr.bf16.mxu0 0
      %815 = vmatpush1.bf16.msra.mxu0 %v657
      %816 = vmatprep.subr.bf16.mxu0 0
      %817 = vmatpush1.bf16.msra.mxu0 %v658
      %818 = vmatprep.subr.bf16.mxu0 0
      %819 = vmatpush1.bf16.msra.mxu0 %v659
      %820 = vmatprep.subr.bf16.mxu0 0
      %821 = vmatpush1.bf16.msra.mxu0 %v660
      %822 = vmatprep.subr.bf16.mxu0 0
      %823 = vmatpush1.bf16.msra.mxu0 %v661
      %824 = vmatprep.subr.bf16.mxu0 0
      %825 = vmatpush1.bf16.msra.mxu0 %v662
      %826 = vmatprep.subr.bf16.mxu0 0
      %827 = vmatpush1.bf16.msra.mxu0 %v663
      %828 = vmatprep.subr.bf16.mxu0 0
      %829 = vmatpush1.bf16.msra.mxu0 %v664
      %830 = vmatprep.subr.bf16.mxu0 0
      %831 = vmatpush1.bf16.msra.mxu0 %v665
      %832 = vmatprep.subr.bf16.mxu0 0
      %833 = vmatpush1.bf16.msra.mxu0 %v666
      %834 = vmatprep.subr.bf16.mxu0 0
      %835 = vmatpush1.bf16.msra.mxu0 %v667
      %836 = vmatprep.subr.bf16.mxu0 0
      %837 = vmatpush1.bf16.msra.mxu0 %v668
      %838 = vmatprep.subr.bf16.mxu0 0
      %839 = vmatpush1.bf16.msra.mxu0 %v669
      %840 = vmatprep.mubr.bf16.mxu0 %v414
      %841 = vmatmul.mubr.bf16.gmra.mrb[0].mxu0 %v413
      %v842 = vpop.f32.mrb[0].mxu0
      %v843 = vadd.f32 %v802, %v842
      %v844 = vpop.f32.mrb[0].mxu0
      %v845 = vpop.f32.mrb[0].mxu0
      %v846 = vadd.f32 %v805, %v845
      %v847 = vpop.f32.mrb[0].mxu0
      %848 = vdwg.mxu0
      %849 = vmatprep.subr.bf16.mxu0 0
      %850 = vmatpush1.bf16.msra.mxu0 %v670
      %851 = vmatprep.subr.bf16.mxu0 0
      %852 = vmatpush1.bf16.msra.mxu0 %v671
      %853 = vmatprep.subr.bf16.mxu0 0
      %854 = vmatpush1.bf16.msra.mxu0 0
      %855 = vmatprep.subr.bf16.mxu0 0
      %856 = vmatpush1.bf16.msra.mxu0 0
      %857 = vmatprep.subr.bf16.mxu0 0
      %858 = vmatpush1.bf16.msra.mxu0 0
      %859 = vmatprep.subr.bf16.mxu0 0
      %860 = vmatpush1.bf16.msra.mxu0 0
      %861 = vmatprep.subr.bf16.mxu0 0
      %862 = vmatpush1.bf16.msra.mxu0 0
      %863 = vmatprep.subr.bf16.mxu0 0
      %864 = vmatpush1.bf16.msra.mxu0 0
      %865 = vmatprep.subr.bf16.mxu0 0
      %866 = vmatpush1.bf16.msra.mxu0 0
      %867 = vmatprep.subr.bf16.mxu0 0
      %868 = vmatpush1.bf16.msra.mxu0 0
      %869 = vmatprep.subr.bf16.mxu0 0
      %870 = vmatpush1.bf16.msra.mxu0 0
      %871 = vmatprep.subr.bf16.mxu0 0
      %872 = vmatpush1.bf16.msra.mxu0 0
      %873 = vmatprep.subr.bf16.mxu0 0
      %874 = vmatpush1.bf16.msra.mxu0 0
      %875 = vmatprep.subr.bf16.mxu0 0
      %876 = vmatpush1.bf16.msra.mxu0 0
      %877 = vmatprep.subr.bf16.mxu0 0
      %878 = vmatpush1.bf16.msra.mxu0 0
      %879 = vmatprep.subr.bf16.mxu0 0
      %880 = vmatpush1.bf16.msra.mxu0 0
      %881 = vmatprep.mubr.bf16.mxu0 0
      %882 = vmatmul.mubr.bf16.gmra.mrb[0].mxu0 %v724
      %v883 = vpop.f32.mrb[0].mxu0
      %v884 = vadd.f32 %v843, %v883
      %v885 = vpop.f32.mrb[0].mxu0
      %v886 = vpop.f32.mrb[0].mxu0
      %v887 = vadd.f32 %v846, %v886
      %v888 = vpop.f32.mrb[0].mxu0
      %889 = vdwg.mxu0
      %v890 = vpack.c.bf16 %v887, %v884
      %v892 = vunpack.c.l.b16 %v890
      %v893 = vunpack.c.h.b16 %v890
      %v894 = vpack.c.b16 %v892, %v892
      %v895 = vpack.c.b16 %v893, %v893
      %vm898 = vcmask 519168
      %899 = vst.msk [vmem:[%s262] sm:$0xf] %vm898, %v894
      %900 = vst.msk [vmem:[%s262 + $0x4] sm:$0xf] %vm898, %v895
      %vm901 = vcmask 523264
      %v902 = vsel %vm901, %v884, 0.0
      %v903 = vsel %vm901, %v887, 0.0
      %v904 = vadd.f32 %v902, %v903
      %905 = vst.msk [vmem:[%s270] sm:$0xff] %vm901, %v904
      %v906 = vmul.f32 %v884, %v884
      %v907 = vmul.f32 %v887, %v887
      %v908 = vsel %vm901, %v906, 0.0
      %v909 = vsel %vm901, %v907, 0.0
      %v910 = vadd.f32 %v908, %v909
      %911 = vst.msk [vmem:[%s277] sm:$0xff] %vm901, %v910
      %s912 = smul.u32 2, %s20
      %p913 = scmp.lt.s32.totalorder %s912, 3
      %s914 = scalar_select %p913, %s912, 3
      %p915 = scmp.lt.s32.totalorder %s21, 0
      %s916 = scalar_select %p915, %s21, 0
      %s917 = sadd.s32 %s916, %s914
      %s918 = smul.addr %s917, 4
      %s919 = scalar_lea.vmem %s2, %s918
      %p920 = scmp.lt.s32.totalorder %s20, 1
      %s921 = scalar_select %p920, %s20, 1
      %p922 = scmp.lt.s32.totalorder %s21, 0
      %s923 = scalar_select %p922, %s21, 0
      %s924 = sadd.s32 %s923, %s921
      %s925 = smul.addr %s924, 8
      %s926 = scalar_lea.vmem %s3, %s925
      %p927 = scmp.lt.s32.totalorder %s20, 1
      %s928 = scalar_select %p927, %s20, 1
      %p929 = scmp.lt.s32.totalorder %s21, 0
      %s930 = scalar_select %p929, %s21, 0
      %s931 = sadd.s32 %s930, %s928
      %s932 = smul.addr %s931, 8
      %s933 = scalar_lea.vmem %s4, %s932
      // Predicated region
      $region29: #{discriminator_forward.13} parent=27 // pred_check
        %p934 = pneg %p100
      $region30: #{discriminator_forward.13} parent=27 // pred_check_branch
        %936 = sbr.rel (%p934) target = $region32
      $region31: #{discriminator_forward.13} parent=27 // pred_region
        %s937 = smul.u32 2, %s20
      $region32: #{discriminator_forward.13} parent=27 // pred_fallthru
        _
      // Predicated region
      $region33: #{discriminator_forward.13} parent=27 // pred_check
        %p938 = pneg %p128
      $region34: #{discriminator_forward.13} parent=27 // pred_check_branch
        %940 = sbr.rel (%p938) target = $region36
      $region35: #{discriminator_forward.13} parent=27 // pred_region
        _
      $region36: #{discriminator_forward.13} parent=27 // pred_fallthru
        _
      // Predicated region
      $region37: #{discriminator_forward.13} parent=27 // pred_check
        %p941 = pneg %p156
      $region38: #{discriminator_forward.13} parent=27 // pred_check_branch
        %943 = sbr.rel (%p941) target = $region40
      $region39: #{discriminator_forward.13} parent=27 // pred_region
        _
      $region40: #{discriminator_forward.13} parent=27 // pred_fallthru
        _
    $region28: #{discriminator_forward.13} parent=5 // pred_fallthru
      _
    %p944 = scmp.le.s32.totalorder 2, %s11
    // Predicated region
    $region41: #{discriminator_forward.13} parent=5 // pred_check
      %p945 = pneg %p944
    $region42: #{discriminator_forward.13} parent=5 // pred_check_branch
      %947 = sbr.rel (%p945) target = $region44
    $region43: #{discriminator_forward.13} parent=5 // pred_region
      %s948 = ssub.s32 %s11, 2
      // Predicated region
      $region45: #{discriminator_forward.13} parent=43 // pred_check
        %p949 = pneg %p106
      $region46: #{discriminator_forward.13} parent=43 // pred_check_branch
        %951 = sbr.rel (%p949) target = $region48
      $region47: #{discriminator_forward.13} parent=43 // pred_region
        %s952 = smul.u32 2, %s22
        %p953 = scmp.lt.s32.totalorder %s952, 3
        %s954 = scalar_select %p953, %s952, 3
        %p955 = scmp.lt.s32.totalorder %s23, 0
        %s956 = scalar_select %p955, %s23, 0
        %s957 = sadd.s32 %s956, %s954
        %s958 = smul.addr %s957, 4
        %s959 = scalar_lea.vmem %s2, %s958
      $region48: #{discriminator_forward.13} parent=43 // pred_fallthru
        _
      // Predicated region
      $region49: #{discriminator_forward.13} parent=43 // pred_check
        %p960 = pneg %p134
      $region50: #{discriminator_forward.13} parent=43 // pred_check_branch
        %962 = sbr.rel (%p960) target = $region52
      $region51: #{discriminator_forward.13} parent=43 // pred_region
        %p963 = scmp.lt.s32.totalorder %s22, 1
        %s964 = scalar_select %p963, %s22, 1
        %p965 = scmp.lt.s32.totalorder %s23, 0
        %s966 = scalar_select %p965, %s23, 0
        %s967 = sadd.s32 %s966, %s964
        %s968 = smul.addr %s967, 8
        %s969 = scalar_lea.vmem %s3, %s968
      $region52: #{discriminator_forward.13} parent=43 // pred_fallthru
        _
      // Predicated region
      $region53: #{discriminator_forward.13} parent=43 // pred_check
        %p970 = pneg %p162
      $region54: #{discriminator_forward.13} parent=43 // pred_check_branch
        %972 = sbr.rel (%p970) target = $region56
      $region55: #{discriminator_forward.13} parent=43 // pred_region
        %p973 = scmp.lt.s32.totalorder %s22, 1
        %s974 = scalar_select %p973, %s22, 1
        %p975 = scmp.lt.s32.totalorder %s23, 0
        %s976 = scalar_select %p975, %s23, 0
        %s977 = sadd.s32 %s976, %s974
        %s978 = smul.addr %s977, 8
        %s979 = scalar_lea.vmem %s4, %s978
      $region56: #{discriminator_forward.13} parent=43 // pred_fallthru
        _
    $region44: #{discriminator_forward.13} parent=5 // pred_fallthru
      _
  $region6: #{discriminator_forward.13} parent=0 // loop_footer
    %s15 = sadd.s32 1, %s11
  $region7: #{discriminator_forward.13} parent=0 // loop_footer_branch
    %10 = sbr.rel target = $region3
  $region8: #{discriminator_forward.13} parent=0 // loop_exit
    _

// kernel: discriminator_forward.14
$region0: #{discriminator_forward.14}
  #allocation0 [shape = 'u32[]', space=smem, size = 0x4, offset = 0x4, fixed_abs, tag = 'smem constant byte address 0x4 - core index']
  #allocation1 [shape = 'u32[144,128]{1,0:T(1,128)}', space=vmem, size = 0x12000, scoped, tag = 'internal scratch']
  %s0 = inlined_call_operand.vmem [shape: bf16[32,64], index: 0, kind: input, shape index: {}]
  %s1 = inlined_call_operand.vmem [shape: f32[1,64], index: 1, kind: input, shape index: {}]
  %s2 = inlined_call_operand.vmem [shape: f32[1,64], index: 2, kind: input, shape index: {}]
  %s3 = inlined_call_operand.vmem [shape: bf16[32,64], index: 3, kind: output, shape index: {}]
  %s4 = sld [smem:[#allocation0]]
  $region45: #{discriminator_forward.14} parent=0
    _
  %s6 = ssub.s32 1, %s4
  %s7 = scalar_select 0, %s6, %s4
  loop: start=0, step=1, limit=4
  $region2: #{discriminator_forward.14} parent=0 // loop_pre_header
    _
  $region3: #{discriminator_forward.14} parent=0 // loop_header
    %s9 = sphi 0, %s13
    %p10 = scmp.ge.s32.totalorder %s9, 4
    %s16 = sphi 0, %s28
    %s17 = sphi 0, %s24
    %s18 = sphi 0, %s16
    %s19 = sphi 0, %s17
    %s20 = sphi 0, %s18
    %s21 = sphi 0, %s19
    %s33 = sphi 0, %s35
    %s36 = sphi 0, %s33
    %s37 = sphi 0, %s36
    %s53 = sphi 0, %s37
    %s59 = sphi 0, %s61
    %s62 = sphi 0, %s59
    %s63 = sphi 0, %s62
    %s79 = sphi 0, %s63
    %s85 = sphi 0, %s87
    %s88 = sphi 0, %s85
    %s89 = sphi 0, %s88
    %s105 = sphi 0, %s89
    %s113 = sphi 0, %s115
    %s116 = sphi 0, %s113
    %s117 = sphi 0, %s116
    %s133 = sphi 0, %s117
  $region4: #{discriminator_forward.14} parent=0 // loop_header_branch
    %12 = sbr.rel (%p10) target = $region8
  $region5: #{discriminator_forward.14} parent=0 // loop_body
    %s14 = ssub.s32 %s9, 1
    %s15 = ssub.s32 %s9, 2
    %s22 = sadd.s32 1, %s17
    %p23 = scmp.ge.s32.totalorder %s22, 1
    %s24 = scalar_select %p23, 0, %s22
    %s25 = sadd.s32 1, %s16
    %s26 = scalar_select %p23, %s25, %s16
    %p27 = scmp.ge.s32.totalorder %s26, 2
    %s28 = scalar_select %p27, 0, %s26
    %s29 = ssub.s32 %s16, %s28
    %s30 = ssub.s32 %s17, %s24
    %s31 = sor.u32 %s29, %s30
    %p32 = scmp.eq.s32.totalorder %s31, 0
    %s34 = sadd.s32 %s33, 1
    %s35 = scalar_select %p32, %s33, %s34
    %p38 = pneg %p32
    %p39 = scmp.eq.s32.totalorder %s9, 1
    %p40 = por %p38, %p39
    %p41 = scmp.ne.s32.totalorder %s33, %s36
    %p42 = scmp.eq.s32.totalorder %s9, 0
    %p43 = por %p41, %p42
    %p44 = scmp.ne.s32.totalorder %s33, %s36
    %p45 = scmp.eq.s32.totalorder %s14, 1
    %p46 = por %p44, %p45
    %p47 = scmp.ne.s32.totalorder %s36, %s37
    %p48 = scmp.eq.s32.totalorder %s14, 0
    %p49 = por %p47, %p48
    %p50 = scmp.ne.s32.totalorder %s36, %s37
    %p51 = scmp.eq.s32.totalorder %s15, 1
    %p52 = por %p50, %p51
    %p54 = scmp.ne.s32.totalorder %s37, %s53
    %p55 = scmp.eq.s32.totalorder %s15, 0
    %p56 = por %p54, %p55
    %s57 = ssub.s32 %s17, %s24
    %p58 = scmp.eq.s32.totalorder %s57, 0
    %s60 = sadd.s32 %s59, 1
    %s61 = scalar_select %p58, %s59, %s60
    %p64 = pneg %p58
    %p65 = scmp.eq.s32.totalorder %s9, 1
    %p66 = por %p64, %p65
    %p67 = scmp.ne.s32.totalorder %s59, %s62
    %p68 = scmp.eq.s32.totalorder %s9, 0
    %p69 = por %p67, %p68
    %p70 = scmp.ne.s32.totalorder %s59, %s62
    %p71 = scmp.eq.s32.totalorder %s14, 1
    %p72 = por %p70, %p71
    %p73 = scmp.ne.s32.totalorder %s62, %s63
    %p74 = scmp.eq.s32.totalorder %s14, 0
    %p75 = por %p73, %p74
    %p76 = scmp.ne.s32.totalorder %s62, %s63
    %p77 = scmp.eq.s32.totalorder %s15, 1
    %p78 = por %p76, %p77
    %p80 = scmp.ne.s32.totalorder %s63, %s79
    %p81 = scmp.eq.s32.totalorder %s15, 0
    %p82 = por %p80, %p81
    %s83 = ssub.s32 %s17, %s24
    %p84 = scmp.eq.s32.totalorder %s83, 0
    %s86 = sadd.s32 %s85, 1
    %s87 = scalar_select %p84, %s85, %s86
    %p90 = pneg %p84
    %p91 = scmp.eq.s32.totalorder %s9, 1
    %p92 = por %p90, %p91
    %p93 = scmp.ne.s32.totalorder %s85, %s88
    %p94 = scmp.eq.s32.totalorder %s9, 0
    %p95 = por %p93, %p94
    %p96 = scmp.ne.s32.totalorder %s85, %s88
    %p97 = scmp.eq.s32.totalorder %s14, 1
    %p98 = por %p96, %p97
    %p99 = scmp.ne.s32.totalorder %s88, %s89
    %p100 = scmp.eq.s32.totalorder %s14, 0
    %p101 = por %p99, %p100
    %p102 = scmp.ne.s32.totalorder %s88, %s89
    %p103 = scmp.eq.s32.totalorder %s15, 1
    %p104 = por %p102, %p103
    %p106 = scmp.ne.s32.totalorder %s89, %s105
    %p107 = scmp.eq.s32.totalorder %s15, 0
    %p108 = por %p106, %p107
    %s109 = ssub.s32 %s16, %s28
    %s110 = ssub.s32 %s17, %s24
    %s111 = sor.u32 %s109, %s110
    %p112 = scmp.eq.s32.totalorder %s111, 0
    %s114 = sadd.s32 %s113, 1
    %s115 = scalar_select %p112, %s113, %s114
    %p118 = pneg %p112
    %p119 = scmp.eq.s32.totalorder %s9, 1
    %p120 = por %p118, %p119
    %p121 = scmp.ne.s32.totalorder %s113, %s116
    %p122 = scmp.eq.s32.totalorder %s9, 0
    %p123 = por %p121, %p122
    %p124 = scmp.ne.s32.totalorder %s113, %s116
    %p125 = scmp.eq.s32.totalorder %s14, 1
    %p126 = por %p124, %p125
    %p127 = scmp.ne.s32.totalorder %s116, %s117
    %p128 = scmp.eq.s32.totalorder %s14, 0
    %p129 = por %p127, %p128
    %p130 = scmp.ne.s32.totalorder %s116, %s117
    %p131 = scmp.eq.s32.totalorder %s15, 1
    %p132 = por %p130, %p131
    %p134 = scmp.ne.s32.totalorder %s117, %s133
    %p135 = scmp.eq.s32.totalorder %s15, 0
    %p136 = por %p134, %p135
    %p137 = scmp.le.s32.totalorder 1, %s9
    %p138 = scmp.lt.s32.totalorder %s9, 3
    %p139 = pnand %p137, %p138
    %p140 = pneg %p139
    // Predicated region
    $region9: #{discriminator_forward.14} parent=5 // pred_check
      _
    $region10: #{discriminator_forward.14} parent=5 // pred_check_branch
      %142 = sbr.rel (%p139) target = $region12
    $region11: #{discriminator_forward.14} parent=5 // pred_region
      %s143 = ssub.s32 %s9, 1
      // Predicated region
      $region13: #{discriminator_forward.14} parent=11 // pred_check
        %p144 = pneg %p75
      $region14: #{discriminator_forward.14} parent=11 // pred_check_branch
        %146 = sbr.rel (%p144) target = $region16
      $region15: #{discriminator_forward.14} parent=11 // pred_region
        %p147 = scmp.lt.s32.totalorder %s19, 0
        %s148 = scalar_select %p147, %s19, 0
        %s149 = scalar_lea.vmem %s1, %s148
      $region16: #{discriminator_forward.14} parent=11 // pred_fallthru
        _
      // Predicated region
      $region17: #{discriminator_forward.14} parent=11 // pred_check
        %p150 = pneg %p101
      $region18: #{discriminator_forward.14} parent=11 // pred_check_branch
        %152 = sbr.rel (%p150) target = $region20
      $region19: #{discriminator_forward.14} parent=11 // pred_region
        %p153 = scmp.lt.s32.totalorder %s19, 0
        %s154 = scalar_select %p153, %s19, 0
        %s155 = scalar_lea.vmem %s2, %s154
      $region20: #{discriminator_forward.14} parent=11 // pred_fallthru
        _
    $region12: #{discriminator_forward.14} parent=5 // pred_fallthru
      _
    %p156 = scmp.lt.s32.totalorder %s9, 2
    // Predicated region
    $region21: #{discriminator_forward.14} parent=5 // pred_check
      %p157 = pneg %p156
    $region22: #{discriminator_forward.14} parent=5 // pred_check_branch
      %159 = sbr.rel (%p157) target = $region24
    $region23: #{discriminator_forward.14} parent=5 // pred_region
      // Predicated region
      $region25: #{discriminator_forward.14} parent=23 // pred_check
        %p160 = pneg %p43
      $region26: #{discriminator_forward.14} parent=23 // pred_check_branch
        %162 = sbr.rel (%p160) target = $region28
      $region27: #{discriminator_forward.14} parent=23 // pred_region
        %s163 = smul.u32 2, %s16
        %p164 = scmp.lt.s32.totalorder %s163, 3
        %s165 = scalar_select %p164, %s163, 3
        %p166 = scmp.lt.s32.totalorder %s17, 0
        %s167 = scalar_select %p166, %s17, 0
        %s168 = sadd.s32 %s167, %s165
        %s169 = smul.addr %s168, 4
        %s170 = scalar_lea.vmem %s0, %s169
        %s171 = smul.u32 2, %s16
      $region28: #{discriminator_forward.14} parent=23 // pred_fallthru
        _
    $region24: #{discriminator_forward.14} parent=5 // pred_fallthru
      _
    %p172 = scmp.le.s32.totalorder 1, %s9
    %p173 = scmp.lt.s32.totalorder %s9, 3
    %p174 = pnand %p172, %p173
    %p175 = pneg %p174
    // Predicated region
    $region29: #{discriminator_forward.14} parent=5 // pred_check
      _
    $region30: #{discriminator_forward.14} parent=5 // pred_check_branch
      %177 = sbr.rel (%p174) target = $region32
    $region31: #{discriminator_forward.14} parent=5 // pred_region
      %s178 = ssub.s32 %s9, 1
      %s179 = smul.u32 2, %s18
      %p180 = scmp.lt.s32.totalorder %s179, 3
      %s181 = scalar_select %p180, %s179, 3
      %p182 = scmp.lt.s32.totalorder %s19, 0
      %s183 = scalar_select %p182, %s19, 0
      %s184 = sadd.s32 %s183, %s181
      %s185 = smul.addr %s184, 4
      %s186 = scalar_lea.vmem %s0, %s185
      %p187 = pneg %p49
      %p188 = pneg %p46
      %p189 = scmp.lt.s32.totalorder %s19, 0
      %s190 = scalar_select %p189, %s19, 0
      %s191 = scalar_lea.vmem %s1, %s190
      %p192 = pneg %p75
      %p193 = pneg %p72
      %p194 = scmp.lt.s32.totalorder %s19, 0
      %s195 = scalar_select %p194, %s19, 0
      %s196 = scalar_lea.vmem %s2, %s195
      %p197 = pneg %p101
      %p198 = pneg %p98
      %p199 = pneg %p129
      %p200 = pneg %p126
      %s201 = smul.u32 2, %s18
      %p202 = scmp.lt.s32.totalorder %s201, 3
      %s203 = scalar_select %p202, %s201, 3
      %p204 = scmp.lt.s32.totalorder %s19, 0
      %s205 = scalar_select %p204, %s19, 0
      %s206 = sadd.s32 %s205, %s203
      %s207 = smul.addr %s206, 4
      %s208 = scalar_lea.vmem %s3, %s207
      %s209 = smul.u32 2, %s18
      %p210 = scmp.lt.s32.totalorder %s209, 3
      %s211 = scalar_select %p210, %s209, 3
      %p212 = scmp.lt.s32.totalorder %s19, 0
      %s213 = scalar_select %p212, %s19, 0
      %s214 = sadd.s32 %s213, %s211
      %s215 = smul.addr %s214, 4
      %s216 = scalar_lea.vmem %s0, %s215
      %s217 = smul.u32 2, %s18
      %p218 = scmp.lt.s32.totalorder %s19, 0
      %s219 = scalar_select %p218, %s19, 0
      %s220 = scalar_lea.vmem %s1, %s219
      %p221 = scmp.lt.s32.totalorder %s19, 0
      %s222 = scalar_select %p221, %s19, 0
      %s223 = scalar_lea.vmem %s2, %s222
      %s224 = smul.u32 2, %s18
      %p225 = scmp.lt.s32.totalorder %s224, 3
      %s226 = scalar_select %p225, %s224, 3
      %p227 = scmp.lt.s32.totalorder %s19, 0
      %s228 = scalar_select %p227, %s19, 0
      %s229 = sadd.s32 %s228, %s226
      %s230 = smul.addr %s229, 4
      %s231 = scalar_lea.vmem %s3, %s230
      %s232 = smul.u32 2, %s18
      %v233 = vld [vmem:[%s216] sm:$0xf]
      %v234 = vld [vmem:[%s216 + $0x4] sm:$0xf]
      %v235 = vunpack.c.l.bf16 %v233
      %v236 = vunpack.c.l.bf16 %v234
      %v237 = vld [vmem:[%s220] sm:$0x1]
      %v239 = vlaneseq
      %v240 = vshrl.u32 %v239, 7
      %v241 = vsub.s32 0, %v240
      %v242 = vrot.slane %v237, %v241
      %v244 = vmul.f32 %v235, %v242
      %v245 = vmul.f32 %v236, %v242
      %v246 = vld [vmem:[%s223] sm:$0x1]
      %v248 = vlaneseq
      %v249 = vshrl.u32 %v248, 7
      %v250 = vsub.s32 0, %v249
      %v251 = vrot.slane %v246, %v250
      %v253 = vadd.f32 %v244, %v251
      %v254 = vadd.f32 %v245, %v251
      %vm255 = vcmp.gt.f32.partialorder %v253, 0.0
      %vm256 = vcmp.gt.f32.partialorder %v254, 0.0
      %v257 = vmul.f32 %v253, 0.2
      %v258 = vmul.f32 %v254, 0.2
      %v259 = vsel %vm255, %v253, %v257
      %v260 = vsel %vm256, %v254, %v258
      %v261 = vpack.c.bf16 %v260, %v259
      %v263 = vunpack.c.l.b16 %v261
      %v264 = vunpack.c.h.b16 %v261
      %v265 = vpack.c.b16 %v263, %v263
      %v266 = vpack.c.b16 %v264, %v264
      %vm269 = vcmask 519168
      %270 = vst.msk [vmem:[%s231] sm:$0xf] %vm269, %v265
      %271 = vst.msk [vmem:[%s231 + $0x4] sm:$0xf] %vm269, %v266
      %s272 = smul.u32 2, %s18
      %p273 = scmp.lt.s32.totalorder %s272, 3
      %s274 = scalar_select %p273, %s272, 3
      %p275 = scmp.lt.s32.totalorder %s19, 0
      %s276 = scalar_select %p275, %s19, 0
      %s277 = sadd.s32 %s276, %s274
      %s278 = smul.addr %s277, 4
      %s279 = scalar_lea.vmem %s3, %s278
      // Predicated region
      $region33: #{discriminator_forward.14} parent=31 // pred_check
        %p280 = pneg %p126
      $region34: #{discriminator_forward.14} parent=31 // pred_check_branch
        %282 = sbr.rel (%p280) target = $region36
      $region35: #{discriminator_forward.14} parent=31 // pred_region
        %s283 = smul.u32 2, %s18
      $region36: #{discriminator_forward.14} parent=31 // pred_fallthru
        _
    $region32: #{discriminator_forward.14} parent=5 // pred_fallthru
      _
    %p284 = scmp.le.s32.totalorder 2, %s9
    // Predicated region
    $region37: #{discriminator_forward.14} parent=5 // pred_check
      %p285 = pneg %p284
    $region38: #{discriminator_forward.14} parent=5 // pred_check_branch
      %287 = sbr.rel (%p285) target = $region40
    $region39: #{discriminator_forward.14} parent=5 // pred_region
      %s288 = ssub.s32 %s9, 2
      // Predicated region
      $region41: #{discriminator_forward.14} parent=39 // pred_check
        %p289 = pneg %p132
      $region42: #{discriminator_forward.14} parent=39 // pred_check_branch
        %291 = sbr.rel (%p289) target = $region44
      $region43: #{discriminator_forward.14} parent=39 // pred_region
        %s292 = smul.u32 2, %s20
        %p293 = scmp.lt.s32.totalorder %s292, 3
        %s294 = scalar_select %p293, %s292, 3
        %p295 = scmp.lt.s32.totalorder %s21, 0
        %s296 = scalar_select %p295, %s21, 0
        %s297 = sadd.s32 %s296, %s294
        %s298 = smul.addr %s297, 4
        %s299 = scalar_lea.vmem %s3, %s298
      $region44: #{discriminator_forward.14} parent=39 // pred_fallthru
        _
    $region40: #{discriminator_forward.14} parent=5 // pred_fallthru
      _
  $region6: #{discriminator_forward.14} parent=0 // loop_footer
    %s13 = sadd.s32 1, %s9
  $region7: #{discriminator_forward.14} parent=0 // loop_footer_branch
    %8 = sbr.rel target = $region3
  $region8: #{discriminator_forward.14} parent=0 // loop_exit
    _

// kernel: discriminator_forward.15
$region0: #{discriminator_forward.15}
  #allocation0 [shape = 'u32[]', space=smem, size = 0x4, offset = 0x4, fixed_abs, tag = 'smem constant byte address 0x4 - core index']
  #allocation1 [shape = 'u32[144,128]{1,0:T(1,128)}', space=vmem, size = 0x12000, scoped, tag = 'internal scratch']
  %s0 = inlined_call_operand.vmem [shape: bf16[2,1024], index: 0, kind: input, shape index: {}]
  %s1 = inlined_call_operand.vmem [shape: bf16[1024,8], index: 1, kind: input, shape index: {}]
  %s2 = inlined_call_operand.vmem [shape: f32[1,8], index: 2, kind: input, shape index: {}]
  %s3 = inlined_call_operand.vmem [shape: f32[2,8], index: 3, kind: output, shape index: {}]
  %s4 = sld [smem:[#allocation0]]
  $region22: #{discriminator_forward.15} parent=0
    _
  %s6 = ssub.s32 1, %s4
  %s7 = scalar_select 0, %s6, %s4
  // Predicated region
  $region2: #{discriminator_forward.15} parent=0 // pred_check
    _
  $region3: #{discriminator_forward.15} parent=0 // pred_check_branch
    %9 = sbr.rel (0) target = $region5
  $region4: #{discriminator_forward.15} parent=0 // pred_region
    _
  $region5: #{discriminator_forward.15} parent=0 // pred_fallthru
    _
  // Predicated region
  $region6: #{discriminator_forward.15} parent=0 // pred_check
    _
  $region7: #{discriminator_forward.15} parent=0 // pred_check_branch
    %11 = sbr.rel (0) target = $region9
  $region8: #{discriminator_forward.15} parent=0 // pred_region
    _
  $region9: #{discriminator_forward.15} parent=0 // pred_fallthru
    _
  // Predicated region
  $region10: #{discriminator_forward.15} parent=0 // pred_check
    _
  $region11: #{discriminator_forward.15} parent=0 // pred_check_branch
    %13 = sbr.rel (0) target = $region13
  $region12: #{discriminator_forward.15} parent=0 // pred_region
    _
  $region13: #{discriminator_forward.15} parent=0 // pred_fallthru
    _
  %v15 = vld [vmem:[%s0] sm:$0xff]
  %v16 = vld [vmem:[%s1] sm:$0xf]
  %v17 = vld [vmem:[%s1 + $0x4] sm:$0xf]
  %v18 = vld [vmem:[%s1 + $0x8] sm:$0xf]
  %v19 = vld [vmem:[%s1 + $0xc] sm:$0xf]
  %v20 = vld [vmem:[%s1 + $0x10] sm:$0xf]
  %v21 = vld [vmem:[%s1 + $0x14] sm:$0xf]
  %v22 = vld [vmem:[%s1 + $0x18] sm:$0xf]
  %v23 = vld [vmem:[%s1 + $0x1c] sm:$0xf]
  %v24 = vld [vmem:[%s1 + $0x20] sm:$0xf]
  %v25 = vld [vmem:[%s1 + $0x24] sm:$0xf]
  %v26 = vld [vmem:[%s1 + $0x28] sm:$0xf]
  %v27 = vld [vmem:[%s1 + $0x2c] sm:$0xf]
  %v28 = vld [vmem:[%s1 + $0x30] sm:$0xf]
  %v29 = vld [vmem:[%s1 + $0x34] sm:$0xf]
  %v30 = vld [vmem:[%s1 + $0x38] sm:$0xf]
  %v31 = vld [vmem:[%s1 + $0x3c] sm:$0xf]
  %v32 = vld [vmem:[%s1 + $0x40] sm:$0xf]
  %v33 = vld [vmem:[%s1 + $0x44] sm:$0xf]
  %v34 = vld [vmem:[%s1 + $0x48] sm:$0xf]
  %v35 = vld [vmem:[%s1 + $0x4c] sm:$0xf]
  %v36 = vld [vmem:[%s1 + $0x50] sm:$0xf]
  %v37 = vld [vmem:[%s1 + $0x54] sm:$0xf]
  %v38 = vld [vmem:[%s1 + $0x58] sm:$0xf]
  %v39 = vld [vmem:[%s1 + $0x5c] sm:$0xf]
  %v40 = vld [vmem:[%s1 + $0x60] sm:$0xf]
  %v41 = vld [vmem:[%s1 + $0x64] sm:$0xf]
  %v42 = vld [vmem:[%s1 + $0x68] sm:$0xf]
  %v43 = vld [vmem:[%s1 + $0x6c] sm:$0xf]
  %v44 = vld [vmem:[%s1 + $0x70] sm:$0xf]
  %v45 = vld [vmem:[%s1 + $0x74] sm:$0xf]
  %v46 = vld [vmem:[%s1 + $0x78] sm:$0xf]
  %v47 = vld [vmem:[%s1 + $0x7c] sm:$0xf]
  %v48 = vld [vmem:[%s1 + $0x80] sm:$0xf]
  %v49 = vld [vmem:[%s1 + $0x84] sm:$0xf]
  %v50 = vld [vmem:[%s1 + $0x88] sm:$0xf]
  %v51 = vld [vmem:[%s1 + $0x8c] sm:$0xf]
  %v52 = vld [vmem:[%s1 + $0x90] sm:$0xf]
  %v53 = vld [vmem:[%s1 + $0x94] sm:$0xf]
  %v54 = vld [vmem:[%s1 + $0x98] sm:$0xf]
  %v55 = vld [vmem:[%s1 + $0x9c] sm:$0xf]
  %v56 = vld [vmem:[%s1 + $0xa0] sm:$0xf]
  %v57 = vld [vmem:[%s1 + $0xa4] sm:$0xf]
  %v58 = vld [vmem:[%s1 + $0xa8] sm:$0xf]
  %v59 = vld [vmem:[%s1 + $0xac] sm:$0xf]
  %v60 = vld [vmem:[%s1 + $0xb0] sm:$0xf]
  %v61 = vld [vmem:[%s1 + $0xb4] sm:$0xf]
  %v62 = vld [vmem:[%s1 + $0xb8] sm:$0xf]
  %v63 = vld [vmem:[%s1 + $0xbc] sm:$0xf]
  %v64 = vld [vmem:[%s1 + $0xc0] sm:$0xf]
  %v65 = vld [vmem:[%s1 + $0xc4] sm:$0xf]
  %v66 = vld [vmem:[%s1 + $0xc8] sm:$0xf]
  %v67 = vld [vmem:[%s1 + $0xcc] sm:$0xf]
  %v68 = vld [vmem:[%s1 + $0xd0] sm:$0xf]
  %v69 = vld [vmem:[%s1 + $0xd4] sm:$0xf]
  %v70 = vld [vmem:[%s1 + $0xd8] sm:$0xf]
  %v71 = vld [vmem:[%s1 + $0xdc] sm:$0xf]
  %v72 = vld [vmem:[%s1 + $0xe0] sm:$0xf]
  %v73 = vld [vmem:[%s1 + $0xe4] sm:$0xf]
  %v74 = vld [vmem:[%s1 + $0xe8] sm:$0xf]
  %v75 = vld [vmem:[%s1 + $0xec] sm:$0xf]
  %v76 = vld [vmem:[%s1 + $0xf0] sm:$0xf]
  %v77 = vld [vmem:[%s1 + $0xf4] sm:$0xf]
  %v78 = vld [vmem:[%s1 + $0xf8] sm:$0xf]
  %v79 = vld [vmem:[%s1 + $0xfc] sm:$0xf]
  %v80 = vld [vmem:[%s1 + $0x100] sm:$0xf]
  %v81 = vld [vmem:[%s1 + $0x104] sm:$0xf]
  %v82 = vld [vmem:[%s1 + $0x108] sm:$0xf]
  %v83 = vld [vmem:[%s1 + $0x10c] sm:$0xf]
  %v84 = vld [vmem:[%s1 + $0x110] sm:$0xf]
  %v85 = vld [vmem:[%s1 + $0x114] sm:$0xf]
  %v86 = vld [vmem:[%s1 + $0x118] sm:$0xf]
  %v87 = vld [vmem:[%s1 + $0x11c] sm:$0xf]
  %v88 = vld [vmem:[%s1 + $0x120] sm:$0xf]
  %v89 = vld [vmem:[%s1 + $0x124] sm:$0xf]
  %v90 = vld [vmem:[%s1 + $0x128] sm:$0xf]
  %v91 = vld [vmem:[%s1 + $0x12c] sm:$0xf]
  %v92 = vld [vmem:[%s1 + $0x130] sm:$0xf]
  %v93 = vld [vmem:[%s1 + $0x134] sm:$0xf]
  %v94 = vld [vmem:[%s1 + $0x138] sm:$0xf]
  %v95 = vld [vmem:[%s1 + $0x13c] sm:$0xf]
  %v96 = vld [vmem:[%s1 + $0x140] sm:$0xf]
  %v97 = vld [vmem:[%s1 + $0x144] sm:$0xf]
  %v98 = vld [vmem:[%s1 + $0x148] sm:$0xf]
  %v99 = vld [vmem:[%s1 + $0x14c] sm:$0xf]
  %v100 = vld [vmem:[%s1 + $0x150] sm:$0xf]
  %v101 = vld [vmem:[%s1 + $0x154] sm:$0xf]
  %v102 = vld [vmem:[%s1 + $0x158] sm:$0xf]
  %v103 = vld [vmem:[%s1 + $0x15c] sm:$0xf]
  %v104 = vld [vmem:[%s1 + $0x160] sm:$0xf]
  %v105 = vld [vmem:[%s1 + $0x164] sm:$0xf]
  %v106 = vld [vmem:[%s1 + $0x168] sm:$0xf]
  %v107 = vld [vmem:[%s1 + $0x16c] sm:$0xf]
  %v108 = vld [vmem:[%s1 + $0x170] sm:$0xf]
  %v109 = vld [vmem:[%s1 + $0x174] sm:$0xf]
  %v110 = vld [vmem:[%s1 + $0x178] sm:$0xf]
  %v111 = vld [vmem:[%s1 + $0x17c] sm:$0xf]
  %v112 = vld [vmem:[%s1 + $0x180] sm:$0xf]
  %v113 = vld [vmem:[%s1 + $0x184] sm:$0xf]
  %v114 = vld [vmem:[%s1 + $0x188] sm:$0xf]
  %v115 = vld [vmem:[%s1 + $0x18c] sm:$0xf]
  %v116 = vld [vmem:[%s1 + $0x190] sm:$0xf]
  %v117 = vld [vmem:[%s1 + $0x194] sm:$0xf]
  %v118 = vld [vmem:[%s1 + $0x198] sm:$0xf]
  %v119 = vld [vmem:[%s1 + $0x19c] sm:$0xf]
  %v120 = vld [vmem:[%s1 + $0x1a0] sm:$0xf]
  %v121 = vld [vmem:[%s1 + $0x1a4] sm:$0xf]
  %v122 = vld [vmem:[%s1 + $0x1a8] sm:$0xf]
  %v123 = vld [vmem:[%s1 + $0x1ac] sm:$0xf]
  %v124 = vld [vmem:[%s1 + $0x1b0] sm:$0xf]
  %v125 = vld [vmem:[%s1 + $0x1b4] sm:$0xf]
  %v126 = vld [vmem:[%s1 + $0x1b8] sm:$0xf]
  %v127 = vld [vmem:[%s1 + $0x1bc] sm:$0xf]
  %v128 = vld [vmem:[%s1 + $0x1c0] sm:$0xf]
  %v129 = vld [vmem:[%s1 + $0x1c4] sm:$0xf]
  %v130 = vld [vmem:[%s1 + $0x1c8] sm:$0xf]
  %v131 = vld [vmem:[%s1 + $0x1cc] sm:$0xf]
  %v132 = vld [vmem:[%s1 + $0x1d0] sm:$0xf]
  %v133 = vld [vmem:[%s1 + $0x1d4] sm:$0xf]
  %v134 = vld [vmem:[%s1 + $0x1d8] sm:$0xf]
  %v135 = vld [vmem:[%s1 + $0x1dc] sm:$0xf]
  %v136 = vld [vmem:[%s1 + $0x1e0] sm:$0xf]
  %v137 = vld [vmem:[%s1 + $0x1e4] sm:$0xf]
  %v138 = vld [vmem:[%s1 + $0x1e8] sm:$0xf]
  %v139 = vld [vmem:[%s1 + $0x1ec] sm:$0xf]
  %v140 = vld [vmem:[%s1 + $0x1f0] sm:$0xf]
  %v141 = vld [vmem:[%s1 + $0x1f4] sm:$0xf]
  %v142 = vld [vmem:[%s1 + $0x1f8] sm:$0xf]
  %v143 = vld [vmem:[%s1 + $0x1fc] sm:$0xf]
  %v144 = vld [vmem:[%s2] sm:$0x1]
  %v146 = vlaneseq
  %v147 = vshrl.u32 %v146, 7
  %v148 = vsub.s32 0, %v147
  %v149 = vrot.slane %v144, %v148
  %v152 = vcombine.high %v15, %v15
  %v154 = vunpack.c.l.s4 1966171168
  %v155 = vunpack.c.0.s8 %v154
  %v156 = vlaneseq
  %v157 = vshrl.u32 %v156, 7
  %v158 = vsub.s32 %v155, %v157
  %v159 = vrot.slane %v15, %v158
  %v161 = vunpack.c.l.s4 1966171168
  %v162 = vunpack.c.0.s8 %v161
  %v163 = vlaneseq
  %v164 = vshrl.u32 %v163, 7
  %v165 = vsub.s32 %v162, %v164
  %v166 = vrot.slane %v152, %v165
  %v167 = vcombine.high %v159, %v159
  %v168 = vcombine.high %v166, %v166
  %v170 = vunpack.c.l.s4 1966171168
  %v171 = vunpack.c.0.s8 %v170
  %v172 = vlaneseq
  %v173 = vshrl.u32 %v172, 7
  %v174 = vsub.s32 %v171, %v173
  %v175 = vrot.slane %v159, %v174
  %v177 = vunpack.c.l.s4 1966171168
  %v178 = vunpack.c.0.s8 %v177
  %v179 = vlaneseq
  %v180 = vshrl.u32 %v179, 7
  %v181 = vsub.s32 %v178, %v180
  %v182 = vrot.slane %v166, %v181
  %v184 = vunpack.c.l.s4 1966171168
  %v185 = vunpack.c.0.s8 %v184
  %v186 = vlaneseq
  %v187 = vshrl.u32 %v186, 7
  %v188 = vsub.s32 %v185, %v187
  %v189 = vrot.slane %v167, %v188
  %v191 = vunpack.c.l.s4 1966171168
  %v192 = vunpack.c.0.s8 %v191
  %v193 = vlaneseq
  %v194 = vshrl.u32 %v193, 7
  %v195 = vsub.s32 %v192, %v194
  %v196 = vrot.slane %v168, %v195
  %v197 = vcombine.high %v175, %v175
  %v198 = vcombine.high %v182, %v182
  %v199 = vcombine.high %v189, %v189
  %v200 = vcombine.high %v196, %v196
  %v337 = vunpack.c.l.b16 %v16
  %v338 = vunpack.c.l.b16 %v17
  %v339 = vunpack.c.l.b16 %v18
  %v340 = vunpack.c.l.b16 %v19
  %v341 = vunpack.c.l.b16 %v20
  %v342 = vunpack.c.l.b16 %v21
  %v343 = vunpack.c.l.b16 %v22
  %v344 = vunpack.c.l.b16 %v23
  %v345 = vunpack.c.l.b16 %v24
  %v346 = vunpack.c.l.b16 %v25
  %v347 = vunpack.c.l.b16 %v26
  %v348 = vunpack.c.l.b16 %v27
  %v349 = vunpack.c.l.b16 %v28
  %v350 = vunpack.c.l.b16 %v29
  %v351 = vunpack.c.l.b16 %v30
  %v352 = vunpack.c.l.b16 %v31
  %v353 = vunpack.c.l.b16 %v32
  %v354 = vunpack.c.l.b16 %v33
  %v355 = vunpack.c.l.b16 %v34
  %v356 = vunpack.c.l.b16 %v35
  %v357 = vunpack.c.l.b16 %v36
  %v358 = vunpack.c.l.b16 %v37
  %v359 = vunpack.c.l.b16 %v38
  %v360 = vunpack.c.l.b16 %v39
  %v361 = vunpack.c.l.b16 %v40
  %v362 = vunpack.c.l.b16 %v41
  %v363 = vunpack.c.l.b16 %v42
  %v364 = vunpack.c.l.b16 %v43
  %v365 = vunpack.c.l.b16 %v44
  %v366 = vunpack.c.l.b16 %v45
  %v367 = vunpack.c.l.b16 %v46
  %v368 = vunpack.c.l.b16 %v47
  %v369 = vunpack.c.l.b16 %v48
  %v370 = vunpack.c.l.b16 %v49
  %v371 = vunpack.c.l.b16 %v50
  %v372 = vunpack.c.l.b16 %v51
  %v373 = vunpack.c.l.b16 %v52
  %v374 = vunpack.c.l.b16 %v53
  %v375 = vunpack.c.l.b16 %v54
  %v376 = vunpack.c.l.b16 %v55
  %v377 = vunpack.c.l.b16 %v56
  %v378 = vunpack.c.l.b16 %v57
  %v379 = vunpack.c.l.b16 %v58
  %v380 = vunpack.c.l.b16 %v59
  %v381 = vunpack.c.l.b16 %v60
  %v382 = vunpack.c.l.b16 %v61
  %v383 = vunpack.c.l.b16 %v62
  %v384 = vunpack.c.l.b16 %v63
  %v385 = vunpack.c.l.b16 %v64
  %v386 = vunpack.c.l.b16 %v65
  %v387 = vunpack.c.l.b16 %v66
  %v388 = vunpack.c.l.b16 %v67
  %v389 = vunpack.c.l.b16 %v68
  %v390 = vunpack.c.l.b16 %v69
  %v391 = vunpack.c.l.b16 %v70
  %v392 = vunpack.c.l.b16 %v71
  %v393 = vunpack.c.l.b16 %v72
  %v394 = vunpack.c.l.b16 %v73
  %v395 = vunpack.c.l.b16 %v74
  %v396 = vunpack.c.l.b16 %v75
  %v397 = vunpack.c.l.b16 %v76
  %v398 = vunpack.c.l.b16 %v77
  %v399 = vunpack.c.l.b16 %v78
  %v400 = vunpack.c.l.b16 %v79
  %v401 = vunpack.c.l.b16 %v80
  %v402 = vunpack.c.l.b16 %v81
  %v403 = vunpack.c.l.b16 %v82
  %v404 = vunpack.c.l.b16 %v83
  %v405 = vunpack.c.l.b16 %v84
  %v406 = vunpack.c.l.b16 %v85
  %v407 = vunpack.c.l.b16 %v86
  %v408 = vunpack.c.l.b16 %v87
  %v409 = vunpack.c.l.b16 %v88
  %v410 = vunpack.c.l.b16 %v89
  %v411 = vunpack.c.l.b16 %v90
  %v412 = vunpack.c.l.b16 %v91
  %v413 = vunpack.c.l.b16 %v92
  %v414 = vunpack.c.l.b16 %v93
  %v415 = vunpack.c.l.b16 %v94
  %v416 = vunpack.c.l.b16 %v95
  %v417 = vunpack.c.l.b16 %v96
  %v418 = vunpack.c.l.b16 %v97
  %v419 = vunpack.c.l.b16 %v98
  %v420 = vunpack.c.l.b16 %v99
  %v421 = vunpack.c.l.b16 %v100
  %v422 = vunpack.c.l.b16 %v101
  %v423 = vunpack.c.l.b16 %v102
  %v424 = vunpack.c.l.b16 %v103
  %v425 = vunpack.c.l.b16 %v104
  %v426 = vunpack.c.l.b16 %v105
  %v427 = vunpack.c.l.b16 %v106
  %v428 = vunpack.c.l.b16 %v107
  %v429 = vunpack.c.l.b16 %v108
  %v430 = vunpack.c.l.b16 %v109
  %v431 = vunpack.c.l.b16 %v110
  %v432 = vunpack.c.l.b16 %v111
  %v433 = vunpack.c.l.b16 %v112
  %v434 = vunpack.c.l.b16 %v113
  %v435 = vunpack.c.l.b16 %v114
  %v436 = vunpack.c.l.b16 %v115
  %v437 = vunpack.c.l.b16 %v116
  %v438 = vunpack.c.l.b16 %v117
  %v439 = vunpack.c.l.b16 %v118
  %v440 = vunpack.c.l.b16 %v119
  %v441 = vunpack.c.l.b16 %v120
  %v442 = vunpack.c.l.b16 %v121
  %v443 = vunpack.c.l.b16 %v122
  %v444 = vunpack.c.l.b16 %v123
  %v445 = vunpack.c.l.b16 %v124
  %v446 = vunpack.c.l.b16 %v125
  %v447 = vunpack.c.l.b16 %v126
  %v448 = vunpack.c.l.b16 %v127
  %v449 = vunpack.c.l.b16 %v128
  %v450 = vunpack.c.l.b16 %v129
  %v451 = vunpack.c.l.b16 %v130
  %v452 = vunpack.c.l.b16 %v131
  %v453 = vunpack.c.l.b16 %v132
  %v454 = vunpack.c.l.b16 %v133
  %v455 = vunpack.c.l.b16 %v134
  %v456 = vunpack.c.l.b16 %v135
  %v457 = vunpack.c.l.b16 %v136
  %v458 = vunpack.c.l.b16 %v137
  %v459 = vunpack.c.l.b16 %v138
  %v460 = vunpack.c.l.b16 %v139
  %v461 = vunpack.c.l.b16 %v140
  %v462 = vunpack.c.l.b16 %v141
  %v463 = vunpack.c.l.b16 %v142
  %v464 = vunpack.c.l.b16 %v143
  %v465 = vpack.c.b16 %v338, %v337
  %v466 = vpack.c.b16 %v340, %v339
  %v467 = vpack.c.b16 %v342, %v341
  %v468 = vpack.c.b16 %v344, %v343
  %v469 = vpack.c.b16 %v346, %v345
  %v470 = vpack.c.b16 %v348, %v347
  %v471 = vpack.c.b16 %v350, %v349
  %v472 = vpack.c.b16 %v352, %v351
  %v473 = vpack.c.b16 %v354, %v353
  %v474 = vpack.c.b16 %v356, %v355
  %v475 = vpack.c.b16 %v358, %v357
  %v476 = vpack.c.b16 %v360, %v359
  %v477 = vpack.c.b16 %v362, %v361
  %v478 = vpack.c.b16 %v364, %v363
  %v479 = vpack.c.b16 %v366, %v365
  %v480 = vpack.c.b16 %v368, %v367
  %v481 = vpack.c.b16 %v370, %v369
  %v482 = vpack.c.b16 %v372, %v371
  %v483 = vpack.c.b16 %v374, %v373
  %v484 = vpack.c.b16 %v376, %v375
  %v485 = vpack.c.b16 %v378, %v377
  %v486 = vpack.c.b16 %v380, %v379
  %v487 = vpack.c.b16 %v382, %v381
  %v488 = vpack.c.b16 %v384, %v383
  %v489 = vpack.c.b16 %v386, %v385
  %v490 = vpack.c.b16 %v388, %v387
  %v491 = vpack.c.b16 %v390, %v389
  %v492 = vpack.c.b16 %v392, %v391
  %v493 = vpack.c.b16 %v394, %v393
  %v494 = vpack.c.b16 %v396, %v395
  %v495 = vpack.c.b16 %v398, %v397
  %v496 = vpack.c.b16 %v400, %v399
  %v497 = vpack.c.b16 %v402, %v401
  %v498 = vpack.c.b16 %v404, %v403
  %v499 = vpack.c.b16 %v406, %v405
  %v500 = vpack.c.b16 %v408, %v407
  %v501 = vpack.c.b16 %v410, %v409
  %v502 = vpack.c.b16 %v412, %v411
  %v503 = vpack.c.b16 %v414, %v413
  %v504 = vpack.c.b16 %v416, %v415
  %v505 = vpack.c.b16 %v418, %v417
  %v506 = vpack.c.b16 %v420, %v419
  %v507 = vpack.c.b16 %v422, %v421
  %v508 = vpack.c.b16 %v424, %v423
  %v509 = vpack.c.b16 %v426, %v425
  %v510 = vpack.c.b16 %v428, %v427
  %v511 = vpack.c.b16 %v430, %v429
  %v512 = vpack.c.b16 %v432, %v431
  %v513 = vpack.c.b16 %v434, %v433
  %v514 = vpack.c.b16 %v436, %v435
  %v515 = vpack.c.b16 %v438, %v437
  %v516 = vpack.c.b16 %v440, %v439
  %v517 = vpack.c.b16 %v442, %v441
  %v518 = vpack.c.b16 %v444, %v443
  %v519 = vpack.c.b16 %v446, %v445
  %v520 = vpack.c.b16 %v448, %v447
  %v521 = vpack.c.b16 %v450, %v449
  %v522 = vpack.c.b16 %v452, %v451
  %v523 = vpack.c.b16 %v454, %v453
  %v524 = vpack.c.b16 %v456, %v455
  %v525 = vpack.c.b16 %v458, %v457
  %v526 = vpack.c.b16 %v460, %v459
  %v527 = vpack.c.b16 %v462, %v461
  %v528 = vpack.c.b16 %v464, %v463
  %593 = vmatprep.subr.bf16.mxu0 0
  %594 = vmatpush1.bf16.msra.mxu0 %v465
  %595 = vmatprep.subr.bf16.mxu0 0
  %596 = vmatpush1.bf16.msra.mxu0 %v466
  %597 = vmatprep.subr.bf16.mxu0 0
  %598 = vmatpush1.bf16.msra.mxu0 %v467
  %599 = vmatprep.subr.bf16.mxu0 0
  %600 = vmatpush1.bf16.msra.mxu0 %v468
  %601 = vmatprep.subr.bf16.mxu0 0
  %602 = vmatpush1.bf16.msra.mxu0 %v469
  %603 = vmatprep.subr.bf16.mxu0 0
  %604 = vmatpush1.bf16.msra.mxu0 %v470
  %605 = vmatprep.subr.bf16.mxu0 0
  %606 = vmatpush1.bf16.msra.mxu0 %v471
  %607 = vmatprep.subr.bf16.mxu0 0
  %608 = vmatpush1.bf16.msra.mxu0 %v472
  %609 = vmatprep.subr.bf16.mxu0 0
  %610 = vmatpush1.bf16.msra.mxu0 %v473
  %611 = vmatprep.subr.bf16.mxu0 0
  %612 = vmatpush1.bf16.msra.mxu0 %v474
  %613 = vmatprep.subr.bf16.mxu0 0
  %614 = vmatpush1.bf16.msra.mxu0 %v475
  %615 = vmatprep.subr.bf16.mxu0 0
  %616 = vmatpush1.bf16.msra.mxu0 %v476
  %617 = vmatprep.subr.bf16.mxu0 0
  %618 = vmatpush1.bf16.msra.mxu0 %v477
  %619 = vmatprep.subr.bf16.mxu0 0
  %620 = vmatpush1.bf16.msra.mxu0 %v478
  %621 = vmatprep.subr.bf16.mxu0 0
  %622 = vmatpush1.bf16.msra.mxu0 %v479
  %623 = vmatprep.subr.bf16.mxu0 0
  %624 = vmatpush1.bf16.msra.mxu0 %v480
  %625 = vmatprep.mubr.bf16.mxu0 %v189
  %626 = vmatmul.mubr.bf16.gmra.mrb[0].mxu0 %v175
  %v627 = vpop.f32.mrb[0].mxu0
  %v628 = vadd.f32 %v149, %v627
  %v629 = vpop.f32.mrb[0].mxu0
  %v630 = vpop.f32.mrb[0].mxu0
  %v631 = vpop.f32.mrb[0].mxu0
  %632 = vdwg.mxu0
  %633 = vmatprep.subr.bf16.mxu0 0
  %634 = vmatpush1.bf16.msra.mxu0 %v481
  %635 = vmatprep.subr.bf16.mxu0 0
  %636 = vmatpush1.bf16.msra.mxu0 %v482
  %637 = vmatprep.subr.bf16.mxu0 0
  %638 = vmatpush1.bf16.msra.mxu0 %v483
  %639 = vmatprep.subr.bf16.mxu0 0
  %640 = vmatpush1.bf16.msra.mxu0 %v484
  %641 = vmatprep.subr.bf16.mxu0 0
  %642 = vmatpush1.bf16.msra.mxu0 %v485
  %643 = vmatprep.subr.bf16.mxu0 0
  %644 = vmatpush1.bf16.msra.mxu0 %v486
  %645 = vmatprep.subr.bf16.mxu0 0
  %646 = vmatpush1.bf16.msra.mxu0 %v487
  %647 = vmatprep.subr.bf16.mxu0 0
  %648 = vmatpush1.bf16.msra.mxu0 %v488
  %649 = vmatprep.subr.bf16.mxu0 0
  %650 = vmatpush1.bf16.msra.mxu0 %v489
  %651 = vmatprep.subr.bf16.mxu0 0
  %652 = vmatpush1.bf16.msra.mxu0 %v490
  %653 = vmatprep.subr.bf16.mxu0 0
  %654 = vmatpush1.bf16.msra.mxu0 %v491
  %655 = vmatprep.subr.bf16.mxu0 0
  %656 = vmatpush1.bf16.msra.mxu0 %v492
  %657 = vmatprep.subr.bf16.mxu0 0
  %658 = vmatpush1.bf16.msra.mxu0 %v493
  %659 = vmatprep.subr.bf16.mxu0 0
  %660 = vmatpush1.bf16.msra.mxu0 %v494
  %661 = vmatprep.subr.bf16.mxu0 0
  %662 = vmatpush1.bf16.msra.mxu0 %v495
  %663 = vmatprep.subr.bf16.mxu0 0
  %664 = vmatpush1.bf16.msra.mxu0 %v496
  %665 = vmatprep.mubr.bf16.mxu0 %v199
  %666 = vmatmul.mubr.bf16.gmra.mrb[0].mxu0 %v197
  %v667 = vpop.f32.mrb[0].mxu0
  %v668 = vadd.f32 %v628, %v667
  %v669 = vpop.f32.mrb[0].mxu0
  %v670 = vpop.f32.mrb[0].mxu0
  %v671 = vpop.f32.mrb[0].mxu0
  %672 = vdwg.mxu0
  %673 = vmatprep.subr.bf16.mxu0 0
  %674 = vmatpush1.bf16.msra.mxu0 %v497
  %675 = vmatprep.subr.bf16.mxu0 0
  %676 = vmatpush1.bf16.msra.mxu0 %v498
  %677 = vmatprep.subr.bf16.mxu0 0
  %678 = vmatpush1.bf16.msra.mxu0 %v499
  %679 = vmatprep.subr.bf16.mxu0 0
  %680 = vmatpush1.bf16.msra.mxu0 %v500
  %681 = vmatprep.subr.bf16.mxu0 0
  %682 = vmatpush1.bf16.msra.mxu0 %v501
  %683 = vmatprep.subr.bf16.mxu0 0
  %684 = vmatpush1.bf16.msra.mxu0 %v502
  %685 = vmatprep.subr.bf16.mxu0 0
  %686 = vmatpush1.bf16.msra.mxu0 %v503
  %687 = vmatprep.subr.bf16.mxu0 0
  %688 = vmatpush1.bf16.msra.mxu0 %v504
  %689 = vmatprep.subr.bf16.mxu0 0
  %690 = vmatpush1.bf16.msra.mxu0 %v505
  %691 = vmatprep.subr.bf16.mxu0 0
  %692 = vmatpush1.bf16.msra.mxu0 %v506
  %693 = vmatprep.subr.bf16.mxu0 0
  %694 = vmatpush1.bf16.msra.mxu0 %v507
  %695 = vmatprep.subr.bf16.mxu0 0
  %696 = vmatpush1.bf16.msra.mxu0 %v508
  %697 = vmatprep.subr.bf16.mxu0 0
  %698 = vmatpush1.bf16.msra.mxu0 %v509
  %699 = vmatprep.subr.bf16.mxu0 0
  %700 = vmatpush1.bf16.msra.mxu0 %v510
  %701 = vmatprep.subr.bf16.mxu0 0
  %702 = vmatpush1.bf16.msra.mxu0 %v511
  %703 = vmatprep.subr.bf16.mxu0 0
  %704 = vmatpush1.bf16.msra.mxu0 %v512
  %705 = vmatprep.mubr.bf16.mxu0 %v196
  %706 = vmatmul.mubr.bf16.gmra.mrb[0].mxu0 %v182
  %v707 = vpop.f32.mrb[0].mxu0
  %v708 = vadd.f32 %v668, %v707
  %v709 = vpop.f32.mrb[0].mxu0
  %v710 = vpop.f32.mrb[0].mxu0
  %v711 = vpop.f32.mrb[0].mxu0
  %712 = vdwg.mxu0
  %713 = vmatprep.subr.bf16.mxu0 0
  %714 = vmatpush1.bf16.msra.mxu0 %v513
  %715 = vmatprep.subr.bf16.mxu0 0
  %716 = vmatpush1.bf16.msra.mxu0 %v514
  %717 = vmatprep.subr.bf16.mxu0 0
  %718 = vmatpush1.bf16.msra.mxu0 %v515
  %719 = vmatprep.subr.bf16.mxu0 0
  %720 = vmatpush1.bf16.msra.mxu0 %v516
  %721 = vmatprep.subr.bf16.mxu0 0
  %722 = vmatpush1.bf16.msra.mxu0 %v517
  %723 = vmatprep.subr.bf16.mxu0 0
  %724 = vmatpush1.bf16.msra.mxu0 %v518
  %725 = vmatprep.subr.bf16.mxu0 0
  %726 = vmatpush1.bf16.msra.mxu0 %v519
  %727 = vmatprep.subr.bf16.mxu0 0
  %728 = vmatpush1.bf16.msra.mxu0 %v520
  %729 = vmatprep.subr.bf16.mxu0 0
  %730 = vmatpush1.bf16.msra.mxu0 %v521
  %731 = vmatprep.subr.bf16.mxu0 0
  %732 = vmatpush1.bf16.msra.mxu0 %v522
  %733 = vmatprep.subr.bf16.mxu0 0
  %734 = vmatpush1.bf16.msra.mxu0 %v523
  %735 = vmatprep.subr.bf16.mxu0 0
  %736 = vmatpush1.bf16.msra.mxu0 %v524
  %737 = vmatprep.subr.bf16.mxu0 0
  %738 = vmatpush1.bf16.msra.mxu0 %v525
  %739 = vmatprep.subr.bf16.mxu0 0
  %740 = vmatpush1.bf16.msra.mxu0 %v526
  %741 = vmatprep.subr.bf16.mxu0 0
  %742 = vmatpush1.bf16.msra.mxu0 %v527
  %743 = vmatprep.subr.bf16.mxu0 0
  %744 = vmatpush1.bf16.msra.mxu0 %v528
  %745 = vmatprep.mubr.bf16.mxu0 %v200
  %746 = vmatmul.mubr.bf16.gmra.mrb[0].mxu0 %v198
  %v747 = vpop.f32.mrb[0].mxu0
  %v748 = vadd.f32 %v708, %v747
  %v749 = vpop.f32.mrb[0].mxu0
  %v750 = vpop.f32.mrb[0].mxu0
  %v751 = vpop.f32.mrb[0].mxu0
  %752 = vdwg.mxu0
  %v753 = vsub.f32 0.0, %v748
  %v754 = vmul.f32 %v753, 1.442695
  %v755 = vpow.pop %v754
  %v756 = vadd.f32 %v755, 1.0
  %v757 = vrcp.pop %v756
  %v758 = vmul.f32 1.0, %v757
  %vm759 = vcmask 58368
  %760 = vst.msk [vmem:[%s3] sm:$0x3] %vm759, %v758
  // Predicated region
  $region14: #{discriminator_forward.15} parent=0 // pred_check
    _
  $region15: #{discriminator_forward.15} parent=0 // pred_check_branch
    %762 = sbr.rel (0) target = $region17
  $region16: #{discriminator_forward.15} parent=0 // pred_region
    _
  $region17: #{discriminator_forward.15} parent=0 // pred_fallthru
    _
  // Predicated region
  $region18: #{discriminator_forward.15} parent=0 // pred_check
    _
  $region19: #{discriminator_forward.15} parent=0 // pred_check_branch
    %764 = sbr.rel (0) target = $region21
  $region20: #{discriminator_forward.15} parent=0 // pred_region
    _
  $region21: #{discriminator_forward.15} parent=0 // pred_fallthru
    _

</llo_original>
